<compile_context>
chip_gen: v7x
topology: tpu7x:2x2x1
jax: 0.10.0
libtpu: 0.0.40
codegen_flags: <defaults>
</compile_context>

<pallas_src>
import numpy as np

import jax
import jax.numpy as jnp
from jax import lax
from jax.experimental import pallas as pl
from jax.experimental.pallas import tpu as pltpu


# ---------------------------------------------------------------------------
# Host-side constant builders (weight / geometry preprocessing, done once).
# Activations inside the kernel are laid out as (H, W*C) per batch element.
# ---------------------------------------------------------------------------
def _conv_consts(w, scale, bias, H, W, stride, padding):
    """Conv2d (no bias) + folded eval-mode BN as a banded matrix for (H, W*C).

    Returns B_pack (kh*W*Cin, OW*Cout) -- vertical stack over the kh taps, with
    the BN scale folded into the weights and the W-direction taps / stride /
    zero padding folded into the band structure -- plus bias_row (1, OW*Cout)
    and the output geometry.  Inside the kernel:
        out = sum_ki rows_ki @ B_pack[ki*W*Cin:(ki+1)*W*Cin] + bias_row
    where rows_ki is a (strided) row gather of the zero-halo activation.
    """
    kh, kw, cin, cout = w.shape
    OH = (H + 2 * padding - kh) // stride + 1
    OW = (W + 2 * padding - kw) // stride + 1
    ws = np.asarray(w, np.float32) * np.asarray(scale, np.float32)[None, None, None, :]

    B = np.zeros((kh, W * cin, OW * cout), np.float32)
    for ki in range(kh):
        for kj in range(kw):
            for ow in range(OW):
                wi = stride * ow + kj - padding
                if 0 <= wi < W:
                    B[ki, wi * cin:(wi + 1) * cin,
                      ow * cout:(ow + 1) * cout] = ws[ki, kj]

    B_pack = B.reshape(kh * W * cin, OW * cout)                   # sublane-aligned slices
    bias_row = np.tile(np.asarray(bias, np.float32), OW)[None, :]  # (1, OW*Cout)
    return B_pack, bias_row, OH, OW, cout


def _maxpool_consts(W, C, k=3, stride=2, padding=1):
    """MaxPool column-tap gather matrices, vertically stacked: (k*W*C, OW*C)."""
    OW = (W + 2 * padding - k) // stride + 1
    CP = np.zeros((k, W * C, OW * C), np.float32)
    eye = np.eye(C, dtype=np.float32)
    for t in range(k):
        for ow in range(OW):
            wi = stride * ow + t - padding
            if 0 <= wi < W:
                CP[t, wi * C:(wi + 1) * C, ow * C:(ow + 1) * C] = eye
    return CP.reshape(k * W * C, OW * C), OW


# ---------------------------------------------------------------------------
# Synthetic, deterministic scaled-down ResNet-18 parameters (BN pre-folded).
# ---------------------------------------------------------------------------
def init_params(seed=0, in_ch=3, base=8, num_classes=10, blocks=(2, 2, 2, 2)):
    rng = np.random.default_rng(seed)

    def conv_w(kh, kw, cin, cout):
        fan_in = kh * kw * cin
        return (rng.standard_normal((kh, kw, cin, cout))
                * np.sqrt(2.0 / fan_in)).astype(np.float32)

    def bn(c, eps=1e-5):
        gamma = 1.0 + 0.1 * rng.standard_normal(c)
        beta = 0.1 * rng.standard_normal(c)
        mean = 0.1 * rng.standard_normal(c)
        var = np.abs(rng.standard_normal(c)) + 0.5
        scale = gamma / np.sqrt(var + eps)               # folded eval-mode BN
        return scale.astype(np.float32), (beta - mean * scale).astype(np.float32)

    params = {"conv1_w": conv_w(7, 7, in_ch, base)}
    params["bn1_s"], params["bn1_b"] = bn(base)

    widths = (base, base * 2, base * 4, base * 8)
    strides = (1, 2, 2, 2)
    cin = base
    for li, (wd, st, nb) in enumerate(zip(widths, strides, blocks)):
        layer = []
        for bi in range(nb):
            stride = st if bi == 0 else 1
            blk = {"stride": stride,
                   "w1": conv_w(3, 3, cin, wd),
                   "w2": conv_w(3, 3, wd, wd)}
            blk["s1"], blk["b1"] = bn(wd)
            blk["s2"], blk["b2"] = bn(wd)
            if stride != 1 or cin != wd:                 # downsample path
                blk["dw"] = conv_w(1, 1, cin, wd)
                blk["ds"], blk["db"] = bn(wd)
            layer.append(blk)
            cin = wd
        params[f"layer{li + 1}"] = layer

    params["fc_w"] = (rng.standard_normal((widths[-1], num_classes))
                      * np.sqrt(1.0 / widths[-1])).astype(np.float32)
    params["fc_b"] = (0.01 * rng.standard_normal(num_classes)).astype(np.float32)
    return params


# ---------------------------------------------------------------------------
# Build the flat constant list + index plan consumed by the fused kernel.
# ---------------------------------------------------------------------------
def build_encoder(params, H, W, num_classes):
    consts = []

    def add(a):
        consts.append(np.asarray(a, np.float32))
        return len(consts) - 1

    rows_need, cols_need = [], []

    def track(pad, h, wcols):                 # activation stored with a zero halo
        rows_need.append(2 * pad + h)
        cols_need.append(wcols)

    def add_conv(w, scale, bias, h, wd, stride, padding):
        B, br, oh, ow, cout = _conv_consts(w, scale, bias, h, wd, stride, padding)
        cin = w.shape[2]
        spec = dict(B=add(B), bias=add(br), kh=int(w.shape[0]),
                    pad=padding, stride=stride, wc=wd * cin,
                    oh=oh, owc=ow * cout)
        return spec, oh, ow, cout

    plan = {"in_pad": 3}
    c_in = params["conv1_w"].shape[2]
    track(3, H, W * c_in)                                # input image, halo 3

    plan["conv1"], h, w_, c = add_conv(params["conv1_w"], params["bn1_s"],
                                       params["bn1_b"], H, W, 2, 3)
    track(1, h, w_ * c)

    CP, ow = _maxpool_consts(w_, c)
    plan["maxpool"] = dict(C=add(CP), k=3, pad=1, stride=2,
                           wc=w_ * c, oh=(h + 2 - 3) // 2 + 1)
    h, w_ = plan["maxpool"]["oh"], ow
    track(1, h, w_ * c)

    plan["layers"] = []
    for li in range(1, 5):
        lplan = []
        for blk in params[f"layer{li}"]:
            st = blk["stride"]
            bspec = {}
            bspec["a"], oh, ow2, oc = add_conv(blk["w1"], blk["s1"], blk["b1"],
                                               h, w_, st, 1)
            track(1, oh, ow2 * oc)
            bspec["b"], _, _, _ = add_conv(blk["w2"], blk["s2"], blk["b2"],
                                           oh, ow2, 1, 1)
            if "dw" in blk:
                bspec["down"], _, _, _ = add_conv(blk["dw"], blk["ds"], blk["db"],
                                                  h, w_, st, 0)
            else:
                bspec["down"] = None
            lplan.append(bspec)
            h, w_, c = oh, ow2, oc
            track(1, h, w_ * c)
        plan["layers"].append(lplan)

    plan["final_h"], plan["final_w"], plan["final_c"] = h, w_, c
    if w_ > 1:                                           # W-direction average
        A_c = np.zeros((w_ * c, c), np.float32)
        for wi in range(w_):
            A_c[wi * c:(wi + 1) * c, :] = np.eye(c, dtype=np.float32) / w_
        plan["avg_c"] = add(A_c)
    else:
        plan["avg_c"] = None

    plan["fc_w"] = add(params["fc_w"])
    plan["fc_b"] = add(np.asarray(params["fc_b"], np.float32)[None, :])

    plan["scratch_rows"] = int(-(-max(rows_need) // 8) * 8)
    plan["scratch_cols"] = int(-(-max(cols_need) // 128) * 128)
    return consts, plan


# ---------------------------------------------------------------------------
# The single fused Pallas kernel (one batch element per grid step).
# ---------------------------------------------------------------------------
def _make_kernel(plan, n_consts):
    def kernel(x_ref, *rest):
        cref = rest[:n_consts]
        o_ref = rest[n_consts]
        act_a = rest[n_consts + 1]
        act_b = rest[n_consts + 2]

        def put(buf, val, pad):
            """Store activation into a scratch buffer with a zero halo of `pad` rows."""
            h, w = val.shape
            if pad > 0:
                z = jnp.zeros((pad, w), jnp.float32)
                buf[0:pad, 0:w] = z
                buf[pad + h:pad + h + pad, 0:w] = z
            buf[pad:pad + h, 0:w] = val

        def row_load(src, start, n, stride, wc):
            ridx = pl.ds(start, n, stride) if stride > 1 else pl.ds(start, n)
            return src[ridx, pl.ds(0, wc)]

        def conv(src, p_src, spec):
            b_ref = cref[spec["B"]]
            bias = cref[spec["bias"]][...]
            kh, pad, st = spec["kh"], spec["pad"], spec["stride"]
            wc, oh = spec["wc"], spec["oh"]
            acc = None
            for ki in range(kh):                       # H-taps: cheap row loads
                rows = row_load(src, p_src + ki - pad, oh, st, wc)
                term = jnp.dot(rows, b_ref[ki * wc:(ki + 1) * wc, :],
                               preferred_element_type=jnp.float32)
                acc = term if acc is None else acc + term
            return acc + bias

        def maxpool(src, p_src, spec):
            c_ref = cref[spec["C"]]
            k, pad, st = spec["k"], spec["pad"], spec["stride"]
            wc, oh = spec["wc"], spec["oh"]
            best = None
            for ti in range(k):
                rows = row_load(src, p_src + ti - pad, oh, st, wc)
                for tj in range(k):
                    cand = jnp.dot(rows, c_ref[tj * wc:(tj + 1) * wc, :],
                                   preferred_element_type=jnp.float32)
                    best = cand if best is None else jnp.maximum(best, cand)
            return best                                # zero-pad == safe: inputs >= 0

        # --- conv1 + bn1 + relu --------------------------------------------
        in_pad = plan["in_pad"]
        put(act_a, x_ref[0], in_pad)                   # image into halo-3 buffer
        h1 = jnp.maximum(conv(act_a, in_pad, plan["conv1"]), 0.0)

        # --- maxpool 3x3 / s2 / p1 -------------------------------------------
        put(act_b, h1, 1)
        x_val = maxpool(act_b, 1, plan["maxpool"])

        # --- layer1 .. layer4 (BasicBlocks) ----------------------------------
        for layer in plan["layers"]:
            for blk in layer:
                put(act_a, x_val, 1)                   # block input (with halo)
                hh = jnp.maximum(conv(act_a, 1, blk["a"]), 0.0)
                put(act_b, hh, 1)
                y = conv(act_b, 1, blk["b"])
                if blk["down"] is not None:
                    idn = conv(act_a, 1, blk["down"])
                else:
                    idn = x_val                        # identity carried as a value
                x_val = jnp.maximum(y + idn, 0.0)

        # --- global average pool + fc ----------------------------------------
        pooled = x_val
        if plan["final_h"] > 1:
            pooled = jnp.mean(pooled, axis=0, keepdims=True)
        if plan["avg_c"] is not None:
            pooled = jnp.dot(pooled, cref[plan["avg_c"]][...],
                             preferred_element_type=jnp.float32)
        logits = jnp.dot(pooled, cref[plan["fc_w"]][...],
                         preferred_element_type=jnp.float32) + cref[plan["fc_b"]][...]
        o_ref[0] = logits.astype(o_ref.dtype)

    return kernel


def encoder_forward(x_nchw, consts, plan, num_classes):
    """x_nchw: (N, C, H, W) float32 (PyTorch layout) -> (N, num_classes)."""
    n, c, hh, ww = x_nchw.shape
    x2 = jnp.transpose(x_nchw, (0, 2, 3, 1)).reshape(n, hh, ww * c)

    kernel = _make_kernel(plan, len(consts))
    in_specs = [pl.BlockSpec((1, hh, ww * c), lambda i: (i, 0, 0))]
    in_specs += [pl.BlockSpec(tuple(cc.shape), lambda i: (0, 0)) for cc in consts]

    rows, cols = plan["scratch_rows"], plan["scratch_cols"]
    out = pl.pallas_call(
        kernel,
        out_shape=jax.ShapeDtypeStruct((n, 1, num_classes), jnp.float32),
        grid=(n,),
        in_specs=in_specs,
        out_specs=pl.BlockSpec((1, 1, num_classes), lambda i: (i, 0, 0)),
        scratch_shapes=[pltpu.VMEM((rows, cols), jnp.float32),   # ping-pong act buffers
                        pltpu.VMEM((rows, cols), jnp.float32)],
        compiler_params=pltpu.CompilerParams(
            dimension_semantics=("parallel",)),
    )(x2, *consts)
    return out.reshape(n, num_classes)


# ---------------------------------------------------------------------------
# Pure-XLA reference of the same network (correctness check only).
# ---------------------------------------------------------------------------
def reference_forward(x_nchw, params):
    def conv_bn(x, w, s, b, stride, pad, relu, residual=None):
        y = lax.conv_general_dilated(
            x, jnp.asarray(w), (stride, stride), [(pad, pad), (pad, pad)],
            dimension_numbers=("NHWC", "HWIO", "NHWC"),
            precision=lax.Precision.HIGHEST)
        y = y * jnp.asarray(s) + jnp.asarray(b)
        if residual is not None:
            y = y + residual
        return jnp.maximum(y, 0.0) if relu else y

    x = jnp.transpose(x_nchw, (0, 2, 3, 1))
    x = conv_bn(x, params["conv1_w"], params["bn1_s"], params["bn1_b"], 2, 3, True)
    x = lax.reduce_window(x, -jnp.inf, lax.max, (1, 3, 3, 1), (1, 2, 2, 1),
                          [(0, 0), (1, 1), (1, 1), (0, 0)])
    for li in range(1, 5):
        for blk in params[f"layer{li}"]:
            identity = x
            h = conv_bn(x, blk["w1"], blk["s1"], blk["b1"], blk["stride"], 1, True)
            y = conv_bn(h, blk["w2"], blk["s2"], blk["b2"], 1, 1, False)
            if "dw" in blk:
                identity = conv_bn(x, blk["dw"], blk["ds"], blk["db"],
                                   blk["stride"], 0, False)
            x = jnp.maximum(y + identity, 0.0)
    x = jnp.mean(x, axis=(1, 2))
    return jnp.dot(x, jnp.asarray(params["fc_w"]),
                   precision=lax.Precision.HIGHEST) + jnp.asarray(params["fc_b"])


# ---------------------------------------------------------------------------
if __name__ == "__main__":
    N, C_IN, H, W, NUM_CLASSES = 2, 3, 32, 32, 10

    params = init_params(seed=0, in_ch=C_IN, base=8, num_classes=NUM_CLASSES)
    consts_np, plan = build_encoder(params, H, W, NUM_CLASSES)
    consts = tuple(jnp.asarray(c) for c in consts_np)

    x = jax.random.normal(jax.random.PRNGKey(0), (N, C_IN, H, W), jnp.float32)

    fwd = jax.jit(lambda xx, cc: encoder_forward(xx, cc, plan, NUM_CLASSES))
    y = jax.block_until_ready(fwd(x, consts))

    assert y.shape == (N, NUM_CLASSES) and y.dtype == jnp.float32
    assert bool(jnp.all(jnp.isfinite(y)))

    y_ref = jax.block_until_ready(reference_forward(x, params))
    assert bool(jnp.allclose(y, y_ref, rtol=5e-2, atol=5e-2)), (
        "Pallas output differs from XLA reference; max abs err = "
        f"{float(jnp.max(jnp.abs(y - y_ref)))}")

    print("KERNEL_OK")
</pallas_src>

<mosaic_0001>
module attributes {stable_mosaic.version = 11 : i64} {
  func.func @kernel(%arg0: i32, %arg1: memref<1x32x96xf32, #tpu.memory_space<vmem>>, %arg2: memref<672x128xf32, #tpu.memory_space<vmem>>, %arg3: memref<1x128xf32, #tpu.memory_space<vmem>>, %arg4: memref<384x64xf32, #tpu.memory_space<vmem>>, %arg5: memref<192x64xf32, #tpu.memory_space<vmem>>, %arg6: memref<1x64xf32, #tpu.memory_space<vmem>>, %arg7: memref<192x64xf32, #tpu.memory_space<vmem>>, %arg8: memref<1x64xf32, #tpu.memory_space<vmem>>, %arg9: memref<192x64xf32, #tpu.memory_space<vmem>>, %arg10: memref<1x64xf32, #tpu.memory_space<vmem>>, %arg11: memref<192x64xf32, #tpu.memory_space<vmem>>, %arg12: memref<1x64xf32, #tpu.memory_space<vmem>>, %arg13: memref<192x64xf32, #tpu.memory_space<vmem>>, %arg14: memref<1x64xf32, #tpu.memory_space<vmem>>, %arg15: memref<192x64xf32, #tpu.memory_space<vmem>>, %arg16: memref<1x64xf32, #tpu.memory_space<vmem>>, %arg17: memref<64x64xf32, #tpu.memory_space<vmem>>, %arg18: memref<1x64xf32, #tpu.memory_space<vmem>>, %arg19: memref<192x64xf32, #tpu.memory_space<vmem>>, %arg20: memref<1x64xf32, #tpu.memory_space<vmem>>, %arg21: memref<192x64xf32, #tpu.memory_space<vmem>>, %arg22: memref<1x64xf32, #tpu.memory_space<vmem>>, %arg23: memref<192x64xf32, #tpu.memory_space<vmem>>, %arg24: memref<1x64xf32, #tpu.memory_space<vmem>>, %arg25: memref<192x64xf32, #tpu.memory_space<vmem>>, %arg26: memref<1x64xf32, #tpu.memory_space<vmem>>, %arg27: memref<64x64xf32, #tpu.memory_space<vmem>>, %arg28: memref<1x64xf32, #tpu.memory_space<vmem>>, %arg29: memref<192x64xf32, #tpu.memory_space<vmem>>, %arg30: memref<1x64xf32, #tpu.memory_space<vmem>>, %arg31: memref<192x64xf32, #tpu.memory_space<vmem>>, %arg32: memref<1x64xf32, #tpu.memory_space<vmem>>, %arg33: memref<192x64xf32, #tpu.memory_space<vmem>>, %arg34: memref<1x64xf32, #tpu.memory_space<vmem>>, %arg35: memref<192x64xf32, #tpu.memory_space<vmem>>, %arg36: memref<1x64xf32, #tpu.memory_space<vmem>>, %arg37: memref<64x64xf32, #tpu.memory_space<vmem>>, %arg38: memref<1x64xf32, #tpu.memory_space<vmem>>, %arg39: memref<192x64xf32, #tpu.memory_space<vmem>>, %arg40: memref<1x64xf32, #tpu.memory_space<vmem>>, %arg41: memref<192x64xf32, #tpu.memory_space<vmem>>, %arg42: memref<1x64xf32, #tpu.memory_space<vmem>>, %arg43: memref<64x10xf32, #tpu.memory_space<vmem>>, %arg44: memref<1x10xf32, #tpu.memory_space<vmem>>, %arg45: memref<1x1x10xf32, #tpu.memory_space<vmem>>, %arg46: memref<40x128xf32, #tpu.memory_space<vmem>>, %arg47: memref<40x128xf32, #tpu.memory_space<vmem>>) attributes {dimension_semantics = [#tpu.dimension_semantics<parallel>], iteration_bounds = array<i64: 2>, scalar_prefetch = 0 : i64, scratch_operands = 2 : i64, tpu.core_type = #tpu.core_type<tc>, window_params = [{transform_indices = @transform_0, window_bounds = array<i64: 1, 32, 96>}, {pipeline_mode = #tpu.pipeline_mode<synchronous>, transform_indices = @transform_1, window_bounds = array<i64: 672, 128>}, {pipeline_mode = #tpu.pipeline_mode<synchronous>, transform_indices = @transform_2, window_bounds = array<i64: 1, 128>}, {pipeline_mode = #tpu.pipeline_mode<synchronous>, transform_indices = @transform_3, window_bounds = array<i64: 384, 64>}, {pipeline_mode = #tpu.pipeline_mode<synchronous>, transform_indices = @transform_4, window_bounds = array<i64: 192, 64>}, {pipeline_mode = #tpu.pipeline_mode<synchronous>, transform_indices = @transform_5, window_bounds = array<i64: 1, 64>}, {pipeline_mode = #tpu.pipeline_mode<synchronous>, transform_indices = @transform_6, window_bounds = array<i64: 192, 64>}, {pipeline_mode = #tpu.pipeline_mode<synchronous>, transform_indices = @transform_7, window_bounds = array<i64: 1, 64>}, {pipeline_mode = #tpu.pipeline_mode<synchronous>, transform_indices = @transform_8, window_bounds = array<i64: 192, 64>}, {pipeline_mode = #tpu.pipeline_mode<synchronous>, transform_indices = @transform_9, window_bounds = array<i64: 1, 64>}, {pipeline_mode = #tpu.pipeline_mode<synchronous>, transform_indices = @transform_10, window_bounds = array<i64: 192, 64>}, {pipeline_mode = #tpu.pipeline_mode<synchronous>, transform_indices = @transform_11, window_bounds = array<i64: 1, 64>}, {pipeline_mode = #tpu.pipeline_mode<synchronous>, transform_indices = @transform_12, window_bounds = array<i64: 192, 64>}, {pipeline_mode = #tpu.pipeline_mode<synchronous>, transform_indices = @transform_13, window_bounds = array<i64: 1, 64>}, {pipeline_mode = #tpu.pipeline_mode<synchronous>, transform_indices = @transform_14, window_bounds = array<i64: 192, 64>}, {pipeline_mode = #tpu.pipeline_mode<synchronous>, transform_indices = @transform_15, window_bounds = array<i64: 1, 64>}, {pipeline_mode = #tpu.pipeline_mode<synchronous>, transform_indices = @transform_16, window_bounds = array<i64: 64, 64>}, {pipeline_mode = #tpu.pipeline_mode<synchronous>, transform_indices = @transform_17, window_bounds = array<i64: 1, 64>}, {pipeline_mode = #tpu.pipeline_mode<synchronous>, transform_indices = @transform_18, window_bounds = array<i64: 192, 64>}, {pipeline_mode = #tpu.pipeline_mode<synchronous>, transform_indices = @transform_19, window_bounds = array<i64: 1, 64>}, {pipeline_mode = #tpu.pipeline_mode<synchronous>, transform_indices = @transform_20, window_bounds = array<i64: 192, 64>}, {pipeline_mode = #tpu.pipeline_mode<synchronous>, transform_indices = @transform_21, window_bounds = array<i64: 1, 64>}, {pipeline_mode = #tpu.pipeline_mode<synchronous>, transform_indices = @transform_22, window_bounds = array<i64: 192, 64>}, {pipeline_mode = #tpu.pipeline_mode<synchronous>, transform_indices = @transform_23, window_bounds = array<i64: 1, 64>}, {pipeline_mode = #tpu.pipeline_mode<synchronous>, transform_indices = @transform_24, window_bounds = array<i64: 192, 64>}, {pipeline_mode = #tpu.pipeline_mode<synchronous>, transform_indices = @transform_25, window_bounds = array<i64: 1, 64>}, {pipeline_mode = #tpu.pipeline_mode<synchronous>, transform_indices = @transform_26, window_bounds = array<i64: 64, 64>}, {pipeline_mode = #tpu.pipeline_mode<synchronous>, transform_indices = @transform_27, window_bounds = array<i64: 1, 64>}, {pipeline_mode = #tpu.pipeline_mode<synchronous>, transform_indices = @transform_28, window_bounds = array<i64: 192, 64>}, {pipeline_mode = #tpu.pipeline_mode<synchronous>, transform_indices = @transform_29, window_bounds = array<i64: 1, 64>}, {pipeline_mode = #tpu.pipeline_mode<synchronous>, transform_indices = @transform_30, window_bounds = array<i64: 192, 64>}, {pipeline_mode = #tpu.pipeline_mode<synchronous>, transform_indices = @transform_31, window_bounds = array<i64: 1, 64>}, {pipeline_mode = #tpu.pipeline_mode<synchronous>, transform_indices = @transform_32, window_bounds = array<i64: 192, 64>}, {pipeline_mode = #tpu.pipeline_mode<synchronous>, transform_indices = @transform_33, window_bounds = array<i64: 1, 64>}, {pipeline_mode = #tpu.pipeline_mode<synchronous>, transform_indices = @transform_34, window_bounds = array<i64: 192, 64>}, {pipeline_mode = #tpu.pipeline_mode<synchronous>, transform_indices = @transform_35, window_bounds = array<i64: 1, 64>}, {pipeline_mode = #tpu.pipeline_mode<synchronous>, transform_indices = @transform_36, window_bounds = array<i64: 64, 64>}, {pipeline_mode = #tpu.pipeline_mode<synchronous>, transform_indices = @transform_37, window_bounds = array<i64: 1, 64>}, {pipeline_mode = #tpu.pipeline_mode<synchronous>, transform_indices = @transform_38, window_bounds = array<i64: 192, 64>}, {pipeline_mode = #tpu.pipeline_mode<synchronous>, transform_indices = @transform_39, window_bounds = array<i64: 1, 64>}, {pipeline_mode = #tpu.pipeline_mode<synchronous>, transform_indices = @transform_40, window_bounds = array<i64: 192, 64>}, {pipeline_mode = #tpu.pipeline_mode<synchronous>, transform_indices = @transform_41, window_bounds = array<i64: 1, 64>}, {pipeline_mode = #tpu.pipeline_mode<synchronous>, transform_indices = @transform_42, window_bounds = array<i64: 64, 10>}, {pipeline_mode = #tpu.pipeline_mode<synchronous>, transform_indices = @transform_43, window_bounds = array<i64: 1, 10>}, {transform_indices = @transform_44, window_bounds = array<i64: 1, 1, 10>}]} {
    %c0 = arith.constant 0 : index
    %c0_0 = arith.constant 0 : index
    %c0_1 = arith.constant 0 : index
    %0 = vector.load %arg1[%c0, %c0_0, %c0_1] : memref<1x32x96xf32, #tpu.memory_space<vmem>>, vector<1x32x96xf32>
    %1 = vector.shape_cast %0 : vector<1x32x96xf32> to vector<32x96xf32>
    %cst = arith.constant 0.000000e+00 : f32
    %2 = vector.broadcast %cst : f32 to vector<3x96xf32>
    %c0_2 = arith.constant 0 : index
    %c0_3 = arith.constant 0 : index
    %3 = vector.load %arg46[%c0_2, %c0_3] : memref<40x128xf32, #tpu.memory_space<vmem>>, vector<3x96xf32>
    tpu.vector_store %arg46[%c0_2, %c0_3], %2 {strides = array<i32>} : memref<40x128xf32, #tpu.memory_space<vmem>>, vector<3x96xf32>,
    %c35 = arith.constant 35 : index
    %c0_4 = arith.constant 0 : index
    %4 = vector.load %arg46[%c35, %c0_4] : memref<40x128xf32, #tpu.memory_space<vmem>>, vector<3x96xf32>
    tpu.vector_store %arg46[%c35, %c0_4], %2 {strides = array<i32>} : memref<40x128xf32, #tpu.memory_space<vmem>>, vector<3x96xf32>,
    %c3 = arith.constant 3 : index
    %c0_5 = arith.constant 0 : index
    %5 = vector.load %arg46[%c3, %c0_5] : memref<40x128xf32, #tpu.memory_space<vmem>>, vector<32x96xf32>
    tpu.vector_store %arg46[%c3, %c0_5], %1 {strides = array<i32>} : memref<40x128xf32, #tpu.memory_space<vmem>>, vector<32x96xf32>,
    %c0_6 = arith.constant 0 : index
    %c0_7 = arith.constant 0 : index
    %6 = vector.load %arg3[%c0_6, %c0_7] : memref<1x128xf32, #tpu.memory_space<vmem>>, vector<1x128xf32>
    %c0_8 = arith.constant 0 : index
    %c0_9 = arith.constant 0 : index
    %7 = tpu.strided_load %arg46[%c0_8, %c0_9] {strides = array<i32: 2, 1>} : memref<40x128xf32, #tpu.memory_space<vmem>>, vector<16x96xf32>
    %c0_10 = arith.constant 0 : index
    %c0_11 = arith.constant 0 : index
    %8 = vector.load %arg2[%c0_10, %c0_11] : memref<672x128xf32, #tpu.memory_space<vmem>>, vector<96x128xf32>
    %cst_12 = arith.constant dense<0.000000e+00> : vector<16x128xf32>
    %9 = tpu.matmul %7, %8, %cst_12 {dimension_numbers = #tpu.dot_dimension_numbers<[1], [0], [0], [1], [0, 0, 1, 1], [], []>} : vector<16x96xf32>, vector<96x128xf32>, vector<16x128xf32> -> vector<16x128xf32>
    %c1 = arith.constant 1 : index
    %c0_13 = arith.constant 0 : index
    %10 = tpu.strided_load %arg46[%c1, %c0_13] {strides = array<i32: 2, 1>} : memref<40x128xf32, #tpu.memory_space<vmem>>, vector<16x96xf32>
    %c96 = arith.constant 96 : index
    %c0_14 = arith.constant 0 : index
    %11 = vector.load %arg2[%c96, %c0_14] : memref<672x128xf32, #tpu.memory_space<vmem>>, vector<96x128xf32>
    %cst_15 = arith.constant dense<0.000000e+00> : vector<16x128xf32>
    %12 = tpu.matmul %10, %11, %cst_15 {dimension_numbers = #tpu.dot_dimension_numbers<[1], [0], [0], [1], [0, 0, 1, 1], [], []>} : vector<16x96xf32>, vector<96x128xf32>, vector<16x128xf32> -> vector<16x128xf32>
    %13 = arith.addf %9, %12 : vector<16x128xf32>
    %c2 = arith.constant 2 : index
    %c0_16 = arith.constant 0 : index
    %14 = tpu.strided_load %arg46[%c2, %c0_16] {strides = array<i32: 2, 1>} : memref<40x128xf32, #tpu.memory_space<vmem>>, vector<16x96xf32>
    %c192 = arith.constant 192 : index
    %c0_17 = arith.constant 0 : index
    %15 = vector.load %arg2[%c192, %c0_17] : memref<672x128xf32, #tpu.memory_space<vmem>>, vector<96x128xf32>
    %cst_18 = arith.constant dense<0.000000e+00> : vector<16x128xf32>
    %16 = tpu.matmul %14, %15, %cst_18 {dimension_numbers = #tpu.dot_dimension_numbers<[1], [0], [0], [1], [0, 0, 1, 1], [], []>} : vector<16x96xf32>, vector<96x128xf32>, vector<16x128xf32> -> vector<16x128xf32>
    %17 = arith.addf %13, %16 : vector<16x128xf32>
    %c3_19 = arith.constant 3 : index
    %c0_20 = arith.constant 0 : index
    %18 = tpu.strided_load %arg46[%c3_19, %c0_20] {strides = array<i32: 2, 1>} : memref<40x128xf32, #tpu.memory_space<vmem>>, vector<16x96xf32>
    %c288 = arith.constant 288 : index
    %c0_21 = arith.constant 0 : index
    %19 = vector.load %arg2[%c288, %c0_21] : memref<672x128xf32, #tpu.memory_space<vmem>>, vector<96x128xf32>
    %cst_22 = arith.constant dense<0.000000e+00> : vector<16x128xf32>
    %20 = tpu.matmul %18, %19, %cst_22 {dimension_numbers = #tpu.dot_dimension_numbers<[1], [0], [0], [1], [0, 0, 1, 1], [], []>} : vector<16x96xf32>, vector<96x128xf32>, vector<16x128xf32> -> vector<16x128xf32>
    %21 = arith.addf %17, %20 : vector<16x128xf32>
    %c4 = arith.constant 4 : index
    %c0_23 = arith.constant 0 : index
    %22 = tpu.strided_load %arg46[%c4, %c0_23] {strides = array<i32: 2, 1>} : memref<40x128xf32, #tpu.memory_space<vmem>>, vector<16x96xf32>
    %c384 = arith.constant 384 : index
    %c0_24 = arith.constant 0 : index
    %23 = vector.load %arg2[%c384, %c0_24] : memref<672x128xf32, #tpu.memory_space<vmem>>, vector<96x128xf32>
    %cst_25 = arith.constant dense<0.000000e+00> : vector<16x128xf32>
    %24 = tpu.matmul %22, %23, %cst_25 {dimension_numbers = #tpu.dot_dimension_numbers<[1], [0], [0], [1], [0, 0, 1, 1], [], []>} : vector<16x96xf32>, vector<96x128xf32>, vector<16x128xf32> -> vector<16x128xf32>
    %25 = arith.addf %21, %24 : vector<16x128xf32>
    %c5 = arith.constant 5 : index
    %c0_26 = arith.constant 0 : index
    %26 = tpu.strided_load %arg46[%c5, %c0_26] {strides = array<i32: 2, 1>} : memref<40x128xf32, #tpu.memory_space<vmem>>, vector<16x96xf32>
    %c480 = arith.constant 480 : index
    %c0_27 = arith.constant 0 : index
    %27 = vector.load %arg2[%c480, %c0_27] : memref<672x128xf32, #tpu.memory_space<vmem>>, vector<96x128xf32>
    %cst_28 = arith.constant dense<0.000000e+00> : vector<16x128xf32>
    %28 = tpu.matmul %26, %27, %cst_28 {dimension_numbers = #tpu.dot_dimension_numbers<[1], [0], [0], [1], [0, 0, 1, 1], [], []>} : vector<16x96xf32>, vector<96x128xf32>, vector<16x128xf32> -> vector<16x128xf32>
    %29 = arith.addf %25, %28 : vector<16x128xf32>
    %c6 = arith.constant 6 : index
    %c0_29 = arith.constant 0 : index
    %30 = tpu.strided_load %arg46[%c6, %c0_29] {strides = array<i32: 2, 1>} : memref<40x128xf32, #tpu.memory_space<vmem>>, vector<16x96xf32>
    %c576 = arith.constant 576 : index
    %c0_30 = arith.constant 0 : index
    %31 = vector.load %arg2[%c576, %c0_30] : memref<672x128xf32, #tpu.memory_space<vmem>>, vector<96x128xf32>
    %cst_31 = arith.constant dense<0.000000e+00> : vector<16x128xf32>
    %32 = tpu.matmul %30, %31, %cst_31 {dimension_numbers = #tpu.dot_dimension_numbers<[1], [0], [0], [1], [0, 0, 1, 1], [], []>} : vector<16x96xf32>, vector<96x128xf32>, vector<16x128xf32> -> vector<16x128xf32>
    %33 = arith.addf %29, %32 : vector<16x128xf32>
    %34 = vector.broadcast %6 : vector<1x128xf32> to vector<16x128xf32>
    %35 = arith.addf %33, %34 : vector<16x128xf32>
    %cst_32 = arith.constant 0.000000e+00 : f32
    %36 = vector.broadcast %cst_32 : f32 to vector<16x128xf32>
    %37 = arith.maximumf %35, %36 : vector<16x128xf32>
    %cst_33 = arith.constant 0.000000e+00 : f32
    %38 = vector.broadcast %cst_33 : f32 to vector<1x128xf32>
    %c0_34 = arith.constant 0 : index
    %c0_35 = arith.constant 0 : index
    %39 = vector.load %arg47[%c0_34, %c0_35] : memref<40x128xf32, #tpu.memory_space<vmem>>, vector<1x128xf32>
    tpu.vector_store %arg47[%c0_34, %c0_35], %38 {strides = array<i32>} : memref<40x128xf32, #tpu.memory_space<vmem>>, vector<1x128xf32>,
    %c17 = arith.constant 17 : index
    %c0_36 = arith.constant 0 : index
    %40 = vector.load %arg47[%c17, %c0_36] : memref<40x128xf32, #tpu.memory_space<vmem>>, vector<1x128xf32>
    tpu.vector_store %arg47[%c17, %c0_36], %38 {strides = array<i32>} : memref<40x128xf32, #tpu.memory_space<vmem>>, vector<1x128xf32>,
    %c1_37 = arith.constant 1 : index
    %c0_38 = arith.constant 0 : index
    %41 = vector.load %arg47[%c1_37, %c0_38] : memref<40x128xf32, #tpu.memory_space<vmem>>, vector<16x128xf32>
    tpu.vector_store %arg47[%c1_37, %c0_38], %37 {strides = array<i32>} : memref<40x128xf32, #tpu.memory_space<vmem>>, vector<16x128xf32>,
    %c0_39 = arith.constant 0 : index
    %c0_40 = arith.constant 0 : index
    %42 = tpu.strided_load %arg47[%c0_39, %c0_40] {strides = array<i32: 2, 1>} : memref<40x128xf32, #tpu.memory_space<vmem>>, vector<8x128xf32>
    %c0_41 = arith.constant 0 : index
    %c0_42 = arith.constant 0 : index
    %43 = vector.load %arg4[%c0_41, %c0_42] : memref<384x64xf32, #tpu.memory_space<vmem>>, vector<128x64xf32>
    %cst_43 = arith.constant dense<0.000000e+00> : vector<8x64xf32>
    %44 = tpu.matmul %42, %43, %cst_43 {dimension_numbers = #tpu.dot_dimension_numbers<[1], [0], [0], [1], [0, 0, 1, 1], [], []>} : vector<8x128xf32>, vector<128x64xf32>, vector<8x64xf32> -> vector<8x64xf32>
    %c128 = arith.constant 128 : index
    %c0_44 = arith.constant 0 : index
    %45 = vector.load %arg4[%c128, %c0_44] : memref<384x64xf32, #tpu.memory_space<vmem>>, vector<128x64xf32>
    %cst_45 = arith.constant dense<0.000000e+00> : vector<8x64xf32>
    %46 = tpu.matmul %42, %45, %cst_45 {dimension_numbers = #tpu.dot_dimension_numbers<[1], [0], [0], [1], [0, 0, 1, 1], [], []>} : vector<8x128xf32>, vector<128x64xf32>, vector<8x64xf32> -> vector<8x64xf32>
    %47 = arith.maximumf %44, %46 : vector<8x64xf32>
    %c256 = arith.constant 256 : index
    %c0_46 = arith.constant 0 : index
    %48 = vector.load %arg4[%c256, %c0_46] : memref<384x64xf32, #tpu.memory_space<vmem>>, vector<128x64xf32>
    %cst_47 = arith.constant dense<0.000000e+00> : vector<8x64xf32>
    %49 = tpu.matmul %42, %48, %cst_47 {dimension_numbers = #tpu.dot_dimension_numbers<[1], [0], [0], [1], [0, 0, 1, 1], [], []>} : vector<8x128xf32>, vector<128x64xf32>, vector<8x64xf32> -> vector<8x64xf32>
    %50 = arith.maximumf %47, %49 : vector<8x64xf32>
    %c1_48 = arith.constant 1 : index
    %c0_49 = arith.constant 0 : index
    %51 = tpu.strided_load %arg47[%c1_48, %c0_49] {strides = array<i32: 2, 1>} : memref<40x128xf32, #tpu.memory_space<vmem>>, vector<8x128xf32>
    %c0_50 = arith.constant 0 : index
    %c0_51 = arith.constant 0 : index
    %52 = vector.load %arg4[%c0_50, %c0_51] : memref<384x64xf32, #tpu.memory_space<vmem>>, vector<128x64xf32>
    %cst_52 = arith.constant dense<0.000000e+00> : vector<8x64xf32>
    %53 = tpu.matmul %51, %52, %cst_52 {dimension_numbers = #tpu.dot_dimension_numbers<[1], [0], [0], [1], [0, 0, 1, 1], [], []>} : vector<8x128xf32>, vector<128x64xf32>, vector<8x64xf32> -> vector<8x64xf32>
    %54 = arith.maximumf %50, %53 : vector<8x64xf32>
    %c128_53 = arith.constant 128 : index
    %c0_54 = arith.constant 0 : index
    %55 = vector.load %arg4[%c128_53, %c0_54] : memref<384x64xf32, #tpu.memory_space<vmem>>, vector<128x64xf32>
    %cst_55 = arith.constant dense<0.000000e+00> : vector<8x64xf32>
    %56 = tpu.matmul %51, %55, %cst_55 {dimension_numbers = #tpu.dot_dimension_numbers<[1], [0], [0], [1], [0, 0, 1, 1], [], []>} : vector<8x128xf32>, vector<128x64xf32>, vector<8x64xf32> -> vector<8x64xf32>
    %57 = arith.maximumf %54, %56 : vector<8x64xf32>
    %c256_56 = arith.constant 256 : index
    %c0_57 = arith.constant 0 : index
    %58 = vector.load %arg4[%c256_56, %c0_57] : memref<384x64xf32, #tpu.memory_space<vmem>>, vector<128x64xf32>
    %cst_58 = arith.constant dense<0.000000e+00> : vector<8x64xf32>
    %59 = tpu.matmul %51, %58, %cst_58 {dimension_numbers = #tpu.dot_dimension_numbers<[1], [0], [0], [1], [0, 0, 1, 1], [], []>} : vector<8x128xf32>, vector<128x64xf32>, vector<8x64xf32> -> vector<8x64xf32>
    %60 = arith.maximumf %57, %59 : vector<8x64xf32>
    %c2_59 = arith.constant 2 : index
    %c0_60 = arith.constant 0 : index
    %61 = tpu.strided_load %arg47[%c2_59, %c0_60] {strides = array<i32: 2, 1>} : memref<40x128xf32, #tpu.memory_space<vmem>>, vector<8x128xf32>
    %c0_61 = arith.constant 0 : index
    %c0_62 = arith.constant 0 : index
    %62 = vector.load %arg4[%c0_61, %c0_62] : memref<384x64xf32, #tpu.memory_space<vmem>>, vector<128x64xf32>
    %cst_63 = arith.constant dense<0.000000e+00> : vector<8x64xf32>
    %63 = tpu.matmul %61, %62, %cst_63 {dimension_numbers = #tpu.dot_dimension_numbers<[1], [0], [0], [1], [0, 0, 1, 1], [], []>} : vector<8x128xf32>, vector<128x64xf32>, vector<8x64xf32> -> vector<8x64xf32>
    %64 = arith.maximumf %60, %63 : vector<8x64xf32>
    %c128_64 = arith.constant 128 : index
    %c0_65 = arith.constant 0 : index
    %65 = vector.load %arg4[%c128_64, %c0_65] : memref<384x64xf32, #tpu.memory_space<vmem>>, vector<128x64xf32>
    %cst_66 = arith.constant dense<0.000000e+00> : vector<8x64xf32>
    %66 = tpu.matmul %61, %65, %cst_66 {dimension_numbers = #tpu.dot_dimension_numbers<[1], [0], [0], [1], [0, 0, 1, 1], [], []>} : vector<8x128xf32>, vector<128x64xf32>, vector<8x64xf32> -> vector<8x64xf32>
    %67 = arith.maximumf %64, %66 : vector<8x64xf32>
    %c256_67 = arith.constant 256 : index
    %c0_68 = arith.constant 0 : index
    %68 = vector.load %arg4[%c256_67, %c0_68] : memref<384x64xf32, #tpu.memory_space<vmem>>, vector<128x64xf32>
    %cst_69 = arith.constant dense<0.000000e+00> : vector<8x64xf32>
    %69 = tpu.matmul %61, %68, %cst_69 {dimension_numbers = #tpu.dot_dimension_numbers<[1], [0], [0], [1], [0, 0, 1, 1], [], []>} : vector<8x128xf32>, vector<128x64xf32>, vector<8x64xf32> -> vector<8x64xf32>
    %70 = arith.maximumf %67, %69 : vector<8x64xf32>
    %cst_70 = arith.constant 0.000000e+00 : f32
    %71 = vector.broadcast %cst_70 : f32 to vector<1x64xf32>
    %c0_71 = arith.constant 0 : index
    %c0_72 = arith.constant 0 : index
    %72 = vector.load %arg46[%c0_71, %c0_72] : memref<40x128xf32, #tpu.memory_space<vmem>>, vector<1x64xf32>
    tpu.vector_store %arg46[%c0_71, %c0_72], %71 {strides = array<i32>} : memref<40x128xf32, #tpu.memory_space<vmem>>, vector<1x64xf32>,
    %c9 = arith.constant 9 : index
    %c0_73 = arith.constant 0 : index
    %73 = vector.load %arg46[%c9, %c0_73] : memref<40x128xf32, #tpu.memory_space<vmem>>, vector<1x64xf32>
    tpu.vector_store %arg46[%c9, %c0_73], %71 {strides = array<i32>} : memref<40x128xf32, #tpu.memory_space<vmem>>, vector<1x64xf32>,
    %c1_74 = arith.constant 1 : index
    %c0_75 = arith.constant 0 : index
    %74 = vector.load %arg46[%c1_74, %c0_75] : memref<40x128xf32, #tpu.memory_space<vmem>>, vector<8x64xf32>
    tpu.vector_store %arg46[%c1_74, %c0_75], %70 {strides = array<i32>} : memref<40x128xf32, #tpu.memory_space<vmem>>, vector<8x64xf32>,
    %c0_76 = arith.constant 0 : index
    %c0_77 = arith.constant 0 : index
    %75 = vector.load %arg6[%c0_76, %c0_77] : memref<1x64xf32, #tpu.memory_space<vmem>>, vector<1x64xf32>
    %c0_78 = arith.constant 0 : index
    %c0_79 = arith.constant 0 : index
    %76 = vector.load %arg46[%c0_78, %c0_79] : memref<40x128xf32, #tpu.memory_space<vmem>>, vector<8x64xf32>
    %c0_80 = arith.constant 0 : index
    %c0_81 = arith.constant 0 : index
    %77 = vector.load %arg5[%c0_80, %c0_81] : memref<192x64xf32, #tpu.memory_space<vmem>>, vector<64x64xf32>
    %cst_82 = arith.constant dense<0.000000e+00> : vector<8x64xf32>
    %78 = tpu.matmul %76, %77, %cst_82 {dimension_numbers = #tpu.dot_dimension_numbers<[1], [0], [0], [1], [0, 0, 1, 1], [], []>} : vector<8x64xf32>, vector<64x64xf32>, vector<8x64xf32> -> vector<8x64xf32>
    %c1_83 = arith.constant 1 : index
    %c0_84 = arith.constant 0 : index
    %79 = vector.load %arg46[%c1_83, %c0_84] : memref<40x128xf32, #tpu.memory_space<vmem>>, vector<8x64xf32>
    %c64 = arith.constant 64 : index
    %c0_85 = arith.constant 0 : index
    %80 = vector.load %arg5[%c64, %c0_85] : memref<192x64xf32, #tpu.memory_space<vmem>>, vector<64x64xf32>
    %cst_86 = arith.constant dense<0.000000e+00> : vector<8x64xf32>
    %81 = tpu.matmul %79, %80, %cst_86 {dimension_numbers = #tpu.dot_dimension_numbers<[1], [0], [0], [1], [0, 0, 1, 1], [], []>} : vector<8x64xf32>, vector<64x64xf32>, vector<8x64xf32> -> vector<8x64xf32>
    %82 = arith.addf %78, %81 : vector<8x64xf32>
    %c2_87 = arith.constant 2 : index
    %c0_88 = arith.constant 0 : index
    %83 = vector.load %arg46[%c2_87, %c0_88] : memref<40x128xf32, #tpu.memory_space<vmem>>, vector<8x64xf32>
    %c128_89 = arith.constant 128 : index
    %c0_90 = arith.constant 0 : index
    %84 = vector.load %arg5[%c128_89, %c0_90] : memref<192x64xf32, #tpu.memory_space<vmem>>, vector<64x64xf32>
    %cst_91 = arith.constant dense<0.000000e+00> : vector<8x64xf32>
    %85 = tpu.matmul %83, %84, %cst_91 {dimension_numbers = #tpu.dot_dimension_numbers<[1], [0], [0], [1], [0, 0, 1, 1], [], []>} : vector<8x64xf32>, vector<64x64xf32>, vector<8x64xf32> -> vector<8x64xf32>
    %86 = arith.addf %82, %85 : vector<8x64xf32>
    %87 = vector.broadcast %75 : vector<1x64xf32> to vector<8x64xf32>
    %88 = arith.addf %86, %87 : vector<8x64xf32>
    %cst_92 = arith.constant 0.000000e+00 : f32
    %89 = vector.broadcast %cst_92 : f32 to vector<8x64xf32>
    %90 = arith.maximumf %88, %89 : vector<8x64xf32>
    %cst_93 = arith.constant 0.000000e+00 : f32
    %91 = vector.broadcast %cst_93 : f32 to vector<1x64xf32>
    %c0_94 = arith.constant 0 : index
    %c0_95 = arith.constant 0 : index
    %92 = vector.load %arg47[%c0_94, %c0_95] : memref<40x128xf32, #tpu.memory_space<vmem>>, vector<1x64xf32>
    tpu.vector_store %arg47[%c0_94, %c0_95], %91 {strides = array<i32>} : memref<40x128xf32, #tpu.memory_space<vmem>>, vector<1x64xf32>,
    %c9_96 = arith.constant 9 : index
    %c0_97 = arith.constant 0 : index
    %93 = vector.load %arg47[%c9_96, %c0_97] : memref<40x128xf32, #tpu.memory_space<vmem>>, vector<1x64xf32>
    tpu.vector_store %arg47[%c9_96, %c0_97], %91 {strides = array<i32>} : memref<40x128xf32, #tpu.memory_space<vmem>>, vector<1x64xf32>,
    %c1_98 = arith.constant 1 : index
    %c0_99 = arith.constant 0 : index
    %94 = vector.load %arg47[%c1_98, %c0_99] : memref<40x128xf32, #tpu.memory_space<vmem>>, vector<8x64xf32>
    tpu.vector_store %arg47[%c1_98, %c0_99], %90 {strides = array<i32>} : memref<40x128xf32, #tpu.memory_space<vmem>>, vector<8x64xf32>,
    %c0_100 = arith.constant 0 : index
    %c0_101 = arith.constant 0 : index
    %95 = vector.load %arg8[%c0_100, %c0_101] : memref<1x64xf32, #tpu.memory_space<vmem>>, vector<1x64xf32>
    %c0_102 = arith.constant 0 : index
    %c0_103 = arith.constant 0 : index
    %96 = vector.load %arg47[%c0_102, %c0_103] : memref<40x128xf32, #tpu.memory_space<vmem>>, vector<8x64xf32>
    %c0_104 = arith.constant 0 : index
    %c0_105 = arith.constant 0 : index
    %97 = vector.load %arg7[%c0_104, %c0_105] : memref<192x64xf32, #tpu.memory_space<vmem>>, vector<64x64xf32>
    %cst_106 = arith.constant dense<0.000000e+00> : vector<8x64xf32>
    %98 = tpu.matmul %96, %97, %cst_106 {dimension_numbers = #tpu.dot_dimension_numbers<[1], [0], [0], [1], [0, 0, 1, 1], [], []>} : vector<8x64xf32>, vector<64x64xf32>, vector<8x64xf32> -> vector<8x64xf32>
    %c1_107 = arith.constant 1 : index
    %c0_108 = arith.constant 0 : index
    %99 = vector.load %arg47[%c1_107, %c0_108] : memref<40x128xf32, #tpu.memory_space<vmem>>, vector<8x64xf32>
    %c64_109 = arith.constant 64 : index
    %c0_110 = arith.constant 0 : index
    %100 = vector.load %arg7[%c64_109, %c0_110] : memref<192x64xf32, #tpu.memory_space<vmem>>, vector<64x64xf32>
    %cst_111 = arith.constant dense<0.000000e+00> : vector<8x64xf32>
    %101 = tpu.matmul %99, %100, %cst_111 {dimension_numbers = #tpu.dot_dimension_numbers<[1], [0], [0], [1], [0, 0, 1, 1], [], []>} : vector<8x64xf32>, vector<64x64xf32>, vector<8x64xf32> -> vector<8x64xf32>
    %102 = arith.addf %98, %101 : vector<8x64xf32>
    %c2_112 = arith.constant 2 : index
    %c0_113 = arith.constant 0 : index
    %103 = vector.load %arg47[%c2_112, %c0_113] : memref<40x128xf32, #tpu.memory_space<vmem>>, vector<8x64xf32>
    %c128_114 = arith.constant 128 : index
    %c0_115 = arith.constant 0 : index
    %104 = vector.load %arg7[%c128_114, %c0_115] : memref<192x64xf32, #tpu.memory_space<vmem>>, vector<64x64xf32>
    %cst_116 = arith.constant dense<0.000000e+00> : vector<8x64xf32>
    %105 = tpu.matmul %103, %104, %cst_116 {dimension_numbers = #tpu.dot_dimension_numbers<[1], [0], [0], [1], [0, 0, 1, 1], [], []>} : vector<8x64xf32>, vector<64x64xf32>, vector<8x64xf32> -> vector<8x64xf32>
    %106 = arith.addf %102, %105 : vector<8x64xf32>
    %107 = vector.broadcast %95 : vector<1x64xf32> to vector<8x64xf32>
    %108 = arith.addf %106, %107 : vector<8x64xf32>
    %109 = arith.addf %108, %70 : vector<8x64xf32>
    %cst_117 = arith.constant 0.000000e+00 : f32
    %110 = vector.broadcast %cst_117 : f32 to vector<8x64xf32>
    %111 = arith.maximumf %109, %110 : vector<8x64xf32>
    %cst_118 = arith.constant 0.000000e+00 : f32
    %112 = vector.broadcast %cst_118 : f32 to vector<1x64xf32>
    %c0_119 = arith.constant 0 : index
    %c0_120 = arith.constant 0 : index
    %113 = vector.load %arg46[%c0_119, %c0_120] : memref<40x128xf32, #tpu.memory_space<vmem>>, vector<1x64xf32>
    tpu.vector_store %arg46[%c0_119, %c0_120], %112 {strides = array<i32>} : memref<40x128xf32, #tpu.memory_space<vmem>>, vector<1x64xf32>,
    %c9_121 = arith.constant 9 : index
    %c0_122 = arith.constant 0 : index
    %114 = vector.load %arg46[%c9_121, %c0_122] : memref<40x128xf32, #tpu.memory_space<vmem>>, vector<1x64xf32>
    tpu.vector_store %arg46[%c9_121, %c0_122], %112 {strides = array<i32>} : memref<40x128xf32, #tpu.memory_space<vmem>>, vector<1x64xf32>,
    %c1_123 = arith.constant 1 : index
    %c0_124 = arith.constant 0 : index
    %115 = vector.load %arg46[%c1_123, %c0_124] : memref<40x128xf32, #tpu.memory_space<vmem>>, vector<8x64xf32>
    tpu.vector_store %arg46[%c1_123, %c0_124], %111 {strides = array<i32>} : memref<40x128xf32, #tpu.memory_space<vmem>>, vector<8x64xf32>,
    %c0_125 = arith.constant 0 : index
    %c0_126 = arith.constant 0 : index
    %116 = vector.load %arg10[%c0_125, %c0_126] : memref<1x64xf32, #tpu.memory_space<vmem>>, vector<1x64xf32>
    %c0_127 = arith.constant 0 : index
    %c0_128 = arith.constant 0 : index
    %117 = vector.load %arg46[%c0_127, %c0_128] : memref<40x128xf32, #tpu.memory_space<vmem>>, vector<8x64xf32>
    %c0_129 = arith.constant 0 : index
    %c0_130 = arith.constant 0 : index
    %118 = vector.load %arg9[%c0_129, %c0_130] : memref<192x64xf32, #tpu.memory_space<vmem>>, vector<64x64xf32>
    %cst_131 = arith.constant dense<0.000000e+00> : vector<8x64xf32>
    %119 = tpu.matmul %117, %118, %cst_131 {dimension_numbers = #tpu.dot_dimension_numbers<[1], [0], [0], [1], [0, 0, 1, 1], [], []>} : vector<8x64xf32>, vector<64x64xf32>, vector<8x64xf32> -> vector<8x64xf32>
    %c1_132 = arith.constant 1 : index
    %c0_133 = arith.constant 0 : index
    %120 = vector.load %arg46[%c1_132, %c0_133] : memref<40x128xf32, #tpu.memory_space<vmem>>, vector<8x64xf32>
    %c64_134 = arith.constant 64 : index
    %c0_135 = arith.constant 0 : index
    %121 = vector.load %arg9[%c64_134, %c0_135] : memref<192x64xf32, #tpu.memory_space<vmem>>, vector<64x64xf32>
    %cst_136 = arith.constant dense<0.000000e+00> : vector<8x64xf32>
    %122 = tpu.matmul %120, %121, %cst_136 {dimension_numbers = #tpu.dot_dimension_numbers<[1], [0], [0], [1], [0, 0, 1, 1], [], []>} : vector<8x64xf32>, vector<64x64xf32>, vector<8x64xf32> -> vector<8x64xf32>
    %123 = arith.addf %119, %122 : vector<8x64xf32>
    %c2_137 = arith.constant 2 : index
    %c0_138 = arith.constant 0 : index
    %124 = vector.load %arg46[%c2_137, %c0_138] : memref<40x128xf32, #tpu.memory_space<vmem>>, vector<8x64xf32>
    %c128_139 = arith.constant 128 : index
    %c0_140 = arith.constant 0 : index
    %125 = vector.load %arg9[%c128_139, %c0_140] : memref<192x64xf32, #tpu.memory_space<vmem>>, vector<64x64xf32>
    %cst_141 = arith.constant dense<0.000000e+00> : vector<8x64xf32>
    %126 = tpu.matmul %124, %125, %cst_141 {dimension_numbers = #tpu.dot_dimension_numbers<[1], [0], [0], [1], [0, 0, 1, 1], [], []>} : vector<8x64xf32>, vector<64x64xf32>, vector<8x64xf32> -> vector<8x64xf32>
    %127 = arith.addf %123, %126 : vector<8x64xf32>
    %128 = vector.broadcast %116 : vector<1x64xf32> to vector<8x64xf32>
    %129 = arith.addf %127, %128 : vector<8x64xf32>
    %cst_142 = arith.constant 0.000000e+00 : f32
    %130 = vector.broadcast %cst_142 : f32 to vector<8x64xf32>
    %131 = arith.maximumf %129, %130 : vector<8x64xf32>
    %cst_143 = arith.constant 0.000000e+00 : f32
    %132 = vector.broadcast %cst_143 : f32 to vector<1x64xf32>
    %c0_144 = arith.constant 0 : index
    %c0_145 = arith.constant 0 : index
    %133 = vector.load %arg47[%c0_144, %c0_145] : memref<40x128xf32, #tpu.memory_space<vmem>>, vector<1x64xf32>
    tpu.vector_store %arg47[%c0_144, %c0_145], %132 {strides = array<i32>} : memref<40x128xf32, #tpu.memory_space<vmem>>, vector<1x64xf32>,
    %c9_146 = arith.constant 9 : index
    %c0_147 = arith.constant 0 : index
    %134 = vector.load %arg47[%c9_146, %c0_147] : memref<40x128xf32, #tpu.memory_space<vmem>>, vector<1x64xf32>
    tpu.vector_store %arg47[%c9_146, %c0_147], %132 {strides = array<i32>} : memref<40x128xf32, #tpu.memory_space<vmem>>, vector<1x64xf32>,
    %c1_148 = arith.constant 1 : index
    %c0_149 = arith.constant 0 : index
    %135 = vector.load %arg47[%c1_148, %c0_149] : memref<40x128xf32, #tpu.memory_space<vmem>>, vector<8x64xf32>
    tpu.vector_store %arg47[%c1_148, %c0_149], %131 {strides = array<i32>} : memref<40x128xf32, #tpu.memory_space<vmem>>, vector<8x64xf32>,
    %c0_150 = arith.constant 0 : index
    %c0_151 = arith.constant 0 : index
    %136 = vector.load %arg12[%c0_150, %c0_151] : memref<1x64xf32, #tpu.memory_space<vmem>>, vector<1x64xf32>
    %c0_152 = arith.constant 0 : index
    %c0_153 = arith.constant 0 : index
    %137 = vector.load %arg47[%c0_152, %c0_153] : memref<40x128xf32, #tpu.memory_space<vmem>>, vector<8x64xf32>
    %c0_154 = arith.constant 0 : index
    %c0_155 = arith.constant 0 : index
    %138 = vector.load %arg11[%c0_154, %c0_155] : memref<192x64xf32, #tpu.memory_space<vmem>>, vector<64x64xf32>
    %cst_156 = arith.constant dense<0.000000e+00> : vector<8x64xf32>
    %139 = tpu.matmul %137, %138, %cst_156 {dimension_numbers = #tpu.dot_dimension_numbers<[1], [0], [0], [1], [0, 0, 1, 1], [], []>} : vector<8x64xf32>, vector<64x64xf32>, vector<8x64xf32> -> vector<8x64xf32>
    %c1_157 = arith.constant 1 : index
    %c0_158 = arith.constant 0 : index
    %140 = vector.load %arg47[%c1_157, %c0_158] : memref<40x128xf32, #tpu.memory_space<vmem>>, vector<8x64xf32>
    %c64_159 = arith.constant 64 : index
    %c0_160 = arith.constant 0 : index
    %141 = vector.load %arg11[%c64_159, %c0_160] : memref<192x64xf32, #tpu.memory_space<vmem>>, vector<64x64xf32>
    %cst_161 = arith.constant dense<0.000000e+00> : vector<8x64xf32>
    %142 = tpu.matmul %140, %141, %cst_161 {dimension_numbers = #tpu.dot_dimension_numbers<[1], [0], [0], [1], [0, 0, 1, 1], [], []>} : vector<8x64xf32>, vector<64x64xf32>, vector<8x64xf32> -> vector<8x64xf32>
    %143 = arith.addf %139, %142 : vector<8x64xf32>
    %c2_162 = arith.constant 2 : index
    %c0_163 = arith.constant 0 : index
    %144 = vector.load %arg47[%c2_162, %c0_163] : memref<40x128xf32, #tpu.memory_space<vmem>>, vector<8x64xf32>
    %c128_164 = arith.constant 128 : index
    %c0_165 = arith.constant 0 : index
    %145 = vector.load %arg11[%c128_164, %c0_165] : memref<192x64xf32, #tpu.memory_space<vmem>>, vector<64x64xf32>
    %cst_166 = arith.constant dense<0.000000e+00> : vector<8x64xf32>
    %146 = tpu.matmul %144, %145, %cst_166 {dimension_numbers = #tpu.dot_dimension_numbers<[1], [0], [0], [1], [0, 0, 1, 1], [], []>} : vector<8x64xf32>, vector<64x64xf32>, vector<8x64xf32> -> vector<8x64xf32>
    %147 = arith.addf %143, %146 : vector<8x64xf32>
    %148 = vector.broadcast %136 : vector<1x64xf32> to vector<8x64xf32>
    %149 = arith.addf %147, %148 : vector<8x64xf32>
    %150 = arith.addf %149, %111 : vector<8x64xf32>
    %cst_167 = arith.constant 0.000000e+00 : f32
    %151 = vector.broadcast %cst_167 : f32 to vector<8x64xf32>
    %152 = arith.maximumf %150, %151 : vector<8x64xf32>
    %cst_168 = arith.constant 0.000000e+00 : f32
    %153 = vector.broadcast %cst_168 : f32 to vector<1x64xf32>
    %c0_169 = arith.constant 0 : index
    %c0_170 = arith.constant 0 : index
    %154 = vector.load %arg46[%c0_169, %c0_170] : memref<40x128xf32, #tpu.memory_space<vmem>>, vector<1x64xf32>
    tpu.vector_store %arg46[%c0_169, %c0_170], %153 {strides = array<i32>} : memref<40x128xf32, #tpu.memory_space<vmem>>, vector<1x64xf32>,
    %c9_171 = arith.constant 9 : index
    %c0_172 = arith.constant 0 : index
    %155 = vector.load %arg46[%c9_171, %c0_172] : memref<40x128xf32, #tpu.memory_space<vmem>>, vector<1x64xf32>
    tpu.vector_store %arg46[%c9_171, %c0_172], %153 {strides = array<i32>} : memref<40x128xf32, #tpu.memory_space<vmem>>, vector<1x64xf32>,
    %c1_173 = arith.constant 1 : index
    %c0_174 = arith.constant 0 : index
    %156 = vector.load %arg46[%c1_173, %c0_174] : memref<40x128xf32, #tpu.memory_space<vmem>>, vector<8x64xf32>
    tpu.vector_store %arg46[%c1_173, %c0_174], %152 {strides = array<i32>} : memref<40x128xf32, #tpu.memory_space<vmem>>, vector<8x64xf32>,
    %c0_175 = arith.constant 0 : index
    %c0_176 = arith.constant 0 : index
    %157 = vector.load %arg14[%c0_175, %c0_176] : memref<1x64xf32, #tpu.memory_space<vmem>>, vector<1x64xf32>
    %c0_177 = arith.constant 0 : index
    %c0_178 = arith.constant 0 : index
    %158 = tpu.strided_load %arg46[%c0_177, %c0_178] {strides = array<i32: 2, 1>} : memref<40x128xf32, #tpu.memory_space<vmem>>, vector<4x64xf32>
    %c0_179 = arith.constant 0 : index
    %c0_180 = arith.constant 0 : index
    %159 = vector.load %arg13[%c0_179, %c0_180] : memref<192x64xf32, #tpu.memory_space<vmem>>, vector<64x64xf32>
    %cst_181 = arith.constant dense<0.000000e+00> : vector<4x64xf32>
    %160 = tpu.matmul %158, %159, %cst_181 {dimension_numbers = #tpu.dot_dimension_numbers<[1], [0], [0], [1], [0, 0, 1, 1], [], []>} : vector<4x64xf32>, vector<64x64xf32>, vector<4x64xf32> -> vector<4x64xf32>
    %c1_182 = arith.constant 1 : index
    %c0_183 = arith.constant 0 : index
    %161 = tpu.strided_load %arg46[%c1_182, %c0_183] {strides = array<i32: 2, 1>} : memref<40x128xf32, #tpu.memory_space<vmem>>, vector<4x64xf32>
    %c64_184 = arith.constant 64 : index
    %c0_185 = arith.constant 0 : index
    %162 = vector.load %arg13[%c64_184, %c0_185] : memref<192x64xf32, #tpu.memory_space<vmem>>, vector<64x64xf32>
    %cst_186 = arith.constant dense<0.000000e+00> : vector<4x64xf32>
    %163 = tpu.matmul %161, %162, %cst_186 {dimension_numbers = #tpu.dot_dimension_numbers<[1], [0], [0], [1], [0, 0, 1, 1], [], []>} : vector<4x64xf32>, vector<64x64xf32>, vector<4x64xf32> -> vector<4x64xf32>
    %164 = arith.addf %160, %163 : vector<4x64xf32>
    %c2_187 = arith.constant 2 : index
    %c0_188 = arith.constant 0 : index
    %165 = tpu.strided_load %arg46[%c2_187, %c0_188] {strides = array<i32: 2, 1>} : memref<40x128xf32, #tpu.memory_space<vmem>>, vector<4x64xf32>
    %c128_189 = arith.constant 128 : index
    %c0_190 = arith.constant 0 : index
    %166 = vector.load %arg13[%c128_189, %c0_190] : memref<192x64xf32, #tpu.memory_space<vmem>>, vector<64x64xf32>
    %cst_191 = arith.constant dense<0.000000e+00> : vector<4x64xf32>
    %167 = tpu.matmul %165, %166, %cst_191 {dimension_numbers = #tpu.dot_dimension_numbers<[1], [0], [0], [1], [0, 0, 1, 1], [], []>} : vector<4x64xf32>, vector<64x64xf32>, vector<4x64xf32> -> vector<4x64xf32>
    %168 = arith.addf %164, %167 : vector<4x64xf32>
    %169 = vector.broadcast %157 : vector<1x64xf32> to vector<4x64xf32>
    %170 = arith.addf %168, %169 : vector<4x64xf32>
    %cst_192 = arith.constant 0.000000e+00 : f32
    %171 = vector.broadcast %cst_192 : f32 to vector<4x64xf32>
    %172 = arith.maximumf %170, %171 : vector<4x64xf32>
    %cst_193 = arith.constant 0.000000e+00 : f32
    %173 = vector.broadcast %cst_193 : f32 to vector<1x64xf32>
    %c0_194 = arith.constant 0 : index
    %c0_195 = arith.constant 0 : index
    %174 = vector.load %arg47[%c0_194, %c0_195] : memref<40x128xf32, #tpu.memory_space<vmem>>, vector<1x64xf32>
    tpu.vector_store %arg47[%c0_194, %c0_195], %173 {strides = array<i32>} : memref<40x128xf32, #tpu.memory_space<vmem>>, vector<1x64xf32>,
    %c5_196 = arith.constant 5 : index
    %c0_197 = arith.constant 0 : index
    %175 = vector.load %arg47[%c5_196, %c0_197] : memref<40x128xf32, #tpu.memory_space<vmem>>, vector<1x64xf32>
    tpu.vector_store %arg47[%c5_196, %c0_197], %173 {strides = array<i32>} : memref<40x128xf32, #tpu.memory_space<vmem>>, vector<1x64xf32>,
    %c1_198 = arith.constant 1 : index
    %c0_199 = arith.constant 0 : index
    %176 = vector.load %arg47[%c1_198, %c0_199] : memref<40x128xf32, #tpu.memory_space<vmem>>, vector<4x64xf32>
    tpu.vector_store %arg47[%c1_198, %c0_199], %172 {strides = array<i32>} : memref<40x128xf32, #tpu.memory_space<vmem>>, vector<4x64xf32>,
    %c0_200 = arith.constant 0 : index
    %c0_201 = arith.constant 0 : index
    %177 = vector.load %arg16[%c0_200, %c0_201] : memref<1x64xf32, #tpu.memory_space<vmem>>, vector<1x64xf32>
    %c0_202 = arith.constant 0 : index
    %c0_203 = arith.constant 0 : index
    %178 = vector.load %arg47[%c0_202, %c0_203] : memref<40x128xf32, #tpu.memory_space<vmem>>, vector<4x64xf32>
    %c0_204 = arith.constant 0 : index
    %c0_205 = arith.constant 0 : index
    %179 = vector.load %arg15[%c0_204, %c0_205] : memref<192x64xf32, #tpu.memory_space<vmem>>, vector<64x64xf32>
    %cst_206 = arith.constant dense<0.000000e+00> : vector<4x64xf32>
    %180 = tpu.matmul %178, %179, %cst_206 {dimension_numbers = #tpu.dot_dimension_numbers<[1], [0], [0], [1], [0, 0, 1, 1], [], []>} : vector<4x64xf32>, vector<64x64xf32>, vector<4x64xf32> -> vector<4x64xf32>
    %c1_207 = arith.constant 1 : index
    %c0_208 = arith.constant 0 : index
    %181 = vector.load %arg47[%c1_207, %c0_208] : memref<40x128xf32, #tpu.memory_space<vmem>>, vector<4x64xf32>
    %c64_209 = arith.constant 64 : index
    %c0_210 = arith.constant 0 : index
    %182 = vector.load %arg15[%c64_209, %c0_210] : memref<192x64xf32, #tpu.memory_space<vmem>>, vector<64x64xf32>
    %cst_211 = arith.constant dense<0.000000e+00> : vector<4x64xf32>
    %183 = tpu.matmul %181, %182, %cst_211 {dimension_numbers = #tpu.dot_dimension_numbers<[1], [0], [0], [1], [0, 0, 1, 1], [], []>} : vector<4x64xf32>, vector<64x64xf32>, vector<4x64xf32> -> vector<4x64xf32>
    %184 = arith.addf %180, %183 : vector<4x64xf32>
    %c2_212 = arith.constant 2 : index
    %c0_213 = arith.constant 0 : index
    %185 = vector.load %arg47[%c2_212, %c0_213] : memref<40x128xf32, #tpu.memory_space<vmem>>, vector<4x64xf32>
    %c128_214 = arith.constant 128 : index
    %c0_215 = arith.constant 0 : index
    %186 = vector.load %arg15[%c128_214, %c0_215] : memref<192x64xf32, #tpu.memory_space<vmem>>, vector<64x64xf32>
    %cst_216 = arith.constant dense<0.000000e+00> : vector<4x64xf32>
    %187 = tpu.matmul %185, %186, %cst_216 {dimension_numbers = #tpu.dot_dimension_numbers<[1], [0], [0], [1], [0, 0, 1, 1], [], []>} : vector<4x64xf32>, vector<64x64xf32>, vector<4x64xf32> -> vector<4x64xf32>
    %188 = arith.addf %184, %187 : vector<4x64xf32>
    %189 = vector.broadcast %177 : vector<1x64xf32> to vector<4x64xf32>
    %190 = arith.addf %188, %189 : vector<4x64xf32>
    %c0_217 = arith.constant 0 : index
    %c0_218 = arith.constant 0 : index
    %191 = vector.load %arg18[%c0_217, %c0_218] : memref<1x64xf32, #tpu.memory_space<vmem>>, vector<1x64xf32>
    %c1_219 = arith.constant 1 : index
    %c0_220 = arith.constant 0 : index
    %192 = tpu.strided_load %arg46[%c1_219, %c0_220] {strides = array<i32: 2, 1>} : memref<40x128xf32, #tpu.memory_space<vmem>>, vector<4x64xf32>
    %c0_221 = arith.constant 0 : index
    %c0_222 = arith.constant 0 : index
    %193 = vector.load %arg17[%c0_221, %c0_222] : memref<64x64xf32, #tpu.memory_space<vmem>>, vector<64x64xf32>
    %cst_223 = arith.constant dense<0.000000e+00> : vector<4x64xf32>
    %194 = tpu.matmul %192, %193, %cst_223 {dimension_numbers = #tpu.dot_dimension_numbers<[1], [0], [0], [1], [0, 0, 1, 1], [], []>} : vector<4x64xf32>, vector<64x64xf32>, vector<4x64xf32> -> vector<4x64xf32>
    %195 = vector.broadcast %191 : vector<1x64xf32> to vector<4x64xf32>
    %196 = arith.addf %194, %195 : vector<4x64xf32>
    %197 = arith.addf %190, %196 : vector<4x64xf32>
    %cst_224 = arith.constant 0.000000e+00 : f32
    %198 = vector.broadcast %cst_224 : f32 to vector<4x64xf32>
    %199 = arith.maximumf %197, %198 : vector<4x64xf32>
    %cst_225 = arith.constant 0.000000e+00 : f32
    %200 = vector.broadcast %cst_225 : f32 to vector<1x64xf32>
    %c0_226 = arith.constant 0 : index
    %c0_227 = arith.constant 0 : index
    %201 = vector.load %arg46[%c0_226, %c0_227] : memref<40x128xf32, #tpu.memory_space<vmem>>, vector<1x64xf32>
    tpu.vector_store %arg46[%c0_226, %c0_227], %200 {strides = array<i32>} : memref<40x128xf32, #tpu.memory_space<vmem>>, vector<1x64xf32>,
    %c5_228 = arith.constant 5 : index
    %c0_229 = arith.constant 0 : index
    %202 = vector.load %arg46[%c5_228, %c0_229] : memref<40x128xf32, #tpu.memory_space<vmem>>, vector<1x64xf32>
    tpu.vector_store %arg46[%c5_228, %c0_229], %200 {strides = array<i32>} : memref<40x128xf32, #tpu.memory_space<vmem>>, vector<1x64xf32>,
    %c1_230 = arith.constant 1 : index
    %c0_231 = arith.constant 0 : index
    %203 = vector.load %arg46[%c1_230, %c0_231] : memref<40x128xf32, #tpu.memory_space<vmem>>, vector<4x64xf32>
    tpu.vector_store %arg46[%c1_230, %c0_231], %199 {strides = array<i32>} : memref<40x128xf32, #tpu.memory_space<vmem>>, vector<4x64xf32>,
    %c0_232 = arith.constant 0 : index
    %c0_233 = arith.constant 0 : index
    %204 = vector.load %arg20[%c0_232, %c0_233] : memref<1x64xf32, #tpu.memory_space<vmem>>, vector<1x64xf32>
    %c0_234 = arith.constant 0 : index
    %c0_235 = arith.constant 0 : index
    %205 = vector.load %arg46[%c0_234, %c0_235] : memref<40x128xf32, #tpu.memory_space<vmem>>, vector<4x64xf32>
    %c0_236 = arith.constant 0 : index
    %c0_237 = arith.constant 0 : index
    %206 = vector.load %arg19[%c0_236, %c0_237] : memref<192x64xf32, #tpu.memory_space<vmem>>, vector<64x64xf32>
    %cst_238 = arith.constant dense<0.000000e+00> : vector<4x64xf32>
    %207 = tpu.matmul %205, %206, %cst_238 {dimension_numbers = #tpu.dot_dimension_numbers<[1], [0], [0], [1], [0, 0, 1, 1], [], []>} : vector<4x64xf32>, vector<64x64xf32>, vector<4x64xf32> -> vector<4x64xf32>
    %c1_239 = arith.constant 1 : index
    %c0_240 = arith.constant 0 : index
    %208 = vector.load %arg46[%c1_239, %c0_240] : memref<40x128xf32, #tpu.memory_space<vmem>>, vector<4x64xf32>
    %c64_241 = arith.constant 64 : index
    %c0_242 = arith.constant 0 : index
    %209 = vector.load %arg19[%c64_241, %c0_242] : memref<192x64xf32, #tpu.memory_space<vmem>>, vector<64x64xf32>
    %cst_243 = arith.constant dense<0.000000e+00> : vector<4x64xf32>
    %210 = tpu.matmul %208, %209, %cst_243 {dimension_numbers = #tpu.dot_dimension_numbers<[1], [0], [0], [1], [0, 0, 1, 1], [], []>} : vector<4x64xf32>, vector<64x64xf32>, vector<4x64xf32> -> vector<4x64xf32>
    %211 = arith.addf %207, %210 : vector<4x64xf32>
    %c2_244 = arith.constant 2 : index
    %c0_245 = arith.constant 0 : index
    %212 = vector.load %arg46[%c2_244, %c0_245] : memref<40x128xf32, #tpu.memory_space<vmem>>, vector<4x64xf32>
    %c128_246 = arith.constant 128 : index
    %c0_247 = arith.constant 0 : index
    %213 = vector.load %arg19[%c128_246, %c0_247] : memref<192x64xf32, #tpu.memory_space<vmem>>, vector<64x64xf32>
    %cst_248 = arith.constant dense<0.000000e+00> : vector<4x64xf32>
    %214 = tpu.matmul %212, %213, %cst_248 {dimension_numbers = #tpu.dot_dimension_numbers<[1], [0], [0], [1], [0, 0, 1, 1], [], []>} : vector<4x64xf32>, vector<64x64xf32>, vector<4x64xf32> -> vector<4x64xf32>
    %215 = arith.addf %211, %214 : vector<4x64xf32>
    %216 = vector.broadcast %204 : vector<1x64xf32> to vector<4x64xf32>
    %217 = arith.addf %215, %216 : vector<4x64xf32>
    %cst_249 = arith.constant 0.000000e+00 : f32
    %218 = vector.broadcast %cst_249 : f32 to vector<4x64xf32>
    %219 = arith.maximumf %217, %218 : vector<4x64xf32>
    %cst_250 = arith.constant 0.000000e+00 : f32
    %220 = vector.broadcast %cst_250 : f32 to vector<1x64xf32>
    %c0_251 = arith.constant 0 : index
    %c0_252 = arith.constant 0 : index
    %221 = vector.load %arg47[%c0_251, %c0_252] : memref<40x128xf32, #tpu.memory_space<vmem>>, vector<1x64xf32>
    tpu.vector_store %arg47[%c0_251, %c0_252], %220 {strides = array<i32>} : memref<40x128xf32, #tpu.memory_space<vmem>>, vector<1x64xf32>,
    %c5_253 = arith.constant 5 : index
    %c0_254 = arith.constant 0 : index
    %222 = vector.load %arg47[%c5_253, %c0_254] : memref<40x128xf32, #tpu.memory_space<vmem>>, vector<1x64xf32>
    tpu.vector_store %arg47[%c5_253, %c0_254], %220 {strides = array<i32>} : memref<40x128xf32, #tpu.memory_space<vmem>>, vector<1x64xf32>,
    %c1_255 = arith.constant 1 : index
    %c0_256 = arith.constant 0 : index
    %223 = vector.load %arg47[%c1_255, %c0_256] : memref<40x128xf32, #tpu.memory_space<vmem>>, vector<4x64xf32>
    tpu.vector_store %arg47[%c1_255, %c0_256], %219 {strides = array<i32>} : memref<40x128xf32, #tpu.memory_space<vmem>>, vector<4x64xf32>,
    %c0_257 = arith.constant 0 : index
    %c0_258 = arith.constant 0 : index
    %224 = vector.load %arg22[%c0_257, %c0_258] : memref<1x64xf32, #tpu.memory_space<vmem>>, vector<1x64xf32>
    %c0_259 = arith.constant 0 : index
    %c0_260 = arith.constant 0 : index
    %225 = vector.load %arg47[%c0_259, %c0_260] : memref<40x128xf32, #tpu.memory_space<vmem>>, vector<4x64xf32>
    %c0_261 = arith.constant 0 : index
    %c0_262 = arith.constant 0 : index
    %226 = vector.load %arg21[%c0_261, %c0_262] : memref<192x64xf32, #tpu.memory_space<vmem>>, vector<64x64xf32>
    %cst_263 = arith.constant dense<0.000000e+00> : vector<4x64xf32>
    %227 = tpu.matmul %225, %226, %cst_263 {dimension_numbers = #tpu.dot_dimension_numbers<[1], [0], [0], [1], [0, 0, 1, 1], [], []>} : vector<4x64xf32>, vector<64x64xf32>, vector<4x64xf32> -> vector<4x64xf32>
    %c1_264 = arith.constant 1 : index
    %c0_265 = arith.constant 0 : index
    %228 = vector.load %arg47[%c1_264, %c0_265] : memref<40x128xf32, #tpu.memory_space<vmem>>, vector<4x64xf32>
    %c64_266 = arith.constant 64 : index
    %c0_267 = arith.constant 0 : index
    %229 = vector.load %arg21[%c64_266, %c0_267] : memref<192x64xf32, #tpu.memory_space<vmem>>, vector<64x64xf32>
    %cst_268 = arith.constant dense<0.000000e+00> : vector<4x64xf32>
    %230 = tpu.matmul %228, %229, %cst_268 {dimension_numbers = #tpu.dot_dimension_numbers<[1], [0], [0], [1], [0, 0, 1, 1], [], []>} : vector<4x64xf32>, vector<64x64xf32>, vector<4x64xf32> -> vector<4x64xf32>
    %231 = arith.addf %227, %230 : vector<4x64xf32>
    %c2_269 = arith.constant 2 : index
    %c0_270 = arith.constant 0 : index
    %232 = vector.load %arg47[%c2_269, %c0_270] : memref<40x128xf32, #tpu.memory_space<vmem>>, vector<4x64xf32>
    %c128_271 = arith.constant 128 : index
    %c0_272 = arith.constant 0 : index
    %233 = vector.load %arg21[%c128_271, %c0_272] : memref<192x64xf32, #tpu.memory_space<vmem>>, vector<64x64xf32>
    %cst_273 = arith.constant dense<0.000000e+00> : vector<4x64xf32>
    %234 = tpu.matmul %232, %233, %cst_273 {dimension_numbers = #tpu.dot_dimension_numbers<[1], [0], [0], [1], [0, 0, 1, 1], [], []>} : vector<4x64xf32>, vector<64x64xf32>, vector<4x64xf32> -> vector<4x64xf32>
    %235 = arith.addf %231, %234 : vector<4x64xf32>
    %236 = vector.broadcast %224 : vector<1x64xf32> to vector<4x64xf32>
    %237 = arith.addf %235, %236 : vector<4x64xf32>
    %238 = arith.addf %237, %199 : vector<4x64xf32>
    %cst_274 = arith.constant 0.000000e+00 : f32
    %239 = vector.broadcast %cst_274 : f32 to vector<4x64xf32>
    %240 = arith.maximumf %238, %239 : vector<4x64xf32>
    %cst_275 = arith.constant 0.000000e+00 : f32
    %241 = vector.broadcast %cst_275 : f32 to vector<1x64xf32>
    %c0_276 = arith.constant 0 : index
    %c0_277 = arith.constant 0 : index
    %242 = vector.load %arg46[%c0_276, %c0_277] : memref<40x128xf32, #tpu.memory_space<vmem>>, vector<1x64xf32>
    tpu.vector_store %arg46[%c0_276, %c0_277], %241 {strides = array<i32>} : memref<40x128xf32, #tpu.memory_space<vmem>>, vector<1x64xf32>,
    %c5_278 = arith.constant 5 : index
    %c0_279 = arith.constant 0 : index
    %243 = vector.load %arg46[%c5_278, %c0_279] : memref<40x128xf32, #tpu.memory_space<vmem>>, vector<1x64xf32>
    tpu.vector_store %arg46[%c5_278, %c0_279], %241 {strides = array<i32>} : memref<40x128xf32, #tpu.memory_space<vmem>>, vector<1x64xf32>,
    %c1_280 = arith.constant 1 : index
    %c0_281 = arith.constant 0 : index
    %244 = vector.load %arg46[%c1_280, %c0_281] : memref<40x128xf32, #tpu.memory_space<vmem>>, vector<4x64xf32>
    tpu.vector_store %arg46[%c1_280, %c0_281], %240 {strides = array<i32>} : memref<40x128xf32, #tpu.memory_space<vmem>>, vector<4x64xf32>,
    %c0_282 = arith.constant 0 : index
    %c0_283 = arith.constant 0 : index
    %245 = vector.load %arg24[%c0_282, %c0_283] : memref<1x64xf32, #tpu.memory_space<vmem>>, vector<1x64xf32>
    %c0_284 = arith.constant 0 : index
    %c0_285 = arith.constant 0 : index
    %246 = tpu.strided_load %arg46[%c0_284, %c0_285] {strides = array<i32: 2, 1>} : memref<40x128xf32, #tpu.memory_space<vmem>>, vector<2x64xf32>
    %c0_286 = arith.constant 0 : index
    %c0_287 = arith.constant 0 : index
    %247 = vector.load %arg23[%c0_286, %c0_287] : memref<192x64xf32, #tpu.memory_space<vmem>>, vector<64x64xf32>
    %cst_288 = arith.constant dense<0.000000e+00> : vector<2x64xf32>
    %248 = tpu.matmul %246, %247, %cst_288 {dimension_numbers = #tpu.dot_dimension_numbers<[1], [0], [0], [1], [0, 0, 1, 1], [], []>} : vector<2x64xf32>, vector<64x64xf32>, vector<2x64xf32> -> vector<2x64xf32>
    %c1_289 = arith.constant 1 : index
    %c0_290 = arith.constant 0 : index
    %249 = tpu.strided_load %arg46[%c1_289, %c0_290] {strides = array<i32: 2, 1>} : memref<40x128xf32, #tpu.memory_space<vmem>>, vector<2x64xf32>
    %c64_291 = arith.constant 64 : index
    %c0_292 = arith.constant 0 : index
    %250 = vector.load %arg23[%c64_291, %c0_292] : memref<192x64xf32, #tpu.memory_space<vmem>>, vector<64x64xf32>
    %cst_293 = arith.constant dense<0.000000e+00> : vector<2x64xf32>
    %251 = tpu.matmul %249, %250, %cst_293 {dimension_numbers = #tpu.dot_dimension_numbers<[1], [0], [0], [1], [0, 0, 1, 1], [], []>} : vector<2x64xf32>, vector<64x64xf32>, vector<2x64xf32> -> vector<2x64xf32>
    %252 = arith.addf %248, %251 : vector<2x64xf32>
    %c2_294 = arith.constant 2 : index
    %c0_295 = arith.constant 0 : index
    %253 = tpu.strided_load %arg46[%c2_294, %c0_295] {strides = array<i32: 2, 1>} : memref<40x128xf32, #tpu.memory_space<vmem>>, vector<2x64xf32>
    %c128_296 = arith.constant 128 : index
    %c0_297 = arith.constant 0 : index
    %254 = vector.load %arg23[%c128_296, %c0_297] : memref<192x64xf32, #tpu.memory_space<vmem>>, vector<64x64xf32>
    %cst_298 = arith.constant dense<0.000000e+00> : vector<2x64xf32>
    %255 = tpu.matmul %253, %254, %cst_298 {dimension_numbers = #tpu.dot_dimension_numbers<[1], [0], [0], [1], [0, 0, 1, 1], [], []>} : vector<2x64xf32>, vector<64x64xf32>, vector<2x64xf32> -> vector<2x64xf32>
    %256 = arith.addf %252, %255 : vector<2x64xf32>
    %257 = vector.broadcast %245 : vector<1x64xf32> to vector<2x64xf32>
    %258 = arith.addf %256, %257 : vector<2x64xf32>
    %cst_299 = arith.constant 0.000000e+00 : f32
    %259 = vector.broadcast %cst_299 : f32 to vector<2x64xf32>
    %260 = arith.maximumf %258, %259 : vector<2x64xf32>
    %cst_300 = arith.constant 0.000000e+00 : f32
    %261 = vector.broadcast %cst_300 : f32 to vector<1x64xf32>
    %c0_301 = arith.constant 0 : index
    %c0_302 = arith.constant 0 : index
    %262 = vector.load %arg47[%c0_301, %c0_302] : memref<40x128xf32, #tpu.memory_space<vmem>>, vector<1x64xf32>
    tpu.vector_store %arg47[%c0_301, %c0_302], %261 {strides = array<i32>} : memref<40x128xf32, #tpu.memory_space<vmem>>, vector<1x64xf32>,
    %c3_303 = arith.constant 3 : index
    %c0_304 = arith.constant 0 : index
    %263 = vector.load %arg47[%c3_303, %c0_304] : memref<40x128xf32, #tpu.memory_space<vmem>>, vector<1x64xf32>
    tpu.vector_store %arg47[%c3_303, %c0_304], %261 {strides = array<i32>} : memref<40x128xf32, #tpu.memory_space<vmem>>, vector<1x64xf32>,
    %c1_305 = arith.constant 1 : index
    %c0_306 = arith.constant 0 : index
    %264 = vector.load %arg47[%c1_305, %c0_306] : memref<40x128xf32, #tpu.memory_space<vmem>>, vector<2x64xf32>
    tpu.vector_store %arg47[%c1_305, %c0_306], %260 {strides = array<i32>} : memref<40x128xf32, #tpu.memory_space<vmem>>, vector<2x64xf32>,
    %c0_307 = arith.constant 0 : index
    %c0_308 = arith.constant 0 : index
    %265 = vector.load %arg26[%c0_307, %c0_308] : memref<1x64xf32, #tpu.memory_space<vmem>>, vector<1x64xf32>
    %c0_309 = arith.constant 0 : index
    %c0_310 = arith.constant 0 : index
    %266 = vector.load %arg47[%c0_309, %c0_310] : memref<40x128xf32, #tpu.memory_space<vmem>>, vector<2x64xf32>
    %c0_311 = arith.constant 0 : index
    %c0_312 = arith.constant 0 : index
    %267 = vector.load %arg25[%c0_311, %c0_312] : memref<192x64xf32, #tpu.memory_space<vmem>>, vector<64x64xf32>
    %cst_313 = arith.constant dense<0.000000e+00> : vector<2x64xf32>
    %268 = tpu.matmul %266, %267, %cst_313 {dimension_numbers = #tpu.dot_dimension_numbers<[1], [0], [0], [1], [0, 0, 1, 1], [], []>} : vector<2x64xf32>, vector<64x64xf32>, vector<2x64xf32> -> vector<2x64xf32>
    %c1_314 = arith.constant 1 : index
    %c0_315 = arith.constant 0 : index
    %269 = vector.load %arg47[%c1_314, %c0_315] : memref<40x128xf32, #tpu.memory_space<vmem>>, vector<2x64xf32>
    %c64_316 = arith.constant 64 : index
    %c0_317 = arith.constant 0 : index
    %270 = vector.load %arg25[%c64_316, %c0_317] : memref<192x64xf32, #tpu.memory_space<vmem>>, vector<64x64xf32>
    %cst_318 = arith.constant dense<0.000000e+00> : vector<2x64xf32>
    %271 = tpu.matmul %269, %270, %cst_318 {dimension_numbers = #tpu.dot_dimension_numbers<[1], [0], [0], [1], [0, 0, 1, 1], [], []>} : vector<2x64xf32>, vector<64x64xf32>, vector<2x64xf32> -> vector<2x64xf32>
    %272 = arith.addf %268, %271 : vector<2x64xf32>
    %c2_319 = arith.constant 2 : index
    %c0_320 = arith.constant 0 : index
    %273 = vector.load %arg47[%c2_319, %c0_320] : memref<40x128xf32, #tpu.memory_space<vmem>>, vector<2x64xf32>
    %c128_321 = arith.constant 128 : index
    %c0_322 = arith.constant 0 : index
    %274 = vector.load %arg25[%c128_321, %c0_322] : memref<192x64xf32, #tpu.memory_space<vmem>>, vector<64x64xf32>
    %cst_323 = arith.constant dense<0.000000e+00> : vector<2x64xf32>
    %275 = tpu.matmul %273, %274, %cst_323 {dimension_numbers = #tpu.dot_dimension_numbers<[1], [0], [0], [1], [0, 0, 1, 1], [], []>} : vector<2x64xf32>, vector<64x64xf32>, vector<2x64xf32> -> vector<2x64xf32>
    %276 = arith.addf %272, %275 : vector<2x64xf32>
    %277 = vector.broadcast %265 : vector<1x64xf32> to vector<2x64xf32>
    %278 = arith.addf %276, %277 : vector<2x64xf32>
    %c0_324 = arith.constant 0 : index
    %c0_325 = arith.constant 0 : index
    %279 = vector.load %arg28[%c0_324, %c0_325] : memref<1x64xf32, #tpu.memory_space<vmem>>, vector<1x64xf32>
    %c1_326 = arith.constant 1 : index
    %c0_327 = arith.constant 0 : index
    %280 = tpu.strided_load %arg46[%c1_326, %c0_327] {strides = array<i32: 2, 1>} : memref<40x128xf32, #tpu.memory_space<vmem>>, vector<2x64xf32>
    %c0_328 = arith.constant 0 : index
    %c0_329 = arith.constant 0 : index
    %281 = vector.load %arg27[%c0_328, %c0_329] : memref<64x64xf32, #tpu.memory_space<vmem>>, vector<64x64xf32>
    %cst_330 = arith.constant dense<0.000000e+00> : vector<2x64xf32>
    %282 = tpu.matmul %280, %281, %cst_330 {dimension_numbers = #tpu.dot_dimension_numbers<[1], [0], [0], [1], [0, 0, 1, 1], [], []>} : vector<2x64xf32>, vector<64x64xf32>, vector<2x64xf32> -> vector<2x64xf32>
    %283 = vector.broadcast %279 : vector<1x64xf32> to vector<2x64xf32>
    %284 = arith.addf %282, %283 : vector<2x64xf32>
    %285 = arith.addf %278, %284 : vector<2x64xf32>
    %cst_331 = arith.constant 0.000000e+00 : f32
    %286 = vector.broadcast %cst_331 : f32 to vector<2x64xf32>
    %287 = arith.maximumf %285, %286 : vector<2x64xf32>
    %cst_332 = arith.constant 0.000000e+00 : f32
    %288 = vector.broadcast %cst_332 : f32 to vector<1x64xf32>
    %c0_333 = arith.constant 0 : index
    %c0_334 = arith.constant 0 : index
    %289 = vector.load %arg46[%c0_333, %c0_334] : memref<40x128xf32, #tpu.memory_space<vmem>>, vector<1x64xf32>
    tpu.vector_store %arg46[%c0_333, %c0_334], %288 {strides = array<i32>} : memref<40x128xf32, #tpu.memory_space<vmem>>, vector<1x64xf32>,
    %c3_335 = arith.constant 3 : index
    %c0_336 = arith.constant 0 : index
    %290 = vector.load %arg46[%c3_335, %c0_336] : memref<40x128xf32, #tpu.memory_space<vmem>>, vector<1x64xf32>
    tpu.vector_store %arg46[%c3_335, %c0_336], %288 {strides = array<i32>} : memref<40x128xf32, #tpu.memory_space<vmem>>, vector<1x64xf32>,
    %c1_337 = arith.constant 1 : index
    %c0_338 = arith.constant 0 : index
    %291 = vector.load %arg46[%c1_337, %c0_338] : memref<40x128xf32, #tpu.memory_space<vmem>>, vector<2x64xf32>
    tpu.vector_store %arg46[%c1_337, %c0_338], %287 {strides = array<i32>} : memref<40x128xf32, #tpu.memory_space<vmem>>, vector<2x64xf32>,
    %c0_339 = arith.constant 0 : index
    %c0_340 = arith.constant 0 : index
    %292 = vector.load %arg30[%c0_339, %c0_340] : memref<1x64xf32, #tpu.memory_space<vmem>>, vector<1x64xf32>
    %c0_341 = arith.constant 0 : index
    %c0_342 = arith.constant 0 : index
    %293 = vector.load %arg46[%c0_341, %c0_342] : memref<40x128xf32, #tpu.memory_space<vmem>>, vector<2x64xf32>
    %c0_343 = arith.constant 0 : index
    %c0_344 = arith.constant 0 : index
    %294 = vector.load %arg29[%c0_343, %c0_344] : memref<192x64xf32, #tpu.memory_space<vmem>>, vector<64x64xf32>
    %cst_345 = arith.constant dense<0.000000e+00> : vector<2x64xf32>
    %295 = tpu.matmul %293, %294, %cst_345 {dimension_numbers = #tpu.dot_dimension_numbers<[1], [0], [0], [1], [0, 0, 1, 1], [], []>} : vector<2x64xf32>, vector<64x64xf32>, vector<2x64xf32> -> vector<2x64xf32>
    %c1_346 = arith.constant 1 : index
    %c0_347 = arith.constant 0 : index
    %296 = vector.load %arg46[%c1_346, %c0_347] : memref<40x128xf32, #tpu.memory_space<vmem>>, vector<2x64xf32>
    %c64_348 = arith.constant 64 : index
    %c0_349 = arith.constant 0 : index
    %297 = vector.load %arg29[%c64_348, %c0_349] : memref<192x64xf32, #tpu.memory_space<vmem>>, vector<64x64xf32>
    %cst_350 = arith.constant dense<0.000000e+00> : vector<2x64xf32>
    %298 = tpu.matmul %296, %297, %cst_350 {dimension_numbers = #tpu.dot_dimension_numbers<[1], [0], [0], [1], [0, 0, 1, 1], [], []>} : vector<2x64xf32>, vector<64x64xf32>, vector<2x64xf32> -> vector<2x64xf32>
    %299 = arith.addf %295, %298 : vector<2x64xf32>
    %c2_351 = arith.constant 2 : index
    %c0_352 = arith.constant 0 : index
    %300 = vector.load %arg46[%c2_351, %c0_352] : memref<40x128xf32, #tpu.memory_space<vmem>>, vector<2x64xf32>
    %c128_353 = arith.constant 128 : index
    %c0_354 = arith.constant 0 : index
    %301 = vector.load %arg29[%c128_353, %c0_354] : memref<192x64xf32, #tpu.memory_space<vmem>>, vector<64x64xf32>
    %cst_355 = arith.constant dense<0.000000e+00> : vector<2x64xf32>
    %302 = tpu.matmul %300, %301, %cst_355 {dimension_numbers = #tpu.dot_dimension_numbers<[1], [0], [0], [1], [0, 0, 1, 1], [], []>} : vector<2x64xf32>, vector<64x64xf32>, vector<2x64xf32> -> vector<2x64xf32>
    %303 = arith.addf %299, %302 : vector<2x64xf32>
    %304 = vector.broadcast %292 : vector<1x64xf32> to vector<2x64xf32>
    %305 = arith.addf %303, %304 : vector<2x64xf32>
    %cst_356 = arith.constant 0.000000e+00 : f32
    %306 = vector.broadcast %cst_356 : f32 to vector<2x64xf32>
    %307 = arith.maximumf %305, %306 : vector<2x64xf32>
    %cst_357 = arith.constant 0.000000e+00 : f32
    %308 = vector.broadcast %cst_357 : f32 to vector<1x64xf32>
    %c0_358 = arith.constant 0 : index
    %c0_359 = arith.constant 0 : index
    %309 = vector.load %arg47[%c0_358, %c0_359] : memref<40x128xf32, #tpu.memory_space<vmem>>, vector<1x64xf32>
    tpu.vector_store %arg47[%c0_358, %c0_359], %308 {strides = array<i32>} : memref<40x128xf32, #tpu.memory_space<vmem>>, vector<1x64xf32>,
    %c3_360 = arith.constant 3 : index
    %c0_361 = arith.constant 0 : index
    %310 = vector.load %arg47[%c3_360, %c0_361] : memref<40x128xf32, #tpu.memory_space<vmem>>, vector<1x64xf32>
    tpu.vector_store %arg47[%c3_360, %c0_361], %308 {strides = array<i32>} : memref<40x128xf32, #tpu.memory_space<vmem>>, vector<1x64xf32>,
    %c1_362 = arith.constant 1 : index
    %c0_363 = arith.constant 0 : index
    %311 = vector.load %arg47[%c1_362, %c0_363] : memref<40x128xf32, #tpu.memory_space<vmem>>, vector<2x64xf32>
    tpu.vector_store %arg47[%c1_362, %c0_363], %307 {strides = array<i32>} : memref<40x128xf32, #tpu.memory_space<vmem>>, vector<2x64xf32>,
    %c0_364 = arith.constant 0 : index
    %c0_365 = arith.constant 0 : index
    %312 = vector.load %arg32[%c0_364, %c0_365] : memref<1x64xf32, #tpu.memory_space<vmem>>, vector<1x64xf32>
    %c0_366 = arith.constant 0 : index
    %c0_367 = arith.constant 0 : index
    %313 = vector.load %arg47[%c0_366, %c0_367] : memref<40x128xf32, #tpu.memory_space<vmem>>, vector<2x64xf32>
    %c0_368 = arith.constant 0 : index
    %c0_369 = arith.constant 0 : index
    %314 = vector.load %arg31[%c0_368, %c0_369] : memref<192x64xf32, #tpu.memory_space<vmem>>, vector<64x64xf32>
    %cst_370 = arith.constant dense<0.000000e+00> : vector<2x64xf32>
    %315 = tpu.matmul %313, %314, %cst_370 {dimension_numbers = #tpu.dot_dimension_numbers<[1], [0], [0], [1], [0, 0, 1, 1], [], []>} : vector<2x64xf32>, vector<64x64xf32>, vector<2x64xf32> -> vector<2x64xf32>
    %c1_371 = arith.constant 1 : index
    %c0_372 = arith.constant 0 : index
    %316 = vector.load %arg47[%c1_371, %c0_372] : memref<40x128xf32, #tpu.memory_space<vmem>>, vector<2x64xf32>
    %c64_373 = arith.constant 64 : index
    %c0_374 = arith.constant 0 : index
    %317 = vector.load %arg31[%c64_373, %c0_374] : memref<192x64xf32, #tpu.memory_space<vmem>>, vector<64x64xf32>
    %cst_375 = arith.constant dense<0.000000e+00> : vector<2x64xf32>
    %318 = tpu.matmul %316, %317, %cst_375 {dimension_numbers = #tpu.dot_dimension_numbers<[1], [0], [0], [1], [0, 0, 1, 1], [], []>} : vector<2x64xf32>, vector<64x64xf32>, vector<2x64xf32> -> vector<2x64xf32>
    %319 = arith.addf %315, %318 : vector<2x64xf32>
    %c2_376 = arith.constant 2 : index
    %c0_377 = arith.constant 0 : index
    %320 = vector.load %arg47[%c2_376, %c0_377] : memref<40x128xf32, #tpu.memory_space<vmem>>, vector<2x64xf32>
    %c128_378 = arith.constant 128 : index
    %c0_379 = arith.constant 0 : index
    %321 = vector.load %arg31[%c128_378, %c0_379] : memref<192x64xf32, #tpu.memory_space<vmem>>, vector<64x64xf32>
    %cst_380 = arith.constant dense<0.000000e+00> : vector<2x64xf32>
    %322 = tpu.matmul %320, %321, %cst_380 {dimension_numbers = #tpu.dot_dimension_numbers<[1], [0], [0], [1], [0, 0, 1, 1], [], []>} : vector<2x64xf32>, vector<64x64xf32>, vector<2x64xf32> -> vector<2x64xf32>
    %323 = arith.addf %319, %322 : vector<2x64xf32>
    %324 = vector.broadcast %312 : vector<1x64xf32> to vector<2x64xf32>
    %325 = arith.addf %323, %324 : vector<2x64xf32>
    %326 = arith.addf %325, %287 : vector<2x64xf32>
    %cst_381 = arith.constant 0.000000e+00 : f32
    %327 = vector.broadcast %cst_381 : f32 to vector<2x64xf32>
    %328 = arith.maximumf %326, %327 : vector<2x64xf32>
    %cst_382 = arith.constant 0.000000e+00 : f32
    %329 = vector.broadcast %cst_382 : f32 to vector<1x64xf32>
    %c0_383 = arith.constant 0 : index
    %c0_384 = arith.constant 0 : index
    %330 = vector.load %arg46[%c0_383, %c0_384] : memref<40x128xf32, #tpu.memory_space<vmem>>, vector<1x64xf32>
    tpu.vector_store %arg46[%c0_383, %c0_384], %329 {strides = array<i32>} : memref<40x128xf32, #tpu.memory_space<vmem>>, vector<1x64xf32>,
    %c3_385 = arith.constant 3 : index
    %c0_386 = arith.constant 0 : index
    %331 = vector.load %arg46[%c3_385, %c0_386] : memref<40x128xf32, #tpu.memory_space<vmem>>, vector<1x64xf32>
    tpu.vector_store %arg46[%c3_385, %c0_386], %329 {strides = array<i32>} : memref<40x128xf32, #tpu.memory_space<vmem>>, vector<1x64xf32>,
    %c1_387 = arith.constant 1 : index
    %c0_388 = arith.constant 0 : index
    %332 = vector.load %arg46[%c1_387, %c0_388] : memref<40x128xf32, #tpu.memory_space<vmem>>, vector<2x64xf32>
    tpu.vector_store %arg46[%c1_387, %c0_388], %328 {strides = array<i32>} : memref<40x128xf32, #tpu.memory_space<vmem>>, vector<2x64xf32>,
    %c0_389 = arith.constant 0 : index
    %c0_390 = arith.constant 0 : index
    %333 = vector.load %arg34[%c0_389, %c0_390] : memref<1x64xf32, #tpu.memory_space<vmem>>, vector<1x64xf32>
    %c0_391 = arith.constant 0 : index
    %c0_392 = arith.constant 0 : index
    %334 = tpu.strided_load %arg46[%c0_391, %c0_392] {strides = array<i32: 2, 1>} : memref<40x128xf32, #tpu.memory_space<vmem>>, vector<1x64xf32>
    %c0_393 = arith.constant 0 : index
    %c0_394 = arith.constant 0 : index
    %335 = vector.load %arg33[%c0_393, %c0_394] : memref<192x64xf32, #tpu.memory_space<vmem>>, vector<64x64xf32>
    %cst_395 = arith.constant dense<0.000000e+00> : vector<1x64xf32>
    %336 = tpu.matmul %334, %335, %cst_395 {dimension_numbers = #tpu.dot_dimension_numbers<[1], [0], [0], [1], [0, 0, 1, 1], [], []>} : vector<1x64xf32>, vector<64x64xf32>, vector<1x64xf32> -> vector<1x64xf32>
    %c1_396 = arith.constant 1 : index
    %c0_397 = arith.constant 0 : index
    %337 = tpu.strided_load %arg46[%c1_396, %c0_397] {strides = array<i32: 2, 1>} : memref<40x128xf32, #tpu.memory_space<vmem>>, vector<1x64xf32>
    %c64_398 = arith.constant 64 : index
    %c0_399 = arith.constant 0 : index
    %338 = vector.load %arg33[%c64_398, %c0_399] : memref<192x64xf32, #tpu.memory_space<vmem>>, vector<64x64xf32>
    %cst_400 = arith.constant dense<0.000000e+00> : vector<1x64xf32>
    %339 = tpu.matmul %337, %338, %cst_400 {dimension_numbers = #tpu.dot_dimension_numbers<[1], [0], [0], [1], [0, 0, 1, 1], [], []>} : vector<1x64xf32>, vector<64x64xf32>, vector<1x64xf32> -> vector<1x64xf32>
    %340 = arith.addf %336, %339 : vector<1x64xf32>
    %c2_401 = arith.constant 2 : index
    %c0_402 = arith.constant 0 : index
    %341 = tpu.strided_load %arg46[%c2_401, %c0_402] {strides = array<i32: 2, 1>} : memref<40x128xf32, #tpu.memory_space<vmem>>, vector<1x64xf32>
    %c128_403 = arith.constant 128 : index
    %c0_404 = arith.constant 0 : index
    %342 = vector.load %arg33[%c128_403, %c0_404] : memref<192x64xf32, #tpu.memory_space<vmem>>, vector<64x64xf32>
    %cst_405 = arith.constant dense<0.000000e+00> : vector<1x64xf32>
    %343 = tpu.matmul %341, %342, %cst_405 {dimension_numbers = #tpu.dot_dimension_numbers<[1], [0], [0], [1], [0, 0, 1, 1], [], []>} : vector<1x64xf32>, vector<64x64xf32>, vector<1x64xf32> -> vector<1x64xf32>
    %344 = arith.addf %340, %343 : vector<1x64xf32>
    %345 = arith.addf %344, %333 : vector<1x64xf32>
    %cst_406 = arith.constant 0.000000e+00 : f32
    %346 = vector.broadcast %cst_406 : f32 to vector<1x64xf32>
    %347 = arith.maximumf %345, %346 : vector<1x64xf32>
    %cst_407 = arith.constant 0.000000e+00 : f32
    %348 = vector.broadcast %cst_407 : f32 to vector<1x64xf32>
    %c0_408 = arith.constant 0 : index
    %c0_409 = arith.constant 0 : index
    %349 = vector.load %arg47[%c0_408, %c0_409] : memref<40x128xf32, #tpu.memory_space<vmem>>, vector<1x64xf32>
    tpu.vector_store %arg47[%c0_408, %c0_409], %348 {strides = array<i32>} : memref<40x128xf32, #tpu.memory_space<vmem>>, vector<1x64xf32>,
    %c2_410 = arith.constant 2 : index
    %c0_411 = arith.constant 0 : index
    %350 = vector.load %arg47[%c2_410, %c0_411] : memref<40x128xf32, #tpu.memory_space<vmem>>, vector<1x64xf32>
    tpu.vector_store %arg47[%c2_410, %c0_411], %348 {strides = array<i32>} : memref<40x128xf32, #tpu.memory_space<vmem>>, vector<1x64xf32>,
    %c1_412 = arith.constant 1 : index
    %c0_413 = arith.constant 0 : index
    %351 = vector.load %arg47[%c1_412, %c0_413] : memref<40x128xf32, #tpu.memory_space<vmem>>, vector<1x64xf32>
    tpu.vector_store %arg47[%c1_412, %c0_413], %347 {strides = array<i32>} : memref<40x128xf32, #tpu.memory_space<vmem>>, vector<1x64xf32>,
    %c0_414 = arith.constant 0 : index
    %c0_415 = arith.constant 0 : index
    %352 = vector.load %arg36[%c0_414, %c0_415] : memref<1x64xf32, #tpu.memory_space<vmem>>, vector<1x64xf32>
    %c0_416 = arith.constant 0 : index
    %c0_417 = arith.constant 0 : index
    %353 = vector.load %arg47[%c0_416, %c0_417] : memref<40x128xf32, #tpu.memory_space<vmem>>, vector<1x64xf32>
    %c0_418 = arith.constant 0 : index
    %c0_419 = arith.constant 0 : index
    %354 = vector.load %arg35[%c0_418, %c0_419] : memref<192x64xf32, #tpu.memory_space<vmem>>, vector<64x64xf32>
    %cst_420 = arith.constant dense<0.000000e+00> : vector<1x64xf32>
    %355 = tpu.matmul %353, %354, %cst_420 {dimension_numbers = #tpu.dot_dimension_numbers<[1], [0], [0], [1], [0, 0, 1, 1], [], []>} : vector<1x64xf32>, vector<64x64xf32>, vector<1x64xf32> -> vector<1x64xf32>
    %c1_421 = arith.constant 1 : index
    %c0_422 = arith.constant 0 : index
    %356 = vector.load %arg47[%c1_421, %c0_422] : memref<40x128xf32, #tpu.memory_space<vmem>>, vector<1x64xf32>
    %c64_423 = arith.constant 64 : index
    %c0_424 = arith.constant 0 : index
    %357 = vector.load %arg35[%c64_423, %c0_424] : memref<192x64xf32, #tpu.memory_space<vmem>>, vector<64x64xf32>
    %cst_425 = arith.constant dense<0.000000e+00> : vector<1x64xf32>
    %358 = tpu.matmul %356, %357, %cst_425 {dimension_numbers = #tpu.dot_dimension_numbers<[1], [0], [0], [1], [0, 0, 1, 1], [], []>} : vector<1x64xf32>, vector<64x64xf32>, vector<1x64xf32> -> vector<1x64xf32>
    %359 = arith.addf %355, %358 : vector<1x64xf32>
    %c2_426 = arith.constant 2 : index
    %c0_427 = arith.constant 0 : index
    %360 = vector.load %arg47[%c2_426, %c0_427] : memref<40x128xf32, #tpu.memory_space<vmem>>, vector<1x64xf32>
    %c128_428 = arith.constant 128 : index
    %c0_429 = arith.constant 0 : index
    %361 = vector.load %arg35[%c128_428, %c0_429] : memref<192x64xf32, #tpu.memory_space<vmem>>, vector<64x64xf32>
    %cst_430 = arith.constant dense<0.000000e+00> : vector<1x64xf32>
    %362 = tpu.matmul %360, %361, %cst_430 {dimension_numbers = #tpu.dot_dimension_numbers<[1], [0], [0], [1], [0, 0, 1, 1], [], []>} : vector<1x64xf32>, vector<64x64xf32>, vector<1x64xf32> -> vector<1x64xf32>
    %363 = arith.addf %359, %362 : vector<1x64xf32>
    %364 = arith.addf %363, %352 : vector<1x64xf32>
    %c0_431 = arith.constant 0 : index
    %c0_432 = arith.constant 0 : index
    %365 = vector.load %arg38[%c0_431, %c0_432] : memref<1x64xf32, #tpu.memory_space<vmem>>, vector<1x64xf32>
    %c1_433 = arith.constant 1 : index
    %c0_434 = arith.constant 0 : index
    %366 = tpu.strided_load %arg46[%c1_433, %c0_434] {strides = array<i32: 2, 1>} : memref<40x128xf32, #tpu.memory_space<vmem>>, vector<1x64xf32>
    %c0_435 = arith.constant 0 : index
    %c0_436 = arith.constant 0 : index
    %367 = vector.load %arg37[%c0_435, %c0_436] : memref<64x64xf32, #tpu.memory_space<vmem>>, vector<64x64xf32>
    %cst_437 = arith.constant dense<0.000000e+00> : vector<1x64xf32>
    %368 = tpu.matmul %366, %367, %cst_437 {dimension_numbers = #tpu.dot_dimension_numbers<[1], [0], [0], [1], [0, 0, 1, 1], [], []>} : vector<1x64xf32>, vector<64x64xf32>, vector<1x64xf32> -> vector<1x64xf32>
    %369 = arith.addf %368, %365 : vector<1x64xf32>
    %370 = arith.addf %364, %369 : vector<1x64xf32>
    %cst_438 = arith.constant 0.000000e+00 : f32
    %371 = vector.broadcast %cst_438 : f32 to vector<1x64xf32>
    %372 = arith.maximumf %370, %371 : vector<1x64xf32>
    %cst_439 = arith.constant 0.000000e+00 : f32
    %373 = vector.broadcast %cst_439 : f32 to vector<1x64xf32>
    %c0_440 = arith.constant 0 : index
    %c0_441 = arith.constant 0 : index
    %374 = vector.load %arg46[%c0_440, %c0_441] : memref<40x128xf32, #tpu.memory_space<vmem>>, vector<1x64xf32>
    tpu.vector_store %arg46[%c0_440, %c0_441], %373 {strides = array<i32>} : memref<40x128xf32, #tpu.memory_space<vmem>>, vector<1x64xf32>,
    %c2_442 = arith.constant 2 : index
    %c0_443 = arith.constant 0 : index
    %375 = vector.load %arg46[%c2_442, %c0_443] : memref<40x128xf32, #tpu.memory_space<vmem>>, vector<1x64xf32>
    tpu.vector_store %arg46[%c2_442, %c0_443], %373 {strides = array<i32>} : memref<40x128xf32, #tpu.memory_space<vmem>>, vector<1x64xf32>,
    %c1_444 = arith.constant 1 : index
    %c0_445 = arith.constant 0 : index
    %376 = vector.load %arg46[%c1_444, %c0_445] : memref<40x128xf32, #tpu.memory_space<vmem>>, vector<1x64xf32>
    tpu.vector_store %arg46[%c1_444, %c0_445], %372 {strides = array<i32>} : memref<40x128xf32, #tpu.memory_space<vmem>>, vector<1x64xf32>,
    %c0_446 = arith.constant 0 : index
    %c0_447 = arith.constant 0 : index
    %377 = vector.load %arg40[%c0_446, %c0_447] : memref<1x64xf32, #tpu.memory_space<vmem>>, vector<1x64xf32>
    %c0_448 = arith.constant 0 : index
    %c0_449 = arith.constant 0 : index
    %378 = vector.load %arg46[%c0_448, %c0_449] : memref<40x128xf32, #tpu.memory_space<vmem>>, vector<1x64xf32>
    %c0_450 = arith.constant 0 : index
    %c0_451 = arith.constant 0 : index
    %379 = vector.load %arg39[%c0_450, %c0_451] : memref<192x64xf32, #tpu.memory_space<vmem>>, vector<64x64xf32>
    %cst_452 = arith.constant dense<0.000000e+00> : vector<1x64xf32>
    %380 = tpu.matmul %378, %379, %cst_452 {dimension_numbers = #tpu.dot_dimension_numbers<[1], [0], [0], [1], [0, 0, 1, 1], [], []>} : vector<1x64xf32>, vector<64x64xf32>, vector<1x64xf32> -> vector<1x64xf32>
    %c1_453 = arith.constant 1 : index
    %c0_454 = arith.constant 0 : index
    %381 = vector.load %arg46[%c1_453, %c0_454] : memref<40x128xf32, #tpu.memory_space<vmem>>, vector<1x64xf32>
    %c64_455 = arith.constant 64 : index
    %c0_456 = arith.constant 0 : index
    %382 = vector.load %arg39[%c64_455, %c0_456] : memref<192x64xf32, #tpu.memory_space<vmem>>, vector<64x64xf32>
    %cst_457 = arith.constant dense<0.000000e+00> : vector<1x64xf32>
    %383 = tpu.matmul %381, %382, %cst_457 {dimension_numbers = #tpu.dot_dimension_numbers<[1], [0], [0], [1], [0, 0, 1, 1], [], []>} : vector<1x64xf32>, vector<64x64xf32>, vector<1x64xf32> -> vector<1x64xf32>
    %384 = arith.addf %380, %383 : vector<1x64xf32>
    %c2_458 = arith.constant 2 : index
    %c0_459 = arith.constant 0 : index
    %385 = vector.load %arg46[%c2_458, %c0_459] : memref<40x128xf32, #tpu.memory_space<vmem>>, vector<1x64xf32>
    %c128_460 = arith.constant 128 : index
    %c0_461 = arith.constant 0 : index
    %386 = vector.load %arg39[%c128_460, %c0_461] : memref<192x64xf32, #tpu.memory_space<vmem>>, vector<64x64xf32>
    %cst_462 = arith.constant dense<0.000000e+00> : vector<1x64xf32>
    %387 = tpu.matmul %385, %386, %cst_462 {dimension_numbers = #tpu.dot_dimension_numbers<[1], [0], [0], [1], [0, 0, 1, 1], [], []>} : vector<1x64xf32>, vector<64x64xf32>, vector<1x64xf32> -> vector<1x64xf32>
    %388 = arith.addf %384, %387 : vector<1x64xf32>
    %389 = arith.addf %388, %377 : vector<1x64xf32>
    %cst_463 = arith.constant 0.000000e+00 : f32
    %390 = vector.broadcast %cst_463 : f32 to vector<1x64xf32>
    %391 = arith.maximumf %389, %390 : vector<1x64xf32>
    %cst_464 = arith.constant 0.000000e+00 : f32
    %392 = vector.broadcast %cst_464 : f32 to vector<1x64xf32>
    %c0_465 = arith.constant 0 : index
    %c0_466 = arith.constant 0 : index
    %393 = vector.load %arg47[%c0_465, %c0_466] : memref<40x128xf32, #tpu.memory_space<vmem>>, vector<1x64xf32>
    tpu.vector_store %arg47[%c0_465, %c0_466], %392 {strides = array<i32>} : memref<40x128xf32, #tpu.memory_space<vmem>>, vector<1x64xf32>,
    %c2_467 = arith.constant 2 : index
    %c0_468 = arith.constant 0 : index
    %394 = vector.load %arg47[%c2_467, %c0_468] : memref<40x128xf32, #tpu.memory_space<vmem>>, vector<1x64xf32>
    tpu.vector_store %arg47[%c2_467, %c0_468], %392 {strides = array<i32>} : memref<40x128xf32, #tpu.memory_space<vmem>>, vector<1x64xf32>,
    %c1_469 = arith.constant 1 : index
    %c0_470 = arith.constant 0 : index
    %395 = vector.load %arg47[%c1_469, %c0_470] : memref<40x128xf32, #tpu.memory_space<vmem>>, vector<1x64xf32>
    tpu.vector_store %arg47[%c1_469, %c0_470], %391 {strides = array<i32>} : memref<40x128xf32, #tpu.memory_space<vmem>>, vector<1x64xf32>,
    %c0_471 = arith.constant 0 : index
    %c0_472 = arith.constant 0 : index
    %396 = vector.load %arg42[%c0_471, %c0_472] : memref<1x64xf32, #tpu.memory_space<vmem>>, vector<1x64xf32>
    %c0_473 = arith.constant 0 : index
    %c0_474 = arith.constant 0 : index
    %397 = vector.load %arg47[%c0_473, %c0_474] : memref<40x128xf32, #tpu.memory_space<vmem>>, vector<1x64xf32>
    %c0_475 = arith.constant 0 : index
    %c0_476 = arith.constant 0 : index
    %398 = vector.load %arg41[%c0_475, %c0_476] : memref<192x64xf32, #tpu.memory_space<vmem>>, vector<64x64xf32>
    %cst_477 = arith.constant dense<0.000000e+00> : vector<1x64xf32>
    %399 = tpu.matmul %397, %398, %cst_477 {dimension_numbers = #tpu.dot_dimension_numbers<[1], [0], [0], [1], [0, 0, 1, 1], [], []>} : vector<1x64xf32>, vector<64x64xf32>, vector<1x64xf32> -> vector<1x64xf32>
    %c1_478 = arith.constant 1 : index
    %c0_479 = arith.constant 0 : index
    %400 = vector.load %arg47[%c1_478, %c0_479] : memref<40x128xf32, #tpu.memory_space<vmem>>, vector<1x64xf32>
    %c64_480 = arith.constant 64 : index
    %c0_481 = arith.constant 0 : index
    %401 = vector.load %arg41[%c64_480, %c0_481] : memref<192x64xf32, #tpu.memory_space<vmem>>, vector<64x64xf32>
    %cst_482 = arith.constant dense<0.000000e+00> : vector<1x64xf32>
    %402 = tpu.matmul %400, %401, %cst_482 {dimension_numbers = #tpu.dot_dimension_numbers<[1], [0], [0], [1], [0, 0, 1, 1], [], []>} : vector<1x64xf32>, vector<64x64xf32>, vector<1x64xf32> -> vector<1x64xf32>
    %403 = arith.addf %399, %402 : vector<1x64xf32>
    %c2_483 = arith.constant 2 : index
    %c0_484 = arith.constant 0 : index
    %404 = vector.load %arg47[%c2_483, %c0_484] : memref<40x128xf32, #tpu.memory_space<vmem>>, vector<1x64xf32>
    %c128_485 = arith.constant 128 : index
    %c0_486 = arith.constant 0 : index
    %405 = vector.load %arg41[%c128_485, %c0_486] : memref<192x64xf32, #tpu.memory_space<vmem>>, vector<64x64xf32>
    %cst_487 = arith.constant dense<0.000000e+00> : vector<1x64xf32>
    %406 = tpu.matmul %404, %405, %cst_487 {dimension_numbers = #tpu.dot_dimension_numbers<[1], [0], [0], [1], [0, 0, 1, 1], [], []>} : vector<1x64xf32>, vector<64x64xf32>, vector<1x64xf32> -> vector<1x64xf32>
    %407 = arith.addf %403, %406 : vector<1x64xf32>
    %408 = arith.addf %407, %396 : vector<1x64xf32>
    %409 = arith.addf %408, %372 : vector<1x64xf32>
    %cst_488 = arith.constant 0.000000e+00 : f32
    %410 = vector.broadcast %cst_488 : f32 to vector<1x64xf32>
    %411 = arith.maximumf %409, %410 : vector<1x64xf32>
    %c0_489 = arith.constant 0 : index
    %c0_490 = arith.constant 0 : index
    %412 = vector.load %arg43[%c0_489, %c0_490] : memref<64x10xf32, #tpu.memory_space<vmem>>, vector<64x10xf32>
    %cst_491 = arith.constant dense<0.000000e+00> : vector<1x10xf32>
    %413 = tpu.matmul %411, %412, %cst_491 {dimension_numbers = #tpu.dot_dimension_numbers<[1], [0], [0], [1], [0, 0, 1, 1], [], []>} : vector<1x64xf32>, vector<64x10xf32>, vector<1x10xf32> -> vector<1x10xf32>
    %c0_492 = arith.constant 0 : index
    %c0_493 = arith.constant 0 : index
    %414 = vector.load %arg44[%c0_492, %c0_493] : memref<1x10xf32, #tpu.memory_space<vmem>>, vector<1x10xf32>
    %415 = arith.addf %413, %414 : vector<1x10xf32>
    %c0_494 = arith.constant 0 : index
    %c0_495 = arith.constant 0 : index
    %c0_496 = arith.constant 0 : index
    %416 = vector.load %arg45[%c0_494, %c0_495, %c0_496] : memref<1x1x10xf32, #tpu.memory_space<vmem>>, vector<1x1x10xf32>
    %417 = vector.shape_cast %416 : vector<1x1x10xf32> to vector<1x10xf32>
    %418 = vector.shape_cast %415 : vector<1x10xf32> to vector<1x1x10xf32>
    tpu.vector_store %arg45[%c0_494, %c0_495, %c0_496], %418 {strides = array<i32>} : memref<1x1x10xf32, #tpu.memory_space<vmem>>, vector<1x1x10xf32>,
    return
  }
  func.func @transform_0(%arg0: i32) -> (i32, i32, i32) {
    %c0_i32 = arith.constant 0 : i32
    %c0_i32_0 = arith.constant 0 : i32
    %c0_i32_1 = arith.constant 0 : i32
    return %arg0, %c0_i32, %c0_i32_0 : i32, i32, i32
  }
  func.func @transform_1(%arg0: i32) -> (i32, i32) {
    %c0_i32 = arith.constant 0 : i32
    %c0_i32_0 = arith.constant 0 : i32
    %c0_i32_1 = arith.constant 0 : i32
    return %c0_i32, %c0_i32_0 : i32, i32
  }
  func.func @transform_2(%arg0: i32) -> (i32, i32) {
    %c0_i32 = arith.constant 0 : i32
    %c0_i32_0 = arith.constant 0 : i32
    %c0_i32_1 = arith.constant 0 : i32
    return %c0_i32, %c0_i32_0 : i32, i32
  }
  func.func @transform_3(%arg0: i32) -> (i32, i32) {
    %c0_i32 = arith.constant 0 : i32
    %c0_i32_0 = arith.constant 0 : i32
    %c0_i32_1 = arith.constant 0 : i32
    return %c0_i32, %c0_i32_0 : i32, i32
  }
  func.func @transform_4(%arg0: i32) -> (i32, i32) {
    %c0_i32 = arith.constant 0 : i32
    %c0_i32_0 = arith.constant 0 : i32
    %c0_i32_1 = arith.constant 0 : i32
    return %c0_i32, %c0_i32_0 : i32, i32
  }
  func.func @transform_5(%arg0: i32) -> (i32, i32) {
    %c0_i32 = arith.constant 0 : i32
    %c0_i32_0 = arith.constant 0 : i32
    %c0_i32_1 = arith.constant 0 : i32
    return %c0_i32, %c0_i32_0 : i32, i32
  }
  func.func @transform_6(%arg0: i32) -> (i32, i32) {
    %c0_i32 = arith.constant 0 : i32
    %c0_i32_0 = arith.constant 0 : i32
    %c0_i32_1 = arith.constant 0 : i32
    return %c0_i32, %c0_i32_0 : i32, i32
  }
  func.func @transform_7(%arg0: i32) -> (i32, i32) {
    %c0_i32 = arith.constant 0 : i32
    %c0_i32_0 = arith.constant 0 : i32
    %c0_i32_1 = arith.constant 0 : i32
    return %c0_i32, %c0_i32_0 : i32, i32
  }
  func.func @transform_8(%arg0: i32) -> (i32, i32) {
    %c0_i32 = arith.constant 0 : i32
    %c0_i32_0 = arith.constant 0 : i32
    %c0_i32_1 = arith.constant 0 : i32
    return %c0_i32, %c0_i32_0 : i32, i32
  }
  func.func @transform_9(%arg0: i32) -> (i32, i32) {
    %c0_i32 = arith.constant 0 : i32
    %c0_i32_0 = arith.constant 0 : i32
    %c0_i32_1 = arith.constant 0 : i32
    return %c0_i32, %c0_i32_0 : i32, i32
  }
  func.func @transform_10(%arg0: i32) -> (i32, i32) {
    %c0_i32 = arith.constant 0 : i32
    %c0_i32_0 = arith.constant 0 : i32
    %c0_i32_1 = arith.constant 0 : i32
    return %c0_i32, %c0_i32_0 : i32, i32
  }
  func.func @transform_11(%arg0: i32) -> (i32, i32) {
    %c0_i32 = arith.constant 0 : i32
    %c0_i32_0 = arith.constant 0 : i32
    %c0_i32_1 = arith.constant 0 : i32
    return %c0_i32, %c0_i32_0 : i32, i32
  }
  func.func @transform_12(%arg0: i32) -> (i32, i32) {
    %c0_i32 = arith.constant 0 : i32
    %c0_i32_0 = arith.constant 0 : i32
    %c0_i32_1 = arith.constant 0 : i32
    return %c0_i32, %c0_i32_0 : i32, i32
  }
  func.func @transform_13(%arg0: i32) -> (i32, i32) {
    %c0_i32 = arith.constant 0 : i32
    %c0_i32_0 = arith.constant 0 : i32
    %c0_i32_1 = arith.constant 0 : i32
    return %c0_i32, %c0_i32_0 : i32, i32
  }
  func.func @transform_14(%arg0: i32) -> (i32, i32) {
    %c0_i32 = arith.constant 0 : i32
    %c0_i32_0 = arith.constant 0 : i32
    %c0_i32_1 = arith.constant 0 : i32
    return %c0_i32, %c0_i32_0 : i32, i32
  }
  func.func @transform_15(%arg0: i32) -> (i32, i32) {
    %c0_i32 = arith.constant 0 : i32
    %c0_i32_0 = arith.constant 0 : i32
    %c0_i32_1 = arith.constant 0 : i32
    return %c0_i32, %c0_i32_0 : i32, i32
  }
  func.func @transform_16(%arg0: i32) -> (i32, i32) {
    %c0_i32 = arith.constant 0 : i32
    %c0_i32_0 = arith.constant 0 : i32
    %c0_i32_1 = arith.constant 0 : i32
    return %c0_i32, %c0_i32_0 : i32, i32
  }
  func.func @transform_17(%arg0: i32) -> (i32, i32) {
    %c0_i32 = arith.constant 0 : i32
    %c0_i32_0 = arith.constant 0 : i32
    %c0_i32_1 = arith.constant 0 : i32
    return %c0_i32, %c0_i32_0 : i32, i32
  }
  func.func @transform_18(%arg0: i32) -> (i32, i32) {
    %c0_i32 = arith.constant 0 : i32
    %c0_i32_0 = arith.constant 0 : i32
    %c0_i32_1 = arith.constant 0 : i32
    return %c0_i32, %c0_i32_0 : i32, i32
  }
  func.func @transform_19(%arg0: i32) -> (i32, i32) {
    %c0_i32 = arith.constant 0 : i32
    %c0_i32_0 = arith.constant 0 : i32
    %c0_i32_1 = arith.constant 0 : i32
    return %c0_i32, %c0_i32_0 : i32, i32
  }
  func.func @transform_20(%arg0: i32) -> (i32, i32) {
    %c0_i32 = arith.constant 0 : i32
    %c0_i32_0 = arith.constant 0 : i32
    %c0_i32_1 = arith.constant 0 : i32
    return %c0_i32, %c0_i32_0 : i32, i32
  }
  func.func @transform_21(%arg0: i32) -> (i32, i32) {
    %c0_i32 = arith.constant 0 : i32
    %c0_i32_0 = arith.constant 0 : i32
    %c0_i32_1 = arith.constant 0 : i32
    return %c0_i32, %c0_i32_0 : i32, i32
  }
  func.func @transform_22(%arg0: i32) -> (i32, i32) {
    %c0_i32 = arith.constant 0 : i32
    %c0_i32_0 = arith.constant 0 : i32
    %c0_i32_1 = arith.constant 0 : i32
    return %c0_i32, %c0_i32_0 : i32, i32
  }
  func.func @transform_23(%arg0: i32) -> (i32, i32) {
    %c0_i32 = arith.constant 0 : i32
    %c0_i32_0 = arith.constant 0 : i32
    %c0_i32_1 = arith.constant 0 : i32
    return %c0_i32, %c0_i32_0 : i32, i32
  }
  func.func @transform_24(%arg0: i32) -> (i32, i32) {
    %c0_i32 = arith.constant 0 : i32
    %c0_i32_0 = arith.constant 0 : i32
    %c0_i32_1 = arith.constant 0 : i32
    return %c0_i32, %c0_i32_0 : i32, i32
  }
  func.func @transform_25(%arg0: i32) -> (i32, i32) {
    %c0_i32 = arith.constant 0 : i32
    %c0_i32_0 = arith.constant 0 : i32
    %c0_i32_1 = arith.constant 0 : i32
    return %c0_i32, %c0_i32_0 : i32, i32
  }
  func.func @transform_26(%arg0: i32) -> (i32, i32) {
    %c0_i32 = arith.constant 0 : i32
    %c0_i32_0 = arith.constant 0 : i32
    %c0_i32_1 = arith.constant 0 : i32
    return %c0_i32, %c0_i32_0 : i32, i32
  }
  func.func @transform_27(%arg0: i32) -> (i32, i32) {
    %c0_i32 = arith.constant 0 : i32
    %c0_i32_0 = arith.constant 0 : i32
    %c0_i32_1 = arith.constant 0 : i32
    return %c0_i32, %c0_i32_0 : i32, i32
  }
  func.func @transform_28(%arg0: i32) -> (i32, i32) {
    %c0_i32 = arith.constant 0 : i32
    %c0_i32_0 = arith.constant 0 : i32
    %c0_i32_1 = arith.constant 0 : i32
    return %c0_i32, %c0_i32_0 : i32, i32
  }
  func.func @transform_29(%arg0: i32) -> (i32, i32) {
    %c0_i32 = arith.constant 0 : i32
    %c0_i32_0 = arith.constant 0 : i32
    %c0_i32_1 = arith.constant 0 : i32
    return %c0_i32, %c0_i32_0 : i32, i32
  }
  func.func @transform_30(%arg0: i32) -> (i32, i32) {
    %c0_i32 = arith.constant 0 : i32
    %c0_i32_0 = arith.constant 0 : i32
    %c0_i32_1 = arith.constant 0 : i32
    return %c0_i32, %c0_i32_0 : i32, i32
  }
  func.func @transform_31(%arg0: i32) -> (i32, i32) {
    %c0_i32 = arith.constant 0 : i32
    %c0_i32_0 = arith.constant 0 : i32
    %c0_i32_1 = arith.constant 0 : i32
    return %c0_i32, %c0_i32_0 : i32, i32
  }
  func.func @transform_32(%arg0: i32) -> (i32, i32) {
    %c0_i32 = arith.constant 0 : i32
    %c0_i32_0 = arith.constant 0 : i32
    %c0_i32_1 = arith.constant 0 : i32
    return %c0_i32, %c0_i32_0 : i32, i32
  }
  func.func @transform_33(%arg0: i32) -> (i32, i32) {
    %c0_i32 = arith.constant 0 : i32
    %c0_i32_0 = arith.constant 0 : i32
    %c0_i32_1 = arith.constant 0 : i32
    return %c0_i32, %c0_i32_0 : i32, i32
  }
  func.func @transform_34(%arg0: i32) -> (i32, i32) {
    %c0_i32 = arith.constant 0 : i32
    %c0_i32_0 = arith.constant 0 : i32
    %c0_i32_1 = arith.constant 0 : i32
    return %c0_i32, %c0_i32_0 : i32, i32
  }
  func.func @transform_35(%arg0: i32) -> (i32, i32) {
    %c0_i32 = arith.constant 0 : i32
    %c0_i32_0 = arith.constant 0 : i32
    %c0_i32_1 = arith.constant 0 : i32
    return %c0_i32, %c0_i32_0 : i32, i32
  }
  func.func @transform_36(%arg0: i32) -> (i32, i32) {
    %c0_i32 = arith.constant 0 : i32
    %c0_i32_0 = arith.constant 0 : i32
    %c0_i32_1 = arith.constant 0 : i32
    return %c0_i32, %c0_i32_0 : i32, i32
  }
  func.func @transform_37(%arg0: i32) -> (i32, i32) {
    %c0_i32 = arith.constant 0 : i32
    %c0_i32_0 = arith.constant 0 : i32
    %c0_i32_1 = arith.constant 0 : i32
    return %c0_i32, %c0_i32_0 : i32, i32
  }
  func.func @transform_38(%arg0: i32) -> (i32, i32) {
    %c0_i32 = arith.constant 0 : i32
    %c0_i32_0 = arith.constant 0 : i32
    %c0_i32_1 = arith.constant 0 : i32
    return %c0_i32, %c0_i32_0 : i32, i32
  }
  func.func @transform_39(%arg0: i32) -> (i32, i32) {
    %c0_i32 = arith.constant 0 : i32
    %c0_i32_0 = arith.constant 0 : i32
    %c0_i32_1 = arith.constant 0 : i32
    return %c0_i32, %c0_i32_0 : i32, i32
  }
  func.func @transform_40(%arg0: i32) -> (i32, i32) {
    %c0_i32 = arith.constant 0 : i32
    %c0_i32_0 = arith.constant 0 : i32
    %c0_i32_1 = arith.constant 0 : i32
    return %c0_i32, %c0_i32_0 : i32, i32
  }
  func.func @transform_41(%arg0: i32) -> (i32, i32) {
    %c0_i32 = arith.constant 0 : i32
    %c0_i32_0 = arith.constant 0 : i32
    %c0_i32_1 = arith.constant 0 : i32
    return %c0_i32, %c0_i32_0 : i32, i32
  }
  func.func @transform_42(%arg0: i32) -> (i32, i32) {
    %c0_i32 = arith.constant 0 : i32
    %c0_i32_0 = arith.constant 0 : i32
    %c0_i32_1 = arith.constant 0 : i32
    return %c0_i32, %c0_i32_0 : i32, i32
  }
  func.func @transform_43(%arg0: i32) -> (i32, i32) {
    %c0_i32 = arith.constant 0 : i32
    %c0_i32_0 = arith.constant 0 : i32
    %c0_i32_1 = arith.constant 0 : i32
    return %c0_i32, %c0_i32_0 : i32, i32
  }
  func.func @transform_44(%arg0: i32) -> (i32, i32, i32) {
    %c0_i32 = arith.constant 0 : i32
    %c0_i32_0 = arith.constant 0 : i32
    %c0_i32_1 = arith.constant 0 : i32
    return %arg0, %c0_i32, %c0_i32_0 : i32, i32, i32
  }
}

</mosaic_0001>

<llo_original>
// kernel: _lambda_.1
$region0: #{_lambda_.1}
  #allocation0 [shape = 'u32[]', space=smem, size = 0x4, offset = 0x4, fixed_abs, tag = 'smem constant byte address 0x4 - core index']
  #allocation1 [shape = 'u32[144,128]{1,0:T(1,128)}', space=vmem, size = 0x12000, scoped, tag = 'internal scratch']
  #allocation2 [shape = 'f32[40,128]{1,0:T(8,128)}', space=vmem, size = 0x5000, scoped, tag = 'scratch operand']
  #allocation3 [shape = 'f32[40,128]{1,0:T(8,128)}', space=vmem, size = 0x5000, scoped, tag = 'scratch operand']
  %s0 = inlined_call_operand.smem [shape: u32[45], index: -1, kind: input, shape index: {}]
  %s1 = sld [smem:[%s0]]
  %s2 = scalar_lea.smem %s0, 1
  %s3 = sld [smem:[%s2]]
  %s4 = scalar_lea.smem %s0, 2
  %s5 = sld [smem:[%s4]]
  %s6 = scalar_lea.smem %s0, 3
  %s7 = sld [smem:[%s6]]
  %s8 = scalar_lea.smem %s0, 4
  %s9 = sld [smem:[%s8]]
  %s10 = scalar_lea.smem %s0, 5
  %s11 = sld [smem:[%s10]]
  %s12 = scalar_lea.smem %s0, 6
  %s13 = sld [smem:[%s12]]
  %s14 = scalar_lea.smem %s0, 7
  %s15 = sld [smem:[%s14]]
  %s16 = scalar_lea.smem %s0, 8
  %s17 = sld [smem:[%s16]]
  %s18 = scalar_lea.smem %s0, 9
  %s19 = sld [smem:[%s18]]
  %s20 = scalar_lea.smem %s0, 10
  %s21 = sld [smem:[%s20]]
  %s22 = scalar_lea.smem %s0, 11
  %s23 = sld [smem:[%s22]]
  %s24 = scalar_lea.smem %s0, 12
  %s25 = sld [smem:[%s24]]
  %s26 = scalar_lea.smem %s0, 13
  %s27 = sld [smem:[%s26]]
  %s28 = scalar_lea.smem %s0, 14
  %s29 = sld [smem:[%s28]]
  %s30 = scalar_lea.smem %s0, 15
  %s31 = sld [smem:[%s30]]
  %s32 = scalar_lea.smem %s0, 16
  %s33 = sld [smem:[%s32]]
  %s34 = scalar_lea.smem %s0, 17
  %s35 = sld [smem:[%s34]]
  %s36 = scalar_lea.smem %s0, 18
  %s37 = sld [smem:[%s36]]
  %s38 = scalar_lea.smem %s0, 19
  %s39 = sld [smem:[%s38]]
  %s40 = scalar_lea.smem %s0, 20
  %s41 = sld [smem:[%s40]]
  %s42 = scalar_lea.smem %s0, 21
  %s43 = sld [smem:[%s42]]
  %s44 = scalar_lea.smem %s0, 22
  %s45 = sld [smem:[%s44]]
  %s46 = scalar_lea.smem %s0, 23
  %s47 = sld [smem:[%s46]]
  %s48 = scalar_lea.smem %s0, 24
  %s49 = sld [smem:[%s48]]
  %s50 = scalar_lea.smem %s0, 25
  %s51 = sld [smem:[%s50]]
  %s52 = scalar_lea.smem %s0, 26
  %s53 = sld [smem:[%s52]]
  %s54 = scalar_lea.smem %s0, 27
  %s55 = sld [smem:[%s54]]
  %s56 = scalar_lea.smem %s0, 28
  %s57 = sld [smem:[%s56]]
  %s58 = scalar_lea.smem %s0, 29
  %s59 = sld [smem:[%s58]]
  %s60 = scalar_lea.smem %s0, 30
  %s61 = sld [smem:[%s60]]
  %s62 = scalar_lea.smem %s0, 31
  %s63 = sld [smem:[%s62]]
  %s64 = scalar_lea.smem %s0, 32
  %s65 = sld [smem:[%s64]]
  %s66 = scalar_lea.smem %s0, 33
  %s67 = sld [smem:[%s66]]
  %s68 = scalar_lea.smem %s0, 34
  %s69 = sld [smem:[%s68]]
  %s70 = scalar_lea.smem %s0, 35
  %s71 = sld [smem:[%s70]]
  %s72 = scalar_lea.smem %s0, 36
  %s73 = sld [smem:[%s72]]
  %s74 = scalar_lea.smem %s0, 37
  %s75 = sld [smem:[%s74]]
  %s76 = scalar_lea.smem %s0, 38
  %s77 = sld [smem:[%s76]]
  %s78 = scalar_lea.smem %s0, 39
  %s79 = sld [smem:[%s78]]
  %s80 = scalar_lea.smem %s0, 40
  %s81 = sld [smem:[%s80]]
  %s82 = scalar_lea.smem %s0, 41
  %s83 = sld [smem:[%s82]]
  %s84 = scalar_lea.smem %s0, 42
  %s85 = sld [smem:[%s84]]
  %s86 = scalar_lea.smem %s0, 43
  %s87 = sld [smem:[%s86]]
  %s88 = scalar_lea.smem %s0, 44
  %s89 = sld [smem:[%s88]]
  %s90 = sld [smem:[#allocation0]]
  $region209: #{_lambda_.1} parent=0
    _
  %s92 = ssub.s32 1, %s90
  %s93 = scalar_select 0, %s92, %s90
  $region1: #{_lambda_.1} parent=0
    #allocation4 [shape = 'u8[1024]{0}', space=vmem, size = 0x400, scoped, tag = 'output window, operand 0']
    #allocation5 [shape = 's32[2]{0}', space=sflag, size = 0x8, scoped, tag = 'scoped memory for _lambda_.1']
    %94 = vsyncpa [#allocation5], 0
    %s95 = scalar_lea.sflag [#allocation5], 1
    %96 = vsyncpa %s95, 0
    loop: start=0, step=1, limit=4
    $region2: #{_lambda_.1} parent=1 // loop_pre_header
      _
    $region3: #{_lambda_.1} parent=1 // loop_header
      %s98 = sphi 0, %s102
      %p99 = scmp.ge.s32.totalorder %s98, 4
      %s108 = sphi 0, %s110
      %s111 = sphi 0, %s108
      %s112 = sphi 0, %s111
      %s128 = sphi 0, %s112
      %s132 = sphi 0, %s132
      %s134 = sphi 0, %s132
      %s135 = sphi 0, %s134
      %s149 = sphi 0, %s135
      %s153 = sphi 0, %s153
      %s155 = sphi 0, %s153
      %s156 = sphi 0, %s155
      %s170 = sphi 0, %s156
      %s174 = sphi 0, %s174
      %s176 = sphi 0, %s174
      %s177 = sphi 0, %s176
      %s191 = sphi 0, %s177
      %s195 = sphi 0, %s195
      %s197 = sphi 0, %s195
      %s198 = sphi 0, %s197
      %s212 = sphi 0, %s198
      %s216 = sphi 0, %s216
      %s218 = sphi 0, %s216
      %s219 = sphi 0, %s218
      %s233 = sphi 0, %s219
      %s237 = sphi 0, %s237
      %s239 = sphi 0, %s237
      %s240 = sphi 0, %s239
      %s254 = sphi 0, %s240
      %s258 = sphi 0, %s258
      %s260 = sphi 0, %s258
      %s261 = sphi 0, %s260
      %s275 = sphi 0, %s261
      %s279 = sphi 0, %s279
      %s281 = sphi 0, %s279
      %s282 = sphi 0, %s281
      %s296 = sphi 0, %s282
      %s300 = sphi 0, %s300
      %s302 = sphi 0, %s300
      %s303 = sphi 0, %s302
      %s317 = sphi 0, %s303
      %s321 = sphi 0, %s321
      %s323 = sphi 0, %s321
      %s324 = sphi 0, %s323
      %s338 = sphi 0, %s324
      %s342 = sphi 0, %s342
      %s344 = sphi 0, %s342
      %s345 = sphi 0, %s344
      %s359 = sphi 0, %s345
      %s363 = sphi 0, %s363
      %s365 = sphi 0, %s363
      %s366 = sphi 0, %s365
      %s380 = sphi 0, %s366
      %s384 = sphi 0, %s384
      %s386 = sphi 0, %s384
      %s387 = sphi 0, %s386
      %s401 = sphi 0, %s387
      %s405 = sphi 0, %s405
      %s407 = sphi 0, %s405
      %s408 = sphi 0, %s407
      %s422 = sphi 0, %s408
      %s426 = sphi 0, %s426
      %s428 = sphi 0, %s426
      %s429 = sphi 0, %s428
      %s443 = sphi 0, %s429
      %s447 = sphi 0, %s447
      %s449 = sphi 0, %s447
      %s450 = sphi 0, %s449
      %s464 = sphi 0, %s450
      %s468 = sphi 0, %s468
      %s470 = sphi 0, %s468
      %s471 = sphi 0, %s470
      %s485 = sphi 0, %s471
      %s489 = sphi 0, %s489
      %s491 = sphi 0, %s489
      %s492 = sphi 0, %s491
      %s506 = sphi 0, %s492
      %s510 = sphi 0, %s510
      %s512 = sphi 0, %s510
      %s513 = sphi 0, %s512
      %s527 = sphi 0, %s513
      %s531 = sphi 0, %s531
      %s533 = sphi 0, %s531
      %s534 = sphi 0, %s533
      %s548 = sphi 0, %s534
      %s552 = sphi 0, %s552
      %s554 = sphi 0, %s552
      %s555 = sphi 0, %s554
      %s569 = sphi 0, %s555
      %s573 = sphi 0, %s573
      %s575 = sphi 0, %s573
      %s576 = sphi 0, %s575
      %s590 = sphi 0, %s576
      %s594 = sphi 0, %s594
      %s596 = sphi 0, %s594
      %s597 = sphi 0, %s596
      %s611 = sphi 0, %s597
      %s615 = sphi 0, %s615
      %s617 = sphi 0, %s615
      %s618 = sphi 0, %s617
      %s632 = sphi 0, %s618
      %s636 = sphi 0, %s636
      %s638 = sphi 0, %s636
      %s639 = sphi 0, %s638
      %s653 = sphi 0, %s639
      %s657 = sphi 0, %s657
      %s659 = sphi 0, %s657
      %s660 = sphi 0, %s659
      %s674 = sphi 0, %s660
      %s678 = sphi 0, %s678
      %s680 = sphi 0, %s678
      %s681 = sphi 0, %s680
      %s695 = sphi 0, %s681
      %s699 = sphi 0, %s699
      %s701 = sphi 0, %s699
      %s702 = sphi 0, %s701
      %s716 = sphi 0, %s702
      %s720 = sphi 0, %s720
      %s722 = sphi 0, %s720
      %s723 = sphi 0, %s722
      %s737 = sphi 0, %s723
      %s741 = sphi 0, %s741
      %s743 = sphi 0, %s741
      %s744 = sphi 0, %s743
      %s758 = sphi 0, %s744
      %s762 = sphi 0, %s762
      %s764 = sphi 0, %s762
      %s765 = sphi 0, %s764
      %s779 = sphi 0, %s765
      %s783 = sphi 0, %s783
      %s785 = sphi 0, %s783
      %s786 = sphi 0, %s785
      %s800 = sphi 0, %s786
      %s804 = sphi 0, %s804
      %s806 = sphi 0, %s804
      %s807 = sphi 0, %s806
      %s821 = sphi 0, %s807
      %s825 = sphi 0, %s825
      %s827 = sphi 0, %s825
      %s828 = sphi 0, %s827
      %s842 = sphi 0, %s828
      %s846 = sphi 0, %s846
      %s848 = sphi 0, %s846
      %s849 = sphi 0, %s848
      %s863 = sphi 0, %s849
      %s867 = sphi 0, %s867
      %s869 = sphi 0, %s867
      %s870 = sphi 0, %s869
      %s884 = sphi 0, %s870
      %s888 = sphi 0, %s888
      %s890 = sphi 0, %s888
      %s891 = sphi 0, %s890
      %s905 = sphi 0, %s891
      %s909 = sphi 0, %s909
      %s911 = sphi 0, %s909
      %s912 = sphi 0, %s911
      %s926 = sphi 0, %s912
      %s930 = sphi 0, %s930
      %s932 = sphi 0, %s930
      %s933 = sphi 0, %s932
      %s947 = sphi 0, %s933
      %s951 = sphi 0, %s951
      %s953 = sphi 0, %s951
      %s954 = sphi 0, %s953
      %s968 = sphi 0, %s954
      %s972 = sphi 0, %s972
      %s974 = sphi 0, %s972
      %s975 = sphi 0, %s974
      %s989 = sphi 0, %s975
      %s993 = sphi 0, %s993
      %s995 = sphi 0, %s993
      %s996 = sphi 0, %s995
      %s1010 = sphi 0, %s996
      %s1014 = sphi 0, %s1014
      %s1016 = sphi 0, %s1014
      %s1017 = sphi 0, %s1016
      %s1031 = sphi 0, %s1017
      %s1037 = sphi 0, %s1039
      %s1040 = sphi 0, %s1037
      %s1041 = sphi 0, %s1040
      %s1057 = sphi 0, %s1041
    $region4: #{_lambda_.1} parent=1 // loop_header_branch
      %101 = sbr.rel (%p99) target = $region8
    $region5: #{_lambda_.1} parent=1 // loop_body
      %s103 = ssub.s32 %s98, 1
      %s104 = ssub.s32 %s98, 2
      %s105 = sadd.s32 %s98, 1
      %s106 = ssub.s32 %s98, %s105
      %p107 = scmp.eq.s32.totalorder %s106, 0
      %s109 = sadd.s32 %s108, 1
      %s110 = scalar_select %p107, %s108, %s109
      %p113 = pneg %p107
      %p114 = scmp.eq.s32.totalorder %s98, 1
      %p115 = por %p113, %p114
      %p116 = scmp.ne.s32.totalorder %s108, %s111
      %p117 = scmp.eq.s32.totalorder %s98, 0
      %p118 = por %p116, %p117
      %p119 = scmp.ne.s32.totalorder %s108, %s111
      %p120 = scmp.eq.s32.totalorder %s103, 1
      %p121 = por %p119, %p120
      %p122 = scmp.ne.s32.totalorder %s111, %s112
      %p123 = scmp.eq.s32.totalorder %s103, 0
      %p124 = por %p122, %p123
      %p125 = scmp.ne.s32.totalorder %s111, %s112
      %p126 = scmp.eq.s32.totalorder %s104, 1
      %p127 = por %p125, %p126
      %p129 = scmp.ne.s32.totalorder %s112, %s128
      %p130 = scmp.eq.s32.totalorder %s104, 0
      %p131 = por %p129, %p130
      %s133 = sadd.s32 %s132, 1
      %p136 = scmp.eq.s32.totalorder %s98, 1
      %p137 = scmp.ne.s32.totalorder %s132, %s134
      %p138 = scmp.eq.s32.totalorder %s98, 0
      %p139 = por %p137, %p138
      %p140 = scmp.ne.s32.totalorder %s132, %s134
      %p141 = scmp.eq.s32.totalorder %s103, 1
      %p142 = por %p140, %p141
      %p143 = scmp.ne.s32.totalorder %s134, %s135
      %p144 = scmp.eq.s32.totalorder %s103, 0
      %p145 = por %p143, %p144
      %p146 = scmp.ne.s32.totalorder %s134, %s135
      %p147 = scmp.eq.s32.totalorder %s104, 1
      %p148 = por %p146, %p147
      %p150 = scmp.ne.s32.totalorder %s135, %s149
      %p151 = scmp.eq.s32.totalorder %s104, 0
      %p152 = por %p150, %p151
      %s154 = sadd.s32 %s153, 1
      %p157 = scmp.eq.s32.totalorder %s98, 1
      %p158 = scmp.ne.s32.totalorder %s153, %s155
      %p159 = scmp.eq.s32.totalorder %s98, 0
      %p160 = por %p158, %p159
      %p161 = scmp.ne.s32.totalorder %s153, %s155
      %p162 = scmp.eq.s32.totalorder %s103, 1
      %p163 = por %p161, %p162
      %p164 = scmp.ne.s32.totalorder %s155, %s156
      %p165 = scmp.eq.s32.totalorder %s103, 0
      %p166 = por %p164, %p165
      %p167 = scmp.ne.s32.totalorder %s155, %s156
      %p168 = scmp.eq.s32.totalorder %s104, 1
      %p169 = por %p167, %p168
      %p171 = scmp.ne.s32.totalorder %s156, %s170
      %p172 = scmp.eq.s32.totalorder %s104, 0
      %p173 = por %p171, %p172
      %s175 = sadd.s32 %s174, 1
      %p178 = scmp.eq.s32.totalorder %s98, 1
      %p179 = scmp.ne.s32.totalorder %s174, %s176
      %p180 = scmp.eq.s32.totalorder %s98, 0
      %p181 = por %p179, %p180
      %p182 = scmp.ne.s32.totalorder %s174, %s176
      %p183 = scmp.eq.s32.totalorder %s103, 1
      %p184 = por %p182, %p183
      %p185 = scmp.ne.s32.totalorder %s176, %s177
      %p186 = scmp.eq.s32.totalorder %s103, 0
      %p187 = por %p185, %p186
      %p188 = scmp.ne.s32.totalorder %s176, %s177
      %p189 = scmp.eq.s32.totalorder %s104, 1
      %p190 = por %p188, %p189
      %p192 = scmp.ne.s32.totalorder %s177, %s191
      %p193 = scmp.eq.s32.totalorder %s104, 0
      %p194 = por %p192, %p193
      %s196 = sadd.s32 %s195, 1
      %p199 = scmp.eq.s32.totalorder %s98, 1
      %p200 = scmp.ne.s32.totalorder %s195, %s197
      %p201 = scmp.eq.s32.totalorder %s98, 0
      %p202 = por %p200, %p201
      %p203 = scmp.ne.s32.totalorder %s195, %s197
      %p204 = scmp.eq.s32.totalorder %s103, 1
      %p205 = por %p203, %p204
      %p206 = scmp.ne.s32.totalorder %s197, %s198
      %p207 = scmp.eq.s32.totalorder %s103, 0
      %p208 = por %p206, %p207
      %p209 = scmp.ne.s32.totalorder %s197, %s198
      %p210 = scmp.eq.s32.totalorder %s104, 1
      %p211 = por %p209, %p210
      %p213 = scmp.ne.s32.totalorder %s198, %s212
      %p214 = scmp.eq.s32.totalorder %s104, 0
      %p215 = por %p213, %p214
      %s217 = sadd.s32 %s216, 1
      %p220 = scmp.eq.s32.totalorder %s98, 1
      %p221 = scmp.ne.s32.totalorder %s216, %s218
      %p222 = scmp.eq.s32.totalorder %s98, 0
      %p223 = por %p221, %p222
      %p224 = scmp.ne.s32.totalorder %s216, %s218
      %p225 = scmp.eq.s32.totalorder %s103, 1
      %p226 = por %p224, %p225
      %p227 = scmp.ne.s32.totalorder %s218, %s219
      %p228 = scmp.eq.s32.totalorder %s103, 0
      %p229 = por %p227, %p228
      %p230 = scmp.ne.s32.totalorder %s218, %s219
      %p231 = scmp.eq.s32.totalorder %s104, 1
      %p232 = por %p230, %p231
      %p234 = scmp.ne.s32.totalorder %s219, %s233
      %p235 = scmp.eq.s32.totalorder %s104, 0
      %p236 = por %p234, %p235
      %s238 = sadd.s32 %s237, 1
      %p241 = scmp.eq.s32.totalorder %s98, 1
      %p242 = scmp.ne.s32.totalorder %s237, %s239
      %p243 = scmp.eq.s32.totalorder %s98, 0
      %p244 = por %p242, %p243
      %p245 = scmp.ne.s32.totalorder %s237, %s239
      %p246 = scmp.eq.s32.totalorder %s103, 1
      %p247 = por %p245, %p246
      %p248 = scmp.ne.s32.totalorder %s239, %s240
      %p249 = scmp.eq.s32.totalorder %s103, 0
      %p250 = por %p248, %p249
      %p251 = scmp.ne.s32.totalorder %s239, %s240
      %p252 = scmp.eq.s32.totalorder %s104, 1
      %p253 = por %p251, %p252
      %p255 = scmp.ne.s32.totalorder %s240, %s254
      %p256 = scmp.eq.s32.totalorder %s104, 0
      %p257 = por %p255, %p256
      %s259 = sadd.s32 %s258, 1
      %p262 = scmp.eq.s32.totalorder %s98, 1
      %p263 = scmp.ne.s32.totalorder %s258, %s260
      %p264 = scmp.eq.s32.totalorder %s98, 0
      %p265 = por %p263, %p264
      %p266 = scmp.ne.s32.totalorder %s258, %s260
      %p267 = scmp.eq.s32.totalorder %s103, 1
      %p268 = por %p266, %p267
      %p269 = scmp.ne.s32.totalorder %s260, %s261
      %p270 = scmp.eq.s32.totalorder %s103, 0
      %p271 = por %p269, %p270
      %p272 = scmp.ne.s32.totalorder %s260, %s261
      %p273 = scmp.eq.s32.totalorder %s104, 1
      %p274 = por %p272, %p273
      %p276 = scmp.ne.s32.totalorder %s261, %s275
      %p277 = scmp.eq.s32.totalorder %s104, 0
      %p278 = por %p276, %p277
      %s280 = sadd.s32 %s279, 1
      %p283 = scmp.eq.s32.totalorder %s98, 1
      %p284 = scmp.ne.s32.totalorder %s279, %s281
      %p285 = scmp.eq.s32.totalorder %s98, 0
      %p286 = por %p284, %p285
      %p287 = scmp.ne.s32.totalorder %s279, %s281
      %p288 = scmp.eq.s32.totalorder %s103, 1
      %p289 = por %p287, %p288
      %p290 = scmp.ne.s32.totalorder %s281, %s282
      %p291 = scmp.eq.s32.totalorder %s103, 0
      %p292 = por %p290, %p291
      %p293 = scmp.ne.s32.totalorder %s281, %s282
      %p294 = scmp.eq.s32.totalorder %s104, 1
      %p295 = por %p293, %p294
      %p297 = scmp.ne.s32.totalorder %s282, %s296
      %p298 = scmp.eq.s32.totalorder %s104, 0
      %p299 = por %p297, %p298
      %s301 = sadd.s32 %s300, 1
      %p304 = scmp.eq.s32.totalorder %s98, 1
      %p305 = scmp.ne.s32.totalorder %s300, %s302
      %p306 = scmp.eq.s32.totalorder %s98, 0
      %p307 = por %p305, %p306
      %p308 = scmp.ne.s32.totalorder %s300, %s302
      %p309 = scmp.eq.s32.totalorder %s103, 1
      %p310 = por %p308, %p309
      %p311 = scmp.ne.s32.totalorder %s302, %s303
      %p312 = scmp.eq.s32.totalorder %s103, 0
      %p313 = por %p311, %p312
      %p314 = scmp.ne.s32.totalorder %s302, %s303
      %p315 = scmp.eq.s32.totalorder %s104, 1
      %p316 = por %p314, %p315
      %p318 = scmp.ne.s32.totalorder %s303, %s317
      %p319 = scmp.eq.s32.totalorder %s104, 0
      %p320 = por %p318, %p319
      %s322 = sadd.s32 %s321, 1
      %p325 = scmp.eq.s32.totalorder %s98, 1
      %p326 = scmp.ne.s32.totalorder %s321, %s323
      %p327 = scmp.eq.s32.totalorder %s98, 0
      %p328 = por %p326, %p327
      %p329 = scmp.ne.s32.totalorder %s321, %s323
      %p330 = scmp.eq.s32.totalorder %s103, 1
      %p331 = por %p329, %p330
      %p332 = scmp.ne.s32.totalorder %s323, %s324
      %p333 = scmp.eq.s32.totalorder %s103, 0
      %p334 = por %p332, %p333
      %p335 = scmp.ne.s32.totalorder %s323, %s324
      %p336 = scmp.eq.s32.totalorder %s104, 1
      %p337 = por %p335, %p336
      %p339 = scmp.ne.s32.totalorder %s324, %s338
      %p340 = scmp.eq.s32.totalorder %s104, 0
      %p341 = por %p339, %p340
      %s343 = sadd.s32 %s342, 1
      %p346 = scmp.eq.s32.totalorder %s98, 1
      %p347 = scmp.ne.s32.totalorder %s342, %s344
      %p348 = scmp.eq.s32.totalorder %s98, 0
      %p349 = por %p347, %p348
      %p350 = scmp.ne.s32.totalorder %s342, %s344
      %p351 = scmp.eq.s32.totalorder %s103, 1
      %p352 = por %p350, %p351
      %p353 = scmp.ne.s32.totalorder %s344, %s345
      %p354 = scmp.eq.s32.totalorder %s103, 0
      %p355 = por %p353, %p354
      %p356 = scmp.ne.s32.totalorder %s344, %s345
      %p357 = scmp.eq.s32.totalorder %s104, 1
      %p358 = por %p356, %p357
      %p360 = scmp.ne.s32.totalorder %s345, %s359
      %p361 = scmp.eq.s32.totalorder %s104, 0
      %p362 = por %p360, %p361
      %s364 = sadd.s32 %s363, 1
      %p367 = scmp.eq.s32.totalorder %s98, 1
      %p368 = scmp.ne.s32.totalorder %s363, %s365
      %p369 = scmp.eq.s32.totalorder %s98, 0
      %p370 = por %p368, %p369
      %p371 = scmp.ne.s32.totalorder %s363, %s365
      %p372 = scmp.eq.s32.totalorder %s103, 1
      %p373 = por %p371, %p372
      %p374 = scmp.ne.s32.totalorder %s365, %s366
      %p375 = scmp.eq.s32.totalorder %s103, 0
      %p376 = por %p374, %p375
      %p377 = scmp.ne.s32.totalorder %s365, %s366
      %p378 = scmp.eq.s32.totalorder %s104, 1
      %p379 = por %p377, %p378
      %p381 = scmp.ne.s32.totalorder %s366, %s380
      %p382 = scmp.eq.s32.totalorder %s104, 0
      %p383 = por %p381, %p382
      %s385 = sadd.s32 %s384, 1
      %p388 = scmp.eq.s32.totalorder %s98, 1
      %p389 = scmp.ne.s32.totalorder %s384, %s386
      %p390 = scmp.eq.s32.totalorder %s98, 0
      %p391 = por %p389, %p390
      %p392 = scmp.ne.s32.totalorder %s384, %s386
      %p393 = scmp.eq.s32.totalorder %s103, 1
      %p394 = por %p392, %p393
      %p395 = scmp.ne.s32.totalorder %s386, %s387
      %p396 = scmp.eq.s32.totalorder %s103, 0
      %p397 = por %p395, %p396
      %p398 = scmp.ne.s32.totalorder %s386, %s387
      %p399 = scmp.eq.s32.totalorder %s104, 1
      %p400 = por %p398, %p399
      %p402 = scmp.ne.s32.totalorder %s387, %s401
      %p403 = scmp.eq.s32.totalorder %s104, 0
      %p404 = por %p402, %p403
      %s406 = sadd.s32 %s405, 1
      %p409 = scmp.eq.s32.totalorder %s98, 1
      %p410 = scmp.ne.s32.totalorder %s405, %s407
      %p411 = scmp.eq.s32.totalorder %s98, 0
      %p412 = por %p410, %p411
      %p413 = scmp.ne.s32.totalorder %s405, %s407
      %p414 = scmp.eq.s32.totalorder %s103, 1
      %p415 = por %p413, %p414
      %p416 = scmp.ne.s32.totalorder %s407, %s408
      %p417 = scmp.eq.s32.totalorder %s103, 0
      %p418 = por %p416, %p417
      %p419 = scmp.ne.s32.totalorder %s407, %s408
      %p420 = scmp.eq.s32.totalorder %s104, 1
      %p421 = por %p419, %p420
      %p423 = scmp.ne.s32.totalorder %s408, %s422
      %p424 = scmp.eq.s32.totalorder %s104, 0
      %p425 = por %p423, %p424
      %s427 = sadd.s32 %s426, 1
      %p430 = scmp.eq.s32.totalorder %s98, 1
      %p431 = scmp.ne.s32.totalorder %s426, %s428
      %p432 = scmp.eq.s32.totalorder %s98, 0
      %p433 = por %p431, %p432
      %p434 = scmp.ne.s32.totalorder %s426, %s428
      %p435 = scmp.eq.s32.totalorder %s103, 1
      %p436 = por %p434, %p435
      %p437 = scmp.ne.s32.totalorder %s428, %s429
      %p438 = scmp.eq.s32.totalorder %s103, 0
      %p439 = por %p437, %p438
      %p440 = scmp.ne.s32.totalorder %s428, %s429
      %p441 = scmp.eq.s32.totalorder %s104, 1
      %p442 = por %p440, %p441
      %p444 = scmp.ne.s32.totalorder %s429, %s443
      %p445 = scmp.eq.s32.totalorder %s104, 0
      %p446 = por %p444, %p445
      %s448 = sadd.s32 %s447, 1
      %p451 = scmp.eq.s32.totalorder %s98, 1
      %p452 = scmp.ne.s32.totalorder %s447, %s449
      %p453 = scmp.eq.s32.totalorder %s98, 0
      %p454 = por %p452, %p453
      %p455 = scmp.ne.s32.totalorder %s447, %s449
      %p456 = scmp.eq.s32.totalorder %s103, 1
      %p457 = por %p455, %p456
      %p458 = scmp.ne.s32.totalorder %s449, %s450
      %p459 = scmp.eq.s32.totalorder %s103, 0
      %p460 = por %p458, %p459
      %p461 = scmp.ne.s32.totalorder %s449, %s450
      %p462 = scmp.eq.s32.totalorder %s104, 1
      %p463 = por %p461, %p462
      %p465 = scmp.ne.s32.totalorder %s450, %s464
      %p466 = scmp.eq.s32.totalorder %s104, 0
      %p467 = por %p465, %p466
      %s469 = sadd.s32 %s468, 1
      %p472 = scmp.eq.s32.totalorder %s98, 1
      %p473 = scmp.ne.s32.totalorder %s468, %s470
      %p474 = scmp.eq.s32.totalorder %s98, 0
      %p475 = por %p473, %p474
      %p476 = scmp.ne.s32.totalorder %s468, %s470
      %p477 = scmp.eq.s32.totalorder %s103, 1
      %p478 = por %p476, %p477
      %p479 = scmp.ne.s32.totalorder %s470, %s471
      %p480 = scmp.eq.s32.totalorder %s103, 0
      %p481 = por %p479, %p480
      %p482 = scmp.ne.s32.totalorder %s470, %s471
      %p483 = scmp.eq.s32.totalorder %s104, 1
      %p484 = por %p482, %p483
      %p486 = scmp.ne.s32.totalorder %s471, %s485
      %p487 = scmp.eq.s32.totalorder %s104, 0
      %p488 = por %p486, %p487
      %s490 = sadd.s32 %s489, 1
      %p493 = scmp.eq.s32.totalorder %s98, 1
      %p494 = scmp.ne.s32.totalorder %s489, %s491
      %p495 = scmp.eq.s32.totalorder %s98, 0
      %p496 = por %p494, %p495
      %p497 = scmp.ne.s32.totalorder %s489, %s491
      %p498 = scmp.eq.s32.totalorder %s103, 1
      %p499 = por %p497, %p498
      %p500 = scmp.ne.s32.totalorder %s491, %s492
      %p501 = scmp.eq.s32.totalorder %s103, 0
      %p502 = por %p500, %p501
      %p503 = scmp.ne.s32.totalorder %s491, %s492
      %p504 = scmp.eq.s32.totalorder %s104, 1
      %p505 = por %p503, %p504
      %p507 = scmp.ne.s32.totalorder %s492, %s506
      %p508 = scmp.eq.s32.totalorder %s104, 0
      %p509 = por %p507, %p508
      %s511 = sadd.s32 %s510, 1
      %p514 = scmp.eq.s32.totalorder %s98, 1
      %p515 = scmp.ne.s32.totalorder %s510, %s512
      %p516 = scmp.eq.s32.totalorder %s98, 0
      %p517 = por %p515, %p516
      %p518 = scmp.ne.s32.totalorder %s510, %s512
      %p519 = scmp.eq.s32.totalorder %s103, 1
      %p520 = por %p518, %p519
      %p521 = scmp.ne.s32.totalorder %s512, %s513
      %p522 = scmp.eq.s32.totalorder %s103, 0
      %p523 = por %p521, %p522
      %p524 = scmp.ne.s32.totalorder %s512, %s513
      %p525 = scmp.eq.s32.totalorder %s104, 1
      %p526 = por %p524, %p525
      %p528 = scmp.ne.s32.totalorder %s513, %s527
      %p529 = scmp.eq.s32.totalorder %s104, 0
      %p530 = por %p528, %p529
      %s532 = sadd.s32 %s531, 1
      %p535 = scmp.eq.s32.totalorder %s98, 1
      %p536 = scmp.ne.s32.totalorder %s531, %s533
      %p537 = scmp.eq.s32.totalorder %s98, 0
      %p538 = por %p536, %p537
      %p539 = scmp.ne.s32.totalorder %s531, %s533
      %p540 = scmp.eq.s32.totalorder %s103, 1
      %p541 = por %p539, %p540
      %p542 = scmp.ne.s32.totalorder %s533, %s534
      %p543 = scmp.eq.s32.totalorder %s103, 0
      %p544 = por %p542, %p543
      %p545 = scmp.ne.s32.totalorder %s533, %s534
      %p546 = scmp.eq.s32.totalorder %s104, 1
      %p547 = por %p545, %p546
      %p549 = scmp.ne.s32.totalorder %s534, %s548
      %p550 = scmp.eq.s32.totalorder %s104, 0
      %p551 = por %p549, %p550
      %s553 = sadd.s32 %s552, 1
      %p556 = scmp.eq.s32.totalorder %s98, 1
      %p557 = scmp.ne.s32.totalorder %s552, %s554
      %p558 = scmp.eq.s32.totalorder %s98, 0
      %p559 = por %p557, %p558
      %p560 = scmp.ne.s32.totalorder %s552, %s554
      %p561 = scmp.eq.s32.totalorder %s103, 1
      %p562 = por %p560, %p561
      %p563 = scmp.ne.s32.totalorder %s554, %s555
      %p564 = scmp.eq.s32.totalorder %s103, 0
      %p565 = por %p563, %p564
      %p566 = scmp.ne.s32.totalorder %s554, %s555
      %p567 = scmp.eq.s32.totalorder %s104, 1
      %p568 = por %p566, %p567
      %p570 = scmp.ne.s32.totalorder %s555, %s569
      %p571 = scmp.eq.s32.totalorder %s104, 0
      %p572 = por %p570, %p571
      %s574 = sadd.s32 %s573, 1
      %p577 = scmp.eq.s32.totalorder %s98, 1
      %p578 = scmp.ne.s32.totalorder %s573, %s575
      %p579 = scmp.eq.s32.totalorder %s98, 0
      %p580 = por %p578, %p579
      %p581 = scmp.ne.s32.totalorder %s573, %s575
      %p582 = scmp.eq.s32.totalorder %s103, 1
      %p583 = por %p581, %p582
      %p584 = scmp.ne.s32.totalorder %s575, %s576
      %p585 = scmp.eq.s32.totalorder %s103, 0
      %p586 = por %p584, %p585
      %p587 = scmp.ne.s32.totalorder %s575, %s576
      %p588 = scmp.eq.s32.totalorder %s104, 1
      %p589 = por %p587, %p588
      %p591 = scmp.ne.s32.totalorder %s576, %s590
      %p592 = scmp.eq.s32.totalorder %s104, 0
      %p593 = por %p591, %p592
      %s595 = sadd.s32 %s594, 1
      %p598 = scmp.eq.s32.totalorder %s98, 1
      %p599 = scmp.ne.s32.totalorder %s594, %s596
      %p600 = scmp.eq.s32.totalorder %s98, 0
      %p601 = por %p599, %p600
      %p602 = scmp.ne.s32.totalorder %s594, %s596
      %p603 = scmp.eq.s32.totalorder %s103, 1
      %p604 = por %p602, %p603
      %p605 = scmp.ne.s32.totalorder %s596, %s597
      %p606 = scmp.eq.s32.totalorder %s103, 0
      %p607 = por %p605, %p606
      %p608 = scmp.ne.s32.totalorder %s596, %s597
      %p609 = scmp.eq.s32.totalorder %s104, 1
      %p610 = por %p608, %p609
      %p612 = scmp.ne.s32.totalorder %s597, %s611
      %p613 = scmp.eq.s32.totalorder %s104, 0
      %p614 = por %p612, %p613
      %s616 = sadd.s32 %s615, 1
      %p619 = scmp.eq.s32.totalorder %s98, 1
      %p620 = scmp.ne.s32.totalorder %s615, %s617
      %p621 = scmp.eq.s32.totalorder %s98, 0
      %p622 = por %p620, %p621
      %p623 = scmp.ne.s32.totalorder %s615, %s617
      %p624 = scmp.eq.s32.totalorder %s103, 1
      %p625 = por %p623, %p624
      %p626 = scmp.ne.s32.totalorder %s617, %s618
      %p627 = scmp.eq.s32.totalorder %s103, 0
      %p628 = por %p626, %p627
      %p629 = scmp.ne.s32.totalorder %s617, %s618
      %p630 = scmp.eq.s32.totalorder %s104, 1
      %p631 = por %p629, %p630
      %p633 = scmp.ne.s32.totalorder %s618, %s632
      %p634 = scmp.eq.s32.totalorder %s104, 0
      %p635 = por %p633, %p634
      %s637 = sadd.s32 %s636, 1
      %p640 = scmp.eq.s32.totalorder %s98, 1
      %p641 = scmp.ne.s32.totalorder %s636, %s638
      %p642 = scmp.eq.s32.totalorder %s98, 0
      %p643 = por %p641, %p642
      %p644 = scmp.ne.s32.totalorder %s636, %s638
      %p645 = scmp.eq.s32.totalorder %s103, 1
      %p646 = por %p644, %p645
      %p647 = scmp.ne.s32.totalorder %s638, %s639
      %p648 = scmp.eq.s32.totalorder %s103, 0
      %p649 = por %p647, %p648
      %p650 = scmp.ne.s32.totalorder %s638, %s639
      %p651 = scmp.eq.s32.totalorder %s104, 1
      %p652 = por %p650, %p651
      %p654 = scmp.ne.s32.totalorder %s639, %s653
      %p655 = scmp.eq.s32.totalorder %s104, 0
      %p656 = por %p654, %p655
      %s658 = sadd.s32 %s657, 1
      %p661 = scmp.eq.s32.totalorder %s98, 1
      %p662 = scmp.ne.s32.totalorder %s657, %s659
      %p663 = scmp.eq.s32.totalorder %s98, 0
      %p664 = por %p662, %p663
      %p665 = scmp.ne.s32.totalorder %s657, %s659
      %p666 = scmp.eq.s32.totalorder %s103, 1
      %p667 = por %p665, %p666
      %p668 = scmp.ne.s32.totalorder %s659, %s660
      %p669 = scmp.eq.s32.totalorder %s103, 0
      %p670 = por %p668, %p669
      %p671 = scmp.ne.s32.totalorder %s659, %s660
      %p672 = scmp.eq.s32.totalorder %s104, 1
      %p673 = por %p671, %p672
      %p675 = scmp.ne.s32.totalorder %s660, %s674
      %p676 = scmp.eq.s32.totalorder %s104, 0
      %p677 = por %p675, %p676
      %s679 = sadd.s32 %s678, 1
      %p682 = scmp.eq.s32.totalorder %s98, 1
      %p683 = scmp.ne.s32.totalorder %s678, %s680
      %p684 = scmp.eq.s32.totalorder %s98, 0
      %p685 = por %p683, %p684
      %p686 = scmp.ne.s32.totalorder %s678, %s680
      %p687 = scmp.eq.s32.totalorder %s103, 1
      %p688 = por %p686, %p687
      %p689 = scmp.ne.s32.totalorder %s680, %s681
      %p690 = scmp.eq.s32.totalorder %s103, 0
      %p691 = por %p689, %p690
      %p692 = scmp.ne.s32.totalorder %s680, %s681
      %p693 = scmp.eq.s32.totalorder %s104, 1
      %p694 = por %p692, %p693
      %p696 = scmp.ne.s32.totalorder %s681, %s695
      %p697 = scmp.eq.s32.totalorder %s104, 0
      %p698 = por %p696, %p697
      %s700 = sadd.s32 %s699, 1
      %p703 = scmp.eq.s32.totalorder %s98, 1
      %p704 = scmp.ne.s32.totalorder %s699, %s701
      %p705 = scmp.eq.s32.totalorder %s98, 0
      %p706 = por %p704, %p705
      %p707 = scmp.ne.s32.totalorder %s699, %s701
      %p708 = scmp.eq.s32.totalorder %s103, 1
      %p709 = por %p707, %p708
      %p710 = scmp.ne.s32.totalorder %s701, %s702
      %p711 = scmp.eq.s32.totalorder %s103, 0
      %p712 = por %p710, %p711
      %p713 = scmp.ne.s32.totalorder %s701, %s702
      %p714 = scmp.eq.s32.totalorder %s104, 1
      %p715 = por %p713, %p714
      %p717 = scmp.ne.s32.totalorder %s702, %s716
      %p718 = scmp.eq.s32.totalorder %s104, 0
      %p719 = por %p717, %p718
      %s721 = sadd.s32 %s720, 1
      %p724 = scmp.eq.s32.totalorder %s98, 1
      %p725 = scmp.ne.s32.totalorder %s720, %s722
      %p726 = scmp.eq.s32.totalorder %s98, 0
      %p727 = por %p725, %p726
      %p728 = scmp.ne.s32.totalorder %s720, %s722
      %p729 = scmp.eq.s32.totalorder %s103, 1
      %p730 = por %p728, %p729
      %p731 = scmp.ne.s32.totalorder %s722, %s723
      %p732 = scmp.eq.s32.totalorder %s103, 0
      %p733 = por %p731, %p732
      %p734 = scmp.ne.s32.totalorder %s722, %s723
      %p735 = scmp.eq.s32.totalorder %s104, 1
      %p736 = por %p734, %p735
      %p738 = scmp.ne.s32.totalorder %s723, %s737
      %p739 = scmp.eq.s32.totalorder %s104, 0
      %p740 = por %p738, %p739
      %s742 = sadd.s32 %s741, 1
      %p745 = scmp.eq.s32.totalorder %s98, 1
      %p746 = scmp.ne.s32.totalorder %s741, %s743
      %p747 = scmp.eq.s32.totalorder %s98, 0
      %p748 = por %p746, %p747
      %p749 = scmp.ne.s32.totalorder %s741, %s743
      %p750 = scmp.eq.s32.totalorder %s103, 1
      %p751 = por %p749, %p750
      %p752 = scmp.ne.s32.totalorder %s743, %s744
      %p753 = scmp.eq.s32.totalorder %s103, 0
      %p754 = por %p752, %p753
      %p755 = scmp.ne.s32.totalorder %s743, %s744
      %p756 = scmp.eq.s32.totalorder %s104, 1
      %p757 = por %p755, %p756
      %p759 = scmp.ne.s32.totalorder %s744, %s758
      %p760 = scmp.eq.s32.totalorder %s104, 0
      %p761 = por %p759, %p760
      %s763 = sadd.s32 %s762, 1
      %p766 = scmp.eq.s32.totalorder %s98, 1
      %p767 = scmp.ne.s32.totalorder %s762, %s764
      %p768 = scmp.eq.s32.totalorder %s98, 0
      %p769 = por %p767, %p768
      %p770 = scmp.ne.s32.totalorder %s762, %s764
      %p771 = scmp.eq.s32.totalorder %s103, 1
      %p772 = por %p770, %p771
      %p773 = scmp.ne.s32.totalorder %s764, %s765
      %p774 = scmp.eq.s32.totalorder %s103, 0
      %p775 = por %p773, %p774
      %p776 = scmp.ne.s32.totalorder %s764, %s765
      %p777 = scmp.eq.s32.totalorder %s104, 1
      %p778 = por %p776, %p777
      %p780 = scmp.ne.s32.totalorder %s765, %s779
      %p781 = scmp.eq.s32.totalorder %s104, 0
      %p782 = por %p780, %p781
      %s784 = sadd.s32 %s783, 1
      %p787 = scmp.eq.s32.totalorder %s98, 1
      %p788 = scmp.ne.s32.totalorder %s783, %s785
      %p789 = scmp.eq.s32.totalorder %s98, 0
      %p790 = por %p788, %p789
      %p791 = scmp.ne.s32.totalorder %s783, %s785
      %p792 = scmp.eq.s32.totalorder %s103, 1
      %p793 = por %p791, %p792
      %p794 = scmp.ne.s32.totalorder %s785, %s786
      %p795 = scmp.eq.s32.totalorder %s103, 0
      %p796 = por %p794, %p795
      %p797 = scmp.ne.s32.totalorder %s785, %s786
      %p798 = scmp.eq.s32.totalorder %s104, 1
      %p799 = por %p797, %p798
      %p801 = scmp.ne.s32.totalorder %s786, %s800
      %p802 = scmp.eq.s32.totalorder %s104, 0
      %p803 = por %p801, %p802
      %s805 = sadd.s32 %s804, 1
      %p808 = scmp.eq.s32.totalorder %s98, 1
      %p809 = scmp.ne.s32.totalorder %s804, %s806
      %p810 = scmp.eq.s32.totalorder %s98, 0
      %p811 = por %p809, %p810
      %p812 = scmp.ne.s32.totalorder %s804, %s806
      %p813 = scmp.eq.s32.totalorder %s103, 1
      %p814 = por %p812, %p813
      %p815 = scmp.ne.s32.totalorder %s806, %s807
      %p816 = scmp.eq.s32.totalorder %s103, 0
      %p817 = por %p815, %p816
      %p818 = scmp.ne.s32.totalorder %s806, %s807
      %p819 = scmp.eq.s32.totalorder %s104, 1
      %p820 = por %p818, %p819
      %p822 = scmp.ne.s32.totalorder %s807, %s821
      %p823 = scmp.eq.s32.totalorder %s104, 0
      %p824 = por %p822, %p823
      %s826 = sadd.s32 %s825, 1
      %p829 = scmp.eq.s32.totalorder %s98, 1
      %p830 = scmp.ne.s32.totalorder %s825, %s827
      %p831 = scmp.eq.s32.totalorder %s98, 0
      %p832 = por %p830, %p831
      %p833 = scmp.ne.s32.totalorder %s825, %s827
      %p834 = scmp.eq.s32.totalorder %s103, 1
      %p835 = por %p833, %p834
      %p836 = scmp.ne.s32.totalorder %s827, %s828
      %p837 = scmp.eq.s32.totalorder %s103, 0
      %p838 = por %p836, %p837
      %p839 = scmp.ne.s32.totalorder %s827, %s828
      %p840 = scmp.eq.s32.totalorder %s104, 1
      %p841 = por %p839, %p840
      %p843 = scmp.ne.s32.totalorder %s828, %s842
      %p844 = scmp.eq.s32.totalorder %s104, 0
      %p845 = por %p843, %p844
      %s847 = sadd.s32 %s846, 1
      %p850 = scmp.eq.s32.totalorder %s98, 1
      %p851 = scmp.ne.s32.totalorder %s846, %s848
      %p852 = scmp.eq.s32.totalorder %s98, 0
      %p853 = por %p851, %p852
      %p854 = scmp.ne.s32.totalorder %s846, %s848
      %p855 = scmp.eq.s32.totalorder %s103, 1
      %p856 = por %p854, %p855
      %p857 = scmp.ne.s32.totalorder %s848, %s849
      %p858 = scmp.eq.s32.totalorder %s103, 0
      %p859 = por %p857, %p858
      %p860 = scmp.ne.s32.totalorder %s848, %s849
      %p861 = scmp.eq.s32.totalorder %s104, 1
      %p862 = por %p860, %p861
      %p864 = scmp.ne.s32.totalorder %s849, %s863
      %p865 = scmp.eq.s32.totalorder %s104, 0
      %p866 = por %p864, %p865
      %s868 = sadd.s32 %s867, 1
      %p871 = scmp.eq.s32.totalorder %s98, 1
      %p872 = scmp.ne.s32.totalorder %s867, %s869
      %p873 = scmp.eq.s32.totalorder %s98, 0
      %p874 = por %p872, %p873
      %p875 = scmp.ne.s32.totalorder %s867, %s869
      %p876 = scmp.eq.s32.totalorder %s103, 1
      %p877 = por %p875, %p876
      %p878 = scmp.ne.s32.totalorder %s869, %s870
      %p879 = scmp.eq.s32.totalorder %s103, 0
      %p880 = por %p878, %p879
      %p881 = scmp.ne.s32.totalorder %s869, %s870
      %p882 = scmp.eq.s32.totalorder %s104, 1
      %p883 = por %p881, %p882
      %p885 = scmp.ne.s32.totalorder %s870, %s884
      %p886 = scmp.eq.s32.totalorder %s104, 0
      %p887 = por %p885, %p886
      %s889 = sadd.s32 %s888, 1
      %p892 = scmp.eq.s32.totalorder %s98, 1
      %p893 = scmp.ne.s32.totalorder %s888, %s890
      %p894 = scmp.eq.s32.totalorder %s98, 0
      %p895 = por %p893, %p894
      %p896 = scmp.ne.s32.totalorder %s888, %s890
      %p897 = scmp.eq.s32.totalorder %s103, 1
      %p898 = por %p896, %p897
      %p899 = scmp.ne.s32.totalorder %s890, %s891
      %p900 = scmp.eq.s32.totalorder %s103, 0
      %p901 = por %p899, %p900
      %p902 = scmp.ne.s32.totalorder %s890, %s891
      %p903 = scmp.eq.s32.totalorder %s104, 1
      %p904 = por %p902, %p903
      %p906 = scmp.ne.s32.totalorder %s891, %s905
      %p907 = scmp.eq.s32.totalorder %s104, 0
      %p908 = por %p906, %p907
      %s910 = sadd.s32 %s909, 1
      %p913 = scmp.eq.s32.totalorder %s98, 1
      %p914 = scmp.ne.s32.totalorder %s909, %s911
      %p915 = scmp.eq.s32.totalorder %s98, 0
      %p916 = por %p914, %p915
      %p917 = scmp.ne.s32.totalorder %s909, %s911
      %p918 = scmp.eq.s32.totalorder %s103, 1
      %p919 = por %p917, %p918
      %p920 = scmp.ne.s32.totalorder %s911, %s912
      %p921 = scmp.eq.s32.totalorder %s103, 0
      %p922 = por %p920, %p921
      %p923 = scmp.ne.s32.totalorder %s911, %s912
      %p924 = scmp.eq.s32.totalorder %s104, 1
      %p925 = por %p923, %p924
      %p927 = scmp.ne.s32.totalorder %s912, %s926
      %p928 = scmp.eq.s32.totalorder %s104, 0
      %p929 = por %p927, %p928
      %s931 = sadd.s32 %s930, 1
      %p934 = scmp.eq.s32.totalorder %s98, 1
      %p935 = scmp.ne.s32.totalorder %s930, %s932
      %p936 = scmp.eq.s32.totalorder %s98, 0
      %p937 = por %p935, %p936
      %p938 = scmp.ne.s32.totalorder %s930, %s932
      %p939 = scmp.eq.s32.totalorder %s103, 1
      %p940 = por %p938, %p939
      %p941 = scmp.ne.s32.totalorder %s932, %s933
      %p942 = scmp.eq.s32.totalorder %s103, 0
      %p943 = por %p941, %p942
      %p944 = scmp.ne.s32.totalorder %s932, %s933
      %p945 = scmp.eq.s32.totalorder %s104, 1
      %p946 = por %p944, %p945
      %p948 = scmp.ne.s32.totalorder %s933, %s947
      %p949 = scmp.eq.s32.totalorder %s104, 0
      %p950 = por %p948, %p949
      %s952 = sadd.s32 %s951, 1
      %p955 = scmp.eq.s32.totalorder %s98, 1
      %p956 = scmp.ne.s32.totalorder %s951, %s953
      %p957 = scmp.eq.s32.totalorder %s98, 0
      %p958 = por %p956, %p957
      %p959 = scmp.ne.s32.totalorder %s951, %s953
      %p960 = scmp.eq.s32.totalorder %s103, 1
      %p961 = por %p959, %p960
      %p962 = scmp.ne.s32.totalorder %s953, %s954
      %p963 = scmp.eq.s32.totalorder %s103, 0
      %p964 = por %p962, %p963
      %p965 = scmp.ne.s32.totalorder %s953, %s954
      %p966 = scmp.eq.s32.totalorder %s104, 1
      %p967 = por %p965, %p966
      %p969 = scmp.ne.s32.totalorder %s954, %s968
      %p970 = scmp.eq.s32.totalorder %s104, 0
      %p971 = por %p969, %p970
      %s973 = sadd.s32 %s972, 1
      %p976 = scmp.eq.s32.totalorder %s98, 1
      %p977 = scmp.ne.s32.totalorder %s972, %s974
      %p978 = scmp.eq.s32.totalorder %s98, 0
      %p979 = por %p977, %p978
      %p980 = scmp.ne.s32.totalorder %s972, %s974
      %p981 = scmp.eq.s32.totalorder %s103, 1
      %p982 = por %p980, %p981
      %p983 = scmp.ne.s32.totalorder %s974, %s975
      %p984 = scmp.eq.s32.totalorder %s103, 0
      %p985 = por %p983, %p984
      %p986 = scmp.ne.s32.totalorder %s974, %s975
      %p987 = scmp.eq.s32.totalorder %s104, 1
      %p988 = por %p986, %p987
      %p990 = scmp.ne.s32.totalorder %s975, %s989
      %p991 = scmp.eq.s32.totalorder %s104, 0
      %p992 = por %p990, %p991
      %s994 = sadd.s32 %s993, 1
      %p997 = scmp.eq.s32.totalorder %s98, 1
      %p998 = scmp.ne.s32.totalorder %s993, %s995
      %p999 = scmp.eq.s32.totalorder %s98, 0
      %p1000 = por %p998, %p999
      %p1001 = scmp.ne.s32.totalorder %s993, %s995
      %p1002 = scmp.eq.s32.totalorder %s103, 1
      %p1003 = por %p1001, %p1002
      %p1004 = scmp.ne.s32.totalorder %s995, %s996
      %p1005 = scmp.eq.s32.totalorder %s103, 0
      %p1006 = por %p1004, %p1005
      %p1007 = scmp.ne.s32.totalorder %s995, %s996
      %p1008 = scmp.eq.s32.totalorder %s104, 1
      %p1009 = por %p1007, %p1008
      %p1011 = scmp.ne.s32.totalorder %s996, %s1010
      %p1012 = scmp.eq.s32.totalorder %s104, 0
      %p1013 = por %p1011, %p1012
      %s1015 = sadd.s32 %s1014, 1
      %p1018 = scmp.eq.s32.totalorder %s98, 1
      %p1019 = scmp.ne.s32.totalorder %s1014, %s1016
      %p1020 = scmp.eq.s32.totalorder %s98, 0
      %p1021 = por %p1019, %p1020
      %p1022 = scmp.ne.s32.totalorder %s1014, %s1016
      %p1023 = scmp.eq.s32.totalorder %s103, 1
      %p1024 = por %p1022, %p1023
      %p1025 = scmp.ne.s32.totalorder %s1016, %s1017
      %p1026 = scmp.eq.s32.totalorder %s103, 0
      %p1027 = por %p1025, %p1026
      %p1028 = scmp.ne.s32.totalorder %s1016, %s1017
      %p1029 = scmp.eq.s32.totalorder %s104, 1
      %p1030 = por %p1028, %p1029
      %p1032 = scmp.ne.s32.totalorder %s1017, %s1031
      %p1033 = scmp.eq.s32.totalorder %s104, 0
      %p1034 = por %p1032, %p1033
      %s1035 = ssub.s32 %s98, %s105
      %p1036 = scmp.eq.s32.totalorder %s1035, 0
      %s1038 = sadd.s32 %s1037, 1
      %s1039 = scalar_select %p1036, %s1037, %s1038
      %p1042 = pneg %p1036
      %p1043 = scmp.eq.s32.totalorder %s98, 1
      %p1044 = por %p1042, %p1043
      %p1045 = scmp.ne.s32.totalorder %s1037, %s1040
      %p1046 = scmp.eq.s32.totalorder %s98, 0
      %p1047 = por %p1045, %p1046
      %p1048 = scmp.ne.s32.totalorder %s1037, %s1040
      %p1049 = scmp.eq.s32.totalorder %s103, 1
      %p1050 = por %p1048, %p1049
      %p1051 = scmp.ne.s32.totalorder %s1040, %s1041
      %p1052 = scmp.eq.s32.totalorder %s103, 0
      %p1053 = por %p1051, %p1052
      %p1054 = scmp.ne.s32.totalorder %s1040, %s1041
      %p1055 = scmp.eq.s32.totalorder %s104, 1
      %p1056 = por %p1054, %p1055
      %p1058 = scmp.ne.s32.totalorder %s1041, %s1057
      %p1059 = scmp.eq.s32.totalorder %s104, 0
      %p1060 = por %p1058, %p1059
      %p1061 = scmp.le.s32.totalorder 1, %s98
      %p1062 = scmp.lt.s32.totalorder %s98, 3
      %p1063 = pnand %p1061, %p1062
      %p1064 = pneg %p1063
      // Predicated region
      $region9: #{_lambda_.1} parent=5 // pred_check
        _
      $region10: #{_lambda_.1} parent=5 // pred_check_branch
        %1066 = sbr.rel (%p1063) target = $region12
      $region11: #{_lambda_.1} parent=5 // pred_region
        %s1067 = ssub.s32 %s98, 1
        // Predicated region
        $region13: #{_lambda_.1} parent=11 // pred_check
          %p1068 = pneg %p145
        $region14: #{_lambda_.1} parent=11 // pred_check_branch
          %1070 = sbr.rel (%p1068) target = $region16
        $region15: #{_lambda_.1} parent=11 // pred_region
          _
        $region16: #{_lambda_.1} parent=11 // pred_fallthru
          _
        // Predicated region
        $region17: #{_lambda_.1} parent=11 // pred_check
          %p1071 = pneg %p166
        $region18: #{_lambda_.1} parent=11 // pred_check_branch
          %1073 = sbr.rel (%p1071) target = $region20
        $region19: #{_lambda_.1} parent=11 // pred_region
          _
        $region20: #{_lambda_.1} parent=11 // pred_fallthru
          _
        // Predicated region
        $region21: #{_lambda_.1} parent=11 // pred_check
          %p1074 = pneg %p187
        $region22: #{_lambda_.1} parent=11 // pred_check_branch
          %1076 = sbr.rel (%p1074) target = $region24
        $region23: #{_lambda_.1} parent=11 // pred_region
          _
        $region24: #{_lambda_.1} parent=11 // pred_fallthru
          _
        // Predicated region
        $region25: #{_lambda_.1} parent=11 // pred_check
          %p1077 = pneg %p208
        $region26: #{_lambda_.1} parent=11 // pred_check_branch
          %1079 = sbr.rel (%p1077) target = $region28
        $region27: #{_lambda_.1} parent=11 // pred_region
          _
        $region28: #{_lambda_.1} parent=11 // pred_fallthru
          _
        // Predicated region
        $region29: #{_lambda_.1} parent=11 // pred_check
          %p1080 = pneg %p229
        $region30: #{_lambda_.1} parent=11 // pred_check_branch
          %1082 = sbr.rel (%p1080) target = $region32
        $region31: #{_lambda_.1} parent=11 // pred_region
          _
        $region32: #{_lambda_.1} parent=11 // pred_fallthru
          _
        // Predicated region
        $region33: #{_lambda_.1} parent=11 // pred_check
          %p1083 = pneg %p250
        $region34: #{_lambda_.1} parent=11 // pred_check_branch
          %1085 = sbr.rel (%p1083) target = $region36
        $region35: #{_lambda_.1} parent=11 // pred_region
          _
        $region36: #{_lambda_.1} parent=11 // pred_fallthru
          _
        // Predicated region
        $region37: #{_lambda_.1} parent=11 // pred_check
          %p1086 = pneg %p271
        $region38: #{_lambda_.1} parent=11 // pred_check_branch
          %1088 = sbr.rel (%p1086) target = $region40
        $region39: #{_lambda_.1} parent=11 // pred_region
          _
        $region40: #{_lambda_.1} parent=11 // pred_fallthru
          _
        // Predicated region
        $region41: #{_lambda_.1} parent=11 // pred_check
          %p1089 = pneg %p292
        $region42: #{_lambda_.1} parent=11 // pred_check_branch
          %1091 = sbr.rel (%p1089) target = $region44
        $region43: #{_lambda_.1} parent=11 // pred_region
          _
        $region44: #{_lambda_.1} parent=11 // pred_fallthru
          _
        // Predicated region
        $region45: #{_lambda_.1} parent=11 // pred_check
          %p1092 = pneg %p313
        $region46: #{_lambda_.1} parent=11 // pred_check_branch
          %1094 = sbr.rel (%p1092) target = $region48
        $region47: #{_lambda_.1} parent=11 // pred_region
          _
        $region48: #{_lambda_.1} parent=11 // pred_fallthru
          _
        // Predicated region
        $region49: #{_lambda_.1} parent=11 // pred_check
          %p1095 = pneg %p334
        $region50: #{_lambda_.1} parent=11 // pred_check_branch
          %1097 = sbr.rel (%p1095) target = $region52
        $region51: #{_lambda_.1} parent=11 // pred_region
          _
        $region52: #{_lambda_.1} parent=11 // pred_fallthru
          _
        // Predicated region
        $region53: #{_lambda_.1} parent=11 // pred_check
          %p1098 = pneg %p355
        $region54: #{_lambda_.1} parent=11 // pred_check_branch
          %1100 = sbr.rel (%p1098) target = $region56
        $region55: #{_lambda_.1} parent=11 // pred_region
          _
        $region56: #{_lambda_.1} parent=11 // pred_fallthru
          _
        // Predicated region
        $region57: #{_lambda_.1} parent=11 // pred_check
          %p1101 = pneg %p376
        $region58: #{_lambda_.1} parent=11 // pred_check_branch
          %1103 = sbr.rel (%p1101) target = $region60
        $region59: #{_lambda_.1} parent=11 // pred_region
          _
        $region60: #{_lambda_.1} parent=11 // pred_fallthru
          _
        // Predicated region
        $region61: #{_lambda_.1} parent=11 // pred_check
          %p1104 = pneg %p397
        $region62: #{_lambda_.1} parent=11 // pred_check_branch
          %1106 = sbr.rel (%p1104) target = $region64
        $region63: #{_lambda_.1} parent=11 // pred_region
          _
        $region64: #{_lambda_.1} parent=11 // pred_fallthru
          _
        // Predicated region
        $region65: #{_lambda_.1} parent=11 // pred_check
          %p1107 = pneg %p418
        $region66: #{_lambda_.1} parent=11 // pred_check_branch
          %1109 = sbr.rel (%p1107) target = $region68
        $region67: #{_lambda_.1} parent=11 // pred_region
          _
        $region68: #{_lambda_.1} parent=11 // pred_fallthru
          _
        // Predicated region
        $region69: #{_lambda_.1} parent=11 // pred_check
          %p1110 = pneg %p439
        $region70: #{_lambda_.1} parent=11 // pred_check_branch
          %1112 = sbr.rel (%p1110) target = $region72
        $region71: #{_lambda_.1} parent=11 // pred_region
          _
        $region72: #{_lambda_.1} parent=11 // pred_fallthru
          _
        // Predicated region
        $region73: #{_lambda_.1} parent=11 // pred_check
          %p1113 = pneg %p460
        $region74: #{_lambda_.1} parent=11 // pred_check_branch
          %1115 = sbr.rel (%p1113) target = $region76
        $region75: #{_lambda_.1} parent=11 // pred_region
          _
        $region76: #{_lambda_.1} parent=11 // pred_fallthru
          _
        // Predicated region
        $region77: #{_lambda_.1} parent=11 // pred_check
          %p1116 = pneg %p481
        $region78: #{_lambda_.1} parent=11 // pred_check_branch
          %1118 = sbr.rel (%p1116) target = $region80
        $region79: #{_lambda_.1} parent=11 // pred_region
          _
        $region80: #{_lambda_.1} parent=11 // pred_fallthru
          _
        // Predicated region
        $region81: #{_lambda_.1} parent=11 // pred_check
          %p1119 = pneg %p502
        $region82: #{_lambda_.1} parent=11 // pred_check_branch
          %1121 = sbr.rel (%p1119) target = $region84
        $region83: #{_lambda_.1} parent=11 // pred_region
          _
        $region84: #{_lambda_.1} parent=11 // pred_fallthru
          _
        // Predicated region
        $region85: #{_lambda_.1} parent=11 // pred_check
          %p1122 = pneg %p523
        $region86: #{_lambda_.1} parent=11 // pred_check_branch
          %1124 = sbr.rel (%p1122) target = $region88
        $region87: #{_lambda_.1} parent=11 // pred_region
          _
        $region88: #{_lambda_.1} parent=11 // pred_fallthru
          _
        // Predicated region
        $region89: #{_lambda_.1} parent=11 // pred_check
          %p1125 = pneg %p544
        $region90: #{_lambda_.1} parent=11 // pred_check_branch
          %1127 = sbr.rel (%p1125) target = $region92
        $region91: #{_lambda_.1} parent=11 // pred_region
          _
        $region92: #{_lambda_.1} parent=11 // pred_fallthru
          _
        // Predicated region
        $region93: #{_lambda_.1} parent=11 // pred_check
          %p1128 = pneg %p565
        $region94: #{_lambda_.1} parent=11 // pred_check_branch
          %1130 = sbr.rel (%p1128) target = $region96
        $region95: #{_lambda_.1} parent=11 // pred_region
          _
        $region96: #{_lambda_.1} parent=11 // pred_fallthru
          _
        // Predicated region
        $region97: #{_lambda_.1} parent=11 // pred_check
          %p1131 = pneg %p586
        $region98: #{_lambda_.1} parent=11 // pred_check_branch
          %1133 = sbr.rel (%p1131) target = $region100
        $region99: #{_lambda_.1} parent=11 // pred_region
          _
        $region100: #{_lambda_.1} parent=11 // pred_fallthru
          _
        // Predicated region
        $region101: #{_lambda_.1} parent=11 // pred_check
          %p1134 = pneg %p607
        $region102: #{_lambda_.1} parent=11 // pred_check_branch
          %1136 = sbr.rel (%p1134) target = $region104
        $region103: #{_lambda_.1} parent=11 // pred_region
          _
        $region104: #{_lambda_.1} parent=11 // pred_fallthru
          _
        // Predicated region
        $region105: #{_lambda_.1} parent=11 // pred_check
          %p1137 = pneg %p628
        $region106: #{_lambda_.1} parent=11 // pred_check_branch
          %1139 = sbr.rel (%p1137) target = $region108
        $region107: #{_lambda_.1} parent=11 // pred_region
          _
        $region108: #{_lambda_.1} parent=11 // pred_fallthru
          _
        // Predicated region
        $region109: #{_lambda_.1} parent=11 // pred_check
          %p1140 = pneg %p649
        $region110: #{_lambda_.1} parent=11 // pred_check_branch
          %1142 = sbr.rel (%p1140) target = $region112
        $region111: #{_lambda_.1} parent=11 // pred_region
          _
        $region112: #{_lambda_.1} parent=11 // pred_fallthru
          _
        // Predicated region
        $region113: #{_lambda_.1} parent=11 // pred_check
          %p1143 = pneg %p670
        $region114: #{_lambda_.1} parent=11 // pred_check_branch
          %1145 = sbr.rel (%p1143) target = $region116
        $region115: #{_lambda_.1} parent=11 // pred_region
          _
        $region116: #{_lambda_.1} parent=11 // pred_fallthru
          _
        // Predicated region
        $region117: #{_lambda_.1} parent=11 // pred_check
          %p1146 = pneg %p691
        $region118: #{_lambda_.1} parent=11 // pred_check_branch
          %1148 = sbr.rel (%p1146) target = $region120
        $region119: #{_lambda_.1} parent=11 // pred_region
          _
        $region120: #{_lambda_.1} parent=11 // pred_fallthru
          _
        // Predicated region
        $region121: #{_lambda_.1} parent=11 // pred_check
          %p1149 = pneg %p712
        $region122: #{_lambda_.1} parent=11 // pred_check_branch
          %1151 = sbr.rel (%p1149) target = $region124
        $region123: #{_lambda_.1} parent=11 // pred_region
          _
        $region124: #{_lambda_.1} parent=11 // pred_fallthru
          _
        // Predicated region
        $region125: #{_lambda_.1} parent=11 // pred_check
          %p1152 = pneg %p733
        $region126: #{_lambda_.1} parent=11 // pred_check_branch
          %1154 = sbr.rel (%p1152) target = $region128
        $region127: #{_lambda_.1} parent=11 // pred_region
          _
        $region128: #{_lambda_.1} parent=11 // pred_fallthru
          _
        // Predicated region
        $region129: #{_lambda_.1} parent=11 // pred_check
          %p1155 = pneg %p754
        $region130: #{_lambda_.1} parent=11 // pred_check_branch
          %1157 = sbr.rel (%p1155) target = $region132
        $region131: #{_lambda_.1} parent=11 // pred_region
          _
        $region132: #{_lambda_.1} parent=11 // pred_fallthru
          _
        // Predicated region
        $region133: #{_lambda_.1} parent=11 // pred_check
          %p1158 = pneg %p775
        $region134: #{_lambda_.1} parent=11 // pred_check_branch
          %1160 = sbr.rel (%p1158) target = $region136
        $region135: #{_lambda_.1} parent=11 // pred_region
          _
        $region136: #{_lambda_.1} parent=11 // pred_fallthru
          _
        // Predicated region
        $region137: #{_lambda_.1} parent=11 // pred_check
          %p1161 = pneg %p796
        $region138: #{_lambda_.1} parent=11 // pred_check_branch
          %1163 = sbr.rel (%p1161) target = $region140
        $region139: #{_lambda_.1} parent=11 // pred_region
          _
        $region140: #{_lambda_.1} parent=11 // pred_fallthru
          _
        // Predicated region
        $region141: #{_lambda_.1} parent=11 // pred_check
          %p1164 = pneg %p817
        $region142: #{_lambda_.1} parent=11 // pred_check_branch
          %1166 = sbr.rel (%p1164) target = $region144
        $region143: #{_lambda_.1} parent=11 // pred_region
          _
        $region144: #{_lambda_.1} parent=11 // pred_fallthru
          _
        // Predicated region
        $region145: #{_lambda_.1} parent=11 // pred_check
          %p1167 = pneg %p838
        $region146: #{_lambda_.1} parent=11 // pred_check_branch
          %1169 = sbr.rel (%p1167) target = $region148
        $region147: #{_lambda_.1} parent=11 // pred_region
          _
        $region148: #{_lambda_.1} parent=11 // pred_fallthru
          _
        // Predicated region
        $region149: #{_lambda_.1} parent=11 // pred_check
          %p1170 = pneg %p859
        $region150: #{_lambda_.1} parent=11 // pred_check_branch
          %1172 = sbr.rel (%p1170) target = $region152
        $region151: #{_lambda_.1} parent=11 // pred_region
          _
        $region152: #{_lambda_.1} parent=11 // pred_fallthru
          _
        // Predicated region
        $region153: #{_lambda_.1} parent=11 // pred_check
          %p1173 = pneg %p880
        $region154: #{_lambda_.1} parent=11 // pred_check_branch
          %1175 = sbr.rel (%p1173) target = $region156
        $region155: #{_lambda_.1} parent=11 // pred_region
          _
        $region156: #{_lambda_.1} parent=11 // pred_fallthru
          _
        // Predicated region
        $region157: #{_lambda_.1} parent=11 // pred_check
          %p1176 = pneg %p901
        $region158: #{_lambda_.1} parent=11 // pred_check_branch
          %1178 = sbr.rel (%p1176) target = $region160
        $region159: #{_lambda_.1} parent=11 // pred_region
          _
        $region160: #{_lambda_.1} parent=11 // pred_fallthru
          _
        // Predicated region
        $region161: #{_lambda_.1} parent=11 // pred_check
          %p1179 = pneg %p922
        $region162: #{_lambda_.1} parent=11 // pred_check_branch
          %1181 = sbr.rel (%p1179) target = $region164
        $region163: #{_lambda_.1} parent=11 // pred_region
          _
        $region164: #{_lambda_.1} parent=11 // pred_fallthru
          _
        // Predicated region
        $region165: #{_lambda_.1} parent=11 // pred_check
          %p1182 = pneg %p943
        $region166: #{_lambda_.1} parent=11 // pred_check_branch
          %1184 = sbr.rel (%p1182) target = $region168
        $region167: #{_lambda_.1} parent=11 // pred_region
          _
        $region168: #{_lambda_.1} parent=11 // pred_fallthru
          _
        // Predicated region
        $region169: #{_lambda_.1} parent=11 // pred_check
          %p1185 = pneg %p964
        $region170: #{_lambda_.1} parent=11 // pred_check_branch
          %1187 = sbr.rel (%p1185) target = $region172
        $region171: #{_lambda_.1} parent=11 // pred_region
          _
        $region172: #{_lambda_.1} parent=11 // pred_fallthru
          _
        // Predicated region
        $region173: #{_lambda_.1} parent=11 // pred_check
          %p1188 = pneg %p985
        $region174: #{_lambda_.1} parent=11 // pred_check_branch
          %1190 = sbr.rel (%p1188) target = $region176
        $region175: #{_lambda_.1} parent=11 // pred_region
          _
        $region176: #{_lambda_.1} parent=11 // pred_fallthru
          _
        // Predicated region
        $region177: #{_lambda_.1} parent=11 // pred_check
          %p1191 = pneg %p1006
        $region178: #{_lambda_.1} parent=11 // pred_check_branch
          %1193 = sbr.rel (%p1191) target = $region180
        $region179: #{_lambda_.1} parent=11 // pred_region
          _
        $region180: #{_lambda_.1} parent=11 // pred_fallthru
          _
        // Predicated region
        $region181: #{_lambda_.1} parent=11 // pred_check
          %p1194 = pneg %p1027
        $region182: #{_lambda_.1} parent=11 // pred_check_branch
          %1196 = sbr.rel (%p1194) target = $region184
        $region183: #{_lambda_.1} parent=11 // pred_region
          _
        $region184: #{_lambda_.1} parent=11 // pred_fallthru
          _
      $region12: #{_lambda_.1} parent=5 // pred_fallthru
        _
      %p1197 = scmp.lt.s32.totalorder %s98, 2
      // Predicated region
      $region185: #{_lambda_.1} parent=5 // pred_check
        %p1198 = pneg %p1197
      $region186: #{_lambda_.1} parent=5 // pred_check_branch
        %1200 = sbr.rel (%p1198) target = $region188
      $region187: #{_lambda_.1} parent=5 // pred_region
        // Predicated region
        $region189: #{_lambda_.1} parent=187 // pred_check
          %p1201 = pneg %p118
        $region190: #{_lambda_.1} parent=187 // pred_check_branch
          %1203 = sbr.rel (%p1201) target = $region192
        $region191: #{_lambda_.1} parent=187 // pred_region
          %p1204 = scmp.lt.s32.totalorder %s98, 1
          %s1205 = scalar_select %p1204, %s98, 1
          %s1206 = smul.addr %s1205, 4
          %s1207 = smul.addr %s1206, 8
          %s1208 = scalar_lea.vmem %s1, %s1207
        $region192: #{_lambda_.1} parent=187 // pred_fallthru
          _
      $region188: #{_lambda_.1} parent=5 // pred_fallthru
        _
      %p1209 = scmp.le.s32.totalorder 1, %s98
      %p1210 = scmp.lt.s32.totalorder %s98, 3
      %p1211 = pnand %p1209, %p1210
      %p1212 = pneg %p1211
      // Predicated region
      $region193: #{_lambda_.1} parent=5 // pred_check
        _
      $region194: #{_lambda_.1} parent=5 // pred_check_branch
        %1214 = sbr.rel (%p1211) target = $region196
      $region195: #{_lambda_.1} parent=5 // pred_region
        %s1215 = ssub.s32 %s98, 1
        %p1216 = scmp.lt.s32.totalorder %s103, 1
        %s1217 = scalar_select %p1216, %s103, 1
        %s1218 = smul.addr %s1217, 4
        %s1219 = smul.addr %s1218, 8
        %s1220 = scalar_lea.vmem %s1, %s1219
        %p1221 = pneg %p124
        %p1222 = pneg %p121
        %p1223 = pneg %p145
        %p1224 = pneg %p142
        %p1225 = pneg %p166
        %p1226 = pneg %p163
        %p1227 = pneg %p187
        %p1228 = pneg %p184
        %p1229 = pneg %p208
        %p1230 = pneg %p205
        %p1231 = pneg %p229
        %p1232 = pneg %p226
        %p1233 = pneg %p250
        %p1234 = pneg %p247
        %p1235 = pneg %p271
        %p1236 = pneg %p268
        %p1237 = pneg %p292
        %p1238 = pneg %p289
        %p1239 = pneg %p313
        %p1240 = pneg %p310
        %p1241 = pneg %p334
        %p1242 = pneg %p331
        %p1243 = pneg %p355
        %p1244 = pneg %p352
        %p1245 = pneg %p376
        %p1246 = pneg %p373
        %p1247 = pneg %p397
        %p1248 = pneg %p394
        %p1249 = pneg %p418
        %p1250 = pneg %p415
        %p1251 = pneg %p439
        %p1252 = pneg %p436
        %p1253 = pneg %p460
        %p1254 = pneg %p457
        %p1255 = pneg %p481
        %p1256 = pneg %p478
        %p1257 = pneg %p502
        %p1258 = pneg %p499
        %p1259 = pneg %p523
        %p1260 = pneg %p520
        %p1261 = pneg %p544
        %p1262 = pneg %p541
        %p1263 = pneg %p565
        %p1264 = pneg %p562
        %p1265 = pneg %p586
        %p1266 = pneg %p583
        %p1267 = pneg %p607
        %p1268 = pneg %p604
        %p1269 = pneg %p628
        %p1270 = pneg %p625
        %p1271 = pneg %p649
        %p1272 = pneg %p646
        %p1273 = pneg %p670
        %p1274 = pneg %p667
        %p1275 = pneg %p691
        %p1276 = pneg %p688
        %p1277 = pneg %p712
        %p1278 = pneg %p709
        %p1279 = pneg %p733
        %p1280 = pneg %p730
        %p1281 = pneg %p754
        %p1282 = pneg %p751
        %p1283 = pneg %p775
        %p1284 = pneg %p772
        %p1285 = pneg %p796
        %p1286 = pneg %p793
        %p1287 = pneg %p817
        %p1288 = pneg %p814
        %p1289 = pneg %p838
        %p1290 = pneg %p835
        %p1291 = pneg %p859
        %p1292 = pneg %p856
        %p1293 = pneg %p880
        %p1294 = pneg %p877
        %p1295 = pneg %p901
        %p1296 = pneg %p898
        %p1297 = pneg %p922
        %p1298 = pneg %p919
        %p1299 = pneg %p943
        %p1300 = pneg %p940
        %p1301 = pneg %p964
        %p1302 = pneg %p961
        %p1303 = pneg %p985
        %p1304 = pneg %p982
        %p1305 = pneg %p1006
        %p1306 = pneg %p1003
        %p1307 = pneg %p1027
        %p1308 = pneg %p1024
        %p1309 = pneg %p1053
        %p1310 = pneg %p1050
        %s1311 = sand.u32 %s1040, 1
        %s1312 = scalar_lea.sflag [#allocation5], %s1311
        %s1313 = sand.u32 %s1040, 1
        %s1314 = scalar_lea.vmem [#allocation4], %s1313
        %p1315 = scmp.lt.s32.totalorder %s103, 1
        %s1316 = scalar_select %p1315, %s103, 1
        %s1317 = smul.addr %s1316, 4
        %s1318 = smul.addr %s1317, 8
        %s1319 = scalar_lea.vmem %s1, %s1318
        %v1320 = vld [vmem:[%s1319] sm:$0xff]
        %v1321 = vld [vmem:[%s1319 + $0x8] sm:$0xff]
        %v1322 = vld [vmem:[%s1319 + $0x10] sm:$0xff]
        %v1323 = vld [vmem:[%s1319 + $0x18] sm:$0xff]
        %vm1324 = vcmask 780288
        %1325 = vst.msk [vmem:[#allocation2] sm:$0x7] %vm1324, 0.0
        %1326 = vst.msk [vmem:[#allocation2 + $0x23] sm:$0x7] %vm1324, 0.0
        %vm1327 = vcmask 785408
        %1328 = vst.msk [vmem:[#allocation2 + $0x3] sm:$0xff] %vm1327, %v1320
        %1329 = vst.msk [vmem:[#allocation2 + $0xb] sm:$0xff] %vm1327, %v1321
        %1330 = vst.msk [vmem:[#allocation2 + $0x13] sm:$0xff] %vm1327, %v1322
        %1331 = vst.msk [vmem:[#allocation2 + $0x1b] sm:$0xff] %vm1327, %v1323
        %v1332 = vld [vmem:[%s5] sm:$0x1]
        %v1333 = vld [vmem:[#allocation2] ss:$2 sm:$0xff]
        %s1334 = scalar_lea.vmem [#allocation2], 16
        %v1335 = vld [vmem:[%s1334] ss:$2 sm:$0xff]
        %v1336 = vld [vmem:[%s3] sm:$0xff]
        %v1337 = vld [vmem:[%s3 + $0x8] sm:$0xff]
        %v1338 = vld [vmem:[%s3 + $0x10] sm:$0xff]
        %v1339 = vld [vmem:[%s3 + $0x18] sm:$0xff]
        %v1340 = vld [vmem:[%s3 + $0x20] sm:$0xff]
        %v1341 = vld [vmem:[%s3 + $0x28] sm:$0xff]
        %v1342 = vld [vmem:[%s3 + $0x30] sm:$0xff]
        %v1343 = vld [vmem:[%s3 + $0x38] sm:$0xff]
        %v1344 = vld [vmem:[%s3 + $0x40] sm:$0xff]
        %v1345 = vld [vmem:[%s3 + $0x48] sm:$0xff]
        %v1346 = vld [vmem:[%s3 + $0x50] sm:$0xff]
        %v1347 = vld [vmem:[%s3 + $0x58] sm:$0xff]
        %s1348 = scalar_lea.vmem [#allocation2], 1
        %v1349 = vld [vmem:[%s1348] ss:$2 sm:$0xff]
        %s1350 = scalar_lea.vmem [#allocation2], 17
        %v1351 = vld [vmem:[%s1350] ss:$2 sm:$0xff]
        %v1352 = vld [vmem:[%s3 + $0x60] sm:$0xff]
        %v1353 = vld [vmem:[%s3 + $0x68] sm:$0xff]
        %v1354 = vld [vmem:[%s3 + $0x70] sm:$0xff]
        %v1355 = vld [vmem:[%s3 + $0x78] sm:$0xff]
        %v1356 = vld [vmem:[%s3 + $0x80] sm:$0xff]
        %v1357 = vld [vmem:[%s3 + $0x88] sm:$0xff]
        %v1358 = vld [vmem:[%s3 + $0x90] sm:$0xff]
        %v1359 = vld [vmem:[%s3 + $0x98] sm:$0xff]
        %v1360 = vld [vmem:[%s3 + $0xa0] sm:$0xff]
        %v1361 = vld [vmem:[%s3 + $0xa8] sm:$0xff]
        %v1362 = vld [vmem:[%s3 + $0xb0] sm:$0xff]
        %v1363 = vld [vmem:[%s3 + $0xb8] sm:$0xff]
        %v1365 = vsel %vm1327, %v1349, 0
        %v1368 = vsel %vm1327, %v1351, 0
        %1370 = vmatprep.subr.mxu0 0.0
        %1371 = vmatpush1.msra.mxu0 %v1352
        %1372 = vmatprep.subr.mxu0 0.0
        %1373 = vmatpush1.msra.mxu0 %v1353
        %1374 = vmatprep.subr.mxu0 0.0
        %1375 = vmatpush1.msra.mxu0 %v1354
        %1376 = vmatprep.subr.mxu0 0.0
        %1377 = vmatpush1.msra.mxu0 %v1355
        %1378 = vmatprep.subr.mxu0 0.0
        %1379 = vmatpush1.msra.mxu0 %v1356
        %1380 = vmatprep.subr.mxu0 0.0
        %1381 = vmatpush1.msra.mxu0 %v1357
        %1382 = vmatprep.subr.mxu0 0.0
        %1383 = vmatpush1.msra.mxu0 %v1358
        %1384 = vmatprep.subr.mxu0 0.0
        %1385 = vmatpush1.msra.mxu0 %v1359
        %1386 = vmatprep.subr.mxu0 0.0
        %1387 = vmatpush1.msra.mxu0 %v1360
        %1388 = vmatprep.subr.mxu0 0.0
        %1389 = vmatpush1.msra.mxu0 %v1361
        %1390 = vmatprep.subr.mxu0 0.0
        %1391 = vmatpush1.msra.mxu0 %v1362
        %1392 = vmatprep.subr.mxu0 0.0
        %1393 = vmatpush1.msra.mxu0 %v1363
        %1394 = vmatprep.subr.mxu0 0.0
        %1395 = vmatpush1.msra.mxu0 0.0
        %1396 = vmatprep.subr.mxu0 0.0
        %1397 = vmatpush1.msra.mxu0 0.0
        %1398 = vmatprep.subr.mxu0 0.0
        %1399 = vmatpush1.msra.mxu0 0.0
        %1400 = vmatprep.subr.mxu0 0.0
        %1401 = vmatpush1.msra.mxu0 0.0
        %1402 = vmatprep.subr.mxu0 0.0
        %1403 = vmatpush1.msra.mxu0 0.0
        %1404 = vmatprep.subr.mxu0 0.0
        %1405 = vmatpush1.msra.mxu0 0.0
        %1406 = vmatprep.subr.mxu0 0.0
        %1407 = vmatpush1.msra.mxu0 0.0
        %1408 = vmatprep.subr.mxu0 0.0
        %1409 = vmatpush1.msra.mxu0 0.0
        %1410 = vmatprep.subr.mxu0 0.0
        %1411 = vmatpush1.msra.mxu0 0.0
        %1412 = vmatprep.subr.mxu0 0.0
        %1413 = vmatpush1.msra.mxu0 0.0
        %1414 = vmatprep.subr.mxu0 0.0
        %1415 = vmatpush1.msra.mxu0 0.0
        %1416 = vmatprep.subr.mxu0 0.0
        %1417 = vmatpush1.msra.mxu0 0.0
        %1418 = vmatprep.subr.mxu0 0.0
        %1419 = vmatpush1.msra.mxu0 0.0
        %1420 = vmatprep.subr.mxu0 0.0
        %1421 = vmatpush1.msra.mxu0 0.0
        %1422 = vmatprep.subr.mxu0 0.0
        %1423 = vmatpush1.msra.mxu0 0.0
        %1424 = vmatprep.subr.mxu0 0.0
        %1425 = vmatpush1.msra.mxu0 0.0
        %1426 = vmatprep.subr.mxu0 0.0
        %1427 = vmatpush1.msra.mxu0 0.0
        %1428 = vmatprep.subr.mxu0 0.0
        %1429 = vmatpush1.msra.mxu0 0.0
        %1430 = vmatprep.subr.mxu0 0.0
        %1431 = vmatpush1.msra.mxu0 0.0
        %1432 = vmatprep.subr.mxu0 0.0
        %1433 = vmatpush1.msra.mxu0 0.0
        %1434 = vmatprep.mubr.f32.mxu0 0.0
        %1435 = vmatmul.mubr.f32.gmra.mrb[0].mxu0 %v1365
        %v1436 = vpop.f32.mrb[0].mxu0
        %v1437 = vadd.f32 0.0, %v1436
        %v1438 = vpop.f32.mrb[0].mxu0
        %1439 = vmatprep.mubr.f32.mxu0 0.0
        %1440 = vmatmul.mubr.f32.gmra.mrb[0].mxu0 %v1368
        %v1441 = vpop.f32.mrb[0].mxu0
        %v1442 = vadd.f32 0.0, %v1441
        %v1443 = vpop.f32.mrb[0].mxu0
        %1444 = vdwg.mxu0
        %v1446 = vsel %vm1327, %v1333, 0
        %v1449 = vsel %vm1327, %v1335, 0
        %1451 = vmatprep.subr.mxu0 0.0
        %1452 = vmatpush1.msra.mxu0 %v1336
        %1453 = vmatprep.subr.mxu0 0.0
        %1454 = vmatpush1.msra.mxu0 %v1337
        %1455 = vmatprep.subr.mxu0 0.0
        %1456 = vmatpush1.msra.mxu0 %v1338
        %1457 = vmatprep.subr.mxu0 0.0
        %1458 = vmatpush1.msra.mxu0 %v1339
        %1459 = vmatprep.subr.mxu0 0.0
        %1460 = vmatpush1.msra.mxu0 %v1340
        %1461 = vmatprep.subr.mxu0 0.0
        %1462 = vmatpush1.msra.mxu0 %v1341
        %1463 = vmatprep.subr.mxu0 0.0
        %1464 = vmatpush1.msra.mxu0 %v1342
        %1465 = vmatprep.subr.mxu0 0.0
        %1466 = vmatpush1.msra.mxu0 %v1343
        %1467 = vmatprep.subr.mxu0 0.0
        %1468 = vmatpush1.msra.mxu0 %v1344
        %1469 = vmatprep.subr.mxu0 0.0
        %1470 = vmatpush1.msra.mxu0 %v1345
        %1471 = vmatprep.subr.mxu0 0.0
        %1472 = vmatpush1.msra.mxu0 %v1346
        %1473 = vmatprep.subr.mxu0 0.0
        %1474 = vmatpush1.msra.mxu0 %v1347
        %1475 = vmatprep.subr.mxu0 0.0
        %1476 = vmatpush1.msra.mxu0 0.0
        %1477 = vmatprep.subr.mxu0 0.0
        %1478 = vmatpush1.msra.mxu0 0.0
        %1479 = vmatprep.subr.mxu0 0.0
        %1480 = vmatpush1.msra.mxu0 0.0
        %1481 = vmatprep.subr.mxu0 0.0
        %1482 = vmatpush1.msra.mxu0 0.0
        %1483 = vmatprep.subr.mxu0 0.0
        %1484 = vmatpush1.msra.mxu0 0.0
        %1485 = vmatprep.subr.mxu0 0.0
        %1486 = vmatpush1.msra.mxu0 0.0
        %1487 = vmatprep.subr.mxu0 0.0
        %1488 = vmatpush1.msra.mxu0 0.0
        %1489 = vmatprep.subr.mxu0 0.0
        %1490 = vmatpush1.msra.mxu0 0.0
        %1491 = vmatprep.subr.mxu0 0.0
        %1492 = vmatpush1.msra.mxu0 0.0
        %1493 = vmatprep.subr.mxu0 0.0
        %1494 = vmatpush1.msra.mxu0 0.0
        %1495 = vmatprep.subr.mxu0 0.0
        %1496 = vmatpush1.msra.mxu0 0.0
        %1497 = vmatprep.subr.mxu0 0.0
        %1498 = vmatpush1.msra.mxu0 0.0
        %1499 = vmatprep.subr.mxu0 0.0
        %1500 = vmatpush1.msra.mxu0 0.0
        %1501 = vmatprep.subr.mxu0 0.0
        %1502 = vmatpush1.msra.mxu0 0.0
        %1503 = vmatprep.subr.mxu0 0.0
        %1504 = vmatpush1.msra.mxu0 0.0
        %1505 = vmatprep.subr.mxu0 0.0
        %1506 = vmatpush1.msra.mxu0 0.0
        %1507 = vmatprep.subr.mxu0 0.0
        %1508 = vmatpush1.msra.mxu0 0.0
        %1509 = vmatprep.subr.mxu0 0.0
        %1510 = vmatpush1.msra.mxu0 0.0
        %1511 = vmatprep.subr.mxu0 0.0
        %1512 = vmatpush1.msra.mxu0 0.0
        %1513 = vmatprep.subr.mxu0 0.0
        %1514 = vmatpush1.msra.mxu0 0.0
        %1515 = vmatprep.mubr.f32.mxu0 0.0
        %1516 = vmatmul.mubr.f32.gmra.mrb[0].mxu0 %v1446
        %v1517 = vpop.f32.mrb[0].mxu0
        %v1518 = vadd.f32 %v1437, %v1517
        %v1519 = vpop.f32.mrb[0].mxu0
        %1520 = vmatprep.mubr.f32.mxu0 0.0
        %1521 = vmatmul.mubr.f32.gmra.mrb[0].mxu0 %v1449
        %v1522 = vpop.f32.mrb[0].mxu0
        %v1523 = vadd.f32 %v1442, %v1522
        %v1524 = vpop.f32.mrb[0].mxu0
        %1525 = vdwg.mxu0
        %s1526 = scalar_lea.vmem [#allocation2], 2
        %v1527 = vld [vmem:[%s1526] ss:$2 sm:$0xff]
        %s1528 = scalar_lea.vmem [#allocation2], 18
        %v1529 = vld [vmem:[%s1528] ss:$2 sm:$0xff]
        %v1530 = vld [vmem:[%s3 + $0xc0] sm:$0xff]
        %v1531 = vld [vmem:[%s3 + $0xc8] sm:$0xff]
        %v1532 = vld [vmem:[%s3 + $0xd0] sm:$0xff]
        %v1533 = vld [vmem:[%s3 + $0xd8] sm:$0xff]
        %v1534 = vld [vmem:[%s3 + $0xe0] sm:$0xff]
        %v1535 = vld [vmem:[%s3 + $0xe8] sm:$0xff]
        %v1536 = vld [vmem:[%s3 + $0xf0] sm:$0xff]
        %v1537 = vld [vmem:[%s3 + $0xf8] sm:$0xff]
        %v1538 = vld [vmem:[%s3 + $0x100] sm:$0xff]
        %v1539 = vld [vmem:[%s3 + $0x108] sm:$0xff]
        %v1540 = vld [vmem:[%s3 + $0x110] sm:$0xff]
        %v1541 = vld [vmem:[%s3 + $0x118] sm:$0xff]
        %v1543 = vsel %vm1327, %v1527, 0
        %v1546 = vsel %vm1327, %v1529, 0
        %1548 = vmatprep.subr.mxu0 0.0
        %1549 = vmatpush1.msra.mxu0 %v1530
        %1550 = vmatprep.subr.mxu0 0.0
        %1551 = vmatpush1.msra.mxu0 %v1531
        %1552 = vmatprep.subr.mxu0 0.0
        %1553 = vmatpush1.msra.mxu0 %v1532
        %1554 = vmatprep.subr.mxu0 0.0
        %1555 = vmatpush1.msra.mxu0 %v1533
        %1556 = vmatprep.subr.mxu0 0.0
        %1557 = vmatpush1.msra.mxu0 %v1534
        %1558 = vmatprep.subr.mxu0 0.0
        %1559 = vmatpush1.msra.mxu0 %v1535
        %1560 = vmatprep.subr.mxu0 0.0
        %1561 = vmatpush1.msra.mxu0 %v1536
        %1562 = vmatprep.subr.mxu0 0.0
        %1563 = vmatpush1.msra.mxu0 %v1537
        %1564 = vmatprep.subr.mxu0 0.0
        %1565 = vmatpush1.msra.mxu0 %v1538
        %1566 = vmatprep.subr.mxu0 0.0
        %1567 = vmatpush1.msra.mxu0 %v1539
        %1568 = vmatprep.subr.mxu0 0.0
        %1569 = vmatpush1.msra.mxu0 %v1540
        %1570 = vmatprep.subr.mxu0 0.0
        %1571 = vmatpush1.msra.mxu0 %v1541
        %1572 = vmatprep.subr.mxu0 0.0
        %1573 = vmatpush1.msra.mxu0 0.0
        %1574 = vmatprep.subr.mxu0 0.0
        %1575 = vmatpush1.msra.mxu0 0.0
        %1576 = vmatprep.subr.mxu0 0.0
        %1577 = vmatpush1.msra.mxu0 0.0
        %1578 = vmatprep.subr.mxu0 0.0
        %1579 = vmatpush1.msra.mxu0 0.0
        %1580 = vmatprep.subr.mxu0 0.0
        %1581 = vmatpush1.msra.mxu0 0.0
        %1582 = vmatprep.subr.mxu0 0.0
        %1583 = vmatpush1.msra.mxu0 0.0
        %1584 = vmatprep.subr.mxu0 0.0
        %1585 = vmatpush1.msra.mxu0 0.0
        %1586 = vmatprep.subr.mxu0 0.0
        %1587 = vmatpush1.msra.mxu0 0.0
        %1588 = vmatprep.subr.mxu0 0.0
        %1589 = vmatpush1.msra.mxu0 0.0
        %1590 = vmatprep.subr.mxu0 0.0
        %1591 = vmatpush1.msra.mxu0 0.0
        %1592 = vmatprep.subr.mxu0 0.0
        %1593 = vmatpush1.msra.mxu0 0.0
        %1594 = vmatprep.subr.mxu0 0.0
        %1595 = vmatpush1.msra.mxu0 0.0
        %1596 = vmatprep.subr.mxu0 0.0
        %1597 = vmatpush1.msra.mxu0 0.0
        %1598 = vmatprep.subr.mxu0 0.0
        %1599 = vmatpush1.msra.mxu0 0.0
        %1600 = vmatprep.subr.mxu0 0.0
        %1601 = vmatpush1.msra.mxu0 0.0
        %1602 = vmatprep.subr.mxu0 0.0
        %1603 = vmatpush1.msra.mxu0 0.0
        %1604 = vmatprep.subr.mxu0 0.0
        %1605 = vmatpush1.msra.mxu0 0.0
        %1606 = vmatprep.subr.mxu0 0.0
        %1607 = vmatpush1.msra.mxu0 0.0
        %1608 = vmatprep.subr.mxu0 0.0
        %1609 = vmatpush1.msra.mxu0 0.0
        %1610 = vmatprep.subr.mxu0 0.0
        %1611 = vmatpush1.msra.mxu0 0.0
        %1612 = vmatprep.mubr.f32.mxu0 0.0
        %1613 = vmatmul.mubr.f32.gmra.mrb[0].mxu0 %v1543
        %v1614 = vpop.f32.mrb[0].mxu0
        %v1615 = vadd.f32 0.0, %v1614
        %v1616 = vpop.f32.mrb[0].mxu0
        %1617 = vmatprep.mubr.f32.mxu0 0.0
        %1618 = vmatmul.mubr.f32.gmra.mrb[0].mxu0 %v1546
        %v1619 = vpop.f32.mrb[0].mxu0
        %v1620 = vadd.f32 0.0, %v1619
        %v1621 = vpop.f32.mrb[0].mxu0
        %1622 = vdwg.mxu0
        %v1623 = vadd.f32 %v1518, %v1615
        %v1624 = vadd.f32 %v1523, %v1620
        %s1625 = scalar_lea.vmem [#allocation2], 3
        %v1626 = vld [vmem:[%s1625] ss:$2 sm:$0xff]
        %s1627 = scalar_lea.vmem [#allocation2], 19
        %v1628 = vld [vmem:[%s1627] ss:$2 sm:$0xff]
        %v1629 = vld [vmem:[%s3 + $0x120] sm:$0xff]
        %v1630 = vld [vmem:[%s3 + $0x128] sm:$0xff]
        %v1631 = vld [vmem:[%s3 + $0x130] sm:$0xff]
        %v1632 = vld [vmem:[%s3 + $0x138] sm:$0xff]
        %v1633 = vld [vmem:[%s3 + $0x140] sm:$0xff]
        %v1634 = vld [vmem:[%s3 + $0x148] sm:$0xff]
        %v1635 = vld [vmem:[%s3 + $0x150] sm:$0xff]
        %v1636 = vld [vmem:[%s3 + $0x158] sm:$0xff]
        %v1637 = vld [vmem:[%s3 + $0x160] sm:$0xff]
        %v1638 = vld [vmem:[%s3 + $0x168] sm:$0xff]
        %v1639 = vld [vmem:[%s3 + $0x170] sm:$0xff]
        %v1640 = vld [vmem:[%s3 + $0x178] sm:$0xff]
        %v1642 = vsel %vm1327, %v1626, 0
        %v1645 = vsel %vm1327, %v1628, 0
        %1647 = vmatprep.subr.mxu0 0.0
        %1648 = vmatpush1.msra.mxu0 %v1629
        %1649 = vmatprep.subr.mxu0 0.0
        %1650 = vmatpush1.msra.mxu0 %v1630
        %1651 = vmatprep.subr.mxu0 0.0
        %1652 = vmatpush1.msra.mxu0 %v1631
        %1653 = vmatprep.subr.mxu0 0.0
        %1654 = vmatpush1.msra.mxu0 %v1632
        %1655 = vmatprep.subr.mxu0 0.0
        %1656 = vmatpush1.msra.mxu0 %v1633
        %1657 = vmatprep.subr.mxu0 0.0
        %1658 = vmatpush1.msra.mxu0 %v1634
        %1659 = vmatprep.subr.mxu0 0.0
        %1660 = vmatpush1.msra.mxu0 %v1635
        %1661 = vmatprep.subr.mxu0 0.0
        %1662 = vmatpush1.msra.mxu0 %v1636
        %1663 = vmatprep.subr.mxu0 0.0
        %1664 = vmatpush1.msra.mxu0 %v1637
        %1665 = vmatprep.subr.mxu0 0.0
        %1666 = vmatpush1.msra.mxu0 %v1638
        %1667 = vmatprep.subr.mxu0 0.0
        %1668 = vmatpush1.msra.mxu0 %v1639
        %1669 = vmatprep.subr.mxu0 0.0
        %1670 = vmatpush1.msra.mxu0 %v1640
        %1671 = vmatprep.subr.mxu0 0.0
        %1672 = vmatpush1.msra.mxu0 0.0
        %1673 = vmatprep.subr.mxu0 0.0
        %1674 = vmatpush1.msra.mxu0 0.0
        %1675 = vmatprep.subr.mxu0 0.0
        %1676 = vmatpush1.msra.mxu0 0.0
        %1677 = vmatprep.subr.mxu0 0.0
        %1678 = vmatpush1.msra.mxu0 0.0
        %1679 = vmatprep.subr.mxu0 0.0
        %1680 = vmatpush1.msra.mxu0 0.0
        %1681 = vmatprep.subr.mxu0 0.0
        %1682 = vmatpush1.msra.mxu0 0.0
        %1683 = vmatprep.subr.mxu0 0.0
        %1684 = vmatpush1.msra.mxu0 0.0
        %1685 = vmatprep.subr.mxu0 0.0
        %1686 = vmatpush1.msra.mxu0 0.0
        %1687 = vmatprep.subr.mxu0 0.0
        %1688 = vmatpush1.msra.mxu0 0.0
        %1689 = vmatprep.subr.mxu0 0.0
        %1690 = vmatpush1.msra.mxu0 0.0
        %1691 = vmatprep.subr.mxu0 0.0
        %1692 = vmatpush1.msra.mxu0 0.0
        %1693 = vmatprep.subr.mxu0 0.0
        %1694 = vmatpush1.msra.mxu0 0.0
        %1695 = vmatprep.subr.mxu0 0.0
        %1696 = vmatpush1.msra.mxu0 0.0
        %1697 = vmatprep.subr.mxu0 0.0
        %1698 = vmatpush1.msra.mxu0 0.0
        %1699 = vmatprep.subr.mxu0 0.0
        %1700 = vmatpush1.msra.mxu0 0.0
        %1701 = vmatprep.subr.mxu0 0.0
        %1702 = vmatpush1.msra.mxu0 0.0
        %1703 = vmatprep.subr.mxu0 0.0
        %1704 = vmatpush1.msra.mxu0 0.0
        %1705 = vmatprep.subr.mxu0 0.0
        %1706 = vmatpush1.msra.mxu0 0.0
        %1707 = vmatprep.subr.mxu0 0.0
        %1708 = vmatpush1.msra.mxu0 0.0
        %1709 = vmatprep.subr.mxu0 0.0
        %1710 = vmatpush1.msra.mxu0 0.0
        %1711 = vmatprep.mubr.f32.mxu0 0.0
        %1712 = vmatmul.mubr.f32.gmra.mrb[0].mxu0 %v1642
        %v1713 = vpop.f32.mrb[0].mxu0
        %v1714 = vadd.f32 0.0, %v1713
        %v1715 = vpop.f32.mrb[0].mxu0
        %1716 = vmatprep.mubr.f32.mxu0 0.0
        %1717 = vmatmul.mubr.f32.gmra.mrb[0].mxu0 %v1645
        %v1718 = vpop.f32.mrb[0].mxu0
        %v1719 = vadd.f32 0.0, %v1718
        %v1720 = vpop.f32.mrb[0].mxu0
        %1721 = vdwg.mxu0
        %v1722 = vadd.f32 %v1623, %v1714
        %v1723 = vadd.f32 %v1624, %v1719
        %s1724 = scalar_lea.vmem [#allocation2], 4
        %v1725 = vld [vmem:[%s1724] ss:$2 sm:$0xff]
        %s1726 = scalar_lea.vmem [#allocation2], 20
        %v1727 = vld [vmem:[%s1726] ss:$2 sm:$0xff]
        %v1728 = vld [vmem:[%s3 + $0x180] sm:$0xff]
        %v1729 = vld [vmem:[%s3 + $0x188] sm:$0xff]
        %v1730 = vld [vmem:[%s3 + $0x190] sm:$0xff]
        %v1731 = vld [vmem:[%s3 + $0x198] sm:$0xff]
        %v1732 = vld [vmem:[%s3 + $0x1a0] sm:$0xff]
        %v1733 = vld [vmem:[%s3 + $0x1a8] sm:$0xff]
        %v1734 = vld [vmem:[%s3 + $0x1b0] sm:$0xff]
        %v1735 = vld [vmem:[%s3 + $0x1b8] sm:$0xff]
        %v1736 = vld [vmem:[%s3 + $0x1c0] sm:$0xff]
        %v1737 = vld [vmem:[%s3 + $0x1c8] sm:$0xff]
        %v1738 = vld [vmem:[%s3 + $0x1d0] sm:$0xff]
        %v1739 = vld [vmem:[%s3 + $0x1d8] sm:$0xff]
        %v1741 = vsel %vm1327, %v1725, 0
        %v1744 = vsel %vm1327, %v1727, 0
        %1746 = vmatprep.subr.mxu0 0.0
        %1747 = vmatpush1.msra.mxu0 %v1728
        %1748 = vmatprep.subr.mxu0 0.0
        %1749 = vmatpush1.msra.mxu0 %v1729
        %1750 = vmatprep.subr.mxu0 0.0
        %1751 = vmatpush1.msra.mxu0 %v1730
        %1752 = vmatprep.subr.mxu0 0.0
        %1753 = vmatpush1.msra.mxu0 %v1731
        %1754 = vmatprep.subr.mxu0 0.0
        %1755 = vmatpush1.msra.mxu0 %v1732
        %1756 = vmatprep.subr.mxu0 0.0
        %1757 = vmatpush1.msra.mxu0 %v1733
        %1758 = vmatprep.subr.mxu0 0.0
        %1759 = vmatpush1.msra.mxu0 %v1734
        %1760 = vmatprep.subr.mxu0 0.0
        %1761 = vmatpush1.msra.mxu0 %v1735
        %1762 = vmatprep.subr.mxu0 0.0
        %1763 = vmatpush1.msra.mxu0 %v1736
        %1764 = vmatprep.subr.mxu0 0.0
        %1765 = vmatpush1.msra.mxu0 %v1737
        %1766 = vmatprep.subr.mxu0 0.0
        %1767 = vmatpush1.msra.mxu0 %v1738
        %1768 = vmatprep.subr.mxu0 0.0
        %1769 = vmatpush1.msra.mxu0 %v1739
        %1770 = vmatprep.subr.mxu0 0.0
        %1771 = vmatpush1.msra.mxu0 0.0
        %1772 = vmatprep.subr.mxu0 0.0
        %1773 = vmatpush1.msra.mxu0 0.0
        %1774 = vmatprep.subr.mxu0 0.0
        %1775 = vmatpush1.msra.mxu0 0.0
        %1776 = vmatprep.subr.mxu0 0.0
        %1777 = vmatpush1.msra.mxu0 0.0
        %1778 = vmatprep.subr.mxu0 0.0
        %1779 = vmatpush1.msra.mxu0 0.0
        %1780 = vmatprep.subr.mxu0 0.0
        %1781 = vmatpush1.msra.mxu0 0.0
        %1782 = vmatprep.subr.mxu0 0.0
        %1783 = vmatpush1.msra.mxu0 0.0
        %1784 = vmatprep.subr.mxu0 0.0
        %1785 = vmatpush1.msra.mxu0 0.0
        %1786 = vmatprep.subr.mxu0 0.0
        %1787 = vmatpush1.msra.mxu0 0.0
        %1788 = vmatprep.subr.mxu0 0.0
        %1789 = vmatpush1.msra.mxu0 0.0
        %1790 = vmatprep.subr.mxu0 0.0
        %1791 = vmatpush1.msra.mxu0 0.0
        %1792 = vmatprep.subr.mxu0 0.0
        %1793 = vmatpush1.msra.mxu0 0.0
        %1794 = vmatprep.subr.mxu0 0.0
        %1795 = vmatpush1.msra.mxu0 0.0
        %1796 = vmatprep.subr.mxu0 0.0
        %1797 = vmatpush1.msra.mxu0 0.0
        %1798 = vmatprep.subr.mxu0 0.0
        %1799 = vmatpush1.msra.mxu0 0.0
        %1800 = vmatprep.subr.mxu0 0.0
        %1801 = vmatpush1.msra.mxu0 0.0
        %1802 = vmatprep.subr.mxu0 0.0
        %1803 = vmatpush1.msra.mxu0 0.0
        %1804 = vmatprep.subr.mxu0 0.0
        %1805 = vmatpush1.msra.mxu0 0.0
        %1806 = vmatprep.subr.mxu0 0.0
        %1807 = vmatpush1.msra.mxu0 0.0
        %1808 = vmatprep.subr.mxu0 0.0
        %1809 = vmatpush1.msra.mxu0 0.0
        %1810 = vmatprep.mubr.f32.mxu0 0.0
        %1811 = vmatmul.mubr.f32.gmra.mrb[0].mxu0 %v1741
        %v1812 = vpop.f32.mrb[0].mxu0
        %v1813 = vadd.f32 0.0, %v1812
        %v1814 = vpop.f32.mrb[0].mxu0
        %1815 = vmatprep.mubr.f32.mxu0 0.0
        %1816 = vmatmul.mubr.f32.gmra.mrb[0].mxu0 %v1744
        %v1817 = vpop.f32.mrb[0].mxu0
        %v1818 = vadd.f32 0.0, %v1817
        %v1819 = vpop.f32.mrb[0].mxu0
        %1820 = vdwg.mxu0
        %v1821 = vadd.f32 %v1722, %v1813
        %v1822 = vadd.f32 %v1723, %v1818
        %s1823 = scalar_lea.vmem [#allocation2], 5
        %v1824 = vld [vmem:[%s1823] ss:$2 sm:$0xff]
        %s1825 = scalar_lea.vmem [#allocation2], 21
        %v1826 = vld [vmem:[%s1825] ss:$2 sm:$0xff]
        %v1827 = vld [vmem:[%s3 + $0x1e0] sm:$0xff]
        %v1828 = vld [vmem:[%s3 + $0x1e8] sm:$0xff]
        %v1829 = vld [vmem:[%s3 + $0x1f0] sm:$0xff]
        %v1830 = vld [vmem:[%s3 + $0x1f8] sm:$0xff]
        %v1831 = vld [vmem:[%s3 + $0x200] sm:$0xff]
        %v1832 = vld [vmem:[%s3 + $0x208] sm:$0xff]
        %v1833 = vld [vmem:[%s3 + $0x210] sm:$0xff]
        %v1834 = vld [vmem:[%s3 + $0x218] sm:$0xff]
        %v1835 = vld [vmem:[%s3 + $0x220] sm:$0xff]
        %v1836 = vld [vmem:[%s3 + $0x228] sm:$0xff]
        %v1837 = vld [vmem:[%s3 + $0x230] sm:$0xff]
        %v1838 = vld [vmem:[%s3 + $0x238] sm:$0xff]
        %v1840 = vsel %vm1327, %v1824, 0
        %v1843 = vsel %vm1327, %v1826, 0
        %1845 = vmatprep.subr.mxu0 0.0
        %1846 = vmatpush1.msra.mxu0 %v1827
        %1847 = vmatprep.subr.mxu0 0.0
        %1848 = vmatpush1.msra.mxu0 %v1828
        %1849 = vmatprep.subr.mxu0 0.0
        %1850 = vmatpush1.msra.mxu0 %v1829
        %1851 = vmatprep.subr.mxu0 0.0
        %1852 = vmatpush1.msra.mxu0 %v1830
        %1853 = vmatprep.subr.mxu0 0.0
        %1854 = vmatpush1.msra.mxu0 %v1831
        %1855 = vmatprep.subr.mxu0 0.0
        %1856 = vmatpush1.msra.mxu0 %v1832
        %1857 = vmatprep.subr.mxu0 0.0
        %1858 = vmatpush1.msra.mxu0 %v1833
        %1859 = vmatprep.subr.mxu0 0.0
        %1860 = vmatpush1.msra.mxu0 %v1834
        %1861 = vmatprep.subr.mxu0 0.0
        %1862 = vmatpush1.msra.mxu0 %v1835
        %1863 = vmatprep.subr.mxu0 0.0
        %1864 = vmatpush1.msra.mxu0 %v1836
        %1865 = vmatprep.subr.mxu0 0.0
        %1866 = vmatpush1.msra.mxu0 %v1837
        %1867 = vmatprep.subr.mxu0 0.0
        %1868 = vmatpush1.msra.mxu0 %v1838
        %1869 = vmatprep.subr.mxu0 0.0
        %1870 = vmatpush1.msra.mxu0 0.0
        %1871 = vmatprep.subr.mxu0 0.0
        %1872 = vmatpush1.msra.mxu0 0.0
        %1873 = vmatprep.subr.mxu0 0.0
        %1874 = vmatpush1.msra.mxu0 0.0
        %1875 = vmatprep.subr.mxu0 0.0
        %1876 = vmatpush1.msra.mxu0 0.0
        %1877 = vmatprep.subr.mxu0 0.0
        %1878 = vmatpush1.msra.mxu0 0.0
        %1879 = vmatprep.subr.mxu0 0.0
        %1880 = vmatpush1.msra.mxu0 0.0
        %1881 = vmatprep.subr.mxu0 0.0
        %1882 = vmatpush1.msra.mxu0 0.0
        %1883 = vmatprep.subr.mxu0 0.0
        %1884 = vmatpush1.msra.mxu0 0.0
        %1885 = vmatprep.subr.mxu0 0.0
        %1886 = vmatpush1.msra.mxu0 0.0
        %1887 = vmatprep.subr.mxu0 0.0
        %1888 = vmatpush1.msra.mxu0 0.0
        %1889 = vmatprep.subr.mxu0 0.0
        %1890 = vmatpush1.msra.mxu0 0.0
        %1891 = vmatprep.subr.mxu0 0.0
        %1892 = vmatpush1.msra.mxu0 0.0
        %1893 = vmatprep.subr.mxu0 0.0
        %1894 = vmatpush1.msra.mxu0 0.0
        %1895 = vmatprep.subr.mxu0 0.0
        %1896 = vmatpush1.msra.mxu0 0.0
        %1897 = vmatprep.subr.mxu0 0.0
        %1898 = vmatpush1.msra.mxu0 0.0
        %1899 = vmatprep.subr.mxu0 0.0
        %1900 = vmatpush1.msra.mxu0 0.0
        %1901 = vmatprep.subr.mxu0 0.0
        %1902 = vmatpush1.msra.mxu0 0.0
        %1903 = vmatprep.subr.mxu0 0.0
        %1904 = vmatpush1.msra.mxu0 0.0
        %1905 = vmatprep.subr.mxu0 0.0
        %1906 = vmatpush1.msra.mxu0 0.0
        %1907 = vmatprep.subr.mxu0 0.0
        %1908 = vmatpush1.msra.mxu0 0.0
        %1909 = vmatprep.mubr.f32.mxu0 0.0
        %1910 = vmatmul.mubr.f32.gmra.mrb[0].mxu0 %v1840
        %v1911 = vpop.f32.mrb[0].mxu0
        %v1912 = vadd.f32 0.0, %v1911
        %v1913 = vpop.f32.mrb[0].mxu0
        %1914 = vmatprep.mubr.f32.mxu0 0.0
        %1915 = vmatmul.mubr.f32.gmra.mrb[0].mxu0 %v1843
        %v1916 = vpop.f32.mrb[0].mxu0
        %v1917 = vadd.f32 0.0, %v1916
        %v1918 = vpop.f32.mrb[0].mxu0
        %1919 = vdwg.mxu0
        %v1920 = vadd.f32 %v1821, %v1912
        %v1921 = vadd.f32 %v1822, %v1917
        %s1922 = scalar_lea.vmem [#allocation2], 6
        %v1923 = vld [vmem:[%s1922] ss:$2 sm:$0xff]
        %s1924 = scalar_lea.vmem [#allocation2], 22
        %v1925 = vld [vmem:[%s1924] ss:$2 sm:$0xff]
        %v1926 = vld [vmem:[%s3 + $0x240] sm:$0xff]
        %v1927 = vld [vmem:[%s3 + $0x248] sm:$0xff]
        %v1928 = vld [vmem:[%s3 + $0x250] sm:$0xff]
        %v1929 = vld [vmem:[%s3 + $0x258] sm:$0xff]
        %v1930 = vld [vmem:[%s3 + $0x260] sm:$0xff]
        %v1931 = vld [vmem:[%s3 + $0x268] sm:$0xff]
        %v1932 = vld [vmem:[%s3 + $0x270] sm:$0xff]
        %v1933 = vld [vmem:[%s3 + $0x278] sm:$0xff]
        %v1934 = vld [vmem:[%s3 + $0x280] sm:$0xff]
        %v1935 = vld [vmem:[%s3 + $0x288] sm:$0xff]
        %v1936 = vld [vmem:[%s3 + $0x290] sm:$0xff]
        %v1937 = vld [vmem:[%s3 + $0x298] sm:$0xff]
        %v1939 = vsel %vm1327, %v1923, 0
        %v1942 = vsel %vm1327, %v1925, 0
        %1944 = vmatprep.subr.mxu0 0.0
        %1945 = vmatpush1.msra.mxu0 %v1926
        %1946 = vmatprep.subr.mxu0 0.0
        %1947 = vmatpush1.msra.mxu0 %v1927
        %1948 = vmatprep.subr.mxu0 0.0
        %1949 = vmatpush1.msra.mxu0 %v1928
        %1950 = vmatprep.subr.mxu0 0.0
        %1951 = vmatpush1.msra.mxu0 %v1929
        %1952 = vmatprep.subr.mxu0 0.0
        %1953 = vmatpush1.msra.mxu0 %v1930
        %1954 = vmatprep.subr.mxu0 0.0
        %1955 = vmatpush1.msra.mxu0 %v1931
        %1956 = vmatprep.subr.mxu0 0.0
        %1957 = vmatpush1.msra.mxu0 %v1932
        %1958 = vmatprep.subr.mxu0 0.0
        %1959 = vmatpush1.msra.mxu0 %v1933
        %1960 = vmatprep.subr.mxu0 0.0
        %1961 = vmatpush1.msra.mxu0 %v1934
        %1962 = vmatprep.subr.mxu0 0.0
        %1963 = vmatpush1.msra.mxu0 %v1935
        %1964 = vmatprep.subr.mxu0 0.0
        %1965 = vmatpush1.msra.mxu0 %v1936
        %1966 = vmatprep.subr.mxu0 0.0
        %1967 = vmatpush1.msra.mxu0 %v1937
        %1968 = vmatprep.subr.mxu0 0.0
        %1969 = vmatpush1.msra.mxu0 0.0
        %1970 = vmatprep.subr.mxu0 0.0
        %1971 = vmatpush1.msra.mxu0 0.0
        %1972 = vmatprep.subr.mxu0 0.0
        %1973 = vmatpush1.msra.mxu0 0.0
        %1974 = vmatprep.subr.mxu0 0.0
        %1975 = vmatpush1.msra.mxu0 0.0
        %1976 = vmatprep.subr.mxu0 0.0
        %1977 = vmatpush1.msra.mxu0 0.0
        %1978 = vmatprep.subr.mxu0 0.0
        %1979 = vmatpush1.msra.mxu0 0.0
        %1980 = vmatprep.subr.mxu0 0.0
        %1981 = vmatpush1.msra.mxu0 0.0
        %1982 = vmatprep.subr.mxu0 0.0
        %1983 = vmatpush1.msra.mxu0 0.0
        %1984 = vmatprep.subr.mxu0 0.0
        %1985 = vmatpush1.msra.mxu0 0.0
        %1986 = vmatprep.subr.mxu0 0.0
        %1987 = vmatpush1.msra.mxu0 0.0
        %1988 = vmatprep.subr.mxu0 0.0
        %1989 = vmatpush1.msra.mxu0 0.0
        %1990 = vmatprep.subr.mxu0 0.0
        %1991 = vmatpush1.msra.mxu0 0.0
        %1992 = vmatprep.subr.mxu0 0.0
        %1993 = vmatpush1.msra.mxu0 0.0
        %1994 = vmatprep.subr.mxu0 0.0
        %1995 = vmatpush1.msra.mxu0 0.0
        %1996 = vmatprep.subr.mxu0 0.0
        %1997 = vmatpush1.msra.mxu0 0.0
        %1998 = vmatprep.subr.mxu0 0.0
        %1999 = vmatpush1.msra.mxu0 0.0
        %2000 = vmatprep.subr.mxu0 0.0
        %2001 = vmatpush1.msra.mxu0 0.0
        %2002 = vmatprep.subr.mxu0 0.0
        %2003 = vmatpush1.msra.mxu0 0.0
        %2004 = vmatprep.subr.mxu0 0.0
        %2005 = vmatpush1.msra.mxu0 0.0
        %2006 = vmatprep.subr.mxu0 0.0
        %2007 = vmatpush1.msra.mxu0 0.0
        %2008 = vmatprep.mubr.f32.mxu0 0.0
        %2009 = vmatmul.mubr.f32.gmra.mrb[0].mxu0 %v1939
        %v2010 = vpop.f32.mrb[0].mxu0
        %v2011 = vadd.f32 0.0, %v2010
        %v2012 = vpop.f32.mrb[0].mxu0
        %2013 = vmatprep.mubr.f32.mxu0 0.0
        %2014 = vmatmul.mubr.f32.gmra.mrb[0].mxu0 %v1942
        %v2015 = vpop.f32.mrb[0].mxu0
        %v2016 = vadd.f32 0.0, %v2015
        %v2017 = vpop.f32.mrb[0].mxu0
        %2018 = vdwg.mxu0
        %v2019 = vadd.f32 %v1920, %v2011
        %v2020 = vadd.f32 %v1921, %v2016
        %v2022 = vlaneseq
        %v2023 = vshrl.u32 %v2022, 7
        %v2024 = vsub.s32 0, %v2023
        %v2025 = vrot.slane %v1332, %v2024
        %v2027 = vadd.f32 %v2019, %v2025
        %v2028 = vadd.f32 %v2020, %v2025
        %v2029 = vmax.f32 %v2027, 0.0
        %v2030 = vmax.f32 %v2028, 0.0
        %2031 = vst [vmem:[#allocation3] sm:$0x1] 0.0
        %2032 = vst [vmem:[#allocation3 + $0x11] sm:$0x1] 0.0
        %2033 = vst [vmem:[#allocation3 + $0x1] sm:$0xff] %v2029
        %2034 = vst [vmem:[#allocation3 + $0x9] sm:$0xff] %v2030
        %v2035 = vld [vmem:[#allocation3] ss:$2 sm:$0xff]
        %v2036 = vld [vmem:[%s7] sm:$0xff]
        %v2037 = vld [vmem:[%s7 + $0x8] sm:$0xff]
        %v2038 = vld [vmem:[%s7 + $0x10] sm:$0xff]
        %v2039 = vld [vmem:[%s7 + $0x18] sm:$0xff]
        %v2040 = vld [vmem:[%s7 + $0x20] sm:$0xff]
        %v2041 = vld [vmem:[%s7 + $0x28] sm:$0xff]
        %v2042 = vld [vmem:[%s7 + $0x30] sm:$0xff]
        %v2043 = vld [vmem:[%s7 + $0x38] sm:$0xff]
        %v2044 = vld [vmem:[%s7 + $0x40] sm:$0xff]
        %v2045 = vld [vmem:[%s7 + $0x48] sm:$0xff]
        %v2046 = vld [vmem:[%s7 + $0x50] sm:$0xff]
        %v2047 = vld [vmem:[%s7 + $0x58] sm:$0xff]
        %v2048 = vld [vmem:[%s7 + $0x60] sm:$0xff]
        %v2049 = vld [vmem:[%s7 + $0x68] sm:$0xff]
        %v2050 = vld [vmem:[%s7 + $0x70] sm:$0xff]
        %v2051 = vld [vmem:[%s7 + $0x78] sm:$0xff]
        %2052 = vmatprep.subr.mxu0 0.0
        %2053 = vmatpush1.msra.mxu0 %v2036
        %2054 = vmatprep.subr.mxu0 0.0
        %2055 = vmatpush1.msra.mxu0 %v2037
        %2056 = vmatprep.subr.mxu0 0.0
        %2057 = vmatpush1.msra.mxu0 %v2038
        %2058 = vmatprep.subr.mxu0 0.0
        %2059 = vmatpush1.msra.mxu0 %v2039
        %2060 = vmatprep.subr.mxu0 0.0
        %2061 = vmatpush1.msra.mxu0 %v2040
        %2062 = vmatprep.subr.mxu0 0.0
        %2063 = vmatpush1.msra.mxu0 %v2041
        %2064 = vmatprep.subr.mxu0 0.0
        %2065 = vmatpush1.msra.mxu0 %v2042
        %2066 = vmatprep.subr.mxu0 0.0
        %2067 = vmatpush1.msra.mxu0 %v2043
        %2068 = vmatprep.subr.mxu0 0.0
        %2069 = vmatpush1.msra.mxu0 %v2044
        %2070 = vmatprep.subr.mxu0 0.0
        %2071 = vmatpush1.msra.mxu0 %v2045
        %2072 = vmatprep.subr.mxu0 0.0
        %2073 = vmatpush1.msra.mxu0 %v2046
        %2074 = vmatprep.subr.mxu0 0.0
        %2075 = vmatpush1.msra.mxu0 %v2047
        %2076 = vmatprep.subr.mxu0 0.0
        %2077 = vmatpush1.msra.mxu0 %v2048
        %2078 = vmatprep.subr.mxu0 0.0
        %2079 = vmatpush1.msra.mxu0 %v2049
        %2080 = vmatprep.subr.mxu0 0.0
        %2081 = vmatpush1.msra.mxu0 %v2050
        %2082 = vmatprep.subr.mxu0 0.0
        %2083 = vmatpush1.msra.mxu0 %v2051
        %2084 = vmatprep.subr.mxu0 0.0
        %2085 = vmatpush1.msra.mxu0 0.0
        %2086 = vmatprep.subr.mxu0 0.0
        %2087 = vmatpush1.msra.mxu0 0.0
        %2088 = vmatprep.subr.mxu0 0.0
        %2089 = vmatpush1.msra.mxu0 0.0
        %2090 = vmatprep.subr.mxu0 0.0
        %2091 = vmatpush1.msra.mxu0 0.0
        %2092 = vmatprep.subr.mxu0 0.0
        %2093 = vmatpush1.msra.mxu0 0.0
        %2094 = vmatprep.subr.mxu0 0.0
        %2095 = vmatpush1.msra.mxu0 0.0
        %2096 = vmatprep.subr.mxu0 0.0
        %2097 = vmatpush1.msra.mxu0 0.0
        %2098 = vmatprep.subr.mxu0 0.0
        %2099 = vmatpush1.msra.mxu0 0.0
        %2100 = vmatprep.subr.mxu0 0.0
        %2101 = vmatpush1.msra.mxu0 0.0
        %2102 = vmatprep.subr.mxu0 0.0
        %2103 = vmatpush1.msra.mxu0 0.0
        %2104 = vmatprep.subr.mxu0 0.0
        %2105 = vmatpush1.msra.mxu0 0.0
        %2106 = vmatprep.subr.mxu0 0.0
        %2107 = vmatpush1.msra.mxu0 0.0
        %2108 = vmatprep.subr.mxu0 0.0
        %2109 = vmatpush1.msra.mxu0 0.0
        %2110 = vmatprep.subr.mxu0 0.0
        %2111 = vmatpush1.msra.mxu0 0.0
        %2112 = vmatprep.subr.mxu0 0.0
        %2113 = vmatpush1.msra.mxu0 0.0
        %2114 = vmatprep.subr.mxu0 0.0
        %2115 = vmatpush1.msra.mxu0 0.0
        %2116 = vmatprep.mubr.f32.mxu0 0.0
        %2117 = vmatmul.mubr.f32.gmra.mrb[0].mxu0 %v2035
        %v2118 = vpop.f32.mrb[0].mxu0
        %v2119 = vadd.f32 0.0, %v2118
        %v2120 = vpop.f32.mrb[0].mxu0
        %2121 = vdwg.mxu0
        %v2122 = vld [vmem:[%s7 + $0x80] sm:$0xff]
        %v2123 = vld [vmem:[%s7 + $0x88] sm:$0xff]
        %v2124 = vld [vmem:[%s7 + $0x90] sm:$0xff]
        %v2125 = vld [vmem:[%s7 + $0x98] sm:$0xff]
        %v2126 = vld [vmem:[%s7 + $0xa0] sm:$0xff]
        %v2127 = vld [vmem:[%s7 + $0xa8] sm:$0xff]
        %v2128 = vld [vmem:[%s7 + $0xb0] sm:$0xff]
        %v2129 = vld [vmem:[%s7 + $0xb8] sm:$0xff]
        %v2130 = vld [vmem:[%s7 + $0xc0] sm:$0xff]
        %v2131 = vld [vmem:[%s7 + $0xc8] sm:$0xff]
        %v2132 = vld [vmem:[%s7 + $0xd0] sm:$0xff]
        %v2133 = vld [vmem:[%s7 + $0xd8] sm:$0xff]
        %v2134 = vld [vmem:[%s7 + $0xe0] sm:$0xff]
        %v2135 = vld [vmem:[%s7 + $0xe8] sm:$0xff]
        %v2136 = vld [vmem:[%s7 + $0xf0] sm:$0xff]
        %v2137 = vld [vmem:[%s7 + $0xf8] sm:$0xff]
        %2138 = vmatprep.subr.mxu0 0.0
        %2139 = vmatpush1.msra.mxu0 %v2122
        %2140 = vmatprep.subr.mxu0 0.0
        %2141 = vmatpush1.msra.mxu0 %v2123
        %2142 = vmatprep.subr.mxu0 0.0
        %2143 = vmatpush1.msra.mxu0 %v2124
        %2144 = vmatprep.subr.mxu0 0.0
        %2145 = vmatpush1.msra.mxu0 %v2125
        %2146 = vmatprep.subr.mxu0 0.0
        %2147 = vmatpush1.msra.mxu0 %v2126
        %2148 = vmatprep.subr.mxu0 0.0
        %2149 = vmatpush1.msra.mxu0 %v2127
        %2150 = vmatprep.subr.mxu0 0.0
        %2151 = vmatpush1.msra.mxu0 %v2128
        %2152 = vmatprep.subr.mxu0 0.0
        %2153 = vmatpush1.msra.mxu0 %v2129
        %2154 = vmatprep.subr.mxu0 0.0
        %2155 = vmatpush1.msra.mxu0 %v2130
        %2156 = vmatprep.subr.mxu0 0.0
        %2157 = vmatpush1.msra.mxu0 %v2131
        %2158 = vmatprep.subr.mxu0 0.0
        %2159 = vmatpush1.msra.mxu0 %v2132
        %2160 = vmatprep.subr.mxu0 0.0
        %2161 = vmatpush1.msra.mxu0 %v2133
        %2162 = vmatprep.subr.mxu0 0.0
        %2163 = vmatpush1.msra.mxu0 %v2134
        %2164 = vmatprep.subr.mxu0 0.0
        %2165 = vmatpush1.msra.mxu0 %v2135
        %2166 = vmatprep.subr.mxu0 0.0
        %2167 = vmatpush1.msra.mxu0 %v2136
        %2168 = vmatprep.subr.mxu0 0.0
        %2169 = vmatpush1.msra.mxu0 %v2137
        %2170 = vmatprep.subr.mxu0 0.0
        %2171 = vmatpush1.msra.mxu0 0.0
        %2172 = vmatprep.subr.mxu0 0.0
        %2173 = vmatpush1.msra.mxu0 0.0
        %2174 = vmatprep.subr.mxu0 0.0
        %2175 = vmatpush1.msra.mxu0 0.0
        %2176 = vmatprep.subr.mxu0 0.0
        %2177 = vmatpush1.msra.mxu0 0.0
        %2178 = vmatprep.subr.mxu0 0.0
        %2179 = vmatpush1.msra.mxu0 0.0
        %2180 = vmatprep.subr.mxu0 0.0
        %2181 = vmatpush1.msra.mxu0 0.0
        %2182 = vmatprep.subr.mxu0 0.0
        %2183 = vmatpush1.msra.mxu0 0.0
        %2184 = vmatprep.subr.mxu0 0.0
        %2185 = vmatpush1.msra.mxu0 0.0
        %2186 = vmatprep.subr.mxu0 0.0
        %2187 = vmatpush1.msra.mxu0 0.0
        %2188 = vmatprep.subr.mxu0 0.0
        %2189 = vmatpush1.msra.mxu0 0.0
        %2190 = vmatprep.subr.mxu0 0.0
        %2191 = vmatpush1.msra.mxu0 0.0
        %2192 = vmatprep.subr.mxu0 0.0
        %2193 = vmatpush1.msra.mxu0 0.0
        %2194 = vmatprep.subr.mxu0 0.0
        %2195 = vmatpush1.msra.mxu0 0.0
        %2196 = vmatprep.subr.mxu0 0.0
        %2197 = vmatpush1.msra.mxu0 0.0
        %2198 = vmatprep.subr.mxu0 0.0
        %2199 = vmatpush1.msra.mxu0 0.0
        %2200 = vmatprep.subr.mxu0 0.0
        %2201 = vmatpush1.msra.mxu0 0.0
        %2202 = vmatprep.mubr.f32.mxu0 0.0
        %2203 = vmatmul.mubr.f32.gmra.mrb[0].mxu0 %v2035
        %v2204 = vpop.f32.mrb[0].mxu0
        %v2205 = vadd.f32 0.0, %v2204
        %v2206 = vpop.f32.mrb[0].mxu0
        %2207 = vdwg.mxu0
        %v2208 = vmax.f32 %v2119, %v2205
        %v2209 = vld [vmem:[%s7 + $0x100] sm:$0xff]
        %v2210 = vld [vmem:[%s7 + $0x108] sm:$0xff]
        %v2211 = vld [vmem:[%s7 + $0x110] sm:$0xff]
        %v2212 = vld [vmem:[%s7 + $0x118] sm:$0xff]
        %v2213 = vld [vmem:[%s7 + $0x120] sm:$0xff]
        %v2214 = vld [vmem:[%s7 + $0x128] sm:$0xff]
        %v2215 = vld [vmem:[%s7 + $0x130] sm:$0xff]
        %v2216 = vld [vmem:[%s7 + $0x138] sm:$0xff]
        %v2217 = vld [vmem:[%s7 + $0x140] sm:$0xff]
        %v2218 = vld [vmem:[%s7 + $0x148] sm:$0xff]
        %v2219 = vld [vmem:[%s7 + $0x150] sm:$0xff]
        %v2220 = vld [vmem:[%s7 + $0x158] sm:$0xff]
        %v2221 = vld [vmem:[%s7 + $0x160] sm:$0xff]
        %v2222 = vld [vmem:[%s7 + $0x168] sm:$0xff]
        %v2223 = vld [vmem:[%s7 + $0x170] sm:$0xff]
        %v2224 = vld [vmem:[%s7 + $0x178] sm:$0xff]
        %2225 = vmatprep.subr.mxu0 0.0
        %2226 = vmatpush1.msra.mxu0 %v2209
        %2227 = vmatprep.subr.mxu0 0.0
        %2228 = vmatpush1.msra.mxu0 %v2210
        %2229 = vmatprep.subr.mxu0 0.0
        %2230 = vmatpush1.msra.mxu0 %v2211
        %2231 = vmatprep.subr.mxu0 0.0
        %2232 = vmatpush1.msra.mxu0 %v2212
        %2233 = vmatprep.subr.mxu0 0.0
        %2234 = vmatpush1.msra.mxu0 %v2213
        %2235 = vmatprep.subr.mxu0 0.0
        %2236 = vmatpush1.msra.mxu0 %v2214
        %2237 = vmatprep.subr.mxu0 0.0
        %2238 = vmatpush1.msra.mxu0 %v2215
        %2239 = vmatprep.subr.mxu0 0.0
        %2240 = vmatpush1.msra.mxu0 %v2216
        %2241 = vmatprep.subr.mxu0 0.0
        %2242 = vmatpush1.msra.mxu0 %v2217
        %2243 = vmatprep.subr.mxu0 0.0
        %2244 = vmatpush1.msra.mxu0 %v2218
        %2245 = vmatprep.subr.mxu0 0.0
        %2246 = vmatpush1.msra.mxu0 %v2219
        %2247 = vmatprep.subr.mxu0 0.0
        %2248 = vmatpush1.msra.mxu0 %v2220
        %2249 = vmatprep.subr.mxu0 0.0
        %2250 = vmatpush1.msra.mxu0 %v2221
        %2251 = vmatprep.subr.mxu0 0.0
        %2252 = vmatpush1.msra.mxu0 %v2222
        %2253 = vmatprep.subr.mxu0 0.0
        %2254 = vmatpush1.msra.mxu0 %v2223
        %2255 = vmatprep.subr.mxu0 0.0
        %2256 = vmatpush1.msra.mxu0 %v2224
        %2257 = vmatprep.subr.mxu0 0.0
        %2258 = vmatpush1.msra.mxu0 0.0
        %2259 = vmatprep.subr.mxu0 0.0
        %2260 = vmatpush1.msra.mxu0 0.0
        %2261 = vmatprep.subr.mxu0 0.0
        %2262 = vmatpush1.msra.mxu0 0.0
        %2263 = vmatprep.subr.mxu0 0.0
        %2264 = vmatpush1.msra.mxu0 0.0
        %2265 = vmatprep.subr.mxu0 0.0
        %2266 = vmatpush1.msra.mxu0 0.0
        %2267 = vmatprep.subr.mxu0 0.0
        %2268 = vmatpush1.msra.mxu0 0.0
        %2269 = vmatprep.subr.mxu0 0.0
        %2270 = vmatpush1.msra.mxu0 0.0
        %2271 = vmatprep.subr.mxu0 0.0
        %2272 = vmatpush1.msra.mxu0 0.0
        %2273 = vmatprep.subr.mxu0 0.0
        %2274 = vmatpush1.msra.mxu0 0.0
        %2275 = vmatprep.subr.mxu0 0.0
        %2276 = vmatpush1.msra.mxu0 0.0
        %2277 = vmatprep.subr.mxu0 0.0
        %2278 = vmatpush1.msra.mxu0 0.0
        %2279 = vmatprep.subr.mxu0 0.0
        %2280 = vmatpush1.msra.mxu0 0.0
        %2281 = vmatprep.subr.mxu0 0.0
        %2282 = vmatpush1.msra.mxu0 0.0
        %2283 = vmatprep.subr.mxu0 0.0
        %2284 = vmatpush1.msra.mxu0 0.0
        %2285 = vmatprep.subr.mxu0 0.0
        %2286 = vmatpush1.msra.mxu0 0.0
        %2287 = vmatprep.subr.mxu0 0.0
        %2288 = vmatpush1.msra.mxu0 0.0
        %2289 = vmatprep.mubr.f32.mxu0 0.0
        %2290 = vmatmul.mubr.f32.gmra.mrb[0].mxu0 %v2035
        %v2291 = vpop.f32.mrb[0].mxu0
        %v2292 = vadd.f32 0.0, %v2291
        %v2293 = vpop.f32.mrb[0].mxu0
        %2294 = vdwg.mxu0
        %v2295 = vmax.f32 %v2208, %v2292
        %s2296 = scalar_lea.vmem [#allocation3], 1
        %v2297 = vld [vmem:[%s2296] ss:$2 sm:$0xff]
        %2298 = vmatprep.subr.mxu0 0.0
        %2299 = vmatpush1.msra.mxu0 %v2036
        %2300 = vmatprep.subr.mxu0 0.0
        %2301 = vmatpush1.msra.mxu0 %v2037
        %2302 = vmatprep.subr.mxu0 0.0
        %2303 = vmatpush1.msra.mxu0 %v2038
        %2304 = vmatprep.subr.mxu0 0.0
        %2305 = vmatpush1.msra.mxu0 %v2039
        %2306 = vmatprep.subr.mxu0 0.0
        %2307 = vmatpush1.msra.mxu0 %v2040
        %2308 = vmatprep.subr.mxu0 0.0
        %2309 = vmatpush1.msra.mxu0 %v2041
        %2310 = vmatprep.subr.mxu0 0.0
        %2311 = vmatpush1.msra.mxu0 %v2042
        %2312 = vmatprep.subr.mxu0 0.0
        %2313 = vmatpush1.msra.mxu0 %v2043
        %2314 = vmatprep.subr.mxu0 0.0
        %2315 = vmatpush1.msra.mxu0 %v2044
        %2316 = vmatprep.subr.mxu0 0.0
        %2317 = vmatpush1.msra.mxu0 %v2045
        %2318 = vmatprep.subr.mxu0 0.0
        %2319 = vmatpush1.msra.mxu0 %v2046
        %2320 = vmatprep.subr.mxu0 0.0
        %2321 = vmatpush1.msra.mxu0 %v2047
        %2322 = vmatprep.subr.mxu0 0.0
        %2323 = vmatpush1.msra.mxu0 %v2048
        %2324 = vmatprep.subr.mxu0 0.0
        %2325 = vmatpush1.msra.mxu0 %v2049
        %2326 = vmatprep.subr.mxu0 0.0
        %2327 = vmatpush1.msra.mxu0 %v2050
        %2328 = vmatprep.subr.mxu0 0.0
        %2329 = vmatpush1.msra.mxu0 %v2051
        %2330 = vmatprep.subr.mxu0 0.0
        %2331 = vmatpush1.msra.mxu0 0.0
        %2332 = vmatprep.subr.mxu0 0.0
        %2333 = vmatpush1.msra.mxu0 0.0
        %2334 = vmatprep.subr.mxu0 0.0
        %2335 = vmatpush1.msra.mxu0 0.0
        %2336 = vmatprep.subr.mxu0 0.0
        %2337 = vmatpush1.msra.mxu0 0.0
        %2338 = vmatprep.subr.mxu0 0.0
        %2339 = vmatpush1.msra.mxu0 0.0
        %2340 = vmatprep.subr.mxu0 0.0
        %2341 = vmatpush1.msra.mxu0 0.0
        %2342 = vmatprep.subr.mxu0 0.0
        %2343 = vmatpush1.msra.mxu0 0.0
        %2344 = vmatprep.subr.mxu0 0.0
        %2345 = vmatpush1.msra.mxu0 0.0
        %2346 = vmatprep.subr.mxu0 0.0
        %2347 = vmatpush1.msra.mxu0 0.0
        %2348 = vmatprep.subr.mxu0 0.0
        %2349 = vmatpush1.msra.mxu0 0.0
        %2350 = vmatprep.subr.mxu0 0.0
        %2351 = vmatpush1.msra.mxu0 0.0
        %2352 = vmatprep.subr.mxu0 0.0
        %2353 = vmatpush1.msra.mxu0 0.0
        %2354 = vmatprep.subr.mxu0 0.0
        %2355 = vmatpush1.msra.mxu0 0.0
        %2356 = vmatprep.subr.mxu0 0.0
        %2357 = vmatpush1.msra.mxu0 0.0
        %2358 = vmatprep.subr.mxu0 0.0
        %2359 = vmatpush1.msra.mxu0 0.0
        %2360 = vmatprep.subr.mxu0 0.0
        %2361 = vmatpush1.msra.mxu0 0.0
        %2362 = vmatprep.mubr.f32.mxu0 0.0
        %2363 = vmatmul.mubr.f32.gmra.mrb[0].mxu0 %v2297
        %v2364 = vpop.f32.mrb[0].mxu0
        %v2365 = vadd.f32 0.0, %v2364
        %v2366 = vpop.f32.mrb[0].mxu0
        %2367 = vdwg.mxu0
        %v2368 = vmax.f32 %v2295, %v2365
        %2369 = vmatprep.subr.mxu0 0.0
        %2370 = vmatpush1.msra.mxu0 %v2122
        %2371 = vmatprep.subr.mxu0 0.0
        %2372 = vmatpush1.msra.mxu0 %v2123
        %2373 = vmatprep.subr.mxu0 0.0
        %2374 = vmatpush1.msra.mxu0 %v2124
        %2375 = vmatprep.subr.mxu0 0.0
        %2376 = vmatpush1.msra.mxu0 %v2125
        %2377 = vmatprep.subr.mxu0 0.0
        %2378 = vmatpush1.msra.mxu0 %v2126
        %2379 = vmatprep.subr.mxu0 0.0
        %2380 = vmatpush1.msra.mxu0 %v2127
        %2381 = vmatprep.subr.mxu0 0.0
        %2382 = vmatpush1.msra.mxu0 %v2128
        %2383 = vmatprep.subr.mxu0 0.0
        %2384 = vmatpush1.msra.mxu0 %v2129
        %2385 = vmatprep.subr.mxu0 0.0
        %2386 = vmatpush1.msra.mxu0 %v2130
        %2387 = vmatprep.subr.mxu0 0.0
        %2388 = vmatpush1.msra.mxu0 %v2131
        %2389 = vmatprep.subr.mxu0 0.0
        %2390 = vmatpush1.msra.mxu0 %v2132
        %2391 = vmatprep.subr.mxu0 0.0
        %2392 = vmatpush1.msra.mxu0 %v2133
        %2393 = vmatprep.subr.mxu0 0.0
        %2394 = vmatpush1.msra.mxu0 %v2134
        %2395 = vmatprep.subr.mxu0 0.0
        %2396 = vmatpush1.msra.mxu0 %v2135
        %2397 = vmatprep.subr.mxu0 0.0
        %2398 = vmatpush1.msra.mxu0 %v2136
        %2399 = vmatprep.subr.mxu0 0.0
        %2400 = vmatpush1.msra.mxu0 %v2137
        %2401 = vmatprep.subr.mxu0 0.0
        %2402 = vmatpush1.msra.mxu0 0.0
        %2403 = vmatprep.subr.mxu0 0.0
        %2404 = vmatpush1.msra.mxu0 0.0
        %2405 = vmatprep.subr.mxu0 0.0
        %2406 = vmatpush1.msra.mxu0 0.0
        %2407 = vmatprep.subr.mxu0 0.0
        %2408 = vmatpush1.msra.mxu0 0.0
        %2409 = vmatprep.subr.mxu0 0.0
        %2410 = vmatpush1.msra.mxu0 0.0
        %2411 = vmatprep.subr.mxu0 0.0
        %2412 = vmatpush1.msra.mxu0 0.0
        %2413 = vmatprep.subr.mxu0 0.0
        %2414 = vmatpush1.msra.mxu0 0.0
        %2415 = vmatprep.subr.mxu0 0.0
        %2416 = vmatpush1.msra.mxu0 0.0
        %2417 = vmatprep.subr.mxu0 0.0
        %2418 = vmatpush1.msra.mxu0 0.0
        %2419 = vmatprep.subr.mxu0 0.0
        %2420 = vmatpush1.msra.mxu0 0.0
        %2421 = vmatprep.subr.mxu0 0.0
        %2422 = vmatpush1.msra.mxu0 0.0
        %2423 = vmatprep.subr.mxu0 0.0
        %2424 = vmatpush1.msra.mxu0 0.0
        %2425 = vmatprep.subr.mxu0 0.0
        %2426 = vmatpush1.msra.mxu0 0.0
        %2427 = vmatprep.subr.mxu0 0.0
        %2428 = vmatpush1.msra.mxu0 0.0
        %2429 = vmatprep.subr.mxu0 0.0
        %2430 = vmatpush1.msra.mxu0 0.0
        %2431 = vmatprep.subr.mxu0 0.0
        %2432 = vmatpush1.msra.mxu0 0.0
        %2433 = vmatprep.mubr.f32.mxu0 0.0
        %2434 = vmatmul.mubr.f32.gmra.mrb[0].mxu0 %v2297
        %v2435 = vpop.f32.mrb[0].mxu0
        %v2436 = vadd.f32 0.0, %v2435
        %v2437 = vpop.f32.mrb[0].mxu0
        %2438 = vdwg.mxu0
        %v2439 = vmax.f32 %v2368, %v2436
        %2440 = vmatprep.subr.mxu0 0.0
        %2441 = vmatpush1.msra.mxu0 %v2209
        %2442 = vmatprep.subr.mxu0 0.0
        %2443 = vmatpush1.msra.mxu0 %v2210
        %2444 = vmatprep.subr.mxu0 0.0
        %2445 = vmatpush1.msra.mxu0 %v2211
        %2446 = vmatprep.subr.mxu0 0.0
        %2447 = vmatpush1.msra.mxu0 %v2212
        %2448 = vmatprep.subr.mxu0 0.0
        %2449 = vmatpush1.msra.mxu0 %v2213
        %2450 = vmatprep.subr.mxu0 0.0
        %2451 = vmatpush1.msra.mxu0 %v2214
        %2452 = vmatprep.subr.mxu0 0.0
        %2453 = vmatpush1.msra.mxu0 %v2215
        %2454 = vmatprep.subr.mxu0 0.0
        %2455 = vmatpush1.msra.mxu0 %v2216
        %2456 = vmatprep.subr.mxu0 0.0
        %2457 = vmatpush1.msra.mxu0 %v2217
        %2458 = vmatprep.subr.mxu0 0.0
        %2459 = vmatpush1.msra.mxu0 %v2218
        %2460 = vmatprep.subr.mxu0 0.0
        %2461 = vmatpush1.msra.mxu0 %v2219
        %2462 = vmatprep.subr.mxu0 0.0
        %2463 = vmatpush1.msra.mxu0 %v2220
        %2464 = vmatprep.subr.mxu0 0.0
        %2465 = vmatpush1.msra.mxu0 %v2221
        %2466 = vmatprep.subr.mxu0 0.0
        %2467 = vmatpush1.msra.mxu0 %v2222
        %2468 = vmatprep.subr.mxu0 0.0
        %2469 = vmatpush1.msra.mxu0 %v2223
        %2470 = vmatprep.subr.mxu0 0.0
        %2471 = vmatpush1.msra.mxu0 %v2224
        %2472 = vmatprep.subr.mxu0 0.0
        %2473 = vmatpush1.msra.mxu0 0.0
        %2474 = vmatprep.subr.mxu0 0.0
        %2475 = vmatpush1.msra.mxu0 0.0
        %2476 = vmatprep.subr.mxu0 0.0
        %2477 = vmatpush1.msra.mxu0 0.0
        %2478 = vmatprep.subr.mxu0 0.0
        %2479 = vmatpush1.msra.mxu0 0.0
        %2480 = vmatprep.subr.mxu0 0.0
        %2481 = vmatpush1.msra.mxu0 0.0
        %2482 = vmatprep.subr.mxu0 0.0
        %2483 = vmatpush1.msra.mxu0 0.0
        %2484 = vmatprep.subr.mxu0 0.0
        %2485 = vmatpush1.msra.mxu0 0.0
        %2486 = vmatprep.subr.mxu0 0.0
        %2487 = vmatpush1.msra.mxu0 0.0
        %2488 = vmatprep.subr.mxu0 0.0
        %2489 = vmatpush1.msra.mxu0 0.0
        %2490 = vmatprep.subr.mxu0 0.0
        %2491 = vmatpush1.msra.mxu0 0.0
        %2492 = vmatprep.subr.mxu0 0.0
        %2493 = vmatpush1.msra.mxu0 0.0
        %2494 = vmatprep.subr.mxu0 0.0
        %2495 = vmatpush1.msra.mxu0 0.0
        %2496 = vmatprep.subr.mxu0 0.0
        %2497 = vmatpush1.msra.mxu0 0.0
        %2498 = vmatprep.subr.mxu0 0.0
        %2499 = vmatpush1.msra.mxu0 0.0
        %2500 = vmatprep.subr.mxu0 0.0
        %2501 = vmatpush1.msra.mxu0 0.0
        %2502 = vmatprep.subr.mxu0 0.0
        %2503 = vmatpush1.msra.mxu0 0.0
        %2504 = vmatprep.mubr.f32.mxu0 0.0
        %2505 = vmatmul.mubr.f32.gmra.mrb[0].mxu0 %v2297
        %v2506 = vpop.f32.mrb[0].mxu0
        %v2507 = vadd.f32 0.0, %v2506
        %v2508 = vpop.f32.mrb[0].mxu0
        %2509 = vdwg.mxu0
        %v2510 = vmax.f32 %v2439, %v2507
        %s2511 = scalar_lea.vmem [#allocation3], 2
        %v2512 = vld [vmem:[%s2511] ss:$2 sm:$0xff]
        %2513 = vmatprep.subr.mxu0 0.0
        %2514 = vmatpush1.msra.mxu0 %v2036
        %2515 = vmatprep.subr.mxu0 0.0
        %2516 = vmatpush1.msra.mxu0 %v2037
        %2517 = vmatprep.subr.mxu0 0.0
        %2518 = vmatpush1.msra.mxu0 %v2038
        %2519 = vmatprep.subr.mxu0 0.0
        %2520 = vmatpush1.msra.mxu0 %v2039
        %2521 = vmatprep.subr.mxu0 0.0
        %2522 = vmatpush1.msra.mxu0 %v2040
        %2523 = vmatprep.subr.mxu0 0.0
        %2524 = vmatpush1.msra.mxu0 %v2041
        %2525 = vmatprep.subr.mxu0 0.0
        %2526 = vmatpush1.msra.mxu0 %v2042
        %2527 = vmatprep.subr.mxu0 0.0
        %2528 = vmatpush1.msra.mxu0 %v2043
        %2529 = vmatprep.subr.mxu0 0.0
        %2530 = vmatpush1.msra.mxu0 %v2044
        %2531 = vmatprep.subr.mxu0 0.0
        %2532 = vmatpush1.msra.mxu0 %v2045
        %2533 = vmatprep.subr.mxu0 0.0
        %2534 = vmatpush1.msra.mxu0 %v2046
        %2535 = vmatprep.subr.mxu0 0.0
        %2536 = vmatpush1.msra.mxu0 %v2047
        %2537 = vmatprep.subr.mxu0 0.0
        %2538 = vmatpush1.msra.mxu0 %v2048
        %2539 = vmatprep.subr.mxu0 0.0
        %2540 = vmatpush1.msra.mxu0 %v2049
        %2541 = vmatprep.subr.mxu0 0.0
        %2542 = vmatpush1.msra.mxu0 %v2050
        %2543 = vmatprep.subr.mxu0 0.0
        %2544 = vmatpush1.msra.mxu0 %v2051
        %2545 = vmatprep.subr.mxu0 0.0
        %2546 = vmatpush1.msra.mxu0 0.0
        %2547 = vmatprep.subr.mxu0 0.0
        %2548 = vmatpush1.msra.mxu0 0.0
        %2549 = vmatprep.subr.mxu0 0.0
        %2550 = vmatpush1.msra.mxu0 0.0
        %2551 = vmatprep.subr.mxu0 0.0
        %2552 = vmatpush1.msra.mxu0 0.0
        %2553 = vmatprep.subr.mxu0 0.0
        %2554 = vmatpush1.msra.mxu0 0.0
        %2555 = vmatprep.subr.mxu0 0.0
        %2556 = vmatpush1.msra.mxu0 0.0
        %2557 = vmatprep.subr.mxu0 0.0
        %2558 = vmatpush1.msra.mxu0 0.0
        %2559 = vmatprep.subr.mxu0 0.0
        %2560 = vmatpush1.msra.mxu0 0.0
        %2561 = vmatprep.subr.mxu0 0.0
        %2562 = vmatpush1.msra.mxu0 0.0
        %2563 = vmatprep.subr.mxu0 0.0
        %2564 = vmatpush1.msra.mxu0 0.0
        %2565 = vmatprep.subr.mxu0 0.0
        %2566 = vmatpush1.msra.mxu0 0.0
        %2567 = vmatprep.subr.mxu0 0.0
        %2568 = vmatpush1.msra.mxu0 0.0
        %2569 = vmatprep.subr.mxu0 0.0
        %2570 = vmatpush1.msra.mxu0 0.0
        %2571 = vmatprep.subr.mxu0 0.0
        %2572 = vmatpush1.msra.mxu0 0.0
        %2573 = vmatprep.subr.mxu0 0.0
        %2574 = vmatpush1.msra.mxu0 0.0
        %2575 = vmatprep.subr.mxu0 0.0
        %2576 = vmatpush1.msra.mxu0 0.0
        %2577 = vmatprep.mubr.f32.mxu0 0.0
        %2578 = vmatmul.mubr.f32.gmra.mrb[0].mxu0 %v2512
        %v2579 = vpop.f32.mrb[0].mxu0
        %v2580 = vadd.f32 0.0, %v2579
        %v2581 = vpop.f32.mrb[0].mxu0
        %2582 = vdwg.mxu0
        %v2583 = vmax.f32 %v2510, %v2580
        %2584 = vmatprep.subr.mxu0 0.0
        %2585 = vmatpush1.msra.mxu0 %v2122
        %2586 = vmatprep.subr.mxu0 0.0
        %2587 = vmatpush1.msra.mxu0 %v2123
        %2588 = vmatprep.subr.mxu0 0.0
        %2589 = vmatpush1.msra.mxu0 %v2124
        %2590 = vmatprep.subr.mxu0 0.0
        %2591 = vmatpush1.msra.mxu0 %v2125
        %2592 = vmatprep.subr.mxu0 0.0
        %2593 = vmatpush1.msra.mxu0 %v2126
        %2594 = vmatprep.subr.mxu0 0.0
        %2595 = vmatpush1.msra.mxu0 %v2127
        %2596 = vmatprep.subr.mxu0 0.0
        %2597 = vmatpush1.msra.mxu0 %v2128
        %2598 = vmatprep.subr.mxu0 0.0
        %2599 = vmatpush1.msra.mxu0 %v2129
        %2600 = vmatprep.subr.mxu0 0.0
        %2601 = vmatpush1.msra.mxu0 %v2130
        %2602 = vmatprep.subr.mxu0 0.0
        %2603 = vmatpush1.msra.mxu0 %v2131
        %2604 = vmatprep.subr.mxu0 0.0
        %2605 = vmatpush1.msra.mxu0 %v2132
        %2606 = vmatprep.subr.mxu0 0.0
        %2607 = vmatpush1.msra.mxu0 %v2133
        %2608 = vmatprep.subr.mxu0 0.0
        %2609 = vmatpush1.msra.mxu0 %v2134
        %2610 = vmatprep.subr.mxu0 0.0
        %2611 = vmatpush1.msra.mxu0 %v2135
        %2612 = vmatprep.subr.mxu0 0.0
        %2613 = vmatpush1.msra.mxu0 %v2136
        %2614 = vmatprep.subr.mxu0 0.0
        %2615 = vmatpush1.msra.mxu0 %v2137
        %2616 = vmatprep.subr.mxu0 0.0
        %2617 = vmatpush1.msra.mxu0 0.0
        %2618 = vmatprep.subr.mxu0 0.0
        %2619 = vmatpush1.msra.mxu0 0.0
        %2620 = vmatprep.subr.mxu0 0.0
        %2621 = vmatpush1.msra.mxu0 0.0
        %2622 = vmatprep.subr.mxu0 0.0
        %2623 = vmatpush1.msra.mxu0 0.0
        %2624 = vmatprep.subr.mxu0 0.0
        %2625 = vmatpush1.msra.mxu0 0.0
        %2626 = vmatprep.subr.mxu0 0.0
        %2627 = vmatpush1.msra.mxu0 0.0
        %2628 = vmatprep.subr.mxu0 0.0
        %2629 = vmatpush1.msra.mxu0 0.0
        %2630 = vmatprep.subr.mxu0 0.0
        %2631 = vmatpush1.msra.mxu0 0.0
        %2632 = vmatprep.subr.mxu0 0.0
        %2633 = vmatpush1.msra.mxu0 0.0
        %2634 = vmatprep.subr.mxu0 0.0
        %2635 = vmatpush1.msra.mxu0 0.0
        %2636 = vmatprep.subr.mxu0 0.0
        %2637 = vmatpush1.msra.mxu0 0.0
        %2638 = vmatprep.subr.mxu0 0.0
        %2639 = vmatpush1.msra.mxu0 0.0
        %2640 = vmatprep.subr.mxu0 0.0
        %2641 = vmatpush1.msra.mxu0 0.0
        %2642 = vmatprep.subr.mxu0 0.0
        %2643 = vmatpush1.msra.mxu0 0.0
        %2644 = vmatprep.subr.mxu0 0.0
        %2645 = vmatpush1.msra.mxu0 0.0
        %2646 = vmatprep.subr.mxu0 0.0
        %2647 = vmatpush1.msra.mxu0 0.0
        %2648 = vmatprep.mubr.f32.mxu0 0.0
        %2649 = vmatmul.mubr.f32.gmra.mrb[0].mxu0 %v2512
        %v2650 = vpop.f32.mrb[0].mxu0
        %v2651 = vadd.f32 0.0, %v2650
        %v2652 = vpop.f32.mrb[0].mxu0
        %2653 = vdwg.mxu0
        %v2654 = vmax.f32 %v2583, %v2651
        %2655 = vmatprep.subr.mxu0 0.0
        %2656 = vmatpush1.msra.mxu0 %v2209
        %2657 = vmatprep.subr.mxu0 0.0
        %2658 = vmatpush1.msra.mxu0 %v2210
        %2659 = vmatprep.subr.mxu0 0.0
        %2660 = vmatpush1.msra.mxu0 %v2211
        %2661 = vmatprep.subr.mxu0 0.0
        %2662 = vmatpush1.msra.mxu0 %v2212
        %2663 = vmatprep.subr.mxu0 0.0
        %2664 = vmatpush1.msra.mxu0 %v2213
        %2665 = vmatprep.subr.mxu0 0.0
        %2666 = vmatpush1.msra.mxu0 %v2214
        %2667 = vmatprep.subr.mxu0 0.0
        %2668 = vmatpush1.msra.mxu0 %v2215
        %2669 = vmatprep.subr.mxu0 0.0
        %2670 = vmatpush1.msra.mxu0 %v2216
        %2671 = vmatprep.subr.mxu0 0.0
        %2672 = vmatpush1.msra.mxu0 %v2217
        %2673 = vmatprep.subr.mxu0 0.0
        %2674 = vmatpush1.msra.mxu0 %v2218
        %2675 = vmatprep.subr.mxu0 0.0
        %2676 = vmatpush1.msra.mxu0 %v2219
        %2677 = vmatprep.subr.mxu0 0.0
        %2678 = vmatpush1.msra.mxu0 %v2220
        %2679 = vmatprep.subr.mxu0 0.0
        %2680 = vmatpush1.msra.mxu0 %v2221
        %2681 = vmatprep.subr.mxu0 0.0
        %2682 = vmatpush1.msra.mxu0 %v2222
        %2683 = vmatprep.subr.mxu0 0.0
        %2684 = vmatpush1.msra.mxu0 %v2223
        %2685 = vmatprep.subr.mxu0 0.0
        %2686 = vmatpush1.msra.mxu0 %v2224
        %2687 = vmatprep.subr.mxu0 0.0
        %2688 = vmatpush1.msra.mxu0 0.0
        %2689 = vmatprep.subr.mxu0 0.0
        %2690 = vmatpush1.msra.mxu0 0.0
        %2691 = vmatprep.subr.mxu0 0.0
        %2692 = vmatpush1.msra.mxu0 0.0
        %2693 = vmatprep.subr.mxu0 0.0
        %2694 = vmatpush1.msra.mxu0 0.0
        %2695 = vmatprep.subr.mxu0 0.0
        %2696 = vmatpush1.msra.mxu0 0.0
        %2697 = vmatprep.subr.mxu0 0.0
        %2698 = vmatpush1.msra.mxu0 0.0
        %2699 = vmatprep.subr.mxu0 0.0
        %2700 = vmatpush1.msra.mxu0 0.0
        %2701 = vmatprep.subr.mxu0 0.0
        %2702 = vmatpush1.msra.mxu0 0.0
        %2703 = vmatprep.subr.mxu0 0.0
        %2704 = vmatpush1.msra.mxu0 0.0
        %2705 = vmatprep.subr.mxu0 0.0
        %2706 = vmatpush1.msra.mxu0 0.0
        %2707 = vmatprep.subr.mxu0 0.0
        %2708 = vmatpush1.msra.mxu0 0.0
        %2709 = vmatprep.subr.mxu0 0.0
        %2710 = vmatpush1.msra.mxu0 0.0
        %2711 = vmatprep.subr.mxu0 0.0
        %2712 = vmatpush1.msra.mxu0 0.0
        %2713 = vmatprep.subr.mxu0 0.0
        %2714 = vmatpush1.msra.mxu0 0.0
        %2715 = vmatprep.subr.mxu0 0.0
        %2716 = vmatpush1.msra.mxu0 0.0
        %2717 = vmatprep.subr.mxu0 0.0
        %2718 = vmatpush1.msra.mxu0 0.0
        %2719 = vmatprep.mubr.f32.mxu0 0.0
        %2720 = vmatmul.mubr.f32.gmra.mrb[0].mxu0 %v2512
        %v2721 = vpop.f32.mrb[0].mxu0
        %v2722 = vadd.f32 0.0, %v2721
        %v2723 = vpop.f32.mrb[0].mxu0
        %2724 = vdwg.mxu0
        %v2725 = vmax.f32 %v2654, %v2722
        %vm2726 = vcmask 516096
        %2727 = vst.msk [vmem:[#allocation2] sm:$0x1] %vm2726, 0.0
        %2728 = vst.msk [vmem:[#allocation2 + $0x9] sm:$0x1] %vm2726, 0.0
        %vm2729 = vcmask 523264
        %2730 = vst.msk [vmem:[#allocation2 + $0x1] sm:$0xff] %vm2729, %v2725
        %v2731 = vld [vmem:[%s11] sm:$0x1]
        %v2732 = vld [vmem:[#allocation2] sm:$0xff]
        %v2733 = vld [vmem:[%s9] sm:$0xff]
        %v2734 = vld [vmem:[%s9 + $0x8] sm:$0xff]
        %v2735 = vld [vmem:[%s9 + $0x10] sm:$0xff]
        %v2736 = vld [vmem:[%s9 + $0x18] sm:$0xff]
        %v2737 = vld [vmem:[%s9 + $0x20] sm:$0xff]
        %v2738 = vld [vmem:[%s9 + $0x28] sm:$0xff]
        %v2739 = vld [vmem:[%s9 + $0x30] sm:$0xff]
        %v2740 = vld [vmem:[%s9 + $0x38] sm:$0xff]
        %v2741 = vld [vmem:[#allocation2 + $0x1] sm:$0xff]
        %v2742 = vld [vmem:[%s9 + $0x40] sm:$0xff]
        %v2743 = vld [vmem:[%s9 + $0x48] sm:$0xff]
        %v2744 = vld [vmem:[%s9 + $0x50] sm:$0xff]
        %v2745 = vld [vmem:[%s9 + $0x58] sm:$0xff]
        %v2746 = vld [vmem:[%s9 + $0x60] sm:$0xff]
        %v2747 = vld [vmem:[%s9 + $0x68] sm:$0xff]
        %v2748 = vld [vmem:[%s9 + $0x70] sm:$0xff]
        %v2749 = vld [vmem:[%s9 + $0x78] sm:$0xff]
        %v2751 = vsel %vm2729, %v2741, 0
        %2753 = vmatprep.subr.mxu0 0.0
        %2754 = vmatpush1.msra.mxu0 %v2742
        %2755 = vmatprep.subr.mxu0 0.0
        %2756 = vmatpush1.msra.mxu0 %v2743
        %2757 = vmatprep.subr.mxu0 0.0
        %2758 = vmatpush1.msra.mxu0 %v2744
        %2759 = vmatprep.subr.mxu0 0.0
        %2760 = vmatpush1.msra.mxu0 %v2745
        %2761 = vmatprep.subr.mxu0 0.0
        %2762 = vmatpush1.msra.mxu0 %v2746
        %2763 = vmatprep.subr.mxu0 0.0
        %2764 = vmatpush1.msra.mxu0 %v2747
        %2765 = vmatprep.subr.mxu0 0.0
        %2766 = vmatpush1.msra.mxu0 %v2748
        %2767 = vmatprep.subr.mxu0 0.0
        %2768 = vmatpush1.msra.mxu0 %v2749
        %2769 = vmatprep.subr.mxu0 0.0
        %2770 = vmatpush1.msra.mxu0 0.0
        %2771 = vmatprep.subr.mxu0 0.0
        %2772 = vmatpush1.msra.mxu0 0.0
        %2773 = vmatprep.subr.mxu0 0.0
        %2774 = vmatpush1.msra.mxu0 0.0
        %2775 = vmatprep.subr.mxu0 0.0
        %2776 = vmatpush1.msra.mxu0 0.0
        %2777 = vmatprep.subr.mxu0 0.0
        %2778 = vmatpush1.msra.mxu0 0.0
        %2779 = vmatprep.subr.mxu0 0.0
        %2780 = vmatpush1.msra.mxu0 0.0
        %2781 = vmatprep.subr.mxu0 0.0
        %2782 = vmatpush1.msra.mxu0 0.0
        %2783 = vmatprep.subr.mxu0 0.0
        %2784 = vmatpush1.msra.mxu0 0.0
        %2785 = vmatprep.subr.mxu0 0.0
        %2786 = vmatpush1.msra.mxu0 0.0
        %2787 = vmatprep.subr.mxu0 0.0
        %2788 = vmatpush1.msra.mxu0 0.0
        %2789 = vmatprep.subr.mxu0 0.0
        %2790 = vmatpush1.msra.mxu0 0.0
        %2791 = vmatprep.subr.mxu0 0.0
        %2792 = vmatpush1.msra.mxu0 0.0
        %2793 = vmatprep.subr.mxu0 0.0
        %2794 = vmatpush1.msra.mxu0 0.0
        %2795 = vmatprep.subr.mxu0 0.0
        %2796 = vmatpush1.msra.mxu0 0.0
        %2797 = vmatprep.subr.mxu0 0.0
        %2798 = vmatpush1.msra.mxu0 0.0
        %2799 = vmatprep.subr.mxu0 0.0
        %2800 = vmatpush1.msra.mxu0 0.0
        %2801 = vmatprep.subr.mxu0 0.0
        %2802 = vmatpush1.msra.mxu0 0.0
        %2803 = vmatprep.subr.mxu0 0.0
        %2804 = vmatpush1.msra.mxu0 0.0
        %2805 = vmatprep.subr.mxu0 0.0
        %2806 = vmatpush1.msra.mxu0 0.0
        %2807 = vmatprep.subr.mxu0 0.0
        %2808 = vmatpush1.msra.mxu0 0.0
        %2809 = vmatprep.subr.mxu0 0.0
        %2810 = vmatpush1.msra.mxu0 0.0
        %2811 = vmatprep.subr.mxu0 0.0
        %2812 = vmatpush1.msra.mxu0 0.0
        %2813 = vmatprep.subr.mxu0 0.0
        %2814 = vmatpush1.msra.mxu0 0.0
        %2815 = vmatprep.subr.mxu0 0.0
        %2816 = vmatpush1.msra.mxu0 0.0
        %2817 = vmatprep.mubr.f32.mxu0 0.0
        %2818 = vmatmul.mubr.f32.gmra.mrb[0].mxu0 %v2751
        %v2819 = vpop.f32.mrb[0].mxu0
        %v2820 = vadd.f32 0.0, %v2819
        %v2821 = vpop.f32.mrb[0].mxu0
        %2822 = vdwg.mxu0
        %v2824 = vsel %vm2729, %v2732, 0
        %2826 = vmatprep.subr.mxu0 0.0
        %2827 = vmatpush1.msra.mxu0 %v2733
        %2828 = vmatprep.subr.mxu0 0.0
        %2829 = vmatpush1.msra.mxu0 %v2734
        %2830 = vmatprep.subr.mxu0 0.0
        %2831 = vmatpush1.msra.mxu0 %v2735
        %2832 = vmatprep.subr.mxu0 0.0
        %2833 = vmatpush1.msra.mxu0 %v2736
        %2834 = vmatprep.subr.mxu0 0.0
        %2835 = vmatpush1.msra.mxu0 %v2737
        %2836 = vmatprep.subr.mxu0 0.0
        %2837 = vmatpush1.msra.mxu0 %v2738
        %2838 = vmatprep.subr.mxu0 0.0
        %2839 = vmatpush1.msra.mxu0 %v2739
        %2840 = vmatprep.subr.mxu0 0.0
        %2841 = vmatpush1.msra.mxu0 %v2740
        %2842 = vmatprep.subr.mxu0 0.0
        %2843 = vmatpush1.msra.mxu0 0.0
        %2844 = vmatprep.subr.mxu0 0.0
        %2845 = vmatpush1.msra.mxu0 0.0
        %2846 = vmatprep.subr.mxu0 0.0
        %2847 = vmatpush1.msra.mxu0 0.0
        %2848 = vmatprep.subr.mxu0 0.0
        %2849 = vmatpush1.msra.mxu0 0.0
        %2850 = vmatprep.subr.mxu0 0.0
        %2851 = vmatpush1.msra.mxu0 0.0
        %2852 = vmatprep.subr.mxu0 0.0
        %2853 = vmatpush1.msra.mxu0 0.0
        %2854 = vmatprep.subr.mxu0 0.0
        %2855 = vmatpush1.msra.mxu0 0.0
        %2856 = vmatprep.subr.mxu0 0.0
        %2857 = vmatpush1.msra.mxu0 0.0
        %2858 = vmatprep.subr.mxu0 0.0
        %2859 = vmatpush1.msra.mxu0 0.0
        %2860 = vmatprep.subr.mxu0 0.0
        %2861 = vmatpush1.msra.mxu0 0.0
        %2862 = vmatprep.subr.mxu0 0.0
        %2863 = vmatpush1.msra.mxu0 0.0
        %2864 = vmatprep.subr.mxu0 0.0
        %2865 = vmatpush1.msra.mxu0 0.0
        %2866 = vmatprep.subr.mxu0 0.0
        %2867 = vmatpush1.msra.mxu0 0.0
        %2868 = vmatprep.subr.mxu0 0.0
        %2869 = vmatpush1.msra.mxu0 0.0
        %2870 = vmatprep.subr.mxu0 0.0
        %2871 = vmatpush1.msra.mxu0 0.0
        %2872 = vmatprep.subr.mxu0 0.0
        %2873 = vmatpush1.msra.mxu0 0.0
        %2874 = vmatprep.subr.mxu0 0.0
        %2875 = vmatpush1.msra.mxu0 0.0
        %2876 = vmatprep.subr.mxu0 0.0
        %2877 = vmatpush1.msra.mxu0 0.0
        %2878 = vmatprep.subr.mxu0 0.0
        %2879 = vmatpush1.msra.mxu0 0.0
        %2880 = vmatprep.subr.mxu0 0.0
        %2881 = vmatpush1.msra.mxu0 0.0
        %2882 = vmatprep.subr.mxu0 0.0
        %2883 = vmatpush1.msra.mxu0 0.0
        %2884 = vmatprep.subr.mxu0 0.0
        %2885 = vmatpush1.msra.mxu0 0.0
        %2886 = vmatprep.subr.mxu0 0.0
        %2887 = vmatpush1.msra.mxu0 0.0
        %2888 = vmatprep.subr.mxu0 0.0
        %2889 = vmatpush1.msra.mxu0 0.0
        %2890 = vmatprep.mubr.f32.mxu0 0.0
        %2891 = vmatmul.mubr.f32.gmra.mrb[0].mxu0 %v2824
        %v2892 = vpop.f32.mrb[0].mxu0
        %v2893 = vadd.f32 %v2820, %v2892
        %v2894 = vpop.f32.mrb[0].mxu0
        %2895 = vdwg.mxu0
        %v2896 = vld [vmem:[#allocation2 + $0x2] sm:$0xff]
        %v2897 = vld [vmem:[%s9 + $0x80] sm:$0xff]
        %v2898 = vld [vmem:[%s9 + $0x88] sm:$0xff]
        %v2899 = vld [vmem:[%s9 + $0x90] sm:$0xff]
        %v2900 = vld [vmem:[%s9 + $0x98] sm:$0xff]
        %v2901 = vld [vmem:[%s9 + $0xa0] sm:$0xff]
        %v2902 = vld [vmem:[%s9 + $0xa8] sm:$0xff]
        %v2903 = vld [vmem:[%s9 + $0xb0] sm:$0xff]
        %v2904 = vld [vmem:[%s9 + $0xb8] sm:$0xff]
        %v2906 = vsel %vm2729, %v2896, 0
        %2908 = vmatprep.subr.mxu0 0.0
        %2909 = vmatpush1.msra.mxu0 %v2897
        %2910 = vmatprep.subr.mxu0 0.0
        %2911 = vmatpush1.msra.mxu0 %v2898
        %2912 = vmatprep.subr.mxu0 0.0
        %2913 = vmatpush1.msra.mxu0 %v2899
        %2914 = vmatprep.subr.mxu0 0.0
        %2915 = vmatpush1.msra.mxu0 %v2900
        %2916 = vmatprep.subr.mxu0 0.0
        %2917 = vmatpush1.msra.mxu0 %v2901
        %2918 = vmatprep.subr.mxu0 0.0
        %2919 = vmatpush1.msra.mxu0 %v2902
        %2920 = vmatprep.subr.mxu0 0.0
        %2921 = vmatpush1.msra.mxu0 %v2903
        %2922 = vmatprep.subr.mxu0 0.0
        %2923 = vmatpush1.msra.mxu0 %v2904
        %2924 = vmatprep.subr.mxu0 0.0
        %2925 = vmatpush1.msra.mxu0 0.0
        %2926 = vmatprep.subr.mxu0 0.0
        %2927 = vmatpush1.msra.mxu0 0.0
        %2928 = vmatprep.subr.mxu0 0.0
        %2929 = vmatpush1.msra.mxu0 0.0
        %2930 = vmatprep.subr.mxu0 0.0
        %2931 = vmatpush1.msra.mxu0 0.0
        %2932 = vmatprep.subr.mxu0 0.0
        %2933 = vmatpush1.msra.mxu0 0.0
        %2934 = vmatprep.subr.mxu0 0.0
        %2935 = vmatpush1.msra.mxu0 0.0
        %2936 = vmatprep.subr.mxu0 0.0
        %2937 = vmatpush1.msra.mxu0 0.0
        %2938 = vmatprep.subr.mxu0 0.0
        %2939 = vmatpush1.msra.mxu0 0.0
        %2940 = vmatprep.subr.mxu0 0.0
        %2941 = vmatpush1.msra.mxu0 0.0
        %2942 = vmatprep.subr.mxu0 0.0
        %2943 = vmatpush1.msra.mxu0 0.0
        %2944 = vmatprep.subr.mxu0 0.0
        %2945 = vmatpush1.msra.mxu0 0.0
        %2946 = vmatprep.subr.mxu0 0.0
        %2947 = vmatpush1.msra.mxu0 0.0
        %2948 = vmatprep.subr.mxu0 0.0
        %2949 = vmatpush1.msra.mxu0 0.0
        %2950 = vmatprep.subr.mxu0 0.0
        %2951 = vmatpush1.msra.mxu0 0.0
        %2952 = vmatprep.subr.mxu0 0.0
        %2953 = vmatpush1.msra.mxu0 0.0
        %2954 = vmatprep.subr.mxu0 0.0
        %2955 = vmatpush1.msra.mxu0 0.0
        %2956 = vmatprep.subr.mxu0 0.0
        %2957 = vmatpush1.msra.mxu0 0.0
        %2958 = vmatprep.subr.mxu0 0.0
        %2959 = vmatpush1.msra.mxu0 0.0
        %2960 = vmatprep.subr.mxu0 0.0
        %2961 = vmatpush1.msra.mxu0 0.0
        %2962 = vmatprep.subr.mxu0 0.0
        %2963 = vmatpush1.msra.mxu0 0.0
        %2964 = vmatprep.subr.mxu0 0.0
        %2965 = vmatpush1.msra.mxu0 0.0
        %2966 = vmatprep.subr.mxu0 0.0
        %2967 = vmatpush1.msra.mxu0 0.0
        %2968 = vmatprep.subr.mxu0 0.0
        %2969 = vmatpush1.msra.mxu0 0.0
        %2970 = vmatprep.subr.mxu0 0.0
        %2971 = vmatpush1.msra.mxu0 0.0
        %2972 = vmatprep.mubr.f32.mxu0 0.0
        %2973 = vmatmul.mubr.f32.gmra.mrb[0].mxu0 %v2906
        %v2974 = vpop.f32.mrb[0].mxu0
        %v2975 = vadd.f32 0.0, %v2974
        %v2976 = vpop.f32.mrb[0].mxu0
        %2977 = vdwg.mxu0
        %v2978 = vadd.f32 %v2893, %v2975
        %v2980 = vlaneseq
        %v2981 = vshrl.u32 %v2980, 7
        %v2982 = vsub.s32 0, %v2981
        %v2983 = vrot.slane %v2731, %v2982
        %v2985 = vadd.f32 %v2978, %v2983
        %v2986 = vmax.f32 %v2985, 0.0
        %2987 = vst.msk [vmem:[#allocation3] sm:$0x1] %vm2726, 0.0
        %2988 = vst.msk [vmem:[#allocation3 + $0x9] sm:$0x1] %vm2726, 0.0
        %2989 = vst.msk [vmem:[#allocation3 + $0x1] sm:$0xff] %vm2729, %v2986
        %v2990 = vld [vmem:[%s15] sm:$0x1]
        %v2991 = vld [vmem:[#allocation3] sm:$0xff]
        %v2992 = vld [vmem:[%s13] sm:$0xff]
        %v2993 = vld [vmem:[%s13 + $0x8] sm:$0xff]
        %v2994 = vld [vmem:[%s13 + $0x10] sm:$0xff]
        %v2995 = vld [vmem:[%s13 + $0x18] sm:$0xff]
        %v2996 = vld [vmem:[%s13 + $0x20] sm:$0xff]
        %v2997 = vld [vmem:[%s13 + $0x28] sm:$0xff]
        %v2998 = vld [vmem:[%s13 + $0x30] sm:$0xff]
        %v2999 = vld [vmem:[%s13 + $0x38] sm:$0xff]
        %v3000 = vld [vmem:[#allocation3 + $0x1] sm:$0xff]
        %v3001 = vld [vmem:[%s13 + $0x40] sm:$0xff]
        %v3002 = vld [vmem:[%s13 + $0x48] sm:$0xff]
        %v3003 = vld [vmem:[%s13 + $0x50] sm:$0xff]
        %v3004 = vld [vmem:[%s13 + $0x58] sm:$0xff]
        %v3005 = vld [vmem:[%s13 + $0x60] sm:$0xff]
        %v3006 = vld [vmem:[%s13 + $0x68] sm:$0xff]
        %v3007 = vld [vmem:[%s13 + $0x70] sm:$0xff]
        %v3008 = vld [vmem:[%s13 + $0x78] sm:$0xff]
        %v3010 = vsel %vm2729, %v3000, 0
        %3012 = vmatprep.subr.mxu0 0.0
        %3013 = vmatpush1.msra.mxu0 %v3001
        %3014 = vmatprep.subr.mxu0 0.0
        %3015 = vmatpush1.msra.mxu0 %v3002
        %3016 = vmatprep.subr.mxu0 0.0
        %3017 = vmatpush1.msra.mxu0 %v3003
        %3018 = vmatprep.subr.mxu0 0.0
        %3019 = vmatpush1.msra.mxu0 %v3004
        %3020 = vmatprep.subr.mxu0 0.0
        %3021 = vmatpush1.msra.mxu0 %v3005
        %3022 = vmatprep.subr.mxu0 0.0
        %3023 = vmatpush1.msra.mxu0 %v3006
        %3024 = vmatprep.subr.mxu0 0.0
        %3025 = vmatpush1.msra.mxu0 %v3007
        %3026 = vmatprep.subr.mxu0 0.0
        %3027 = vmatpush1.msra.mxu0 %v3008
        %3028 = vmatprep.subr.mxu0 0.0
        %3029 = vmatpush1.msra.mxu0 0.0
        %3030 = vmatprep.subr.mxu0 0.0
        %3031 = vmatpush1.msra.mxu0 0.0
        %3032 = vmatprep.subr.mxu0 0.0
        %3033 = vmatpush1.msra.mxu0 0.0
        %3034 = vmatprep.subr.mxu0 0.0
        %3035 = vmatpush1.msra.mxu0 0.0
        %3036 = vmatprep.subr.mxu0 0.0
        %3037 = vmatpush1.msra.mxu0 0.0
        %3038 = vmatprep.subr.mxu0 0.0
        %3039 = vmatpush1.msra.mxu0 0.0
        %3040 = vmatprep.subr.mxu0 0.0
        %3041 = vmatpush1.msra.mxu0 0.0
        %3042 = vmatprep.subr.mxu0 0.0
        %3043 = vmatpush1.msra.mxu0 0.0
        %3044 = vmatprep.subr.mxu0 0.0
        %3045 = vmatpush1.msra.mxu0 0.0
        %3046 = vmatprep.subr.mxu0 0.0
        %3047 = vmatpush1.msra.mxu0 0.0
        %3048 = vmatprep.subr.mxu0 0.0
        %3049 = vmatpush1.msra.mxu0 0.0
        %3050 = vmatprep.subr.mxu0 0.0
        %3051 = vmatpush1.msra.mxu0 0.0
        %3052 = vmatprep.subr.mxu0 0.0
        %3053 = vmatpush1.msra.mxu0 0.0
        %3054 = vmatprep.subr.mxu0 0.0
        %3055 = vmatpush1.msra.mxu0 0.0
        %3056 = vmatprep.subr.mxu0 0.0
        %3057 = vmatpush1.msra.mxu0 0.0
        %3058 = vmatprep.subr.mxu0 0.0
        %3059 = vmatpush1.msra.mxu0 0.0
        %3060 = vmatprep.subr.mxu0 0.0
        %3061 = vmatpush1.msra.mxu0 0.0
        %3062 = vmatprep.subr.mxu0 0.0
        %3063 = vmatpush1.msra.mxu0 0.0
        %3064 = vmatprep.subr.mxu0 0.0
        %3065 = vmatpush1.msra.mxu0 0.0
        %3066 = vmatprep.subr.mxu0 0.0
        %3067 = vmatpush1.msra.mxu0 0.0
        %3068 = vmatprep.subr.mxu0 0.0
        %3069 = vmatpush1.msra.mxu0 0.0
        %3070 = vmatprep.subr.mxu0 0.0
        %3071 = vmatpush1.msra.mxu0 0.0
        %3072 = vmatprep.subr.mxu0 0.0
        %3073 = vmatpush1.msra.mxu0 0.0
        %3074 = vmatprep.subr.mxu0 0.0
        %3075 = vmatpush1.msra.mxu0 0.0
        %3076 = vmatprep.mubr.f32.mxu0 0.0
        %3077 = vmatmul.mubr.f32.gmra.mrb[0].mxu0 %v3010
        %v3078 = vpop.f32.mrb[0].mxu0
        %v3079 = vadd.f32 0.0, %v3078
        %v3080 = vpop.f32.mrb[0].mxu0
        %3081 = vdwg.mxu0
        %v3083 = vsel %vm2729, %v2991, 0
        %3085 = vmatprep.subr.mxu0 0.0
        %3086 = vmatpush1.msra.mxu0 %v2992
        %3087 = vmatprep.subr.mxu0 0.0
        %3088 = vmatpush1.msra.mxu0 %v2993
        %3089 = vmatprep.subr.mxu0 0.0
        %3090 = vmatpush1.msra.mxu0 %v2994
        %3091 = vmatprep.subr.mxu0 0.0
        %3092 = vmatpush1.msra.mxu0 %v2995
        %3093 = vmatprep.subr.mxu0 0.0
        %3094 = vmatpush1.msra.mxu0 %v2996
        %3095 = vmatprep.subr.mxu0 0.0
        %3096 = vmatpush1.msra.mxu0 %v2997
        %3097 = vmatprep.subr.mxu0 0.0
        %3098 = vmatpush1.msra.mxu0 %v2998
        %3099 = vmatprep.subr.mxu0 0.0
        %3100 = vmatpush1.msra.mxu0 %v2999
        %3101 = vmatprep.subr.mxu0 0.0
        %3102 = vmatpush1.msra.mxu0 0.0
        %3103 = vmatprep.subr.mxu0 0.0
        %3104 = vmatpush1.msra.mxu0 0.0
        %3105 = vmatprep.subr.mxu0 0.0
        %3106 = vmatpush1.msra.mxu0 0.0
        %3107 = vmatprep.subr.mxu0 0.0
        %3108 = vmatpush1.msra.mxu0 0.0
        %3109 = vmatprep.subr.mxu0 0.0
        %3110 = vmatpush1.msra.mxu0 0.0
        %3111 = vmatprep.subr.mxu0 0.0
        %3112 = vmatpush1.msra.mxu0 0.0
        %3113 = vmatprep.subr.mxu0 0.0
        %3114 = vmatpush1.msra.mxu0 0.0
        %3115 = vmatprep.subr.mxu0 0.0
        %3116 = vmatpush1.msra.mxu0 0.0
        %3117 = vmatprep.subr.mxu0 0.0
        %3118 = vmatpush1.msra.mxu0 0.0
        %3119 = vmatprep.subr.mxu0 0.0
        %3120 = vmatpush1.msra.mxu0 0.0
        %3121 = vmatprep.subr.mxu0 0.0
        %3122 = vmatpush1.msra.mxu0 0.0
        %3123 = vmatprep.subr.mxu0 0.0
        %3124 = vmatpush1.msra.mxu0 0.0
        %3125 = vmatprep.subr.mxu0 0.0
        %3126 = vmatpush1.msra.mxu0 0.0
        %3127 = vmatprep.subr.mxu0 0.0
        %3128 = vmatpush1.msra.mxu0 0.0
        %3129 = vmatprep.subr.mxu0 0.0
        %3130 = vmatpush1.msra.mxu0 0.0
        %3131 = vmatprep.subr.mxu0 0.0
        %3132 = vmatpush1.msra.mxu0 0.0
        %3133 = vmatprep.subr.mxu0 0.0
        %3134 = vmatpush1.msra.mxu0 0.0
        %3135 = vmatprep.subr.mxu0 0.0
        %3136 = vmatpush1.msra.mxu0 0.0
        %3137 = vmatprep.subr.mxu0 0.0
        %3138 = vmatpush1.msra.mxu0 0.0
        %3139 = vmatprep.subr.mxu0 0.0
        %3140 = vmatpush1.msra.mxu0 0.0
        %3141 = vmatprep.subr.mxu0 0.0
        %3142 = vmatpush1.msra.mxu0 0.0
        %3143 = vmatprep.subr.mxu0 0.0
        %3144 = vmatpush1.msra.mxu0 0.0
        %3145 = vmatprep.subr.mxu0 0.0
        %3146 = vmatpush1.msra.mxu0 0.0
        %3147 = vmatprep.subr.mxu0 0.0
        %3148 = vmatpush1.msra.mxu0 0.0
        %3149 = vmatprep.mubr.f32.mxu0 0.0
        %3150 = vmatmul.mubr.f32.gmra.mrb[0].mxu0 %v3083
        %v3151 = vpop.f32.mrb[0].mxu0
        %v3152 = vadd.f32 %v3079, %v3151
        %v3153 = vpop.f32.mrb[0].mxu0
        %3154 = vdwg.mxu0
        %v3155 = vld [vmem:[#allocation3 + $0x2] sm:$0xff]
        %v3156 = vld [vmem:[%s13 + $0x80] sm:$0xff]
        %v3157 = vld [vmem:[%s13 + $0x88] sm:$0xff]
        %v3158 = vld [vmem:[%s13 + $0x90] sm:$0xff]
        %v3159 = vld [vmem:[%s13 + $0x98] sm:$0xff]
        %v3160 = vld [vmem:[%s13 + $0xa0] sm:$0xff]
        %v3161 = vld [vmem:[%s13 + $0xa8] sm:$0xff]
        %v3162 = vld [vmem:[%s13 + $0xb0] sm:$0xff]
        %v3163 = vld [vmem:[%s13 + $0xb8] sm:$0xff]
        %v3165 = vsel %vm2729, %v3155, 0
        %3167 = vmatprep.subr.mxu0 0.0
        %3168 = vmatpush1.msra.mxu0 %v3156
        %3169 = vmatprep.subr.mxu0 0.0
        %3170 = vmatpush1.msra.mxu0 %v3157
        %3171 = vmatprep.subr.mxu0 0.0
        %3172 = vmatpush1.msra.mxu0 %v3158
        %3173 = vmatprep.subr.mxu0 0.0
        %3174 = vmatpush1.msra.mxu0 %v3159
        %3175 = vmatprep.subr.mxu0 0.0
        %3176 = vmatpush1.msra.mxu0 %v3160
        %3177 = vmatprep.subr.mxu0 0.0
        %3178 = vmatpush1.msra.mxu0 %v3161
        %3179 = vmatprep.subr.mxu0 0.0
        %3180 = vmatpush1.msra.mxu0 %v3162
        %3181 = vmatprep.subr.mxu0 0.0
        %3182 = vmatpush1.msra.mxu0 %v3163
        %3183 = vmatprep.subr.mxu0 0.0
        %3184 = vmatpush1.msra.mxu0 0.0
        %3185 = vmatprep.subr.mxu0 0.0
        %3186 = vmatpush1.msra.mxu0 0.0
        %3187 = vmatprep.subr.mxu0 0.0
        %3188 = vmatpush1.msra.mxu0 0.0
        %3189 = vmatprep.subr.mxu0 0.0
        %3190 = vmatpush1.msra.mxu0 0.0
        %3191 = vmatprep.subr.mxu0 0.0
        %3192 = vmatpush1.msra.mxu0 0.0
        %3193 = vmatprep.subr.mxu0 0.0
        %3194 = vmatpush1.msra.mxu0 0.0
        %3195 = vmatprep.subr.mxu0 0.0
        %3196 = vmatpush1.msra.mxu0 0.0
        %3197 = vmatprep.subr.mxu0 0.0
        %3198 = vmatpush1.msra.mxu0 0.0
        %3199 = vmatprep.subr.mxu0 0.0
        %3200 = vmatpush1.msra.mxu0 0.0
        %3201 = vmatprep.subr.mxu0 0.0
        %3202 = vmatpush1.msra.mxu0 0.0
        %3203 = vmatprep.subr.mxu0 0.0
        %3204 = vmatpush1.msra.mxu0 0.0
        %3205 = vmatprep.subr.mxu0 0.0
        %3206 = vmatpush1.msra.mxu0 0.0
        %3207 = vmatprep.subr.mxu0 0.0
        %3208 = vmatpush1.msra.mxu0 0.0
        %3209 = vmatprep.subr.mxu0 0.0
        %3210 = vmatpush1.msra.mxu0 0.0
        %3211 = vmatprep.subr.mxu0 0.0
        %3212 = vmatpush1.msra.mxu0 0.0
        %3213 = vmatprep.subr.mxu0 0.0
        %3214 = vmatpush1.msra.mxu0 0.0
        %3215 = vmatprep.subr.mxu0 0.0
        %3216 = vmatpush1.msra.mxu0 0.0
        %3217 = vmatprep.subr.mxu0 0.0
        %3218 = vmatpush1.msra.mxu0 0.0
        %3219 = vmatprep.subr.mxu0 0.0
        %3220 = vmatpush1.msra.mxu0 0.0
        %3221 = vmatprep.subr.mxu0 0.0
        %3222 = vmatpush1.msra.mxu0 0.0
        %3223 = vmatprep.subr.mxu0 0.0
        %3224 = vmatpush1.msra.mxu0 0.0
        %3225 = vmatprep.subr.mxu0 0.0
        %3226 = vmatpush1.msra.mxu0 0.0
        %3227 = vmatprep.subr.mxu0 0.0
        %3228 = vmatpush1.msra.mxu0 0.0
        %3229 = vmatprep.subr.mxu0 0.0
        %3230 = vmatpush1.msra.mxu0 0.0
        %3231 = vmatprep.mubr.f32.mxu0 0.0
        %3232 = vmatmul.mubr.f32.gmra.mrb[0].mxu0 %v3165
        %v3233 = vpop.f32.mrb[0].mxu0
        %v3234 = vadd.f32 0.0, %v3233
        %v3235 = vpop.f32.mrb[0].mxu0
        %3236 = vdwg.mxu0
        %v3237 = vadd.f32 %v3152, %v3234
        %v3239 = vlaneseq
        %v3240 = vshrl.u32 %v3239, 7
        %v3241 = vsub.s32 0, %v3240
        %v3242 = vrot.slane %v2990, %v3241
        %v3244 = vadd.f32 %v3237, %v3242
        %v3245 = vadd.f32 %v3244, %v2725
        %v3246 = vmax.f32 %v3245, 0.0
        %3247 = vst.msk [vmem:[#allocation2] sm:$0x1] %vm2726, 0.0
        %3248 = vst.msk [vmem:[#allocation2 + $0x9] sm:$0x1] %vm2726, 0.0
        %3249 = vst.msk [vmem:[#allocation2 + $0x1] sm:$0xff] %vm2729, %v3246
        %v3250 = vld [vmem:[%s19] sm:$0x1]
        %v3251 = vld [vmem:[#allocation2] sm:$0xff]
        %v3252 = vld [vmem:[%s17] sm:$0xff]
        %v3253 = vld [vmem:[%s17 + $0x8] sm:$0xff]
        %v3254 = vld [vmem:[%s17 + $0x10] sm:$0xff]
        %v3255 = vld [vmem:[%s17 + $0x18] sm:$0xff]
        %v3256 = vld [vmem:[%s17 + $0x20] sm:$0xff]
        %v3257 = vld [vmem:[%s17 + $0x28] sm:$0xff]
        %v3258 = vld [vmem:[%s17 + $0x30] sm:$0xff]
        %v3259 = vld [vmem:[%s17 + $0x38] sm:$0xff]
        %v3260 = vld [vmem:[#allocation2 + $0x1] sm:$0xff]
        %v3261 = vld [vmem:[%s17 + $0x40] sm:$0xff]
        %v3262 = vld [vmem:[%s17 + $0x48] sm:$0xff]
        %v3263 = vld [vmem:[%s17 + $0x50] sm:$0xff]
        %v3264 = vld [vmem:[%s17 + $0x58] sm:$0xff]
        %v3265 = vld [vmem:[%s17 + $0x60] sm:$0xff]
        %v3266 = vld [vmem:[%s17 + $0x68] sm:$0xff]
        %v3267 = vld [vmem:[%s17 + $0x70] sm:$0xff]
        %v3268 = vld [vmem:[%s17 + $0x78] sm:$0xff]
        %v3270 = vsel %vm2729, %v3260, 0
        %3272 = vmatprep.subr.mxu0 0.0
        %3273 = vmatpush1.msra.mxu0 %v3261
        %3274 = vmatprep.subr.mxu0 0.0
        %3275 = vmatpush1.msra.mxu0 %v3262
        %3276 = vmatprep.subr.mxu0 0.0
        %3277 = vmatpush1.msra.mxu0 %v3263
        %3278 = vmatprep.subr.mxu0 0.0
        %3279 = vmatpush1.msra.mxu0 %v3264
        %3280 = vmatprep.subr.mxu0 0.0
        %3281 = vmatpush1.msra.mxu0 %v3265
        %3282 = vmatprep.subr.mxu0 0.0
        %3283 = vmatpush1.msra.mxu0 %v3266
        %3284 = vmatprep.subr.mxu0 0.0
        %3285 = vmatpush1.msra.mxu0 %v3267
        %3286 = vmatprep.subr.mxu0 0.0
        %3287 = vmatpush1.msra.mxu0 %v3268
        %3288 = vmatprep.subr.mxu0 0.0
        %3289 = vmatpush1.msra.mxu0 0.0
        %3290 = vmatprep.subr.mxu0 0.0
        %3291 = vmatpush1.msra.mxu0 0.0
        %3292 = vmatprep.subr.mxu0 0.0
        %3293 = vmatpush1.msra.mxu0 0.0
        %3294 = vmatprep.subr.mxu0 0.0
        %3295 = vmatpush1.msra.mxu0 0.0
        %3296 = vmatprep.subr.mxu0 0.0
        %3297 = vmatpush1.msra.mxu0 0.0
        %3298 = vmatprep.subr.mxu0 0.0
        %3299 = vmatpush1.msra.mxu0 0.0
        %3300 = vmatprep.subr.mxu0 0.0
        %3301 = vmatpush1.msra.mxu0 0.0
        %3302 = vmatprep.subr.mxu0 0.0
        %3303 = vmatpush1.msra.mxu0 0.0
        %3304 = vmatprep.subr.mxu0 0.0
        %3305 = vmatpush1.msra.mxu0 0.0
        %3306 = vmatprep.subr.mxu0 0.0
        %3307 = vmatpush1.msra.mxu0 0.0
        %3308 = vmatprep.subr.mxu0 0.0
        %3309 = vmatpush1.msra.mxu0 0.0
        %3310 = vmatprep.subr.mxu0 0.0
        %3311 = vmatpush1.msra.mxu0 0.0
        %3312 = vmatprep.subr.mxu0 0.0
        %3313 = vmatpush1.msra.mxu0 0.0
        %3314 = vmatprep.subr.mxu0 0.0
        %3315 = vmatpush1.msra.mxu0 0.0
        %3316 = vmatprep.subr.mxu0 0.0
        %3317 = vmatpush1.msra.mxu0 0.0
        %3318 = vmatprep.subr.mxu0 0.0
        %3319 = vmatpush1.msra.mxu0 0.0
        %3320 = vmatprep.subr.mxu0 0.0
        %3321 = vmatpush1.msra.mxu0 0.0
        %3322 = vmatprep.subr.mxu0 0.0
        %3323 = vmatpush1.msra.mxu0 0.0
        %3324 = vmatprep.subr.mxu0 0.0
        %3325 = vmatpush1.msra.mxu0 0.0
        %3326 = vmatprep.subr.mxu0 0.0
        %3327 = vmatpush1.msra.mxu0 0.0
        %3328 = vmatprep.subr.mxu0 0.0
        %3329 = vmatpush1.msra.mxu0 0.0
        %3330 = vmatprep.subr.mxu0 0.0
        %3331 = vmatpush1.msra.mxu0 0.0
        %3332 = vmatprep.subr.mxu0 0.0
        %3333 = vmatpush1.msra.mxu0 0.0
        %3334 = vmatprep.subr.mxu0 0.0
        %3335 = vmatpush1.msra.mxu0 0.0
        %3336 = vmatprep.mubr.f32.mxu0 0.0
        %3337 = vmatmul.mubr.f32.gmra.mrb[0].mxu0 %v3270
        %v3338 = vpop.f32.mrb[0].mxu0
        %v3339 = vadd.f32 0.0, %v3338
        %v3340 = vpop.f32.mrb[0].mxu0
        %3341 = vdwg.mxu0
        %v3343 = vsel %vm2729, %v3251, 0
        %3345 = vmatprep.subr.mxu0 0.0
        %3346 = vmatpush1.msra.mxu0 %v3252
        %3347 = vmatprep.subr.mxu0 0.0
        %3348 = vmatpush1.msra.mxu0 %v3253
        %3349 = vmatprep.subr.mxu0 0.0
        %3350 = vmatpush1.msra.mxu0 %v3254
        %3351 = vmatprep.subr.mxu0 0.0
        %3352 = vmatpush1.msra.mxu0 %v3255
        %3353 = vmatprep.subr.mxu0 0.0
        %3354 = vmatpush1.msra.mxu0 %v3256
        %3355 = vmatprep.subr.mxu0 0.0
        %3356 = vmatpush1.msra.mxu0 %v3257
        %3357 = vmatprep.subr.mxu0 0.0
        %3358 = vmatpush1.msra.mxu0 %v3258
        %3359 = vmatprep.subr.mxu0 0.0
        %3360 = vmatpush1.msra.mxu0 %v3259
        %3361 = vmatprep.subr.mxu0 0.0
        %3362 = vmatpush1.msra.mxu0 0.0
        %3363 = vmatprep.subr.mxu0 0.0
        %3364 = vmatpush1.msra.mxu0 0.0
        %3365 = vmatprep.subr.mxu0 0.0
        %3366 = vmatpush1.msra.mxu0 0.0
        %3367 = vmatprep.subr.mxu0 0.0
        %3368 = vmatpush1.msra.mxu0 0.0
        %3369 = vmatprep.subr.mxu0 0.0
        %3370 = vmatpush1.msra.mxu0 0.0
        %3371 = vmatprep.subr.mxu0 0.0
        %3372 = vmatpush1.msra.mxu0 0.0
        %3373 = vmatprep.subr.mxu0 0.0
        %3374 = vmatpush1.msra.mxu0 0.0
        %3375 = vmatprep.subr.mxu0 0.0
        %3376 = vmatpush1.msra.mxu0 0.0
        %3377 = vmatprep.subr.mxu0 0.0
        %3378 = vmatpush1.msra.mxu0 0.0
        %3379 = vmatprep.subr.mxu0 0.0
        %3380 = vmatpush1.msra.mxu0 0.0
        %3381 = vmatprep.subr.mxu0 0.0
        %3382 = vmatpush1.msra.mxu0 0.0
        %3383 = vmatprep.subr.mxu0 0.0
        %3384 = vmatpush1.msra.mxu0 0.0
        %3385 = vmatprep.subr.mxu0 0.0
        %3386 = vmatpush1.msra.mxu0 0.0
        %3387 = vmatprep.subr.mxu0 0.0
        %3388 = vmatpush1.msra.mxu0 0.0
        %3389 = vmatprep.subr.mxu0 0.0
        %3390 = vmatpush1.msra.mxu0 0.0
        %3391 = vmatprep.subr.mxu0 0.0
        %3392 = vmatpush1.msra.mxu0 0.0
        %3393 = vmatprep.subr.mxu0 0.0
        %3394 = vmatpush1.msra.mxu0 0.0
        %3395 = vmatprep.subr.mxu0 0.0
        %3396 = vmatpush1.msra.mxu0 0.0
        %3397 = vmatprep.subr.mxu0 0.0
        %3398 = vmatpush1.msra.mxu0 0.0
        %3399 = vmatprep.subr.mxu0 0.0
        %3400 = vmatpush1.msra.mxu0 0.0
        %3401 = vmatprep.subr.mxu0 0.0
        %3402 = vmatpush1.msra.mxu0 0.0
        %3403 = vmatprep.subr.mxu0 0.0
        %3404 = vmatpush1.msra.mxu0 0.0
        %3405 = vmatprep.subr.mxu0 0.0
        %3406 = vmatpush1.msra.mxu0 0.0
        %3407 = vmatprep.subr.mxu0 0.0
        %3408 = vmatpush1.msra.mxu0 0.0
        %3409 = vmatprep.mubr.f32.mxu0 0.0
        %3410 = vmatmul.mubr.f32.gmra.mrb[0].mxu0 %v3343
        %v3411 = vpop.f32.mrb[0].mxu0
        %v3412 = vadd.f32 %v3339, %v3411
        %v3413 = vpop.f32.mrb[0].mxu0
        %3414 = vdwg.mxu0
        %v3415 = vld [vmem:[#allocation2 + $0x2] sm:$0xff]
        %v3416 = vld [vmem:[%s17 + $0x80] sm:$0xff]
        %v3417 = vld [vmem:[%s17 + $0x88] sm:$0xff]
        %v3418 = vld [vmem:[%s17 + $0x90] sm:$0xff]
        %v3419 = vld [vmem:[%s17 + $0x98] sm:$0xff]
        %v3420 = vld [vmem:[%s17 + $0xa0] sm:$0xff]
        %v3421 = vld [vmem:[%s17 + $0xa8] sm:$0xff]
        %v3422 = vld [vmem:[%s17 + $0xb0] sm:$0xff]
        %v3423 = vld [vmem:[%s17 + $0xb8] sm:$0xff]
        %v3425 = vsel %vm2729, %v3415, 0
        %3427 = vmatprep.subr.mxu0 0.0
        %3428 = vmatpush1.msra.mxu0 %v3416
        %3429 = vmatprep.subr.mxu0 0.0
        %3430 = vmatpush1.msra.mxu0 %v3417
        %3431 = vmatprep.subr.mxu0 0.0
        %3432 = vmatpush1.msra.mxu0 %v3418
        %3433 = vmatprep.subr.mxu0 0.0
        %3434 = vmatpush1.msra.mxu0 %v3419
        %3435 = vmatprep.subr.mxu0 0.0
        %3436 = vmatpush1.msra.mxu0 %v3420
        %3437 = vmatprep.subr.mxu0 0.0
        %3438 = vmatpush1.msra.mxu0 %v3421
        %3439 = vmatprep.subr.mxu0 0.0
        %3440 = vmatpush1.msra.mxu0 %v3422
        %3441 = vmatprep.subr.mxu0 0.0
        %3442 = vmatpush1.msra.mxu0 %v3423
        %3443 = vmatprep.subr.mxu0 0.0
        %3444 = vmatpush1.msra.mxu0 0.0
        %3445 = vmatprep.subr.mxu0 0.0
        %3446 = vmatpush1.msra.mxu0 0.0
        %3447 = vmatprep.subr.mxu0 0.0
        %3448 = vmatpush1.msra.mxu0 0.0
        %3449 = vmatprep.subr.mxu0 0.0
        %3450 = vmatpush1.msra.mxu0 0.0
        %3451 = vmatprep.subr.mxu0 0.0
        %3452 = vmatpush1.msra.mxu0 0.0
        %3453 = vmatprep.subr.mxu0 0.0
        %3454 = vmatpush1.msra.mxu0 0.0
        %3455 = vmatprep.subr.mxu0 0.0
        %3456 = vmatpush1.msra.mxu0 0.0
        %3457 = vmatprep.subr.mxu0 0.0
        %3458 = vmatpush1.msra.mxu0 0.0
        %3459 = vmatprep.subr.mxu0 0.0
        %3460 = vmatpush1.msra.mxu0 0.0
        %3461 = vmatprep.subr.mxu0 0.0
        %3462 = vmatpush1.msra.mxu0 0.0
        %3463 = vmatprep.subr.mxu0 0.0
        %3464 = vmatpush1.msra.mxu0 0.0
        %3465 = vmatprep.subr.mxu0 0.0
        %3466 = vmatpush1.msra.mxu0 0.0
        %3467 = vmatprep.subr.mxu0 0.0
        %3468 = vmatpush1.msra.mxu0 0.0
        %3469 = vmatprep.subr.mxu0 0.0
        %3470 = vmatpush1.msra.mxu0 0.0
        %3471 = vmatprep.subr.mxu0 0.0
        %3472 = vmatpush1.msra.mxu0 0.0
        %3473 = vmatprep.subr.mxu0 0.0
        %3474 = vmatpush1.msra.mxu0 0.0
        %3475 = vmatprep.subr.mxu0 0.0
        %3476 = vmatpush1.msra.mxu0 0.0
        %3477 = vmatprep.subr.mxu0 0.0
        %3478 = vmatpush1.msra.mxu0 0.0
        %3479 = vmatprep.subr.mxu0 0.0
        %3480 = vmatpush1.msra.mxu0 0.0
        %3481 = vmatprep.subr.mxu0 0.0
        %3482 = vmatpush1.msra.mxu0 0.0
        %3483 = vmatprep.subr.mxu0 0.0
        %3484 = vmatpush1.msra.mxu0 0.0
        %3485 = vmatprep.subr.mxu0 0.0
        %3486 = vmatpush1.msra.mxu0 0.0
        %3487 = vmatprep.subr.mxu0 0.0
        %3488 = vmatpush1.msra.mxu0 0.0
        %3489 = vmatprep.subr.mxu0 0.0
        %3490 = vmatpush1.msra.mxu0 0.0
        %3491 = vmatprep.mubr.f32.mxu0 0.0
        %3492 = vmatmul.mubr.f32.gmra.mrb[0].mxu0 %v3425
        %v3493 = vpop.f32.mrb[0].mxu0
        %v3494 = vadd.f32 0.0, %v3493
        %v3495 = vpop.f32.mrb[0].mxu0
        %3496 = vdwg.mxu0
        %v3497 = vadd.f32 %v3412, %v3494
        %v3499 = vlaneseq
        %v3500 = vshrl.u32 %v3499, 7
        %v3501 = vsub.s32 0, %v3500
        %v3502 = vrot.slane %v3250, %v3501
        %v3504 = vadd.f32 %v3497, %v3502
        %v3505 = vmax.f32 %v3504, 0.0
        %3506 = vst.msk [vmem:[#allocation3] sm:$0x1] %vm2726, 0.0
        %3507 = vst.msk [vmem:[#allocation3 + $0x9] sm:$0x1] %vm2726, 0.0
        %3508 = vst.msk [vmem:[#allocation3 + $0x1] sm:$0xff] %vm2729, %v3505
        %v3509 = vld [vmem:[%s23] sm:$0x1]
        %v3510 = vld [vmem:[#allocation3] sm:$0xff]
        %v3511 = vld [vmem:[%s21] sm:$0xff]
        %v3512 = vld [vmem:[%s21 + $0x8] sm:$0xff]
        %v3513 = vld [vmem:[%s21 + $0x10] sm:$0xff]
        %v3514 = vld [vmem:[%s21 + $0x18] sm:$0xff]
        %v3515 = vld [vmem:[%s21 + $0x20] sm:$0xff]
        %v3516 = vld [vmem:[%s21 + $0x28] sm:$0xff]
        %v3517 = vld [vmem:[%s21 + $0x30] sm:$0xff]
        %v3518 = vld [vmem:[%s21 + $0x38] sm:$0xff]
        %v3519 = vld [vmem:[#allocation3 + $0x1] sm:$0xff]
        %v3520 = vld [vmem:[%s21 + $0x40] sm:$0xff]
        %v3521 = vld [vmem:[%s21 + $0x48] sm:$0xff]
        %v3522 = vld [vmem:[%s21 + $0x50] sm:$0xff]
        %v3523 = vld [vmem:[%s21 + $0x58] sm:$0xff]
        %v3524 = vld [vmem:[%s21 + $0x60] sm:$0xff]
        %v3525 = vld [vmem:[%s21 + $0x68] sm:$0xff]
        %v3526 = vld [vmem:[%s21 + $0x70] sm:$0xff]
        %v3527 = vld [vmem:[%s21 + $0x78] sm:$0xff]
        %v3529 = vsel %vm2729, %v3519, 0
        %3531 = vmatprep.subr.mxu0 0.0
        %3532 = vmatpush1.msra.mxu0 %v3520
        %3533 = vmatprep.subr.mxu0 0.0
        %3534 = vmatpush1.msra.mxu0 %v3521
        %3535 = vmatprep.subr.mxu0 0.0
        %3536 = vmatpush1.msra.mxu0 %v3522
        %3537 = vmatprep.subr.mxu0 0.0
        %3538 = vmatpush1.msra.mxu0 %v3523
        %3539 = vmatprep.subr.mxu0 0.0
        %3540 = vmatpush1.msra.mxu0 %v3524
        %3541 = vmatprep.subr.mxu0 0.0
        %3542 = vmatpush1.msra.mxu0 %v3525
        %3543 = vmatprep.subr.mxu0 0.0
        %3544 = vmatpush1.msra.mxu0 %v3526
        %3545 = vmatprep.subr.mxu0 0.0
        %3546 = vmatpush1.msra.mxu0 %v3527
        %3547 = vmatprep.subr.mxu0 0.0
        %3548 = vmatpush1.msra.mxu0 0.0
        %3549 = vmatprep.subr.mxu0 0.0
        %3550 = vmatpush1.msra.mxu0 0.0
        %3551 = vmatprep.subr.mxu0 0.0
        %3552 = vmatpush1.msra.mxu0 0.0
        %3553 = vmatprep.subr.mxu0 0.0
        %3554 = vmatpush1.msra.mxu0 0.0
        %3555 = vmatprep.subr.mxu0 0.0
        %3556 = vmatpush1.msra.mxu0 0.0
        %3557 = vmatprep.subr.mxu0 0.0
        %3558 = vmatpush1.msra.mxu0 0.0
        %3559 = vmatprep.subr.mxu0 0.0
        %3560 = vmatpush1.msra.mxu0 0.0
        %3561 = vmatprep.subr.mxu0 0.0
        %3562 = vmatpush1.msra.mxu0 0.0
        %3563 = vmatprep.subr.mxu0 0.0
        %3564 = vmatpush1.msra.mxu0 0.0
        %3565 = vmatprep.subr.mxu0 0.0
        %3566 = vmatpush1.msra.mxu0 0.0
        %3567 = vmatprep.subr.mxu0 0.0
        %3568 = vmatpush1.msra.mxu0 0.0
        %3569 = vmatprep.subr.mxu0 0.0
        %3570 = vmatpush1.msra.mxu0 0.0
        %3571 = vmatprep.subr.mxu0 0.0
        %3572 = vmatpush1.msra.mxu0 0.0
        %3573 = vmatprep.subr.mxu0 0.0
        %3574 = vmatpush1.msra.mxu0 0.0
        %3575 = vmatprep.subr.mxu0 0.0
        %3576 = vmatpush1.msra.mxu0 0.0
        %3577 = vmatprep.subr.mxu0 0.0
        %3578 = vmatpush1.msra.mxu0 0.0
        %3579 = vmatprep.subr.mxu0 0.0
        %3580 = vmatpush1.msra.mxu0 0.0
        %3581 = vmatprep.subr.mxu0 0.0
        %3582 = vmatpush1.msra.mxu0 0.0
        %3583 = vmatprep.subr.mxu0 0.0
        %3584 = vmatpush1.msra.mxu0 0.0
        %3585 = vmatprep.subr.mxu0 0.0
        %3586 = vmatpush1.msra.mxu0 0.0
        %3587 = vmatprep.subr.mxu0 0.0
        %3588 = vmatpush1.msra.mxu0 0.0
        %3589 = vmatprep.subr.mxu0 0.0
        %3590 = vmatpush1.msra.mxu0 0.0
        %3591 = vmatprep.subr.mxu0 0.0
        %3592 = vmatpush1.msra.mxu0 0.0
        %3593 = vmatprep.subr.mxu0 0.0
        %3594 = vmatpush1.msra.mxu0 0.0
        %3595 = vmatprep.mubr.f32.mxu0 0.0
        %3596 = vmatmul.mubr.f32.gmra.mrb[0].mxu0 %v3529
        %v3597 = vpop.f32.mrb[0].mxu0
        %v3598 = vadd.f32 0.0, %v3597
        %v3599 = vpop.f32.mrb[0].mxu0
        %3600 = vdwg.mxu0
        %v3602 = vsel %vm2729, %v3510, 0
        %3604 = vmatprep.subr.mxu0 0.0
        %3605 = vmatpush1.msra.mxu0 %v3511
        %3606 = vmatprep.subr.mxu0 0.0
        %3607 = vmatpush1.msra.mxu0 %v3512
        %3608 = vmatprep.subr.mxu0 0.0
        %3609 = vmatpush1.msra.mxu0 %v3513
        %3610 = vmatprep.subr.mxu0 0.0
        %3611 = vmatpush1.msra.mxu0 %v3514
        %3612 = vmatprep.subr.mxu0 0.0
        %3613 = vmatpush1.msra.mxu0 %v3515
        %3614 = vmatprep.subr.mxu0 0.0
        %3615 = vmatpush1.msra.mxu0 %v3516
        %3616 = vmatprep.subr.mxu0 0.0
        %3617 = vmatpush1.msra.mxu0 %v3517
        %3618 = vmatprep.subr.mxu0 0.0
        %3619 = vmatpush1.msra.mxu0 %v3518
        %3620 = vmatprep.subr.mxu0 0.0
        %3621 = vmatpush1.msra.mxu0 0.0
        %3622 = vmatprep.subr.mxu0 0.0
        %3623 = vmatpush1.msra.mxu0 0.0
        %3624 = vmatprep.subr.mxu0 0.0
        %3625 = vmatpush1.msra.mxu0 0.0
        %3626 = vmatprep.subr.mxu0 0.0
        %3627 = vmatpush1.msra.mxu0 0.0
        %3628 = vmatprep.subr.mxu0 0.0
        %3629 = vmatpush1.msra.mxu0 0.0
        %3630 = vmatprep.subr.mxu0 0.0
        %3631 = vmatpush1.msra.mxu0 0.0
        %3632 = vmatprep.subr.mxu0 0.0
        %3633 = vmatpush1.msra.mxu0 0.0
        %3634 = vmatprep.subr.mxu0 0.0
        %3635 = vmatpush1.msra.mxu0 0.0
        %3636 = vmatprep.subr.mxu0 0.0
        %3637 = vmatpush1.msra.mxu0 0.0
        %3638 = vmatprep.subr.mxu0 0.0
        %3639 = vmatpush1.msra.mxu0 0.0
        %3640 = vmatprep.subr.mxu0 0.0
        %3641 = vmatpush1.msra.mxu0 0.0
        %3642 = vmatprep.subr.mxu0 0.0
        %3643 = vmatpush1.msra.mxu0 0.0
        %3644 = vmatprep.subr.mxu0 0.0
        %3645 = vmatpush1.msra.mxu0 0.0
        %3646 = vmatprep.subr.mxu0 0.0
        %3647 = vmatpush1.msra.mxu0 0.0
        %3648 = vmatprep.subr.mxu0 0.0
        %3649 = vmatpush1.msra.mxu0 0.0
        %3650 = vmatprep.subr.mxu0 0.0
        %3651 = vmatpush1.msra.mxu0 0.0
        %3652 = vmatprep.subr.mxu0 0.0
        %3653 = vmatpush1.msra.mxu0 0.0
        %3654 = vmatprep.subr.mxu0 0.0
        %3655 = vmatpush1.msra.mxu0 0.0
        %3656 = vmatprep.subr.mxu0 0.0
        %3657 = vmatpush1.msra.mxu0 0.0
        %3658 = vmatprep.subr.mxu0 0.0
        %3659 = vmatpush1.msra.mxu0 0.0
        %3660 = vmatprep.subr.mxu0 0.0
        %3661 = vmatpush1.msra.mxu0 0.0
        %3662 = vmatprep.subr.mxu0 0.0
        %3663 = vmatpush1.msra.mxu0 0.0
        %3664 = vmatprep.subr.mxu0 0.0
        %3665 = vmatpush1.msra.mxu0 0.0
        %3666 = vmatprep.subr.mxu0 0.0
        %3667 = vmatpush1.msra.mxu0 0.0
        %3668 = vmatprep.mubr.f32.mxu0 0.0
        %3669 = vmatmul.mubr.f32.gmra.mrb[0].mxu0 %v3602
        %v3670 = vpop.f32.mrb[0].mxu0
        %v3671 = vadd.f32 %v3598, %v3670
        %v3672 = vpop.f32.mrb[0].mxu0
        %3673 = vdwg.mxu0
        %v3674 = vld [vmem:[#allocation3 + $0x2] sm:$0xff]
        %v3675 = vld [vmem:[%s21 + $0x80] sm:$0xff]
        %v3676 = vld [vmem:[%s21 + $0x88] sm:$0xff]
        %v3677 = vld [vmem:[%s21 + $0x90] sm:$0xff]
        %v3678 = vld [vmem:[%s21 + $0x98] sm:$0xff]
        %v3679 = vld [vmem:[%s21 + $0xa0] sm:$0xff]
        %v3680 = vld [vmem:[%s21 + $0xa8] sm:$0xff]
        %v3681 = vld [vmem:[%s21 + $0xb0] sm:$0xff]
        %v3682 = vld [vmem:[%s21 + $0xb8] sm:$0xff]
        %v3684 = vsel %vm2729, %v3674, 0
        %3686 = vmatprep.subr.mxu0 0.0
        %3687 = vmatpush1.msra.mxu0 %v3675
        %3688 = vmatprep.subr.mxu0 0.0
        %3689 = vmatpush1.msra.mxu0 %v3676
        %3690 = vmatprep.subr.mxu0 0.0
        %3691 = vmatpush1.msra.mxu0 %v3677
        %3692 = vmatprep.subr.mxu0 0.0
        %3693 = vmatpush1.msra.mxu0 %v3678
        %3694 = vmatprep.subr.mxu0 0.0
        %3695 = vmatpush1.msra.mxu0 %v3679
        %3696 = vmatprep.subr.mxu0 0.0
        %3697 = vmatpush1.msra.mxu0 %v3680
        %3698 = vmatprep.subr.mxu0 0.0
        %3699 = vmatpush1.msra.mxu0 %v3681
        %3700 = vmatprep.subr.mxu0 0.0
        %3701 = vmatpush1.msra.mxu0 %v3682
        %3702 = vmatprep.subr.mxu0 0.0
        %3703 = vmatpush1.msra.mxu0 0.0
        %3704 = vmatprep.subr.mxu0 0.0
        %3705 = vmatpush1.msra.mxu0 0.0
        %3706 = vmatprep.subr.mxu0 0.0
        %3707 = vmatpush1.msra.mxu0 0.0
        %3708 = vmatprep.subr.mxu0 0.0
        %3709 = vmatpush1.msra.mxu0 0.0
        %3710 = vmatprep.subr.mxu0 0.0
        %3711 = vmatpush1.msra.mxu0 0.0
        %3712 = vmatprep.subr.mxu0 0.0
        %3713 = vmatpush1.msra.mxu0 0.0
        %3714 = vmatprep.subr.mxu0 0.0
        %3715 = vmatpush1.msra.mxu0 0.0
        %3716 = vmatprep.subr.mxu0 0.0
        %3717 = vmatpush1.msra.mxu0 0.0
        %3718 = vmatprep.subr.mxu0 0.0
        %3719 = vmatpush1.msra.mxu0 0.0
        %3720 = vmatprep.subr.mxu0 0.0
        %3721 = vmatpush1.msra.mxu0 0.0
        %3722 = vmatprep.subr.mxu0 0.0
        %3723 = vmatpush1.msra.mxu0 0.0
        %3724 = vmatprep.subr.mxu0 0.0
        %3725 = vmatpush1.msra.mxu0 0.0
        %3726 = vmatprep.subr.mxu0 0.0
        %3727 = vmatpush1.msra.mxu0 0.0
        %3728 = vmatprep.subr.mxu0 0.0
        %3729 = vmatpush1.msra.mxu0 0.0
        %3730 = vmatprep.subr.mxu0 0.0
        %3731 = vmatpush1.msra.mxu0 0.0
        %3732 = vmatprep.subr.mxu0 0.0
        %3733 = vmatpush1.msra.mxu0 0.0
        %3734 = vmatprep.subr.mxu0 0.0
        %3735 = vmatpush1.msra.mxu0 0.0
        %3736 = vmatprep.subr.mxu0 0.0
        %3737 = vmatpush1.msra.mxu0 0.0
        %3738 = vmatprep.subr.mxu0 0.0
        %3739 = vmatpush1.msra.mxu0 0.0
        %3740 = vmatprep.subr.mxu0 0.0
        %3741 = vmatpush1.msra.mxu0 0.0
        %3742 = vmatprep.subr.mxu0 0.0
        %3743 = vmatpush1.msra.mxu0 0.0
        %3744 = vmatprep.subr.mxu0 0.0
        %3745 = vmatpush1.msra.mxu0 0.0
        %3746 = vmatprep.subr.mxu0 0.0
        %3747 = vmatpush1.msra.mxu0 0.0
        %3748 = vmatprep.subr.mxu0 0.0
        %3749 = vmatpush1.msra.mxu0 0.0
        %3750 = vmatprep.mubr.f32.mxu0 0.0
        %3751 = vmatmul.mubr.f32.gmra.mrb[0].mxu0 %v3684
        %v3752 = vpop.f32.mrb[0].mxu0
        %v3753 = vadd.f32 0.0, %v3752
        %v3754 = vpop.f32.mrb[0].mxu0
        %3755 = vdwg.mxu0
        %v3756 = vadd.f32 %v3671, %v3753
        %v3758 = vlaneseq
        %v3759 = vshrl.u32 %v3758, 7
        %v3760 = vsub.s32 0, %v3759
        %v3761 = vrot.slane %v3509, %v3760
        %v3763 = vadd.f32 %v3756, %v3761
        %v3764 = vadd.f32 %v3763, %v3246
        %v3765 = vmax.f32 %v3764, 0.0
        %3766 = vst.msk [vmem:[#allocation2] sm:$0x1] %vm2726, 0.0
        %3767 = vst.msk [vmem:[#allocation2 + $0x9] sm:$0x1] %vm2726, 0.0
        %3768 = vst.msk [vmem:[#allocation2 + $0x1] sm:$0xff] %vm2729, %v3765
        %v3769 = vld [vmem:[%s27] sm:$0x1]
        %v3770 = vld [vmem:[#allocation2] ss:$2 sm:$0xf]
        %v3771 = vld [vmem:[%s25] sm:$0xff]
        %v3772 = vld [vmem:[%s25 + $0x8] sm:$0xff]
        %v3773 = vld [vmem:[%s25 + $0x10] sm:$0xff]
        %v3774 = vld [vmem:[%s25 + $0x18] sm:$0xff]
        %v3775 = vld [vmem:[%s25 + $0x20] sm:$0xff]
        %v3776 = vld [vmem:[%s25 + $0x28] sm:$0xff]
        %v3777 = vld [vmem:[%s25 + $0x30] sm:$0xff]
        %v3778 = vld [vmem:[%s25 + $0x38] sm:$0xff]
        %v3779 = vld [vmem:[%s1348] ss:$2 sm:$0xf]
        %v3780 = vld [vmem:[%s25 + $0x40] sm:$0xff]
        %v3781 = vld [vmem:[%s25 + $0x48] sm:$0xff]
        %v3782 = vld [vmem:[%s25 + $0x50] sm:$0xff]
        %v3783 = vld [vmem:[%s25 + $0x58] sm:$0xff]
        %v3784 = vld [vmem:[%s25 + $0x60] sm:$0xff]
        %v3785 = vld [vmem:[%s25 + $0x68] sm:$0xff]
        %v3786 = vld [vmem:[%s25 + $0x70] sm:$0xff]
        %v3787 = vld [vmem:[%s25 + $0x78] sm:$0xff]
        %v3789 = vsel %vm2729, %v3779, 0
        %3791 = vmatprep.subr.mxu0 0.0
        %3792 = vmatpush1.msra.mxu0 %v3780
        %3793 = vmatprep.subr.mxu0 0.0
        %3794 = vmatpush1.msra.mxu0 %v3781
        %3795 = vmatprep.subr.mxu0 0.0
        %3796 = vmatpush1.msra.mxu0 %v3782
        %3797 = vmatprep.subr.mxu0 0.0
        %3798 = vmatpush1.msra.mxu0 %v3783
        %3799 = vmatprep.subr.mxu0 0.0
        %3800 = vmatpush1.msra.mxu0 %v3784
        %3801 = vmatprep.subr.mxu0 0.0
        %3802 = vmatpush1.msra.mxu0 %v3785
        %3803 = vmatprep.subr.mxu0 0.0
        %3804 = vmatpush1.msra.mxu0 %v3786
        %3805 = vmatprep.subr.mxu0 0.0
        %3806 = vmatpush1.msra.mxu0 %v3787
        %3807 = vmatprep.subr.mxu0 0.0
        %3808 = vmatpush1.msra.mxu0 0.0
        %3809 = vmatprep.subr.mxu0 0.0
        %3810 = vmatpush1.msra.mxu0 0.0
        %3811 = vmatprep.subr.mxu0 0.0
        %3812 = vmatpush1.msra.mxu0 0.0
        %3813 = vmatprep.subr.mxu0 0.0
        %3814 = vmatpush1.msra.mxu0 0.0
        %3815 = vmatprep.subr.mxu0 0.0
        %3816 = vmatpush1.msra.mxu0 0.0
        %3817 = vmatprep.subr.mxu0 0.0
        %3818 = vmatpush1.msra.mxu0 0.0
        %3819 = vmatprep.subr.mxu0 0.0
        %3820 = vmatpush1.msra.mxu0 0.0
        %3821 = vmatprep.subr.mxu0 0.0
        %3822 = vmatpush1.msra.mxu0 0.0
        %3823 = vmatprep.subr.mxu0 0.0
        %3824 = vmatpush1.msra.mxu0 0.0
        %3825 = vmatprep.subr.mxu0 0.0
        %3826 = vmatpush1.msra.mxu0 0.0
        %3827 = vmatprep.subr.mxu0 0.0
        %3828 = vmatpush1.msra.mxu0 0.0
        %3829 = vmatprep.subr.mxu0 0.0
        %3830 = vmatpush1.msra.mxu0 0.0
        %3831 = vmatprep.subr.mxu0 0.0
        %3832 = vmatpush1.msra.mxu0 0.0
        %3833 = vmatprep.subr.mxu0 0.0
        %3834 = vmatpush1.msra.mxu0 0.0
        %3835 = vmatprep.subr.mxu0 0.0
        %3836 = vmatpush1.msra.mxu0 0.0
        %3837 = vmatprep.subr.mxu0 0.0
        %3838 = vmatpush1.msra.mxu0 0.0
        %3839 = vmatprep.subr.mxu0 0.0
        %3840 = vmatpush1.msra.mxu0 0.0
        %3841 = vmatprep.subr.mxu0 0.0
        %3842 = vmatpush1.msra.mxu0 0.0
        %3843 = vmatprep.subr.mxu0 0.0
        %3844 = vmatpush1.msra.mxu0 0.0
        %3845 = vmatprep.subr.mxu0 0.0
        %3846 = vmatpush1.msra.mxu0 0.0
        %3847 = vmatprep.subr.mxu0 0.0
        %3848 = vmatpush1.msra.mxu0 0.0
        %3849 = vmatprep.subr.mxu0 0.0
        %3850 = vmatpush1.msra.mxu0 0.0
        %3851 = vmatprep.subr.mxu0 0.0
        %3852 = vmatpush1.msra.mxu0 0.0
        %3853 = vmatprep.subr.mxu0 0.0
        %3854 = vmatpush1.msra.mxu0 0.0
        %3855 = vmatprep.mubr.f32.mxu0 0.0
        %3856 = vmatmul.mubr.f32.gmra.mrb[0].mxu0 %v3789
        %v3857 = vpop.f32.mrb[0].mxu0
        %v3858 = vadd.f32 0.0, %v3857
        %v3859 = vpop.f32.mrb[0].mxu0
        %3860 = vdwg.mxu0
        %v3862 = vsel %vm2729, %v3770, 0
        %3864 = vmatprep.subr.mxu0 0.0
        %3865 = vmatpush1.msra.mxu0 %v3771
        %3866 = vmatprep.subr.mxu0 0.0
        %3867 = vmatpush1.msra.mxu0 %v3772
        %3868 = vmatprep.subr.mxu0 0.0
        %3869 = vmatpush1.msra.mxu0 %v3773
        %3870 = vmatprep.subr.mxu0 0.0
        %3871 = vmatpush1.msra.mxu0 %v3774
        %3872 = vmatprep.subr.mxu0 0.0
        %3873 = vmatpush1.msra.mxu0 %v3775
        %3874 = vmatprep.subr.mxu0 0.0
        %3875 = vmatpush1.msra.mxu0 %v3776
        %3876 = vmatprep.subr.mxu0 0.0
        %3877 = vmatpush1.msra.mxu0 %v3777
        %3878 = vmatprep.subr.mxu0 0.0
        %3879 = vmatpush1.msra.mxu0 %v3778
        %3880 = vmatprep.subr.mxu0 0.0
        %3881 = vmatpush1.msra.mxu0 0.0
        %3882 = vmatprep.subr.mxu0 0.0
        %3883 = vmatpush1.msra.mxu0 0.0
        %3884 = vmatprep.subr.mxu0 0.0
        %3885 = vmatpush1.msra.mxu0 0.0
        %3886 = vmatprep.subr.mxu0 0.0
        %3887 = vmatpush1.msra.mxu0 0.0
        %3888 = vmatprep.subr.mxu0 0.0
        %3889 = vmatpush1.msra.mxu0 0.0
        %3890 = vmatprep.subr.mxu0 0.0
        %3891 = vmatpush1.msra.mxu0 0.0
        %3892 = vmatprep.subr.mxu0 0.0
        %3893 = vmatpush1.msra.mxu0 0.0
        %3894 = vmatprep.subr.mxu0 0.0
        %3895 = vmatpush1.msra.mxu0 0.0
        %3896 = vmatprep.subr.mxu0 0.0
        %3897 = vmatpush1.msra.mxu0 0.0
        %3898 = vmatprep.subr.mxu0 0.0
        %3899 = vmatpush1.msra.mxu0 0.0
        %3900 = vmatprep.subr.mxu0 0.0
        %3901 = vmatpush1.msra.mxu0 0.0
        %3902 = vmatprep.subr.mxu0 0.0
        %3903 = vmatpush1.msra.mxu0 0.0
        %3904 = vmatprep.subr.mxu0 0.0
        %3905 = vmatpush1.msra.mxu0 0.0
        %3906 = vmatprep.subr.mxu0 0.0
        %3907 = vmatpush1.msra.mxu0 0.0
        %3908 = vmatprep.subr.mxu0 0.0
        %3909 = vmatpush1.msra.mxu0 0.0
        %3910 = vmatprep.subr.mxu0 0.0
        %3911 = vmatpush1.msra.mxu0 0.0
        %3912 = vmatprep.subr.mxu0 0.0
        %3913 = vmatpush1.msra.mxu0 0.0
        %3914 = vmatprep.subr.mxu0 0.0
        %3915 = vmatpush1.msra.mxu0 0.0
        %3916 = vmatprep.subr.mxu0 0.0
        %3917 = vmatpush1.msra.mxu0 0.0
        %3918 = vmatprep.subr.mxu0 0.0
        %3919 = vmatpush1.msra.mxu0 0.0
        %3920 = vmatprep.subr.mxu0 0.0
        %3921 = vmatpush1.msra.mxu0 0.0
        %3922 = vmatprep.subr.mxu0 0.0
        %3923 = vmatpush1.msra.mxu0 0.0
        %3924 = vmatprep.subr.mxu0 0.0
        %3925 = vmatpush1.msra.mxu0 0.0
        %3926 = vmatprep.subr.mxu0 0.0
        %3927 = vmatpush1.msra.mxu0 0.0
        %3928 = vmatprep.mubr.f32.mxu0 0.0
        %3929 = vmatmul.mubr.f32.gmra.mrb[0].mxu0 %v3862
        %v3930 = vpop.f32.mrb[0].mxu0
        %v3931 = vadd.f32 %v3858, %v3930
        %v3932 = vpop.f32.mrb[0].mxu0
        %3933 = vdwg.mxu0
        %v3934 = vld [vmem:[%s1526] ss:$2 sm:$0xf]
        %v3935 = vld [vmem:[%s25 + $0x80] sm:$0xff]
        %v3936 = vld [vmem:[%s25 + $0x88] sm:$0xff]
        %v3937 = vld [vmem:[%s25 + $0x90] sm:$0xff]
        %v3938 = vld [vmem:[%s25 + $0x98] sm:$0xff]
        %v3939 = vld [vmem:[%s25 + $0xa0] sm:$0xff]
        %v3940 = vld [vmem:[%s25 + $0xa8] sm:$0xff]
        %v3941 = vld [vmem:[%s25 + $0xb0] sm:$0xff]
        %v3942 = vld [vmem:[%s25 + $0xb8] sm:$0xff]
        %v3944 = vsel %vm2729, %v3934, 0
        %3946 = vmatprep.subr.mxu0 0.0
        %3947 = vmatpush1.msra.mxu0 %v3935
        %3948 = vmatprep.subr.mxu0 0.0
        %3949 = vmatpush1.msra.mxu0 %v3936
        %3950 = vmatprep.subr.mxu0 0.0
        %3951 = vmatpush1.msra.mxu0 %v3937
        %3952 = vmatprep.subr.mxu0 0.0
        %3953 = vmatpush1.msra.mxu0 %v3938
        %3954 = vmatprep.subr.mxu0 0.0
        %3955 = vmatpush1.msra.mxu0 %v3939
        %3956 = vmatprep.subr.mxu0 0.0
        %3957 = vmatpush1.msra.mxu0 %v3940
        %3958 = vmatprep.subr.mxu0 0.0
        %3959 = vmatpush1.msra.mxu0 %v3941
        %3960 = vmatprep.subr.mxu0 0.0
        %3961 = vmatpush1.msra.mxu0 %v3942
        %3962 = vmatprep.subr.mxu0 0.0
        %3963 = vmatpush1.msra.mxu0 0.0
        %3964 = vmatprep.subr.mxu0 0.0
        %3965 = vmatpush1.msra.mxu0 0.0
        %3966 = vmatprep.subr.mxu0 0.0
        %3967 = vmatpush1.msra.mxu0 0.0
        %3968 = vmatprep.subr.mxu0 0.0
        %3969 = vmatpush1.msra.mxu0 0.0
        %3970 = vmatprep.subr.mxu0 0.0
        %3971 = vmatpush1.msra.mxu0 0.0
        %3972 = vmatprep.subr.mxu0 0.0
        %3973 = vmatpush1.msra.mxu0 0.0
        %3974 = vmatprep.subr.mxu0 0.0
        %3975 = vmatpush1.msra.mxu0 0.0
        %3976 = vmatprep.subr.mxu0 0.0
        %3977 = vmatpush1.msra.mxu0 0.0
        %3978 = vmatprep.subr.mxu0 0.0
        %3979 = vmatpush1.msra.mxu0 0.0
        %3980 = vmatprep.subr.mxu0 0.0
        %3981 = vmatpush1.msra.mxu0 0.0
        %3982 = vmatprep.subr.mxu0 0.0
        %3983 = vmatpush1.msra.mxu0 0.0
        %3984 = vmatprep.subr.mxu0 0.0
        %3985 = vmatpush1.msra.mxu0 0.0
        %3986 = vmatprep.subr.mxu0 0.0
        %3987 = vmatpush1.msra.mxu0 0.0
        %3988 = vmatprep.subr.mxu0 0.0
        %3989 = vmatpush1.msra.mxu0 0.0
        %3990 = vmatprep.subr.mxu0 0.0
        %3991 = vmatpush1.msra.mxu0 0.0
        %3992 = vmatprep.subr.mxu0 0.0
        %3993 = vmatpush1.msra.mxu0 0.0
        %3994 = vmatprep.subr.mxu0 0.0
        %3995 = vmatpush1.msra.mxu0 0.0
        %3996 = vmatprep.subr.mxu0 0.0
        %3997 = vmatpush1.msra.mxu0 0.0
        %3998 = vmatprep.subr.mxu0 0.0
        %3999 = vmatpush1.msra.mxu0 0.0
        %4000 = vmatprep.subr.mxu0 0.0
        %4001 = vmatpush1.msra.mxu0 0.0
        %4002 = vmatprep.subr.mxu0 0.0
        %4003 = vmatpush1.msra.mxu0 0.0
        %4004 = vmatprep.subr.mxu0 0.0
        %4005 = vmatpush1.msra.mxu0 0.0
        %4006 = vmatprep.subr.mxu0 0.0
        %4007 = vmatpush1.msra.mxu0 0.0
        %4008 = vmatprep.subr.mxu0 0.0
        %4009 = vmatpush1.msra.mxu0 0.0
        %4010 = vmatprep.mubr.f32.mxu0 0.0
        %4011 = vmatmul.mubr.f32.gmra.mrb[0].mxu0 %v3944
        %v4012 = vpop.f32.mrb[0].mxu0
        %v4013 = vadd.f32 0.0, %v4012
        %v4014 = vpop.f32.mrb[0].mxu0
        %4015 = vdwg.mxu0
        %v4016 = vadd.f32 %v3931, %v4013
        %v4018 = vlaneseq
        %v4019 = vshrl.u32 %v4018, 7
        %v4020 = vsub.s32 0, %v4019
        %v4021 = vrot.slane %v3769, %v4020
        %v4023 = vadd.f32 %v4016, %v4021
        %v4024 = vmax.f32 %v4023, 0.0
        %4025 = vst.msk [vmem:[#allocation3] sm:$0x1] %vm2726, 0.0
        %4026 = vst.msk [vmem:[#allocation3 + $0x5] sm:$0x1] %vm2726, 0.0
        %vm4027 = vcmask 519168
        %4028 = vst.msk [vmem:[#allocation3 + $0x1] sm:$0xf] %vm4027, %v4024
        %v4029 = vld [vmem:[%s31] sm:$0x1]
        %v4030 = vld [vmem:[#allocation3] sm:$0xf]
        %v4031 = vld [vmem:[%s29] sm:$0xff]
        %v4032 = vld [vmem:[%s29 + $0x8] sm:$0xff]
        %v4033 = vld [vmem:[%s29 + $0x10] sm:$0xff]
        %v4034 = vld [vmem:[%s29 + $0x18] sm:$0xff]
        %v4035 = vld [vmem:[%s29 + $0x20] sm:$0xff]
        %v4036 = vld [vmem:[%s29 + $0x28] sm:$0xff]
        %v4037 = vld [vmem:[%s29 + $0x30] sm:$0xff]
        %v4038 = vld [vmem:[%s29 + $0x38] sm:$0xff]
        %v4039 = vld [vmem:[#allocation3 + $0x1] sm:$0xf]
        %v4040 = vld [vmem:[%s29 + $0x40] sm:$0xff]
        %v4041 = vld [vmem:[%s29 + $0x48] sm:$0xff]
        %v4042 = vld [vmem:[%s29 + $0x50] sm:$0xff]
        %v4043 = vld [vmem:[%s29 + $0x58] sm:$0xff]
        %v4044 = vld [vmem:[%s29 + $0x60] sm:$0xff]
        %v4045 = vld [vmem:[%s29 + $0x68] sm:$0xff]
        %v4046 = vld [vmem:[%s29 + $0x70] sm:$0xff]
        %v4047 = vld [vmem:[%s29 + $0x78] sm:$0xff]
        %v4049 = vsel %vm2729, %v4039, 0
        %4051 = vmatprep.subr.mxu0 0.0
        %4052 = vmatpush1.msra.mxu0 %v4040
        %4053 = vmatprep.subr.mxu0 0.0
        %4054 = vmatpush1.msra.mxu0 %v4041
        %4055 = vmatprep.subr.mxu0 0.0
        %4056 = vmatpush1.msra.mxu0 %v4042
        %4057 = vmatprep.subr.mxu0 0.0
        %4058 = vmatpush1.msra.mxu0 %v4043
        %4059 = vmatprep.subr.mxu0 0.0
        %4060 = vmatpush1.msra.mxu0 %v4044
        %4061 = vmatprep.subr.mxu0 0.0
        %4062 = vmatpush1.msra.mxu0 %v4045
        %4063 = vmatprep.subr.mxu0 0.0
        %4064 = vmatpush1.msra.mxu0 %v4046
        %4065 = vmatprep.subr.mxu0 0.0
        %4066 = vmatpush1.msra.mxu0 %v4047
        %4067 = vmatprep.subr.mxu0 0.0
        %4068 = vmatpush1.msra.mxu0 0.0
        %4069 = vmatprep.subr.mxu0 0.0
        %4070 = vmatpush1.msra.mxu0 0.0
        %4071 = vmatprep.subr.mxu0 0.0
        %4072 = vmatpush1.msra.mxu0 0.0
        %4073 = vmatprep.subr.mxu0 0.0
        %4074 = vmatpush1.msra.mxu0 0.0
        %4075 = vmatprep.subr.mxu0 0.0
        %4076 = vmatpush1.msra.mxu0 0.0
        %4077 = vmatprep.subr.mxu0 0.0
        %4078 = vmatpush1.msra.mxu0 0.0
        %4079 = vmatprep.subr.mxu0 0.0
        %4080 = vmatpush1.msra.mxu0 0.0
        %4081 = vmatprep.subr.mxu0 0.0
        %4082 = vmatpush1.msra.mxu0 0.0
        %4083 = vmatprep.subr.mxu0 0.0
        %4084 = vmatpush1.msra.mxu0 0.0
        %4085 = vmatprep.subr.mxu0 0.0
        %4086 = vmatpush1.msra.mxu0 0.0
        %4087 = vmatprep.subr.mxu0 0.0
        %4088 = vmatpush1.msra.mxu0 0.0
        %4089 = vmatprep.subr.mxu0 0.0
        %4090 = vmatpush1.msra.mxu0 0.0
        %4091 = vmatprep.subr.mxu0 0.0
        %4092 = vmatpush1.msra.mxu0 0.0
        %4093 = vmatprep.subr.mxu0 0.0
        %4094 = vmatpush1.msra.mxu0 0.0
        %4095 = vmatprep.subr.mxu0 0.0
        %4096 = vmatpush1.msra.mxu0 0.0
        %4097 = vmatprep.subr.mxu0 0.0
        %4098 = vmatpush1.msra.mxu0 0.0
        %4099 = vmatprep.subr.mxu0 0.0
        %4100 = vmatpush1.msra.mxu0 0.0
        %4101 = vmatprep.subr.mxu0 0.0
        %4102 = vmatpush1.msra.mxu0 0.0
        %4103 = vmatprep.subr.mxu0 0.0
        %4104 = vmatpush1.msra.mxu0 0.0
        %4105 = vmatprep.subr.mxu0 0.0
        %4106 = vmatpush1.msra.mxu0 0.0
        %4107 = vmatprep.subr.mxu0 0.0
        %4108 = vmatpush1.msra.mxu0 0.0
        %4109 = vmatprep.subr.mxu0 0.0
        %4110 = vmatpush1.msra.mxu0 0.0
        %4111 = vmatprep.subr.mxu0 0.0
        %4112 = vmatpush1.msra.mxu0 0.0
        %4113 = vmatprep.subr.mxu0 0.0
        %4114 = vmatpush1.msra.mxu0 0.0
        %4115 = vmatprep.mubr.f32.mxu0 0.0
        %4116 = vmatmul.mubr.f32.gmra.mrb[0].mxu0 %v4049
        %v4117 = vpop.f32.mrb[0].mxu0
        %v4118 = vadd.f32 0.0, %v4117
        %v4119 = vpop.f32.mrb[0].mxu0
        %4120 = vdwg.mxu0
        %v4122 = vsel %vm2729, %v4030, 0
        %4124 = vmatprep.subr.mxu0 0.0
        %4125 = vmatpush1.msra.mxu0 %v4031
        %4126 = vmatprep.subr.mxu0 0.0
        %4127 = vmatpush1.msra.mxu0 %v4032
        %4128 = vmatprep.subr.mxu0 0.0
        %4129 = vmatpush1.msra.mxu0 %v4033
        %4130 = vmatprep.subr.mxu0 0.0
        %4131 = vmatpush1.msra.mxu0 %v4034
        %4132 = vmatprep.subr.mxu0 0.0
        %4133 = vmatpush1.msra.mxu0 %v4035
        %4134 = vmatprep.subr.mxu0 0.0
        %4135 = vmatpush1.msra.mxu0 %v4036
        %4136 = vmatprep.subr.mxu0 0.0
        %4137 = vmatpush1.msra.mxu0 %v4037
        %4138 = vmatprep.subr.mxu0 0.0
        %4139 = vmatpush1.msra.mxu0 %v4038
        %4140 = vmatprep.subr.mxu0 0.0
        %4141 = vmatpush1.msra.mxu0 0.0
        %4142 = vmatprep.subr.mxu0 0.0
        %4143 = vmatpush1.msra.mxu0 0.0
        %4144 = vmatprep.subr.mxu0 0.0
        %4145 = vmatpush1.msra.mxu0 0.0
        %4146 = vmatprep.subr.mxu0 0.0
        %4147 = vmatpush1.msra.mxu0 0.0
        %4148 = vmatprep.subr.mxu0 0.0
        %4149 = vmatpush1.msra.mxu0 0.0
        %4150 = vmatprep.subr.mxu0 0.0
        %4151 = vmatpush1.msra.mxu0 0.0
        %4152 = vmatprep.subr.mxu0 0.0
        %4153 = vmatpush1.msra.mxu0 0.0
        %4154 = vmatprep.subr.mxu0 0.0
        %4155 = vmatpush1.msra.mxu0 0.0
        %4156 = vmatprep.subr.mxu0 0.0
        %4157 = vmatpush1.msra.mxu0 0.0
        %4158 = vmatprep.subr.mxu0 0.0
        %4159 = vmatpush1.msra.mxu0 0.0
        %4160 = vmatprep.subr.mxu0 0.0
        %4161 = vmatpush1.msra.mxu0 0.0
        %4162 = vmatprep.subr.mxu0 0.0
        %4163 = vmatpush1.msra.mxu0 0.0
        %4164 = vmatprep.subr.mxu0 0.0
        %4165 = vmatpush1.msra.mxu0 0.0
        %4166 = vmatprep.subr.mxu0 0.0
        %4167 = vmatpush1.msra.mxu0 0.0
        %4168 = vmatprep.subr.mxu0 0.0
        %4169 = vmatpush1.msra.mxu0 0.0
        %4170 = vmatprep.subr.mxu0 0.0
        %4171 = vmatpush1.msra.mxu0 0.0
        %4172 = vmatprep.subr.mxu0 0.0
        %4173 = vmatpush1.msra.mxu0 0.0
        %4174 = vmatprep.subr.mxu0 0.0
        %4175 = vmatpush1.msra.mxu0 0.0
        %4176 = vmatprep.subr.mxu0 0.0
        %4177 = vmatpush1.msra.mxu0 0.0
        %4178 = vmatprep.subr.mxu0 0.0
        %4179 = vmatpush1.msra.mxu0 0.0
        %4180 = vmatprep.subr.mxu0 0.0
        %4181 = vmatpush1.msra.mxu0 0.0
        %4182 = vmatprep.subr.mxu0 0.0
        %4183 = vmatpush1.msra.mxu0 0.0
        %4184 = vmatprep.subr.mxu0 0.0
        %4185 = vmatpush1.msra.mxu0 0.0
        %4186 = vmatprep.subr.mxu0 0.0
        %4187 = vmatpush1.msra.mxu0 0.0
        %4188 = vmatprep.mubr.f32.mxu0 0.0
        %4189 = vmatmul.mubr.f32.gmra.mrb[0].mxu0 %v4122
        %v4190 = vpop.f32.mrb[0].mxu0
        %v4191 = vadd.f32 %v4118, %v4190
        %v4192 = vpop.f32.mrb[0].mxu0
        %4193 = vdwg.mxu0
        %v4194 = vld [vmem:[#allocation3 + $0x2] sm:$0xf]
        %v4195 = vld [vmem:[%s29 + $0x80] sm:$0xff]
        %v4196 = vld [vmem:[%s29 + $0x88] sm:$0xff]
        %v4197 = vld [vmem:[%s29 + $0x90] sm:$0xff]
        %v4198 = vld [vmem:[%s29 + $0x98] sm:$0xff]
        %v4199 = vld [vmem:[%s29 + $0xa0] sm:$0xff]
        %v4200 = vld [vmem:[%s29 + $0xa8] sm:$0xff]
        %v4201 = vld [vmem:[%s29 + $0xb0] sm:$0xff]
        %v4202 = vld [vmem:[%s29 + $0xb8] sm:$0xff]
        %v4204 = vsel %vm2729, %v4194, 0
        %4206 = vmatprep.subr.mxu0 0.0
        %4207 = vmatpush1.msra.mxu0 %v4195
        %4208 = vmatprep.subr.mxu0 0.0
        %4209 = vmatpush1.msra.mxu0 %v4196
        %4210 = vmatprep.subr.mxu0 0.0
        %4211 = vmatpush1.msra.mxu0 %v4197
        %4212 = vmatprep.subr.mxu0 0.0
        %4213 = vmatpush1.msra.mxu0 %v4198
        %4214 = vmatprep.subr.mxu0 0.0
        %4215 = vmatpush1.msra.mxu0 %v4199
        %4216 = vmatprep.subr.mxu0 0.0
        %4217 = vmatpush1.msra.mxu0 %v4200
        %4218 = vmatprep.subr.mxu0 0.0
        %4219 = vmatpush1.msra.mxu0 %v4201
        %4220 = vmatprep.subr.mxu0 0.0
        %4221 = vmatpush1.msra.mxu0 %v4202
        %4222 = vmatprep.subr.mxu0 0.0
        %4223 = vmatpush1.msra.mxu0 0.0
        %4224 = vmatprep.subr.mxu0 0.0
        %4225 = vmatpush1.msra.mxu0 0.0
        %4226 = vmatprep.subr.mxu0 0.0
        %4227 = vmatpush1.msra.mxu0 0.0
        %4228 = vmatprep.subr.mxu0 0.0
        %4229 = vmatpush1.msra.mxu0 0.0
        %4230 = vmatprep.subr.mxu0 0.0
        %4231 = vmatpush1.msra.mxu0 0.0
        %4232 = vmatprep.subr.mxu0 0.0
        %4233 = vmatpush1.msra.mxu0 0.0
        %4234 = vmatprep.subr.mxu0 0.0
        %4235 = vmatpush1.msra.mxu0 0.0
        %4236 = vmatprep.subr.mxu0 0.0
        %4237 = vmatpush1.msra.mxu0 0.0
        %4238 = vmatprep.subr.mxu0 0.0
        %4239 = vmatpush1.msra.mxu0 0.0
        %4240 = vmatprep.subr.mxu0 0.0
        %4241 = vmatpush1.msra.mxu0 0.0
        %4242 = vmatprep.subr.mxu0 0.0
        %4243 = vmatpush1.msra.mxu0 0.0
        %4244 = vmatprep.subr.mxu0 0.0
        %4245 = vmatpush1.msra.mxu0 0.0
        %4246 = vmatprep.subr.mxu0 0.0
        %4247 = vmatpush1.msra.mxu0 0.0
        %4248 = vmatprep.subr.mxu0 0.0
        %4249 = vmatpush1.msra.mxu0 0.0
        %4250 = vmatprep.subr.mxu0 0.0
        %4251 = vmatpush1.msra.mxu0 0.0
        %4252 = vmatprep.subr.mxu0 0.0
        %4253 = vmatpush1.msra.mxu0 0.0
        %4254 = vmatprep.subr.mxu0 0.0
        %4255 = vmatpush1.msra.mxu0 0.0
        %4256 = vmatprep.subr.mxu0 0.0
        %4257 = vmatpush1.msra.mxu0 0.0
        %4258 = vmatprep.subr.mxu0 0.0
        %4259 = vmatpush1.msra.mxu0 0.0
        %4260 = vmatprep.subr.mxu0 0.0
        %4261 = vmatpush1.msra.mxu0 0.0
        %4262 = vmatprep.subr.mxu0 0.0
        %4263 = vmatpush1.msra.mxu0 0.0
        %4264 = vmatprep.subr.mxu0 0.0
        %4265 = vmatpush1.msra.mxu0 0.0
        %4266 = vmatprep.subr.mxu0 0.0
        %4267 = vmatpush1.msra.mxu0 0.0
        %4268 = vmatprep.subr.mxu0 0.0
        %4269 = vmatpush1.msra.mxu0 0.0
        %4270 = vmatprep.mubr.f32.mxu0 0.0
        %4271 = vmatmul.mubr.f32.gmra.mrb[0].mxu0 %v4204
        %v4272 = vpop.f32.mrb[0].mxu0
        %v4273 = vadd.f32 0.0, %v4272
        %v4274 = vpop.f32.mrb[0].mxu0
        %4275 = vdwg.mxu0
        %v4276 = vadd.f32 %v4191, %v4273
        %v4278 = vlaneseq
        %v4279 = vshrl.u32 %v4278, 7
        %v4280 = vsub.s32 0, %v4279
        %v4281 = vrot.slane %v4029, %v4280
        %v4283 = vadd.f32 %v4276, %v4281
        %v4284 = vld [vmem:[%s35] sm:$0x1]
        %v4285 = vld [vmem:[%s1348] ss:$2 sm:$0xf]
        %v4286 = vld [vmem:[%s33] sm:$0xff]
        %v4287 = vld [vmem:[%s33 + $0x8] sm:$0xff]
        %v4288 = vld [vmem:[%s33 + $0x10] sm:$0xff]
        %v4289 = vld [vmem:[%s33 + $0x18] sm:$0xff]
        %v4290 = vld [vmem:[%s33 + $0x20] sm:$0xff]
        %v4291 = vld [vmem:[%s33 + $0x28] sm:$0xff]
        %v4292 = vld [vmem:[%s33 + $0x30] sm:$0xff]
        %v4293 = vld [vmem:[%s33 + $0x38] sm:$0xff]
        %v4295 = vlaneseq
        %v4296 = vshrl.u32 %v4295, 7
        %v4297 = vsub.s32 0, %v4296
        %v4298 = vrot.slane %v4284, %v4297
        %v4301 = vsel %vm2729, %v4285, 0
        %4303 = vmatprep.subr.mxu0 0.0
        %4304 = vmatpush1.msra.mxu0 %v4286
        %4305 = vmatprep.subr.mxu0 0.0
        %4306 = vmatpush1.msra.mxu0 %v4287
        %4307 = vmatprep.subr.mxu0 0.0
        %4308 = vmatpush1.msra.mxu0 %v4288
        %4309 = vmatprep.subr.mxu0 0.0
        %4310 = vmatpush1.msra.mxu0 %v4289
        %4311 = vmatprep.subr.mxu0 0.0
        %4312 = vmatpush1.msra.mxu0 %v4290
        %4313 = vmatprep.subr.mxu0 0.0
        %4314 = vmatpush1.msra.mxu0 %v4291
        %4315 = vmatprep.subr.mxu0 0.0
        %4316 = vmatpush1.msra.mxu0 %v4292
        %4317 = vmatprep.subr.mxu0 0.0
        %4318 = vmatpush1.msra.mxu0 %v4293
        %4319 = vmatprep.subr.mxu0 0.0
        %4320 = vmatpush1.msra.mxu0 0.0
        %4321 = vmatprep.subr.mxu0 0.0
        %4322 = vmatpush1.msra.mxu0 0.0
        %4323 = vmatprep.subr.mxu0 0.0
        %4324 = vmatpush1.msra.mxu0 0.0
        %4325 = vmatprep.subr.mxu0 0.0
        %4326 = vmatpush1.msra.mxu0 0.0
        %4327 = vmatprep.subr.mxu0 0.0
        %4328 = vmatpush1.msra.mxu0 0.0
        %4329 = vmatprep.subr.mxu0 0.0
        %4330 = vmatpush1.msra.mxu0 0.0
        %4331 = vmatprep.subr.mxu0 0.0
        %4332 = vmatpush1.msra.mxu0 0.0
        %4333 = vmatprep.subr.mxu0 0.0
        %4334 = vmatpush1.msra.mxu0 0.0
        %4335 = vmatprep.subr.mxu0 0.0
        %4336 = vmatpush1.msra.mxu0 0.0
        %4337 = vmatprep.subr.mxu0 0.0
        %4338 = vmatpush1.msra.mxu0 0.0
        %4339 = vmatprep.subr.mxu0 0.0
        %4340 = vmatpush1.msra.mxu0 0.0
        %4341 = vmatprep.subr.mxu0 0.0
        %4342 = vmatpush1.msra.mxu0 0.0
        %4343 = vmatprep.subr.mxu0 0.0
        %4344 = vmatpush1.msra.mxu0 0.0
        %4345 = vmatprep.subr.mxu0 0.0
        %4346 = vmatpush1.msra.mxu0 0.0
        %4347 = vmatprep.subr.mxu0 0.0
        %4348 = vmatpush1.msra.mxu0 0.0
        %4349 = vmatprep.subr.mxu0 0.0
        %4350 = vmatpush1.msra.mxu0 0.0
        %4351 = vmatprep.subr.mxu0 0.0
        %4352 = vmatpush1.msra.mxu0 0.0
        %4353 = vmatprep.subr.mxu0 0.0
        %4354 = vmatpush1.msra.mxu0 0.0
        %4355 = vmatprep.subr.mxu0 0.0
        %4356 = vmatpush1.msra.mxu0 0.0
        %4357 = vmatprep.subr.mxu0 0.0
        %4358 = vmatpush1.msra.mxu0 0.0
        %4359 = vmatprep.subr.mxu0 0.0
        %4360 = vmatpush1.msra.mxu0 0.0
        %4361 = vmatprep.subr.mxu0 0.0
        %4362 = vmatpush1.msra.mxu0 0.0
        %4363 = vmatprep.subr.mxu0 0.0
        %4364 = vmatpush1.msra.mxu0 0.0
        %4365 = vmatprep.subr.mxu0 0.0
        %4366 = vmatpush1.msra.mxu0 0.0
        %4367 = vmatprep.mubr.f32.mxu0 0.0
        %4368 = vmatmul.mubr.f32.gmra.mrb[0].mxu0 %v4301
        %v4369 = vpop.f32.mrb[0].mxu0
        %v4370 = vadd.f32 %v4298, %v4369
        %v4371 = vpop.f32.mrb[0].mxu0
        %4372 = vdwg.mxu0
        %v4373 = vadd.f32 %v4283, %v4370
        %v4374 = vmax.f32 %v4373, 0.0
        %4375 = vst.msk [vmem:[#allocation2] sm:$0x1] %vm2726, 0.0
        %4376 = vst.msk [vmem:[#allocation2 + $0x5] sm:$0x1] %vm2726, 0.0
        %4377 = vst.msk [vmem:[#allocation2 + $0x1] sm:$0xf] %vm4027, %v4374
        %v4378 = vld [vmem:[%s39] sm:$0x1]
        %v4379 = vld [vmem:[#allocation2] sm:$0xf]
        %v4380 = vld [vmem:[%s37] sm:$0xff]
        %v4381 = vld [vmem:[%s37 + $0x8] sm:$0xff]
        %v4382 = vld [vmem:[%s37 + $0x10] sm:$0xff]
        %v4383 = vld [vmem:[%s37 + $0x18] sm:$0xff]
        %v4384 = vld [vmem:[%s37 + $0x20] sm:$0xff]
        %v4385 = vld [vmem:[%s37 + $0x28] sm:$0xff]
        %v4386 = vld [vmem:[%s37 + $0x30] sm:$0xff]
        %v4387 = vld [vmem:[%s37 + $0x38] sm:$0xff]
        %v4388 = vld [vmem:[#allocation2 + $0x1] sm:$0xf]
        %v4389 = vld [vmem:[%s37 + $0x40] sm:$0xff]
        %v4390 = vld [vmem:[%s37 + $0x48] sm:$0xff]
        %v4391 = vld [vmem:[%s37 + $0x50] sm:$0xff]
        %v4392 = vld [vmem:[%s37 + $0x58] sm:$0xff]
        %v4393 = vld [vmem:[%s37 + $0x60] sm:$0xff]
        %v4394 = vld [vmem:[%s37 + $0x68] sm:$0xff]
        %v4395 = vld [vmem:[%s37 + $0x70] sm:$0xff]
        %v4396 = vld [vmem:[%s37 + $0x78] sm:$0xff]
        %v4398 = vsel %vm2729, %v4388, 0
        %4400 = vmatprep.subr.mxu0 0.0
        %4401 = vmatpush1.msra.mxu0 %v4389
        %4402 = vmatprep.subr.mxu0 0.0
        %4403 = vmatpush1.msra.mxu0 %v4390
        %4404 = vmatprep.subr.mxu0 0.0
        %4405 = vmatpush1.msra.mxu0 %v4391
        %4406 = vmatprep.subr.mxu0 0.0
        %4407 = vmatpush1.msra.mxu0 %v4392
        %4408 = vmatprep.subr.mxu0 0.0
        %4409 = vmatpush1.msra.mxu0 %v4393
        %4410 = vmatprep.subr.mxu0 0.0
        %4411 = vmatpush1.msra.mxu0 %v4394
        %4412 = vmatprep.subr.mxu0 0.0
        %4413 = vmatpush1.msra.mxu0 %v4395
        %4414 = vmatprep.subr.mxu0 0.0
        %4415 = vmatpush1.msra.mxu0 %v4396
        %4416 = vmatprep.subr.mxu0 0.0
        %4417 = vmatpush1.msra.mxu0 0.0
        %4418 = vmatprep.subr.mxu0 0.0
        %4419 = vmatpush1.msra.mxu0 0.0
        %4420 = vmatprep.subr.mxu0 0.0
        %4421 = vmatpush1.msra.mxu0 0.0
        %4422 = vmatprep.subr.mxu0 0.0
        %4423 = vmatpush1.msra.mxu0 0.0
        %4424 = vmatprep.subr.mxu0 0.0
        %4425 = vmatpush1.msra.mxu0 0.0
        %4426 = vmatprep.subr.mxu0 0.0
        %4427 = vmatpush1.msra.mxu0 0.0
        %4428 = vmatprep.subr.mxu0 0.0
        %4429 = vmatpush1.msra.mxu0 0.0
        %4430 = vmatprep.subr.mxu0 0.0
        %4431 = vmatpush1.msra.mxu0 0.0
        %4432 = vmatprep.subr.mxu0 0.0
        %4433 = vmatpush1.msra.mxu0 0.0
        %4434 = vmatprep.subr.mxu0 0.0
        %4435 = vmatpush1.msra.mxu0 0.0
        %4436 = vmatprep.subr.mxu0 0.0
        %4437 = vmatpush1.msra.mxu0 0.0
        %4438 = vmatprep.subr.mxu0 0.0
        %4439 = vmatpush1.msra.mxu0 0.0
        %4440 = vmatprep.subr.mxu0 0.0
        %4441 = vmatpush1.msra.mxu0 0.0
        %4442 = vmatprep.subr.mxu0 0.0
        %4443 = vmatpush1.msra.mxu0 0.0
        %4444 = vmatprep.subr.mxu0 0.0
        %4445 = vmatpush1.msra.mxu0 0.0
        %4446 = vmatprep.subr.mxu0 0.0
        %4447 = vmatpush1.msra.mxu0 0.0
        %4448 = vmatprep.subr.mxu0 0.0
        %4449 = vmatpush1.msra.mxu0 0.0
        %4450 = vmatprep.subr.mxu0 0.0
        %4451 = vmatpush1.msra.mxu0 0.0
        %4452 = vmatprep.subr.mxu0 0.0
        %4453 = vmatpush1.msra.mxu0 0.0
        %4454 = vmatprep.subr.mxu0 0.0
        %4455 = vmatpush1.msra.mxu0 0.0
        %4456 = vmatprep.subr.mxu0 0.0
        %4457 = vmatpush1.msra.mxu0 0.0
        %4458 = vmatprep.subr.mxu0 0.0
        %4459 = vmatpush1.msra.mxu0 0.0
        %4460 = vmatprep.subr.mxu0 0.0
        %4461 = vmatpush1.msra.mxu0 0.0
        %4462 = vmatprep.subr.mxu0 0.0
        %4463 = vmatpush1.msra.mxu0 0.0
        %4464 = vmatprep.mubr.f32.mxu0 0.0
        %4465 = vmatmul.mubr.f32.gmra.mrb[0].mxu0 %v4398
        %v4466 = vpop.f32.mrb[0].mxu0
        %v4467 = vadd.f32 0.0, %v4466
        %v4468 = vpop.f32.mrb[0].mxu0
        %4469 = vdwg.mxu0
        %v4471 = vsel %vm2729, %v4379, 0
        %4473 = vmatprep.subr.mxu0 0.0
        %4474 = vmatpush1.msra.mxu0 %v4380
        %4475 = vmatprep.subr.mxu0 0.0
        %4476 = vmatpush1.msra.mxu0 %v4381
        %4477 = vmatprep.subr.mxu0 0.0
        %4478 = vmatpush1.msra.mxu0 %v4382
        %4479 = vmatprep.subr.mxu0 0.0
        %4480 = vmatpush1.msra.mxu0 %v4383
        %4481 = vmatprep.subr.mxu0 0.0
        %4482 = vmatpush1.msra.mxu0 %v4384
        %4483 = vmatprep.subr.mxu0 0.0
        %4484 = vmatpush1.msra.mxu0 %v4385
        %4485 = vmatprep.subr.mxu0 0.0
        %4486 = vmatpush1.msra.mxu0 %v4386
        %4487 = vmatprep.subr.mxu0 0.0
        %4488 = vmatpush1.msra.mxu0 %v4387
        %4489 = vmatprep.subr.mxu0 0.0
        %4490 = vmatpush1.msra.mxu0 0.0
        %4491 = vmatprep.subr.mxu0 0.0
        %4492 = vmatpush1.msra.mxu0 0.0
        %4493 = vmatprep.subr.mxu0 0.0
        %4494 = vmatpush1.msra.mxu0 0.0
        %4495 = vmatprep.subr.mxu0 0.0
        %4496 = vmatpush1.msra.mxu0 0.0
        %4497 = vmatprep.subr.mxu0 0.0
        %4498 = vmatpush1.msra.mxu0 0.0
        %4499 = vmatprep.subr.mxu0 0.0
        %4500 = vmatpush1.msra.mxu0 0.0
        %4501 = vmatprep.subr.mxu0 0.0
        %4502 = vmatpush1.msra.mxu0 0.0
        %4503 = vmatprep.subr.mxu0 0.0
        %4504 = vmatpush1.msra.mxu0 0.0
        %4505 = vmatprep.subr.mxu0 0.0
        %4506 = vmatpush1.msra.mxu0 0.0
        %4507 = vmatprep.subr.mxu0 0.0
        %4508 = vmatpush1.msra.mxu0 0.0
        %4509 = vmatprep.subr.mxu0 0.0
        %4510 = vmatpush1.msra.mxu0 0.0
        %4511 = vmatprep.subr.mxu0 0.0
        %4512 = vmatpush1.msra.mxu0 0.0
        %4513 = vmatprep.subr.mxu0 0.0
        %4514 = vmatpush1.msra.mxu0 0.0
        %4515 = vmatprep.subr.mxu0 0.0
        %4516 = vmatpush1.msra.mxu0 0.0
        %4517 = vmatprep.subr.mxu0 0.0
        %4518 = vmatpush1.msra.mxu0 0.0
        %4519 = vmatprep.subr.mxu0 0.0
        %4520 = vmatpush1.msra.mxu0 0.0
        %4521 = vmatprep.subr.mxu0 0.0
        %4522 = vmatpush1.msra.mxu0 0.0
        %4523 = vmatprep.subr.mxu0 0.0
        %4524 = vmatpush1.msra.mxu0 0.0
        %4525 = vmatprep.subr.mxu0 0.0
        %4526 = vmatpush1.msra.mxu0 0.0
        %4527 = vmatprep.subr.mxu0 0.0
        %4528 = vmatpush1.msra.mxu0 0.0
        %4529 = vmatprep.subr.mxu0 0.0
        %4530 = vmatpush1.msra.mxu0 0.0
        %4531 = vmatprep.subr.mxu0 0.0
        %4532 = vmatpush1.msra.mxu0 0.0
        %4533 = vmatprep.subr.mxu0 0.0
        %4534 = vmatpush1.msra.mxu0 0.0
        %4535 = vmatprep.subr.mxu0 0.0
        %4536 = vmatpush1.msra.mxu0 0.0
        %4537 = vmatprep.mubr.f32.mxu0 0.0
        %4538 = vmatmul.mubr.f32.gmra.mrb[0].mxu0 %v4471
        %v4539 = vpop.f32.mrb[0].mxu0
        %v4540 = vadd.f32 %v4467, %v4539
        %v4541 = vpop.f32.mrb[0].mxu0
        %4542 = vdwg.mxu0
        %v4543 = vld [vmem:[#allocation2 + $0x2] sm:$0xf]
        %v4544 = vld [vmem:[%s37 + $0x80] sm:$0xff]
        %v4545 = vld [vmem:[%s37 + $0x88] sm:$0xff]
        %v4546 = vld [vmem:[%s37 + $0x90] sm:$0xff]
        %v4547 = vld [vmem:[%s37 + $0x98] sm:$0xff]
        %v4548 = vld [vmem:[%s37 + $0xa0] sm:$0xff]
        %v4549 = vld [vmem:[%s37 + $0xa8] sm:$0xff]
        %v4550 = vld [vmem:[%s37 + $0xb0] sm:$0xff]
        %v4551 = vld [vmem:[%s37 + $0xb8] sm:$0xff]
        %v4553 = vsel %vm2729, %v4543, 0
        %4555 = vmatprep.subr.mxu0 0.0
        %4556 = vmatpush1.msra.mxu0 %v4544
        %4557 = vmatprep.subr.mxu0 0.0
        %4558 = vmatpush1.msra.mxu0 %v4545
        %4559 = vmatprep.subr.mxu0 0.0
        %4560 = vmatpush1.msra.mxu0 %v4546
        %4561 = vmatprep.subr.mxu0 0.0
        %4562 = vmatpush1.msra.mxu0 %v4547
        %4563 = vmatprep.subr.mxu0 0.0
        %4564 = vmatpush1.msra.mxu0 %v4548
        %4565 = vmatprep.subr.mxu0 0.0
        %4566 = vmatpush1.msra.mxu0 %v4549
        %4567 = vmatprep.subr.mxu0 0.0
        %4568 = vmatpush1.msra.mxu0 %v4550
        %4569 = vmatprep.subr.mxu0 0.0
        %4570 = vmatpush1.msra.mxu0 %v4551
        %4571 = vmatprep.subr.mxu0 0.0
        %4572 = vmatpush1.msra.mxu0 0.0
        %4573 = vmatprep.subr.mxu0 0.0
        %4574 = vmatpush1.msra.mxu0 0.0
        %4575 = vmatprep.subr.mxu0 0.0
        %4576 = vmatpush1.msra.mxu0 0.0
        %4577 = vmatprep.subr.mxu0 0.0
        %4578 = vmatpush1.msra.mxu0 0.0
        %4579 = vmatprep.subr.mxu0 0.0
        %4580 = vmatpush1.msra.mxu0 0.0
        %4581 = vmatprep.subr.mxu0 0.0
        %4582 = vmatpush1.msra.mxu0 0.0
        %4583 = vmatprep.subr.mxu0 0.0
        %4584 = vmatpush1.msra.mxu0 0.0
        %4585 = vmatprep.subr.mxu0 0.0
        %4586 = vmatpush1.msra.mxu0 0.0
        %4587 = vmatprep.subr.mxu0 0.0
        %4588 = vmatpush1.msra.mxu0 0.0
        %4589 = vmatprep.subr.mxu0 0.0
        %4590 = vmatpush1.msra.mxu0 0.0
        %4591 = vmatprep.subr.mxu0 0.0
        %4592 = vmatpush1.msra.mxu0 0.0
        %4593 = vmatprep.subr.mxu0 0.0
        %4594 = vmatpush1.msra.mxu0 0.0
        %4595 = vmatprep.subr.mxu0 0.0
        %4596 = vmatpush1.msra.mxu0 0.0
        %4597 = vmatprep.subr.mxu0 0.0
        %4598 = vmatpush1.msra.mxu0 0.0
        %4599 = vmatprep.subr.mxu0 0.0
        %4600 = vmatpush1.msra.mxu0 0.0
        %4601 = vmatprep.subr.mxu0 0.0
        %4602 = vmatpush1.msra.mxu0 0.0
        %4603 = vmatprep.subr.mxu0 0.0
        %4604 = vmatpush1.msra.mxu0 0.0
        %4605 = vmatprep.subr.mxu0 0.0
        %4606 = vmatpush1.msra.mxu0 0.0
        %4607 = vmatprep.subr.mxu0 0.0
        %4608 = vmatpush1.msra.mxu0 0.0
        %4609 = vmatprep.subr.mxu0 0.0
        %4610 = vmatpush1.msra.mxu0 0.0
        %4611 = vmatprep.subr.mxu0 0.0
        %4612 = vmatpush1.msra.mxu0 0.0
        %4613 = vmatprep.subr.mxu0 0.0
        %4614 = vmatpush1.msra.mxu0 0.0
        %4615 = vmatprep.subr.mxu0 0.0
        %4616 = vmatpush1.msra.mxu0 0.0
        %4617 = vmatprep.subr.mxu0 0.0
        %4618 = vmatpush1.msra.mxu0 0.0
        %4619 = vmatprep.mubr.f32.mxu0 0.0
        %4620 = vmatmul.mubr.f32.gmra.mrb[0].mxu0 %v4553
        %v4621 = vpop.f32.mrb[0].mxu0
        %v4622 = vadd.f32 0.0, %v4621
        %v4623 = vpop.f32.mrb[0].mxu0
        %4624 = vdwg.mxu0
        %v4625 = vadd.f32 %v4540, %v4622
        %v4627 = vlaneseq
        %v4628 = vshrl.u32 %v4627, 7
        %v4629 = vsub.s32 0, %v4628
        %v4630 = vrot.slane %v4378, %v4629
        %v4632 = vadd.f32 %v4625, %v4630
        %v4633 = vmax.f32 %v4632, 0.0
        %4634 = vst.msk [vmem:[#allocation3] sm:$0x1] %vm2726, 0.0
        %4635 = vst.msk [vmem:[#allocation3 + $0x5] sm:$0x1] %vm2726, 0.0
        %4636 = vst.msk [vmem:[#allocation3 + $0x1] sm:$0xf] %vm4027, %v4633
        %v4637 = vld [vmem:[%s43] sm:$0x1]
        %v4638 = vld [vmem:[#allocation3] sm:$0xf]
        %v4639 = vld [vmem:[%s41] sm:$0xff]
        %v4640 = vld [vmem:[%s41 + $0x8] sm:$0xff]
        %v4641 = vld [vmem:[%s41 + $0x10] sm:$0xff]
        %v4642 = vld [vmem:[%s41 + $0x18] sm:$0xff]
        %v4643 = vld [vmem:[%s41 + $0x20] sm:$0xff]
        %v4644 = vld [vmem:[%s41 + $0x28] sm:$0xff]
        %v4645 = vld [vmem:[%s41 + $0x30] sm:$0xff]
        %v4646 = vld [vmem:[%s41 + $0x38] sm:$0xff]
        %v4647 = vld [vmem:[#allocation3 + $0x1] sm:$0xf]
        %v4648 = vld [vmem:[%s41 + $0x40] sm:$0xff]
        %v4649 = vld [vmem:[%s41 + $0x48] sm:$0xff]
        %v4650 = vld [vmem:[%s41 + $0x50] sm:$0xff]
        %v4651 = vld [vmem:[%s41 + $0x58] sm:$0xff]
        %v4652 = vld [vmem:[%s41 + $0x60] sm:$0xff]
        %v4653 = vld [vmem:[%s41 + $0x68] sm:$0xff]
        %v4654 = vld [vmem:[%s41 + $0x70] sm:$0xff]
        %v4655 = vld [vmem:[%s41 + $0x78] sm:$0xff]
        %v4657 = vsel %vm2729, %v4647, 0
        %4659 = vmatprep.subr.mxu0 0.0
        %4660 = vmatpush1.msra.mxu0 %v4648
        %4661 = vmatprep.subr.mxu0 0.0
        %4662 = vmatpush1.msra.mxu0 %v4649
        %4663 = vmatprep.subr.mxu0 0.0
        %4664 = vmatpush1.msra.mxu0 %v4650
        %4665 = vmatprep.subr.mxu0 0.0
        %4666 = vmatpush1.msra.mxu0 %v4651
        %4667 = vmatprep.subr.mxu0 0.0
        %4668 = vmatpush1.msra.mxu0 %v4652
        %4669 = vmatprep.subr.mxu0 0.0
        %4670 = vmatpush1.msra.mxu0 %v4653
        %4671 = vmatprep.subr.mxu0 0.0
        %4672 = vmatpush1.msra.mxu0 %v4654
        %4673 = vmatprep.subr.mxu0 0.0
        %4674 = vmatpush1.msra.mxu0 %v4655
        %4675 = vmatprep.subr.mxu0 0.0
        %4676 = vmatpush1.msra.mxu0 0.0
        %4677 = vmatprep.subr.mxu0 0.0
        %4678 = vmatpush1.msra.mxu0 0.0
        %4679 = vmatprep.subr.mxu0 0.0
        %4680 = vmatpush1.msra.mxu0 0.0
        %4681 = vmatprep.subr.mxu0 0.0
        %4682 = vmatpush1.msra.mxu0 0.0
        %4683 = vmatprep.subr.mxu0 0.0
        %4684 = vmatpush1.msra.mxu0 0.0
        %4685 = vmatprep.subr.mxu0 0.0
        %4686 = vmatpush1.msra.mxu0 0.0
        %4687 = vmatprep.subr.mxu0 0.0
        %4688 = vmatpush1.msra.mxu0 0.0
        %4689 = vmatprep.subr.mxu0 0.0
        %4690 = vmatpush1.msra.mxu0 0.0
        %4691 = vmatprep.subr.mxu0 0.0
        %4692 = vmatpush1.msra.mxu0 0.0
        %4693 = vmatprep.subr.mxu0 0.0
        %4694 = vmatpush1.msra.mxu0 0.0
        %4695 = vmatprep.subr.mxu0 0.0
        %4696 = vmatpush1.msra.mxu0 0.0
        %4697 = vmatprep.subr.mxu0 0.0
        %4698 = vmatpush1.msra.mxu0 0.0
        %4699 = vmatprep.subr.mxu0 0.0
        %4700 = vmatpush1.msra.mxu0 0.0
        %4701 = vmatprep.subr.mxu0 0.0
        %4702 = vmatpush1.msra.mxu0 0.0
        %4703 = vmatprep.subr.mxu0 0.0
        %4704 = vmatpush1.msra.mxu0 0.0
        %4705 = vmatprep.subr.mxu0 0.0
        %4706 = vmatpush1.msra.mxu0 0.0
        %4707 = vmatprep.subr.mxu0 0.0
        %4708 = vmatpush1.msra.mxu0 0.0
        %4709 = vmatprep.subr.mxu0 0.0
        %4710 = vmatpush1.msra.mxu0 0.0
        %4711 = vmatprep.subr.mxu0 0.0
        %4712 = vmatpush1.msra.mxu0 0.0
        %4713 = vmatprep.subr.mxu0 0.0
        %4714 = vmatpush1.msra.mxu0 0.0
        %4715 = vmatprep.subr.mxu0 0.0
        %4716 = vmatpush1.msra.mxu0 0.0
        %4717 = vmatprep.subr.mxu0 0.0
        %4718 = vmatpush1.msra.mxu0 0.0
        %4719 = vmatprep.subr.mxu0 0.0
        %4720 = vmatpush1.msra.mxu0 0.0
        %4721 = vmatprep.subr.mxu0 0.0
        %4722 = vmatpush1.msra.mxu0 0.0
        %4723 = vmatprep.mubr.f32.mxu0 0.0
        %4724 = vmatmul.mubr.f32.gmra.mrb[0].mxu0 %v4657
        %v4725 = vpop.f32.mrb[0].mxu0
        %v4726 = vadd.f32 0.0, %v4725
        %v4727 = vpop.f32.mrb[0].mxu0
        %4728 = vdwg.mxu0
        %v4730 = vsel %vm2729, %v4638, 0
        %4732 = vmatprep.subr.mxu0 0.0
        %4733 = vmatpush1.msra.mxu0 %v4639
        %4734 = vmatprep.subr.mxu0 0.0
        %4735 = vmatpush1.msra.mxu0 %v4640
        %4736 = vmatprep.subr.mxu0 0.0
        %4737 = vmatpush1.msra.mxu0 %v4641
        %4738 = vmatprep.subr.mxu0 0.0
        %4739 = vmatpush1.msra.mxu0 %v4642
        %4740 = vmatprep.subr.mxu0 0.0
        %4741 = vmatpush1.msra.mxu0 %v4643
        %4742 = vmatprep.subr.mxu0 0.0
        %4743 = vmatpush1.msra.mxu0 %v4644
        %4744 = vmatprep.subr.mxu0 0.0
        %4745 = vmatpush1.msra.mxu0 %v4645
        %4746 = vmatprep.subr.mxu0 0.0
        %4747 = vmatpush1.msra.mxu0 %v4646
        %4748 = vmatprep.subr.mxu0 0.0
        %4749 = vmatpush1.msra.mxu0 0.0
        %4750 = vmatprep.subr.mxu0 0.0
        %4751 = vmatpush1.msra.mxu0 0.0
        %4752 = vmatprep.subr.mxu0 0.0
        %4753 = vmatpush1.msra.mxu0 0.0
        %4754 = vmatprep.subr.mxu0 0.0
        %4755 = vmatpush1.msra.mxu0 0.0
        %4756 = vmatprep.subr.mxu0 0.0
        %4757 = vmatpush1.msra.mxu0 0.0
        %4758 = vmatprep.subr.mxu0 0.0
        %4759 = vmatpush1.msra.mxu0 0.0
        %4760 = vmatprep.subr.mxu0 0.0
        %4761 = vmatpush1.msra.mxu0 0.0
        %4762 = vmatprep.subr.mxu0 0.0
        %4763 = vmatpush1.msra.mxu0 0.0
        %4764 = vmatprep.subr.mxu0 0.0
        %4765 = vmatpush1.msra.mxu0 0.0
        %4766 = vmatprep.subr.mxu0 0.0
        %4767 = vmatpush1.msra.mxu0 0.0
        %4768 = vmatprep.subr.mxu0 0.0
        %4769 = vmatpush1.msra.mxu0 0.0
        %4770 = vmatprep.subr.mxu0 0.0
        %4771 = vmatpush1.msra.mxu0 0.0
        %4772 = vmatprep.subr.mxu0 0.0
        %4773 = vmatpush1.msra.mxu0 0.0
        %4774 = vmatprep.subr.mxu0 0.0
        %4775 = vmatpush1.msra.mxu0 0.0
        %4776 = vmatprep.subr.mxu0 0.0
        %4777 = vmatpush1.msra.mxu0 0.0
        %4778 = vmatprep.subr.mxu0 0.0
        %4779 = vmatpush1.msra.mxu0 0.0
        %4780 = vmatprep.subr.mxu0 0.0
        %4781 = vmatpush1.msra.mxu0 0.0
        %4782 = vmatprep.subr.mxu0 0.0
        %4783 = vmatpush1.msra.mxu0 0.0
        %4784 = vmatprep.subr.mxu0 0.0
        %4785 = vmatpush1.msra.mxu0 0.0
        %4786 = vmatprep.subr.mxu0 0.0
        %4787 = vmatpush1.msra.mxu0 0.0
        %4788 = vmatprep.subr.mxu0 0.0
        %4789 = vmatpush1.msra.mxu0 0.0
        %4790 = vmatprep.subr.mxu0 0.0
        %4791 = vmatpush1.msra.mxu0 0.0
        %4792 = vmatprep.subr.mxu0 0.0
        %4793 = vmatpush1.msra.mxu0 0.0
        %4794 = vmatprep.subr.mxu0 0.0
        %4795 = vmatpush1.msra.mxu0 0.0
        %4796 = vmatprep.mubr.f32.mxu0 0.0
        %4797 = vmatmul.mubr.f32.gmra.mrb[0].mxu0 %v4730
        %v4798 = vpop.f32.mrb[0].mxu0
        %v4799 = vadd.f32 %v4726, %v4798
        %v4800 = vpop.f32.mrb[0].mxu0
        %4801 = vdwg.mxu0
        %v4802 = vld [vmem:[#allocation3 + $0x2] sm:$0xf]
        %v4803 = vld [vmem:[%s41 + $0x80] sm:$0xff]
        %v4804 = vld [vmem:[%s41 + $0x88] sm:$0xff]
        %v4805 = vld [vmem:[%s41 + $0x90] sm:$0xff]
        %v4806 = vld [vmem:[%s41 + $0x98] sm:$0xff]
        %v4807 = vld [vmem:[%s41 + $0xa0] sm:$0xff]
        %v4808 = vld [vmem:[%s41 + $0xa8] sm:$0xff]
        %v4809 = vld [vmem:[%s41 + $0xb0] sm:$0xff]
        %v4810 = vld [vmem:[%s41 + $0xb8] sm:$0xff]
        %v4812 = vsel %vm2729, %v4802, 0
        %4814 = vmatprep.subr.mxu0 0.0
        %4815 = vmatpush1.msra.mxu0 %v4803
        %4816 = vmatprep.subr.mxu0 0.0
        %4817 = vmatpush1.msra.mxu0 %v4804
        %4818 = vmatprep.subr.mxu0 0.0
        %4819 = vmatpush1.msra.mxu0 %v4805
        %4820 = vmatprep.subr.mxu0 0.0
        %4821 = vmatpush1.msra.mxu0 %v4806
        %4822 = vmatprep.subr.mxu0 0.0
        %4823 = vmatpush1.msra.mxu0 %v4807
        %4824 = vmatprep.subr.mxu0 0.0
        %4825 = vmatpush1.msra.mxu0 %v4808
        %4826 = vmatprep.subr.mxu0 0.0
        %4827 = vmatpush1.msra.mxu0 %v4809
        %4828 = vmatprep.subr.mxu0 0.0
        %4829 = vmatpush1.msra.mxu0 %v4810
        %4830 = vmatprep.subr.mxu0 0.0
        %4831 = vmatpush1.msra.mxu0 0.0
        %4832 = vmatprep.subr.mxu0 0.0
        %4833 = vmatpush1.msra.mxu0 0.0
        %4834 = vmatprep.subr.mxu0 0.0
        %4835 = vmatpush1.msra.mxu0 0.0
        %4836 = vmatprep.subr.mxu0 0.0
        %4837 = vmatpush1.msra.mxu0 0.0
        %4838 = vmatprep.subr.mxu0 0.0
        %4839 = vmatpush1.msra.mxu0 0.0
        %4840 = vmatprep.subr.mxu0 0.0
        %4841 = vmatpush1.msra.mxu0 0.0
        %4842 = vmatprep.subr.mxu0 0.0
        %4843 = vmatpush1.msra.mxu0 0.0
        %4844 = vmatprep.subr.mxu0 0.0
        %4845 = vmatpush1.msra.mxu0 0.0
        %4846 = vmatprep.subr.mxu0 0.0
        %4847 = vmatpush1.msra.mxu0 0.0
        %4848 = vmatprep.subr.mxu0 0.0
        %4849 = vmatpush1.msra.mxu0 0.0
        %4850 = vmatprep.subr.mxu0 0.0
        %4851 = vmatpush1.msra.mxu0 0.0
        %4852 = vmatprep.subr.mxu0 0.0
        %4853 = vmatpush1.msra.mxu0 0.0
        %4854 = vmatprep.subr.mxu0 0.0
        %4855 = vmatpush1.msra.mxu0 0.0
        %4856 = vmatprep.subr.mxu0 0.0
        %4857 = vmatpush1.msra.mxu0 0.0
        %4858 = vmatprep.subr.mxu0 0.0
        %4859 = vmatpush1.msra.mxu0 0.0
        %4860 = vmatprep.subr.mxu0 0.0
        %4861 = vmatpush1.msra.mxu0 0.0
        %4862 = vmatprep.subr.mxu0 0.0
        %4863 = vmatpush1.msra.mxu0 0.0
        %4864 = vmatprep.subr.mxu0 0.0
        %4865 = vmatpush1.msra.mxu0 0.0
        %4866 = vmatprep.subr.mxu0 0.0
        %4867 = vmatpush1.msra.mxu0 0.0
        %4868 = vmatprep.subr.mxu0 0.0
        %4869 = vmatpush1.msra.mxu0 0.0
        %4870 = vmatprep.subr.mxu0 0.0
        %4871 = vmatpush1.msra.mxu0 0.0
        %4872 = vmatprep.subr.mxu0 0.0
        %4873 = vmatpush1.msra.mxu0 0.0
        %4874 = vmatprep.subr.mxu0 0.0
        %4875 = vmatpush1.msra.mxu0 0.0
        %4876 = vmatprep.subr.mxu0 0.0
        %4877 = vmatpush1.msra.mxu0 0.0
        %4878 = vmatprep.mubr.f32.mxu0 0.0
        %4879 = vmatmul.mubr.f32.gmra.mrb[0].mxu0 %v4812
        %v4880 = vpop.f32.mrb[0].mxu0
        %v4881 = vadd.f32 0.0, %v4880
        %v4882 = vpop.f32.mrb[0].mxu0
        %4883 = vdwg.mxu0
        %v4884 = vadd.f32 %v4799, %v4881
        %v4886 = vlaneseq
        %v4887 = vshrl.u32 %v4886, 7
        %v4888 = vsub.s32 0, %v4887
        %v4889 = vrot.slane %v4637, %v4888
        %v4891 = vadd.f32 %v4884, %v4889
        %v4892 = vadd.f32 %v4891, %v4374
        %v4893 = vmax.f32 %v4892, 0.0
        %4894 = vst.msk [vmem:[#allocation2] sm:$0x1] %vm2726, 0.0
        %4895 = vst.msk [vmem:[#allocation2 + $0x5] sm:$0x1] %vm2726, 0.0
        %4896 = vst.msk [vmem:[#allocation2 + $0x1] sm:$0xf] %vm4027, %v4893
        %v4897 = vld [vmem:[%s47] sm:$0x1]
        %v4898 = vld [vmem:[#allocation2] ss:$2 sm:$0x3]
        %v4899 = vld [vmem:[%s45] sm:$0xff]
        %v4900 = vld [vmem:[%s45 + $0x8] sm:$0xff]
        %v4901 = vld [vmem:[%s45 + $0x10] sm:$0xff]
        %v4902 = vld [vmem:[%s45 + $0x18] sm:$0xff]
        %v4903 = vld [vmem:[%s45 + $0x20] sm:$0xff]
        %v4904 = vld [vmem:[%s45 + $0x28] sm:$0xff]
        %v4905 = vld [vmem:[%s45 + $0x30] sm:$0xff]
        %v4906 = vld [vmem:[%s45 + $0x38] sm:$0xff]
        %v4907 = vld [vmem:[%s1348] ss:$2 sm:$0x3]
        %v4908 = vld [vmem:[%s45 + $0x40] sm:$0xff]
        %v4909 = vld [vmem:[%s45 + $0x48] sm:$0xff]
        %v4910 = vld [vmem:[%s45 + $0x50] sm:$0xff]
        %v4911 = vld [vmem:[%s45 + $0x58] sm:$0xff]
        %v4912 = vld [vmem:[%s45 + $0x60] sm:$0xff]
        %v4913 = vld [vmem:[%s45 + $0x68] sm:$0xff]
        %v4914 = vld [vmem:[%s45 + $0x70] sm:$0xff]
        %v4915 = vld [vmem:[%s45 + $0x78] sm:$0xff]
        %v4917 = vsel %vm2729, %v4907, 0
        %4919 = vmatprep.subr.mxu0 0.0
        %4920 = vmatpush1.msra.mxu0 %v4908
        %4921 = vmatprep.subr.mxu0 0.0
        %4922 = vmatpush1.msra.mxu0 %v4909
        %4923 = vmatprep.subr.mxu0 0.0
        %4924 = vmatpush1.msra.mxu0 %v4910
        %4925 = vmatprep.subr.mxu0 0.0
        %4926 = vmatpush1.msra.mxu0 %v4911
        %4927 = vmatprep.subr.mxu0 0.0
        %4928 = vmatpush1.msra.mxu0 %v4912
        %4929 = vmatprep.subr.mxu0 0.0
        %4930 = vmatpush1.msra.mxu0 %v4913
        %4931 = vmatprep.subr.mxu0 0.0
        %4932 = vmatpush1.msra.mxu0 %v4914
        %4933 = vmatprep.subr.mxu0 0.0
        %4934 = vmatpush1.msra.mxu0 %v4915
        %4935 = vmatprep.subr.mxu0 0.0
        %4936 = vmatpush1.msra.mxu0 0.0
        %4937 = vmatprep.subr.mxu0 0.0
        %4938 = vmatpush1.msra.mxu0 0.0
        %4939 = vmatprep.subr.mxu0 0.0
        %4940 = vmatpush1.msra.mxu0 0.0
        %4941 = vmatprep.subr.mxu0 0.0
        %4942 = vmatpush1.msra.mxu0 0.0
        %4943 = vmatprep.subr.mxu0 0.0
        %4944 = vmatpush1.msra.mxu0 0.0
        %4945 = vmatprep.subr.mxu0 0.0
        %4946 = vmatpush1.msra.mxu0 0.0
        %4947 = vmatprep.subr.mxu0 0.0
        %4948 = vmatpush1.msra.mxu0 0.0
        %4949 = vmatprep.subr.mxu0 0.0
        %4950 = vmatpush1.msra.mxu0 0.0
        %4951 = vmatprep.subr.mxu0 0.0
        %4952 = vmatpush1.msra.mxu0 0.0
        %4953 = vmatprep.subr.mxu0 0.0
        %4954 = vmatpush1.msra.mxu0 0.0
        %4955 = vmatprep.subr.mxu0 0.0
        %4956 = vmatpush1.msra.mxu0 0.0
        %4957 = vmatprep.subr.mxu0 0.0
        %4958 = vmatpush1.msra.mxu0 0.0
        %4959 = vmatprep.subr.mxu0 0.0
        %4960 = vmatpush1.msra.mxu0 0.0
        %4961 = vmatprep.subr.mxu0 0.0
        %4962 = vmatpush1.msra.mxu0 0.0
        %4963 = vmatprep.subr.mxu0 0.0
        %4964 = vmatpush1.msra.mxu0 0.0
        %4965 = vmatprep.subr.mxu0 0.0
        %4966 = vmatpush1.msra.mxu0 0.0
        %4967 = vmatprep.subr.mxu0 0.0
        %4968 = vmatpush1.msra.mxu0 0.0
        %4969 = vmatprep.subr.mxu0 0.0
        %4970 = vmatpush1.msra.mxu0 0.0
        %4971 = vmatprep.subr.mxu0 0.0
        %4972 = vmatpush1.msra.mxu0 0.0
        %4973 = vmatprep.subr.mxu0 0.0
        %4974 = vmatpush1.msra.mxu0 0.0
        %4975 = vmatprep.subr.mxu0 0.0
        %4976 = vmatpush1.msra.mxu0 0.0
        %4977 = vmatprep.subr.mxu0 0.0
        %4978 = vmatpush1.msra.mxu0 0.0
        %4979 = vmatprep.subr.mxu0 0.0
        %4980 = vmatpush1.msra.mxu0 0.0
        %4981 = vmatprep.subr.mxu0 0.0
        %4982 = vmatpush1.msra.mxu0 0.0
        %4983 = vmatprep.mubr.f32.mxu0 0.0
        %4984 = vmatmul.mubr.f32.gmra.mrb[0].mxu0 %v4917
        %v4985 = vpop.f32.mrb[0].mxu0
        %v4986 = vadd.f32 0.0, %v4985
        %v4987 = vpop.f32.mrb[0].mxu0
        %4988 = vdwg.mxu0
        %v4990 = vsel %vm2729, %v4898, 0
        %4992 = vmatprep.subr.mxu0 0.0
        %4993 = vmatpush1.msra.mxu0 %v4899
        %4994 = vmatprep.subr.mxu0 0.0
        %4995 = vmatpush1.msra.mxu0 %v4900
        %4996 = vmatprep.subr.mxu0 0.0
        %4997 = vmatpush1.msra.mxu0 %v4901
        %4998 = vmatprep.subr.mxu0 0.0
        %4999 = vmatpush1.msra.mxu0 %v4902
        %5000 = vmatprep.subr.mxu0 0.0
        %5001 = vmatpush1.msra.mxu0 %v4903
        %5002 = vmatprep.subr.mxu0 0.0
        %5003 = vmatpush1.msra.mxu0 %v4904
        %5004 = vmatprep.subr.mxu0 0.0
        %5005 = vmatpush1.msra.mxu0 %v4905
        %5006 = vmatprep.subr.mxu0 0.0
        %5007 = vmatpush1.msra.mxu0 %v4906
        %5008 = vmatprep.subr.mxu0 0.0
        %5009 = vmatpush1.msra.mxu0 0.0
        %5010 = vmatprep.subr.mxu0 0.0
        %5011 = vmatpush1.msra.mxu0 0.0
        %5012 = vmatprep.subr.mxu0 0.0
        %5013 = vmatpush1.msra.mxu0 0.0
        %5014 = vmatprep.subr.mxu0 0.0
        %5015 = vmatpush1.msra.mxu0 0.0
        %5016 = vmatprep.subr.mxu0 0.0
        %5017 = vmatpush1.msra.mxu0 0.0
        %5018 = vmatprep.subr.mxu0 0.0
        %5019 = vmatpush1.msra.mxu0 0.0
        %5020 = vmatprep.subr.mxu0 0.0
        %5021 = vmatpush1.msra.mxu0 0.0
        %5022 = vmatprep.subr.mxu0 0.0
        %5023 = vmatpush1.msra.mxu0 0.0
        %5024 = vmatprep.subr.mxu0 0.0
        %5025 = vmatpush1.msra.mxu0 0.0
        %5026 = vmatprep.subr.mxu0 0.0
        %5027 = vmatpush1.msra.mxu0 0.0
        %5028 = vmatprep.subr.mxu0 0.0
        %5029 = vmatpush1.msra.mxu0 0.0
        %5030 = vmatprep.subr.mxu0 0.0
        %5031 = vmatpush1.msra.mxu0 0.0
        %5032 = vmatprep.subr.mxu0 0.0
        %5033 = vmatpush1.msra.mxu0 0.0
        %5034 = vmatprep.subr.mxu0 0.0
        %5035 = vmatpush1.msra.mxu0 0.0
        %5036 = vmatprep.subr.mxu0 0.0
        %5037 = vmatpush1.msra.mxu0 0.0
        %5038 = vmatprep.subr.mxu0 0.0
        %5039 = vmatpush1.msra.mxu0 0.0
        %5040 = vmatprep.subr.mxu0 0.0
        %5041 = vmatpush1.msra.mxu0 0.0
        %5042 = vmatprep.subr.mxu0 0.0
        %5043 = vmatpush1.msra.mxu0 0.0
        %5044 = vmatprep.subr.mxu0 0.0
        %5045 = vmatpush1.msra.mxu0 0.0
        %5046 = vmatprep.subr.mxu0 0.0
        %5047 = vmatpush1.msra.mxu0 0.0
        %5048 = vmatprep.subr.mxu0 0.0
        %5049 = vmatpush1.msra.mxu0 0.0
        %5050 = vmatprep.subr.mxu0 0.0
        %5051 = vmatpush1.msra.mxu0 0.0
        %5052 = vmatprep.subr.mxu0 0.0
        %5053 = vmatpush1.msra.mxu0 0.0
        %5054 = vmatprep.subr.mxu0 0.0
        %5055 = vmatpush1.msra.mxu0 0.0
        %5056 = vmatprep.mubr.f32.mxu0 0.0
        %5057 = vmatmul.mubr.f32.gmra.mrb[0].mxu0 %v4990
        %v5058 = vpop.f32.mrb[0].mxu0
        %v5059 = vadd.f32 %v4986, %v5058
        %v5060 = vpop.f32.mrb[0].mxu0
        %5061 = vdwg.mxu0
        %v5062 = vld [vmem:[%s1526] ss:$2 sm:$0x3]
        %v5063 = vld [vmem:[%s45 + $0x80] sm:$0xff]
        %v5064 = vld [vmem:[%s45 + $0x88] sm:$0xff]
        %v5065 = vld [vmem:[%s45 + $0x90] sm:$0xff]
        %v5066 = vld [vmem:[%s45 + $0x98] sm:$0xff]
        %v5067 = vld [vmem:[%s45 + $0xa0] sm:$0xff]
        %v5068 = vld [vmem:[%s45 + $0xa8] sm:$0xff]
        %v5069 = vld [vmem:[%s45 + $0xb0] sm:$0xff]
        %v5070 = vld [vmem:[%s45 + $0xb8] sm:$0xff]
        %v5072 = vsel %vm2729, %v5062, 0
        %5074 = vmatprep.subr.mxu0 0.0
        %5075 = vmatpush1.msra.mxu0 %v5063
        %5076 = vmatprep.subr.mxu0 0.0
        %5077 = vmatpush1.msra.mxu0 %v5064
        %5078 = vmatprep.subr.mxu0 0.0
        %5079 = vmatpush1.msra.mxu0 %v5065
        %5080 = vmatprep.subr.mxu0 0.0
        %5081 = vmatpush1.msra.mxu0 %v5066
        %5082 = vmatprep.subr.mxu0 0.0
        %5083 = vmatpush1.msra.mxu0 %v5067
        %5084 = vmatprep.subr.mxu0 0.0
        %5085 = vmatpush1.msra.mxu0 %v5068
        %5086 = vmatprep.subr.mxu0 0.0
        %5087 = vmatpush1.msra.mxu0 %v5069
        %5088 = vmatprep.subr.mxu0 0.0
        %5089 = vmatpush1.msra.mxu0 %v5070
        %5090 = vmatprep.subr.mxu0 0.0
        %5091 = vmatpush1.msra.mxu0 0.0
        %5092 = vmatprep.subr.mxu0 0.0
        %5093 = vmatpush1.msra.mxu0 0.0
        %5094 = vmatprep.subr.mxu0 0.0
        %5095 = vmatpush1.msra.mxu0 0.0
        %5096 = vmatprep.subr.mxu0 0.0
        %5097 = vmatpush1.msra.mxu0 0.0
        %5098 = vmatprep.subr.mxu0 0.0
        %5099 = vmatpush1.msra.mxu0 0.0
        %5100 = vmatprep.subr.mxu0 0.0
        %5101 = vmatpush1.msra.mxu0 0.0
        %5102 = vmatprep.subr.mxu0 0.0
        %5103 = vmatpush1.msra.mxu0 0.0
        %5104 = vmatprep.subr.mxu0 0.0
        %5105 = vmatpush1.msra.mxu0 0.0
        %5106 = vmatprep.subr.mxu0 0.0
        %5107 = vmatpush1.msra.mxu0 0.0
        %5108 = vmatprep.subr.mxu0 0.0
        %5109 = vmatpush1.msra.mxu0 0.0
        %5110 = vmatprep.subr.mxu0 0.0
        %5111 = vmatpush1.msra.mxu0 0.0
        %5112 = vmatprep.subr.mxu0 0.0
        %5113 = vmatpush1.msra.mxu0 0.0
        %5114 = vmatprep.subr.mxu0 0.0
        %5115 = vmatpush1.msra.mxu0 0.0
        %5116 = vmatprep.subr.mxu0 0.0
        %5117 = vmatpush1.msra.mxu0 0.0
        %5118 = vmatprep.subr.mxu0 0.0
        %5119 = vmatpush1.msra.mxu0 0.0
        %5120 = vmatprep.subr.mxu0 0.0
        %5121 = vmatpush1.msra.mxu0 0.0
        %5122 = vmatprep.subr.mxu0 0.0
        %5123 = vmatpush1.msra.mxu0 0.0
        %5124 = vmatprep.subr.mxu0 0.0
        %5125 = vmatpush1.msra.mxu0 0.0
        %5126 = vmatprep.subr.mxu0 0.0
        %5127 = vmatpush1.msra.mxu0 0.0
        %5128 = vmatprep.subr.mxu0 0.0
        %5129 = vmatpush1.msra.mxu0 0.0
        %5130 = vmatprep.subr.mxu0 0.0
        %5131 = vmatpush1.msra.mxu0 0.0
        %5132 = vmatprep.subr.mxu0 0.0
        %5133 = vmatpush1.msra.mxu0 0.0
        %5134 = vmatprep.subr.mxu0 0.0
        %5135 = vmatpush1.msra.mxu0 0.0
        %5136 = vmatprep.subr.mxu0 0.0
        %5137 = vmatpush1.msra.mxu0 0.0
        %5138 = vmatprep.mubr.f32.mxu0 0.0
        %5139 = vmatmul.mubr.f32.gmra.mrb[0].mxu0 %v5072
        %v5140 = vpop.f32.mrb[0].mxu0
        %v5141 = vadd.f32 0.0, %v5140
        %v5142 = vpop.f32.mrb[0].mxu0
        %5143 = vdwg.mxu0
        %v5144 = vadd.f32 %v5059, %v5141
        %v5146 = vlaneseq
        %v5147 = vshrl.u32 %v5146, 7
        %v5148 = vsub.s32 0, %v5147
        %v5149 = vrot.slane %v4897, %v5148
        %v5151 = vadd.f32 %v5144, %v5149
        %v5152 = vmax.f32 %v5151, 0.0
        %5153 = vst.msk [vmem:[#allocation3] sm:$0x1] %vm2726, 0.0
        %5154 = vst.msk [vmem:[#allocation3 + $0x3] sm:$0x1] %vm2726, 0.0
        %vm5155 = vcmask 517120
        %5156 = vst.msk [vmem:[#allocation3 + $0x1] sm:$0x3] %vm5155, %v5152
        %v5157 = vld [vmem:[%s51] sm:$0x1]
        %v5158 = vld [vmem:[#allocation3] sm:$0x3]
        %v5159 = vld [vmem:[%s49] sm:$0xff]
        %v5160 = vld [vmem:[%s49 + $0x8] sm:$0xff]
        %v5161 = vld [vmem:[%s49 + $0x10] sm:$0xff]
        %v5162 = vld [vmem:[%s49 + $0x18] sm:$0xff]
        %v5163 = vld [vmem:[%s49 + $0x20] sm:$0xff]
        %v5164 = vld [vmem:[%s49 + $0x28] sm:$0xff]
        %v5165 = vld [vmem:[%s49 + $0x30] sm:$0xff]
        %v5166 = vld [vmem:[%s49 + $0x38] sm:$0xff]
        %v5167 = vld [vmem:[#allocation3 + $0x1] sm:$0x3]
        %v5168 = vld [vmem:[%s49 + $0x40] sm:$0xff]
        %v5169 = vld [vmem:[%s49 + $0x48] sm:$0xff]
        %v5170 = vld [vmem:[%s49 + $0x50] sm:$0xff]
        %v5171 = vld [vmem:[%s49 + $0x58] sm:$0xff]
        %v5172 = vld [vmem:[%s49 + $0x60] sm:$0xff]
        %v5173 = vld [vmem:[%s49 + $0x68] sm:$0xff]
        %v5174 = vld [vmem:[%s49 + $0x70] sm:$0xff]
        %v5175 = vld [vmem:[%s49 + $0x78] sm:$0xff]
        %v5177 = vsel %vm2729, %v5167, 0
        %5179 = vmatprep.subr.mxu0 0.0
        %5180 = vmatpush1.msra.mxu0 %v5168
        %5181 = vmatprep.subr.mxu0 0.0
        %5182 = vmatpush1.msra.mxu0 %v5169
        %5183 = vmatprep.subr.mxu0 0.0
        %5184 = vmatpush1.msra.mxu0 %v5170
        %5185 = vmatprep.subr.mxu0 0.0
        %5186 = vmatpush1.msra.mxu0 %v5171
        %5187 = vmatprep.subr.mxu0 0.0
        %5188 = vmatpush1.msra.mxu0 %v5172
        %5189 = vmatprep.subr.mxu0 0.0
        %5190 = vmatpush1.msra.mxu0 %v5173
        %5191 = vmatprep.subr.mxu0 0.0
        %5192 = vmatpush1.msra.mxu0 %v5174
        %5193 = vmatprep.subr.mxu0 0.0
        %5194 = vmatpush1.msra.mxu0 %v5175
        %5195 = vmatprep.subr.mxu0 0.0
        %5196 = vmatpush1.msra.mxu0 0.0
        %5197 = vmatprep.subr.mxu0 0.0
        %5198 = vmatpush1.msra.mxu0 0.0
        %5199 = vmatprep.subr.mxu0 0.0
        %5200 = vmatpush1.msra.mxu0 0.0
        %5201 = vmatprep.subr.mxu0 0.0
        %5202 = vmatpush1.msra.mxu0 0.0
        %5203 = vmatprep.subr.mxu0 0.0
        %5204 = vmatpush1.msra.mxu0 0.0
        %5205 = vmatprep.subr.mxu0 0.0
        %5206 = vmatpush1.msra.mxu0 0.0
        %5207 = vmatprep.subr.mxu0 0.0
        %5208 = vmatpush1.msra.mxu0 0.0
        %5209 = vmatprep.subr.mxu0 0.0
        %5210 = vmatpush1.msra.mxu0 0.0
        %5211 = vmatprep.subr.mxu0 0.0
        %5212 = vmatpush1.msra.mxu0 0.0
        %5213 = vmatprep.subr.mxu0 0.0
        %5214 = vmatpush1.msra.mxu0 0.0
        %5215 = vmatprep.subr.mxu0 0.0
        %5216 = vmatpush1.msra.mxu0 0.0
        %5217 = vmatprep.subr.mxu0 0.0
        %5218 = vmatpush1.msra.mxu0 0.0
        %5219 = vmatprep.subr.mxu0 0.0
        %5220 = vmatpush1.msra.mxu0 0.0
        %5221 = vmatprep.subr.mxu0 0.0
        %5222 = vmatpush1.msra.mxu0 0.0
        %5223 = vmatprep.subr.mxu0 0.0
        %5224 = vmatpush1.msra.mxu0 0.0
        %5225 = vmatprep.subr.mxu0 0.0
        %5226 = vmatpush1.msra.mxu0 0.0
        %5227 = vmatprep.subr.mxu0 0.0
        %5228 = vmatpush1.msra.mxu0 0.0
        %5229 = vmatprep.subr.mxu0 0.0
        %5230 = vmatpush1.msra.mxu0 0.0
        %5231 = vmatprep.subr.mxu0 0.0
        %5232 = vmatpush1.msra.mxu0 0.0
        %5233 = vmatprep.subr.mxu0 0.0
        %5234 = vmatpush1.msra.mxu0 0.0
        %5235 = vmatprep.subr.mxu0 0.0
        %5236 = vmatpush1.msra.mxu0 0.0
        %5237 = vmatprep.subr.mxu0 0.0
        %5238 = vmatpush1.msra.mxu0 0.0
        %5239 = vmatprep.subr.mxu0 0.0
        %5240 = vmatpush1.msra.mxu0 0.0
        %5241 = vmatprep.subr.mxu0 0.0
        %5242 = vmatpush1.msra.mxu0 0.0
        %5243 = vmatprep.mubr.f32.mxu0 0.0
        %5244 = vmatmul.mubr.f32.gmra.mrb[0].mxu0 %v5177
        %v5245 = vpop.f32.mrb[0].mxu0
        %v5246 = vadd.f32 0.0, %v5245
        %v5247 = vpop.f32.mrb[0].mxu0
        %5248 = vdwg.mxu0
        %v5250 = vsel %vm2729, %v5158, 0
        %5252 = vmatprep.subr.mxu0 0.0
        %5253 = vmatpush1.msra.mxu0 %v5159
        %5254 = vmatprep.subr.mxu0 0.0
        %5255 = vmatpush1.msra.mxu0 %v5160
        %5256 = vmatprep.subr.mxu0 0.0
        %5257 = vmatpush1.msra.mxu0 %v5161
        %5258 = vmatprep.subr.mxu0 0.0
        %5259 = vmatpush1.msra.mxu0 %v5162
        %5260 = vmatprep.subr.mxu0 0.0
        %5261 = vmatpush1.msra.mxu0 %v5163
        %5262 = vmatprep.subr.mxu0 0.0
        %5263 = vmatpush1.msra.mxu0 %v5164
        %5264 = vmatprep.subr.mxu0 0.0
        %5265 = vmatpush1.msra.mxu0 %v5165
        %5266 = vmatprep.subr.mxu0 0.0
        %5267 = vmatpush1.msra.mxu0 %v5166
        %5268 = vmatprep.subr.mxu0 0.0
        %5269 = vmatpush1.msra.mxu0 0.0
        %5270 = vmatprep.subr.mxu0 0.0
        %5271 = vmatpush1.msra.mxu0 0.0
        %5272 = vmatprep.subr.mxu0 0.0
        %5273 = vmatpush1.msra.mxu0 0.0
        %5274 = vmatprep.subr.mxu0 0.0
        %5275 = vmatpush1.msra.mxu0 0.0
        %5276 = vmatprep.subr.mxu0 0.0
        %5277 = vmatpush1.msra.mxu0 0.0
        %5278 = vmatprep.subr.mxu0 0.0
        %5279 = vmatpush1.msra.mxu0 0.0
        %5280 = vmatprep.subr.mxu0 0.0
        %5281 = vmatpush1.msra.mxu0 0.0
        %5282 = vmatprep.subr.mxu0 0.0
        %5283 = vmatpush1.msra.mxu0 0.0
        %5284 = vmatprep.subr.mxu0 0.0
        %5285 = vmatpush1.msra.mxu0 0.0
        %5286 = vmatprep.subr.mxu0 0.0
        %5287 = vmatpush1.msra.mxu0 0.0
        %5288 = vmatprep.subr.mxu0 0.0
        %5289 = vmatpush1.msra.mxu0 0.0
        %5290 = vmatprep.subr.mxu0 0.0
        %5291 = vmatpush1.msra.mxu0 0.0
        %5292 = vmatprep.subr.mxu0 0.0
        %5293 = vmatpush1.msra.mxu0 0.0
        %5294 = vmatprep.subr.mxu0 0.0
        %5295 = vmatpush1.msra.mxu0 0.0
        %5296 = vmatprep.subr.mxu0 0.0
        %5297 = vmatpush1.msra.mxu0 0.0
        %5298 = vmatprep.subr.mxu0 0.0
        %5299 = vmatpush1.msra.mxu0 0.0
        %5300 = vmatprep.subr.mxu0 0.0
        %5301 = vmatpush1.msra.mxu0 0.0
        %5302 = vmatprep.subr.mxu0 0.0
        %5303 = vmatpush1.msra.mxu0 0.0
        %5304 = vmatprep.subr.mxu0 0.0
        %5305 = vmatpush1.msra.mxu0 0.0
        %5306 = vmatprep.subr.mxu0 0.0
        %5307 = vmatpush1.msra.mxu0 0.0
        %5308 = vmatprep.subr.mxu0 0.0
        %5309 = vmatpush1.msra.mxu0 0.0
        %5310 = vmatprep.subr.mxu0 0.0
        %5311 = vmatpush1.msra.mxu0 0.0
        %5312 = vmatprep.subr.mxu0 0.0
        %5313 = vmatpush1.msra.mxu0 0.0
        %5314 = vmatprep.subr.mxu0 0.0
        %5315 = vmatpush1.msra.mxu0 0.0
        %5316 = vmatprep.mubr.f32.mxu0 0.0
        %5317 = vmatmul.mubr.f32.gmra.mrb[0].mxu0 %v5250
        %v5318 = vpop.f32.mrb[0].mxu0
        %v5319 = vadd.f32 %v5246, %v5318
        %v5320 = vpop.f32.mrb[0].mxu0
        %5321 = vdwg.mxu0
        %v5322 = vld [vmem:[#allocation3 + $0x2] sm:$0x3]
        %v5323 = vld [vmem:[%s49 + $0x80] sm:$0xff]
        %v5324 = vld [vmem:[%s49 + $0x88] sm:$0xff]
        %v5325 = vld [vmem:[%s49 + $0x90] sm:$0xff]
        %v5326 = vld [vmem:[%s49 + $0x98] sm:$0xff]
        %v5327 = vld [vmem:[%s49 + $0xa0] sm:$0xff]
        %v5328 = vld [vmem:[%s49 + $0xa8] sm:$0xff]
        %v5329 = vld [vmem:[%s49 + $0xb0] sm:$0xff]
        %v5330 = vld [vmem:[%s49 + $0xb8] sm:$0xff]
        %v5332 = vsel %vm2729, %v5322, 0
        %5334 = vmatprep.subr.mxu0 0.0
        %5335 = vmatpush1.msra.mxu0 %v5323
        %5336 = vmatprep.subr.mxu0 0.0
        %5337 = vmatpush1.msra.mxu0 %v5324
        %5338 = vmatprep.subr.mxu0 0.0
        %5339 = vmatpush1.msra.mxu0 %v5325
        %5340 = vmatprep.subr.mxu0 0.0
        %5341 = vmatpush1.msra.mxu0 %v5326
        %5342 = vmatprep.subr.mxu0 0.0
        %5343 = vmatpush1.msra.mxu0 %v5327
        %5344 = vmatprep.subr.mxu0 0.0
        %5345 = vmatpush1.msra.mxu0 %v5328
        %5346 = vmatprep.subr.mxu0 0.0
        %5347 = vmatpush1.msra.mxu0 %v5329
        %5348 = vmatprep.subr.mxu0 0.0
        %5349 = vmatpush1.msra.mxu0 %v5330
        %5350 = vmatprep.subr.mxu0 0.0
        %5351 = vmatpush1.msra.mxu0 0.0
        %5352 = vmatprep.subr.mxu0 0.0
        %5353 = vmatpush1.msra.mxu0 0.0
        %5354 = vmatprep.subr.mxu0 0.0
        %5355 = vmatpush1.msra.mxu0 0.0
        %5356 = vmatprep.subr.mxu0 0.0
        %5357 = vmatpush1.msra.mxu0 0.0
        %5358 = vmatprep.subr.mxu0 0.0
        %5359 = vmatpush1.msra.mxu0 0.0
        %5360 = vmatprep.subr.mxu0 0.0
        %5361 = vmatpush1.msra.mxu0 0.0
        %5362 = vmatprep.subr.mxu0 0.0
        %5363 = vmatpush1.msra.mxu0 0.0
        %5364 = vmatprep.subr.mxu0 0.0
        %5365 = vmatpush1.msra.mxu0 0.0
        %5366 = vmatprep.subr.mxu0 0.0
        %5367 = vmatpush1.msra.mxu0 0.0
        %5368 = vmatprep.subr.mxu0 0.0
        %5369 = vmatpush1.msra.mxu0 0.0
        %5370 = vmatprep.subr.mxu0 0.0
        %5371 = vmatpush1.msra.mxu0 0.0
        %5372 = vmatprep.subr.mxu0 0.0
        %5373 = vmatpush1.msra.mxu0 0.0
        %5374 = vmatprep.subr.mxu0 0.0
        %5375 = vmatpush1.msra.mxu0 0.0
        %5376 = vmatprep.subr.mxu0 0.0
        %5377 = vmatpush1.msra.mxu0 0.0
        %5378 = vmatprep.subr.mxu0 0.0
        %5379 = vmatpush1.msra.mxu0 0.0
        %5380 = vmatprep.subr.mxu0 0.0
        %5381 = vmatpush1.msra.mxu0 0.0
        %5382 = vmatprep.subr.mxu0 0.0
        %5383 = vmatpush1.msra.mxu0 0.0
        %5384 = vmatprep.subr.mxu0 0.0
        %5385 = vmatpush1.msra.mxu0 0.0
        %5386 = vmatprep.subr.mxu0 0.0
        %5387 = vmatpush1.msra.mxu0 0.0
        %5388 = vmatprep.subr.mxu0 0.0
        %5389 = vmatpush1.msra.mxu0 0.0
        %5390 = vmatprep.subr.mxu0 0.0
        %5391 = vmatpush1.msra.mxu0 0.0
        %5392 = vmatprep.subr.mxu0 0.0
        %5393 = vmatpush1.msra.mxu0 0.0
        %5394 = vmatprep.subr.mxu0 0.0
        %5395 = vmatpush1.msra.mxu0 0.0
        %5396 = vmatprep.subr.mxu0 0.0
        %5397 = vmatpush1.msra.mxu0 0.0
        %5398 = vmatprep.mubr.f32.mxu0 0.0
        %5399 = vmatmul.mubr.f32.gmra.mrb[0].mxu0 %v5332
        %v5400 = vpop.f32.mrb[0].mxu0
        %v5401 = vadd.f32 0.0, %v5400
        %v5402 = vpop.f32.mrb[0].mxu0
        %5403 = vdwg.mxu0
        %v5404 = vadd.f32 %v5319, %v5401
        %v5406 = vlaneseq
        %v5407 = vshrl.u32 %v5406, 7
        %v5408 = vsub.s32 0, %v5407
        %v5409 = vrot.slane %v5157, %v5408
        %v5411 = vadd.f32 %v5404, %v5409
        %v5412 = vld [vmem:[%s55] sm:$0x1]
        %v5413 = vld [vmem:[%s1348] ss:$2 sm:$0x3]
        %v5414 = vld [vmem:[%s53] sm:$0xff]
        %v5415 = vld [vmem:[%s53 + $0x8] sm:$0xff]
        %v5416 = vld [vmem:[%s53 + $0x10] sm:$0xff]
        %v5417 = vld [vmem:[%s53 + $0x18] sm:$0xff]
        %v5418 = vld [vmem:[%s53 + $0x20] sm:$0xff]
        %v5419 = vld [vmem:[%s53 + $0x28] sm:$0xff]
        %v5420 = vld [vmem:[%s53 + $0x30] sm:$0xff]
        %v5421 = vld [vmem:[%s53 + $0x38] sm:$0xff]
        %v5423 = vlaneseq
        %v5424 = vshrl.u32 %v5423, 7
        %v5425 = vsub.s32 0, %v5424
        %v5426 = vrot.slane %v5412, %v5425
        %v5429 = vsel %vm2729, %v5413, 0
        %5431 = vmatprep.subr.mxu0 0.0
        %5432 = vmatpush1.msra.mxu0 %v5414
        %5433 = vmatprep.subr.mxu0 0.0
        %5434 = vmatpush1.msra.mxu0 %v5415
        %5435 = vmatprep.subr.mxu0 0.0
        %5436 = vmatpush1.msra.mxu0 %v5416
        %5437 = vmatprep.subr.mxu0 0.0
        %5438 = vmatpush1.msra.mxu0 %v5417
        %5439 = vmatprep.subr.mxu0 0.0
        %5440 = vmatpush1.msra.mxu0 %v5418
        %5441 = vmatprep.subr.mxu0 0.0
        %5442 = vmatpush1.msra.mxu0 %v5419
        %5443 = vmatprep.subr.mxu0 0.0
        %5444 = vmatpush1.msra.mxu0 %v5420
        %5445 = vmatprep.subr.mxu0 0.0
        %5446 = vmatpush1.msra.mxu0 %v5421
        %5447 = vmatprep.subr.mxu0 0.0
        %5448 = vmatpush1.msra.mxu0 0.0
        %5449 = vmatprep.subr.mxu0 0.0
        %5450 = vmatpush1.msra.mxu0 0.0
        %5451 = vmatprep.subr.mxu0 0.0
        %5452 = vmatpush1.msra.mxu0 0.0
        %5453 = vmatprep.subr.mxu0 0.0
        %5454 = vmatpush1.msra.mxu0 0.0
        %5455 = vmatprep.subr.mxu0 0.0
        %5456 = vmatpush1.msra.mxu0 0.0
        %5457 = vmatprep.subr.mxu0 0.0
        %5458 = vmatpush1.msra.mxu0 0.0
        %5459 = vmatprep.subr.mxu0 0.0
        %5460 = vmatpush1.msra.mxu0 0.0
        %5461 = vmatprep.subr.mxu0 0.0
        %5462 = vmatpush1.msra.mxu0 0.0
        %5463 = vmatprep.subr.mxu0 0.0
        %5464 = vmatpush1.msra.mxu0 0.0
        %5465 = vmatprep.subr.mxu0 0.0
        %5466 = vmatpush1.msra.mxu0 0.0
        %5467 = vmatprep.subr.mxu0 0.0
        %5468 = vmatpush1.msra.mxu0 0.0
        %5469 = vmatprep.subr.mxu0 0.0
        %5470 = vmatpush1.msra.mxu0 0.0
        %5471 = vmatprep.subr.mxu0 0.0
        %5472 = vmatpush1.msra.mxu0 0.0
        %5473 = vmatprep.subr.mxu0 0.0
        %5474 = vmatpush1.msra.mxu0 0.0
        %5475 = vmatprep.subr.mxu0 0.0
        %5476 = vmatpush1.msra.mxu0 0.0
        %5477 = vmatprep.subr.mxu0 0.0
        %5478 = vmatpush1.msra.mxu0 0.0
        %5479 = vmatprep.subr.mxu0 0.0
        %5480 = vmatpush1.msra.mxu0 0.0
        %5481 = vmatprep.subr.mxu0 0.0
        %5482 = vmatpush1.msra.mxu0 0.0
        %5483 = vmatprep.subr.mxu0 0.0
        %5484 = vmatpush1.msra.mxu0 0.0
        %5485 = vmatprep.subr.mxu0 0.0
        %5486 = vmatpush1.msra.mxu0 0.0
        %5487 = vmatprep.subr.mxu0 0.0
        %5488 = vmatpush1.msra.mxu0 0.0
        %5489 = vmatprep.subr.mxu0 0.0
        %5490 = vmatpush1.msra.mxu0 0.0
        %5491 = vmatprep.subr.mxu0 0.0
        %5492 = vmatpush1.msra.mxu0 0.0
        %5493 = vmatprep.subr.mxu0 0.0
        %5494 = vmatpush1.msra.mxu0 0.0
        %5495 = vmatprep.mubr.f32.mxu0 0.0
        %5496 = vmatmul.mubr.f32.gmra.mrb[0].mxu0 %v5429
        %v5497 = vpop.f32.mrb[0].mxu0
        %v5498 = vadd.f32 %v5426, %v5497
        %v5499 = vpop.f32.mrb[0].mxu0
        %5500 = vdwg.mxu0
        %v5501 = vadd.f32 %v5411, %v5498
        %v5502 = vmax.f32 %v5501, 0.0
        %5503 = vst.msk [vmem:[#allocation2] sm:$0x1] %vm2726, 0.0
        %5504 = vst.msk [vmem:[#allocation2 + $0x3] sm:$0x1] %vm2726, 0.0
        %5505 = vst.msk [vmem:[#allocation2 + $0x1] sm:$0x3] %vm5155, %v5502
        %v5506 = vld [vmem:[%s59] sm:$0x1]
        %v5507 = vld [vmem:[#allocation2] sm:$0x3]
        %v5508 = vld [vmem:[%s57] sm:$0xff]
        %v5509 = vld [vmem:[%s57 + $0x8] sm:$0xff]
        %v5510 = vld [vmem:[%s57 + $0x10] sm:$0xff]
        %v5511 = vld [vmem:[%s57 + $0x18] sm:$0xff]
        %v5512 = vld [vmem:[%s57 + $0x20] sm:$0xff]
        %v5513 = vld [vmem:[%s57 + $0x28] sm:$0xff]
        %v5514 = vld [vmem:[%s57 + $0x30] sm:$0xff]
        %v5515 = vld [vmem:[%s57 + $0x38] sm:$0xff]
        %v5516 = vld [vmem:[#allocation2 + $0x1] sm:$0x3]
        %v5517 = vld [vmem:[%s57 + $0x40] sm:$0xff]
        %v5518 = vld [vmem:[%s57 + $0x48] sm:$0xff]
        %v5519 = vld [vmem:[%s57 + $0x50] sm:$0xff]
        %v5520 = vld [vmem:[%s57 + $0x58] sm:$0xff]
        %v5521 = vld [vmem:[%s57 + $0x60] sm:$0xff]
        %v5522 = vld [vmem:[%s57 + $0x68] sm:$0xff]
        %v5523 = vld [vmem:[%s57 + $0x70] sm:$0xff]
        %v5524 = vld [vmem:[%s57 + $0x78] sm:$0xff]
        %v5526 = vsel %vm2729, %v5516, 0
        %5528 = vmatprep.subr.mxu0 0.0
        %5529 = vmatpush1.msra.mxu0 %v5517
        %5530 = vmatprep.subr.mxu0 0.0
        %5531 = vmatpush1.msra.mxu0 %v5518
        %5532 = vmatprep.subr.mxu0 0.0
        %5533 = vmatpush1.msra.mxu0 %v5519
        %5534 = vmatprep.subr.mxu0 0.0
        %5535 = vmatpush1.msra.mxu0 %v5520
        %5536 = vmatprep.subr.mxu0 0.0
        %5537 = vmatpush1.msra.mxu0 %v5521
        %5538 = vmatprep.subr.mxu0 0.0
        %5539 = vmatpush1.msra.mxu0 %v5522
        %5540 = vmatprep.subr.mxu0 0.0
        %5541 = vmatpush1.msra.mxu0 %v5523
        %5542 = vmatprep.subr.mxu0 0.0
        %5543 = vmatpush1.msra.mxu0 %v5524
        %5544 = vmatprep.subr.mxu0 0.0
        %5545 = vmatpush1.msra.mxu0 0.0
        %5546 = vmatprep.subr.mxu0 0.0
        %5547 = vmatpush1.msra.mxu0 0.0
        %5548 = vmatprep.subr.mxu0 0.0
        %5549 = vmatpush1.msra.mxu0 0.0
        %5550 = vmatprep.subr.mxu0 0.0
        %5551 = vmatpush1.msra.mxu0 0.0
        %5552 = vmatprep.subr.mxu0 0.0
        %5553 = vmatpush1.msra.mxu0 0.0
        %5554 = vmatprep.subr.mxu0 0.0
        %5555 = vmatpush1.msra.mxu0 0.0
        %5556 = vmatprep.subr.mxu0 0.0
        %5557 = vmatpush1.msra.mxu0 0.0
        %5558 = vmatprep.subr.mxu0 0.0
        %5559 = vmatpush1.msra.mxu0 0.0
        %5560 = vmatprep.subr.mxu0 0.0
        %5561 = vmatpush1.msra.mxu0 0.0
        %5562 = vmatprep.subr.mxu0 0.0
        %5563 = vmatpush1.msra.mxu0 0.0
        %5564 = vmatprep.subr.mxu0 0.0
        %5565 = vmatpush1.msra.mxu0 0.0
        %5566 = vmatprep.subr.mxu0 0.0
        %5567 = vmatpush1.msra.mxu0 0.0
        %5568 = vmatprep.subr.mxu0 0.0
        %5569 = vmatpush1.msra.mxu0 0.0
        %5570 = vmatprep.subr.mxu0 0.0
        %5571 = vmatpush1.msra.mxu0 0.0
        %5572 = vmatprep.subr.mxu0 0.0
        %5573 = vmatpush1.msra.mxu0 0.0
        %5574 = vmatprep.subr.mxu0 0.0
        %5575 = vmatpush1.msra.mxu0 0.0
        %5576 = vmatprep.subr.mxu0 0.0
        %5577 = vmatpush1.msra.mxu0 0.0
        %5578 = vmatprep.subr.mxu0 0.0
        %5579 = vmatpush1.msra.mxu0 0.0
        %5580 = vmatprep.subr.mxu0 0.0
        %5581 = vmatpush1.msra.mxu0 0.0
        %5582 = vmatprep.subr.mxu0 0.0
        %5583 = vmatpush1.msra.mxu0 0.0
        %5584 = vmatprep.subr.mxu0 0.0
        %5585 = vmatpush1.msra.mxu0 0.0
        %5586 = vmatprep.subr.mxu0 0.0
        %5587 = vmatpush1.msra.mxu0 0.0
        %5588 = vmatprep.subr.mxu0 0.0
        %5589 = vmatpush1.msra.mxu0 0.0
        %5590 = vmatprep.subr.mxu0 0.0
        %5591 = vmatpush1.msra.mxu0 0.0
        %5592 = vmatprep.mubr.f32.mxu0 0.0
        %5593 = vmatmul.mubr.f32.gmra.mrb[0].mxu0 %v5526
        %v5594 = vpop.f32.mrb[0].mxu0
        %v5595 = vadd.f32 0.0, %v5594
        %v5596 = vpop.f32.mrb[0].mxu0
        %5597 = vdwg.mxu0
        %v5599 = vsel %vm2729, %v5507, 0
        %5601 = vmatprep.subr.mxu0 0.0
        %5602 = vmatpush1.msra.mxu0 %v5508
        %5603 = vmatprep.subr.mxu0 0.0
        %5604 = vmatpush1.msra.mxu0 %v5509
        %5605 = vmatprep.subr.mxu0 0.0
        %5606 = vmatpush1.msra.mxu0 %v5510
        %5607 = vmatprep.subr.mxu0 0.0
        %5608 = vmatpush1.msra.mxu0 %v5511
        %5609 = vmatprep.subr.mxu0 0.0
        %5610 = vmatpush1.msra.mxu0 %v5512
        %5611 = vmatprep.subr.mxu0 0.0
        %5612 = vmatpush1.msra.mxu0 %v5513
        %5613 = vmatprep.subr.mxu0 0.0
        %5614 = vmatpush1.msra.mxu0 %v5514
        %5615 = vmatprep.subr.mxu0 0.0
        %5616 = vmatpush1.msra.mxu0 %v5515
        %5617 = vmatprep.subr.mxu0 0.0
        %5618 = vmatpush1.msra.mxu0 0.0
        %5619 = vmatprep.subr.mxu0 0.0
        %5620 = vmatpush1.msra.mxu0 0.0
        %5621 = vmatprep.subr.mxu0 0.0
        %5622 = vmatpush1.msra.mxu0 0.0
        %5623 = vmatprep.subr.mxu0 0.0
        %5624 = vmatpush1.msra.mxu0 0.0
        %5625 = vmatprep.subr.mxu0 0.0
        %5626 = vmatpush1.msra.mxu0 0.0
        %5627 = vmatprep.subr.mxu0 0.0
        %5628 = vmatpush1.msra.mxu0 0.0
        %5629 = vmatprep.subr.mxu0 0.0
        %5630 = vmatpush1.msra.mxu0 0.0
        %5631 = vmatprep.subr.mxu0 0.0
        %5632 = vmatpush1.msra.mxu0 0.0
        %5633 = vmatprep.subr.mxu0 0.0
        %5634 = vmatpush1.msra.mxu0 0.0
        %5635 = vmatprep.subr.mxu0 0.0
        %5636 = vmatpush1.msra.mxu0 0.0
        %5637 = vmatprep.subr.mxu0 0.0
        %5638 = vmatpush1.msra.mxu0 0.0
        %5639 = vmatprep.subr.mxu0 0.0
        %5640 = vmatpush1.msra.mxu0 0.0
        %5641 = vmatprep.subr.mxu0 0.0
        %5642 = vmatpush1.msra.mxu0 0.0
        %5643 = vmatprep.subr.mxu0 0.0
        %5644 = vmatpush1.msra.mxu0 0.0
        %5645 = vmatprep.subr.mxu0 0.0
        %5646 = vmatpush1.msra.mxu0 0.0
        %5647 = vmatprep.subr.mxu0 0.0
        %5648 = vmatpush1.msra.mxu0 0.0
        %5649 = vmatprep.subr.mxu0 0.0
        %5650 = vmatpush1.msra.mxu0 0.0
        %5651 = vmatprep.subr.mxu0 0.0
        %5652 = vmatpush1.msra.mxu0 0.0
        %5653 = vmatprep.subr.mxu0 0.0
        %5654 = vmatpush1.msra.mxu0 0.0
        %5655 = vmatprep.subr.mxu0 0.0
        %5656 = vmatpush1.msra.mxu0 0.0
        %5657 = vmatprep.subr.mxu0 0.0
        %5658 = vmatpush1.msra.mxu0 0.0
        %5659 = vmatprep.subr.mxu0 0.0
        %5660 = vmatpush1.msra.mxu0 0.0
        %5661 = vmatprep.subr.mxu0 0.0
        %5662 = vmatpush1.msra.mxu0 0.0
        %5663 = vmatprep.subr.mxu0 0.0
        %5664 = vmatpush1.msra.mxu0 0.0
        %5665 = vmatprep.mubr.f32.mxu0 0.0
        %5666 = vmatmul.mubr.f32.gmra.mrb[0].mxu0 %v5599
        %v5667 = vpop.f32.mrb[0].mxu0
        %v5668 = vadd.f32 %v5595, %v5667
        %v5669 = vpop.f32.mrb[0].mxu0
        %5670 = vdwg.mxu0
        %v5671 = vld [vmem:[#allocation2 + $0x2] sm:$0x3]
        %v5672 = vld [vmem:[%s57 + $0x80] sm:$0xff]
        %v5673 = vld [vmem:[%s57 + $0x88] sm:$0xff]
        %v5674 = vld [vmem:[%s57 + $0x90] sm:$0xff]
        %v5675 = vld [vmem:[%s57 + $0x98] sm:$0xff]
        %v5676 = vld [vmem:[%s57 + $0xa0] sm:$0xff]
        %v5677 = vld [vmem:[%s57 + $0xa8] sm:$0xff]
        %v5678 = vld [vmem:[%s57 + $0xb0] sm:$0xff]
        %v5679 = vld [vmem:[%s57 + $0xb8] sm:$0xff]
        %v5681 = vsel %vm2729, %v5671, 0
        %5683 = vmatprep.subr.mxu0 0.0
        %5684 = vmatpush1.msra.mxu0 %v5672
        %5685 = vmatprep.subr.mxu0 0.0
        %5686 = vmatpush1.msra.mxu0 %v5673
        %5687 = vmatprep.subr.mxu0 0.0
        %5688 = vmatpush1.msra.mxu0 %v5674
        %5689 = vmatprep.subr.mxu0 0.0
        %5690 = vmatpush1.msra.mxu0 %v5675
        %5691 = vmatprep.subr.mxu0 0.0
        %5692 = vmatpush1.msra.mxu0 %v5676
        %5693 = vmatprep.subr.mxu0 0.0
        %5694 = vmatpush1.msra.mxu0 %v5677
        %5695 = vmatprep.subr.mxu0 0.0
        %5696 = vmatpush1.msra.mxu0 %v5678
        %5697 = vmatprep.subr.mxu0 0.0
        %5698 = vmatpush1.msra.mxu0 %v5679
        %5699 = vmatprep.subr.mxu0 0.0
        %5700 = vmatpush1.msra.mxu0 0.0
        %5701 = vmatprep.subr.mxu0 0.0
        %5702 = vmatpush1.msra.mxu0 0.0
        %5703 = vmatprep.subr.mxu0 0.0
        %5704 = vmatpush1.msra.mxu0 0.0
        %5705 = vmatprep.subr.mxu0 0.0
        %5706 = vmatpush1.msra.mxu0 0.0
        %5707 = vmatprep.subr.mxu0 0.0
        %5708 = vmatpush1.msra.mxu0 0.0
        %5709 = vmatprep.subr.mxu0 0.0
        %5710 = vmatpush1.msra.mxu0 0.0
        %5711 = vmatprep.subr.mxu0 0.0
        %5712 = vmatpush1.msra.mxu0 0.0
        %5713 = vmatprep.subr.mxu0 0.0
        %5714 = vmatpush1.msra.mxu0 0.0
        %5715 = vmatprep.subr.mxu0 0.0
        %5716 = vmatpush1.msra.mxu0 0.0
        %5717 = vmatprep.subr.mxu0 0.0
        %5718 = vmatpush1.msra.mxu0 0.0
        %5719 = vmatprep.subr.mxu0 0.0
        %5720 = vmatpush1.msra.mxu0 0.0
        %5721 = vmatprep.subr.mxu0 0.0
        %5722 = vmatpush1.msra.mxu0 0.0
        %5723 = vmatprep.subr.mxu0 0.0
        %5724 = vmatpush1.msra.mxu0 0.0
        %5725 = vmatprep.subr.mxu0 0.0
        %5726 = vmatpush1.msra.mxu0 0.0
        %5727 = vmatprep.subr.mxu0 0.0
        %5728 = vmatpush1.msra.mxu0 0.0
        %5729 = vmatprep.subr.mxu0 0.0
        %5730 = vmatpush1.msra.mxu0 0.0
        %5731 = vmatprep.subr.mxu0 0.0
        %5732 = vmatpush1.msra.mxu0 0.0
        %5733 = vmatprep.subr.mxu0 0.0
        %5734 = vmatpush1.msra.mxu0 0.0
        %5735 = vmatprep.subr.mxu0 0.0
        %5736 = vmatpush1.msra.mxu0 0.0
        %5737 = vmatprep.subr.mxu0 0.0
        %5738 = vmatpush1.msra.mxu0 0.0
        %5739 = vmatprep.subr.mxu0 0.0
        %5740 = vmatpush1.msra.mxu0 0.0
        %5741 = vmatprep.subr.mxu0 0.0
        %5742 = vmatpush1.msra.mxu0 0.0
        %5743 = vmatprep.subr.mxu0 0.0
        %5744 = vmatpush1.msra.mxu0 0.0
        %5745 = vmatprep.subr.mxu0 0.0
        %5746 = vmatpush1.msra.mxu0 0.0
        %5747 = vmatprep.mubr.f32.mxu0 0.0
        %5748 = vmatmul.mubr.f32.gmra.mrb[0].mxu0 %v5681
        %v5749 = vpop.f32.mrb[0].mxu0
        %v5750 = vadd.f32 0.0, %v5749
        %v5751 = vpop.f32.mrb[0].mxu0
        %5752 = vdwg.mxu0
        %v5753 = vadd.f32 %v5668, %v5750
        %v5755 = vlaneseq
        %v5756 = vshrl.u32 %v5755, 7
        %v5757 = vsub.s32 0, %v5756
        %v5758 = vrot.slane %v5506, %v5757
        %v5760 = vadd.f32 %v5753, %v5758
        %v5761 = vmax.f32 %v5760, 0.0
        %5762 = vst.msk [vmem:[#allocation3] sm:$0x1] %vm2726, 0.0
        %5763 = vst.msk [vmem:[#allocation3 + $0x3] sm:$0x1] %vm2726, 0.0
        %5764 = vst.msk [vmem:[#allocation3 + $0x1] sm:$0x3] %vm5155, %v5761
        %v5765 = vld [vmem:[%s63] sm:$0x1]
        %v5766 = vld [vmem:[#allocation3] sm:$0x3]
        %v5767 = vld [vmem:[%s61] sm:$0xff]
        %v5768 = vld [vmem:[%s61 + $0x8] sm:$0xff]
        %v5769 = vld [vmem:[%s61 + $0x10] sm:$0xff]
        %v5770 = vld [vmem:[%s61 + $0x18] sm:$0xff]
        %v5771 = vld [vmem:[%s61 + $0x20] sm:$0xff]
        %v5772 = vld [vmem:[%s61 + $0x28] sm:$0xff]
        %v5773 = vld [vmem:[%s61 + $0x30] sm:$0xff]
        %v5774 = vld [vmem:[%s61 + $0x38] sm:$0xff]
        %v5775 = vld [vmem:[#allocation3 + $0x1] sm:$0x3]
        %v5776 = vld [vmem:[%s61 + $0x40] sm:$0xff]
        %v5777 = vld [vmem:[%s61 + $0x48] sm:$0xff]
        %v5778 = vld [vmem:[%s61 + $0x50] sm:$0xff]
        %v5779 = vld [vmem:[%s61 + $0x58] sm:$0xff]
        %v5780 = vld [vmem:[%s61 + $0x60] sm:$0xff]
        %v5781 = vld [vmem:[%s61 + $0x68] sm:$0xff]
        %v5782 = vld [vmem:[%s61 + $0x70] sm:$0xff]
        %v5783 = vld [vmem:[%s61 + $0x78] sm:$0xff]
        %v5785 = vsel %vm2729, %v5775, 0
        %5787 = vmatprep.subr.mxu0 0.0
        %5788 = vmatpush1.msra.mxu0 %v5776
        %5789 = vmatprep.subr.mxu0 0.0
        %5790 = vmatpush1.msra.mxu0 %v5777
        %5791 = vmatprep.subr.mxu0 0.0
        %5792 = vmatpush1.msra.mxu0 %v5778
        %5793 = vmatprep.subr.mxu0 0.0
        %5794 = vmatpush1.msra.mxu0 %v5779
        %5795 = vmatprep.subr.mxu0 0.0
        %5796 = vmatpush1.msra.mxu0 %v5780
        %5797 = vmatprep.subr.mxu0 0.0
        %5798 = vmatpush1.msra.mxu0 %v5781
        %5799 = vmatprep.subr.mxu0 0.0
        %5800 = vmatpush1.msra.mxu0 %v5782
        %5801 = vmatprep.subr.mxu0 0.0
        %5802 = vmatpush1.msra.mxu0 %v5783
        %5803 = vmatprep.subr.mxu0 0.0
        %5804 = vmatpush1.msra.mxu0 0.0
        %5805 = vmatprep.subr.mxu0 0.0
        %5806 = vmatpush1.msra.mxu0 0.0
        %5807 = vmatprep.subr.mxu0 0.0
        %5808 = vmatpush1.msra.mxu0 0.0
        %5809 = vmatprep.subr.mxu0 0.0
        %5810 = vmatpush1.msra.mxu0 0.0
        %5811 = vmatprep.subr.mxu0 0.0
        %5812 = vmatpush1.msra.mxu0 0.0
        %5813 = vmatprep.subr.mxu0 0.0
        %5814 = vmatpush1.msra.mxu0 0.0
        %5815 = vmatprep.subr.mxu0 0.0
        %5816 = vmatpush1.msra.mxu0 0.0
        %5817 = vmatprep.subr.mxu0 0.0
        %5818 = vmatpush1.msra.mxu0 0.0
        %5819 = vmatprep.subr.mxu0 0.0
        %5820 = vmatpush1.msra.mxu0 0.0
        %5821 = vmatprep.subr.mxu0 0.0
        %5822 = vmatpush1.msra.mxu0 0.0
        %5823 = vmatprep.subr.mxu0 0.0
        %5824 = vmatpush1.msra.mxu0 0.0
        %5825 = vmatprep.subr.mxu0 0.0
        %5826 = vmatpush1.msra.mxu0 0.0
        %5827 = vmatprep.subr.mxu0 0.0
        %5828 = vmatpush1.msra.mxu0 0.0
        %5829 = vmatprep.subr.mxu0 0.0
        %5830 = vmatpush1.msra.mxu0 0.0
        %5831 = vmatprep.subr.mxu0 0.0
        %5832 = vmatpush1.msra.mxu0 0.0
        %5833 = vmatprep.subr.mxu0 0.0
        %5834 = vmatpush1.msra.mxu0 0.0
        %5835 = vmatprep.subr.mxu0 0.0
        %5836 = vmatpush1.msra.mxu0 0.0
        %5837 = vmatprep.subr.mxu0 0.0
        %5838 = vmatpush1.msra.mxu0 0.0
        %5839 = vmatprep.subr.mxu0 0.0
        %5840 = vmatpush1.msra.mxu0 0.0
        %5841 = vmatprep.subr.mxu0 0.0
        %5842 = vmatpush1.msra.mxu0 0.0
        %5843 = vmatprep.subr.mxu0 0.0
        %5844 = vmatpush1.msra.mxu0 0.0
        %5845 = vmatprep.subr.mxu0 0.0
        %5846 = vmatpush1.msra.mxu0 0.0
        %5847 = vmatprep.subr.mxu0 0.0
        %5848 = vmatpush1.msra.mxu0 0.0
        %5849 = vmatprep.subr.mxu0 0.0
        %5850 = vmatpush1.msra.mxu0 0.0
        %5851 = vmatprep.mubr.f32.mxu0 0.0
        %5852 = vmatmul.mubr.f32.gmra.mrb[0].mxu0 %v5785
        %v5853 = vpop.f32.mrb[0].mxu0
        %v5854 = vadd.f32 0.0, %v5853
        %v5855 = vpop.f32.mrb[0].mxu0
        %5856 = vdwg.mxu0
        %v5858 = vsel %vm2729, %v5766, 0
        %5860 = vmatprep.subr.mxu0 0.0
        %5861 = vmatpush1.msra.mxu0 %v5767
        %5862 = vmatprep.subr.mxu0 0.0
        %5863 = vmatpush1.msra.mxu0 %v5768
        %5864 = vmatprep.subr.mxu0 0.0
        %5865 = vmatpush1.msra.mxu0 %v5769
        %5866 = vmatprep.subr.mxu0 0.0
        %5867 = vmatpush1.msra.mxu0 %v5770
        %5868 = vmatprep.subr.mxu0 0.0
        %5869 = vmatpush1.msra.mxu0 %v5771
        %5870 = vmatprep.subr.mxu0 0.0
        %5871 = vmatpush1.msra.mxu0 %v5772
        %5872 = vmatprep.subr.mxu0 0.0
        %5873 = vmatpush1.msra.mxu0 %v5773
        %5874 = vmatprep.subr.mxu0 0.0
        %5875 = vmatpush1.msra.mxu0 %v5774
        %5876 = vmatprep.subr.mxu0 0.0
        %5877 = vmatpush1.msra.mxu0 0.0
        %5878 = vmatprep.subr.mxu0 0.0
        %5879 = vmatpush1.msra.mxu0 0.0
        %5880 = vmatprep.subr.mxu0 0.0
        %5881 = vmatpush1.msra.mxu0 0.0
        %5882 = vmatprep.subr.mxu0 0.0
        %5883 = vmatpush1.msra.mxu0 0.0
        %5884 = vmatprep.subr.mxu0 0.0
        %5885 = vmatpush1.msra.mxu0 0.0
        %5886 = vmatprep.subr.mxu0 0.0
        %5887 = vmatpush1.msra.mxu0 0.0
        %5888 = vmatprep.subr.mxu0 0.0
        %5889 = vmatpush1.msra.mxu0 0.0
        %5890 = vmatprep.subr.mxu0 0.0
        %5891 = vmatpush1.msra.mxu0 0.0
        %5892 = vmatprep.subr.mxu0 0.0
        %5893 = vmatpush1.msra.mxu0 0.0
        %5894 = vmatprep.subr.mxu0 0.0
        %5895 = vmatpush1.msra.mxu0 0.0
        %5896 = vmatprep.subr.mxu0 0.0
        %5897 = vmatpush1.msra.mxu0 0.0
        %5898 = vmatprep.subr.mxu0 0.0
        %5899 = vmatpush1.msra.mxu0 0.0
        %5900 = vmatprep.subr.mxu0 0.0
        %5901 = vmatpush1.msra.mxu0 0.0
        %5902 = vmatprep.subr.mxu0 0.0
        %5903 = vmatpush1.msra.mxu0 0.0
        %5904 = vmatprep.subr.mxu0 0.0
        %5905 = vmatpush1.msra.mxu0 0.0
        %5906 = vmatprep.subr.mxu0 0.0
        %5907 = vmatpush1.msra.mxu0 0.0
        %5908 = vmatprep.subr.mxu0 0.0
        %5909 = vmatpush1.msra.mxu0 0.0
        %5910 = vmatprep.subr.mxu0 0.0
        %5911 = vmatpush1.msra.mxu0 0.0
        %5912 = vmatprep.subr.mxu0 0.0
        %5913 = vmatpush1.msra.mxu0 0.0
        %5914 = vmatprep.subr.mxu0 0.0
        %5915 = vmatpush1.msra.mxu0 0.0
        %5916 = vmatprep.subr.mxu0 0.0
        %5917 = vmatpush1.msra.mxu0 0.0
        %5918 = vmatprep.subr.mxu0 0.0
        %5919 = vmatpush1.msra.mxu0 0.0
        %5920 = vmatprep.subr.mxu0 0.0
        %5921 = vmatpush1.msra.mxu0 0.0
        %5922 = vmatprep.subr.mxu0 0.0
        %5923 = vmatpush1.msra.mxu0 0.0
        %5924 = vmatprep.mubr.f32.mxu0 0.0
        %5925 = vmatmul.mubr.f32.gmra.mrb[0].mxu0 %v5858
        %v5926 = vpop.f32.mrb[0].mxu0
        %v5927 = vadd.f32 %v5854, %v5926
        %v5928 = vpop.f32.mrb[0].mxu0
        %5929 = vdwg.mxu0
        %v5930 = vld [vmem:[#allocation3 + $0x2] sm:$0x3]
        %v5931 = vld [vmem:[%s61 + $0x80] sm:$0xff]
        %v5932 = vld [vmem:[%s61 + $0x88] sm:$0xff]
        %v5933 = vld [vmem:[%s61 + $0x90] sm:$0xff]
        %v5934 = vld [vmem:[%s61 + $0x98] sm:$0xff]
        %v5935 = vld [vmem:[%s61 + $0xa0] sm:$0xff]
        %v5936 = vld [vmem:[%s61 + $0xa8] sm:$0xff]
        %v5937 = vld [vmem:[%s61 + $0xb0] sm:$0xff]
        %v5938 = vld [vmem:[%s61 + $0xb8] sm:$0xff]
        %v5940 = vsel %vm2729, %v5930, 0
        %5942 = vmatprep.subr.mxu0 0.0
        %5943 = vmatpush1.msra.mxu0 %v5931
        %5944 = vmatprep.subr.mxu0 0.0
        %5945 = vmatpush1.msra.mxu0 %v5932
        %5946 = vmatprep.subr.mxu0 0.0
        %5947 = vmatpush1.msra.mxu0 %v5933
        %5948 = vmatprep.subr.mxu0 0.0
        %5949 = vmatpush1.msra.mxu0 %v5934
        %5950 = vmatprep.subr.mxu0 0.0
        %5951 = vmatpush1.msra.mxu0 %v5935
        %5952 = vmatprep.subr.mxu0 0.0
        %5953 = vmatpush1.msra.mxu0 %v5936
        %5954 = vmatprep.subr.mxu0 0.0
        %5955 = vmatpush1.msra.mxu0 %v5937
        %5956 = vmatprep.subr.mxu0 0.0
        %5957 = vmatpush1.msra.mxu0 %v5938
        %5958 = vmatprep.subr.mxu0 0.0
        %5959 = vmatpush1.msra.mxu0 0.0
        %5960 = vmatprep.subr.mxu0 0.0
        %5961 = vmatpush1.msra.mxu0 0.0
        %5962 = vmatprep.subr.mxu0 0.0
        %5963 = vmatpush1.msra.mxu0 0.0
        %5964 = vmatprep.subr.mxu0 0.0
        %5965 = vmatpush1.msra.mxu0 0.0
        %5966 = vmatprep.subr.mxu0 0.0
        %5967 = vmatpush1.msra.mxu0 0.0
        %5968 = vmatprep.subr.mxu0 0.0
        %5969 = vmatpush1.msra.mxu0 0.0
        %5970 = vmatprep.subr.mxu0 0.0
        %5971 = vmatpush1.msra.mxu0 0.0
        %5972 = vmatprep.subr.mxu0 0.0
        %5973 = vmatpush1.msra.mxu0 0.0
        %5974 = vmatprep.subr.mxu0 0.0
        %5975 = vmatpush1.msra.mxu0 0.0
        %5976 = vmatprep.subr.mxu0 0.0
        %5977 = vmatpush1.msra.mxu0 0.0
        %5978 = vmatprep.subr.mxu0 0.0
        %5979 = vmatpush1.msra.mxu0 0.0
        %5980 = vmatprep.subr.mxu0 0.0
        %5981 = vmatpush1.msra.mxu0 0.0
        %5982 = vmatprep.subr.mxu0 0.0
        %5983 = vmatpush1.msra.mxu0 0.0
        %5984 = vmatprep.subr.mxu0 0.0
        %5985 = vmatpush1.msra.mxu0 0.0
        %5986 = vmatprep.subr.mxu0 0.0
        %5987 = vmatpush1.msra.mxu0 0.0
        %5988 = vmatprep.subr.mxu0 0.0
        %5989 = vmatpush1.msra.mxu0 0.0
        %5990 = vmatprep.subr.mxu0 0.0
        %5991 = vmatpush1.msra.mxu0 0.0
        %5992 = vmatprep.subr.mxu0 0.0
        %5993 = vmatpush1.msra.mxu0 0.0
        %5994 = vmatprep.subr.mxu0 0.0
        %5995 = vmatpush1.msra.mxu0 0.0
        %5996 = vmatprep.subr.mxu0 0.0
        %5997 = vmatpush1.msra.mxu0 0.0
        %5998 = vmatprep.subr.mxu0 0.0
        %5999 = vmatpush1.msra.mxu0 0.0
        %6000 = vmatprep.subr.mxu0 0.0
        %6001 = vmatpush1.msra.mxu0 0.0
        %6002 = vmatprep.subr.mxu0 0.0
        %6003 = vmatpush1.msra.mxu0 0.0
        %6004 = vmatprep.subr.mxu0 0.0
        %6005 = vmatpush1.msra.mxu0 0.0
        %6006 = vmatprep.mubr.f32.mxu0 0.0
        %6007 = vmatmul.mubr.f32.gmra.mrb[0].mxu0 %v5940
        %v6008 = vpop.f32.mrb[0].mxu0
        %v6009 = vadd.f32 0.0, %v6008
        %v6010 = vpop.f32.mrb[0].mxu0
        %6011 = vdwg.mxu0
        %v6012 = vadd.f32 %v5927, %v6009
        %v6014 = vlaneseq
        %v6015 = vshrl.u32 %v6014, 7
        %v6016 = vsub.s32 0, %v6015
        %v6017 = vrot.slane %v5765, %v6016
        %v6019 = vadd.f32 %v6012, %v6017
        %v6020 = vadd.f32 %v6019, %v5502
        %v6021 = vmax.f32 %v6020, 0.0
        %6022 = vst.msk [vmem:[#allocation2] sm:$0x1] %vm2726, 0.0
        %6023 = vst.msk [vmem:[#allocation2 + $0x3] sm:$0x1] %vm2726, 0.0
        %6024 = vst.msk [vmem:[#allocation2 + $0x1] sm:$0x3] %vm5155, %v6021
        %v6025 = vld [vmem:[%s67] sm:$0x1]
        %v6026 = vld [vmem:[#allocation2] ss:$2 sm:$0x1]
        %v6027 = vld [vmem:[%s65] sm:$0xff]
        %v6028 = vld [vmem:[%s65 + $0x8] sm:$0xff]
        %v6029 = vld [vmem:[%s65 + $0x10] sm:$0xff]
        %v6030 = vld [vmem:[%s65 + $0x18] sm:$0xff]
        %v6031 = vld [vmem:[%s65 + $0x20] sm:$0xff]
        %v6032 = vld [vmem:[%s65 + $0x28] sm:$0xff]
        %v6033 = vld [vmem:[%s65 + $0x30] sm:$0xff]
        %v6034 = vld [vmem:[%s65 + $0x38] sm:$0xff]
        %v6035 = vld [vmem:[%s1348] ss:$2 sm:$0x1]
        %v6036 = vld [vmem:[%s65 + $0x40] sm:$0xff]
        %v6037 = vld [vmem:[%s65 + $0x48] sm:$0xff]
        %v6038 = vld [vmem:[%s65 + $0x50] sm:$0xff]
        %v6039 = vld [vmem:[%s65 + $0x58] sm:$0xff]
        %v6040 = vld [vmem:[%s65 + $0x60] sm:$0xff]
        %v6041 = vld [vmem:[%s65 + $0x68] sm:$0xff]
        %v6042 = vld [vmem:[%s65 + $0x70] sm:$0xff]
        %v6043 = vld [vmem:[%s65 + $0x78] sm:$0xff]
        %v6045 = vsel %vm2729, %v6035, 0
        %6047 = vmatprep.subr.mxu0 0.0
        %6048 = vmatpush1.msra.mxu0 %v6036
        %6049 = vmatprep.subr.mxu0 0.0
        %6050 = vmatpush1.msra.mxu0 %v6037
        %6051 = vmatprep.subr.mxu0 0.0
        %6052 = vmatpush1.msra.mxu0 %v6038
        %6053 = vmatprep.subr.mxu0 0.0
        %6054 = vmatpush1.msra.mxu0 %v6039
        %6055 = vmatprep.subr.mxu0 0.0
        %6056 = vmatpush1.msra.mxu0 %v6040
        %6057 = vmatprep.subr.mxu0 0.0
        %6058 = vmatpush1.msra.mxu0 %v6041
        %6059 = vmatprep.subr.mxu0 0.0
        %6060 = vmatpush1.msra.mxu0 %v6042
        %6061 = vmatprep.subr.mxu0 0.0
        %6062 = vmatpush1.msra.mxu0 %v6043
        %6063 = vmatprep.subr.mxu0 0.0
        %6064 = vmatpush1.msra.mxu0 0.0
        %6065 = vmatprep.subr.mxu0 0.0
        %6066 = vmatpush1.msra.mxu0 0.0
        %6067 = vmatprep.subr.mxu0 0.0
        %6068 = vmatpush1.msra.mxu0 0.0
        %6069 = vmatprep.subr.mxu0 0.0
        %6070 = vmatpush1.msra.mxu0 0.0
        %6071 = vmatprep.subr.mxu0 0.0
        %6072 = vmatpush1.msra.mxu0 0.0
        %6073 = vmatprep.subr.mxu0 0.0
        %6074 = vmatpush1.msra.mxu0 0.0
        %6075 = vmatprep.subr.mxu0 0.0
        %6076 = vmatpush1.msra.mxu0 0.0
        %6077 = vmatprep.subr.mxu0 0.0
        %6078 = vmatpush1.msra.mxu0 0.0
        %6079 = vmatprep.subr.mxu0 0.0
        %6080 = vmatpush1.msra.mxu0 0.0
        %6081 = vmatprep.subr.mxu0 0.0
        %6082 = vmatpush1.msra.mxu0 0.0
        %6083 = vmatprep.subr.mxu0 0.0
        %6084 = vmatpush1.msra.mxu0 0.0
        %6085 = vmatprep.subr.mxu0 0.0
        %6086 = vmatpush1.msra.mxu0 0.0
        %6087 = vmatprep.subr.mxu0 0.0
        %6088 = vmatpush1.msra.mxu0 0.0
        %6089 = vmatprep.subr.mxu0 0.0
        %6090 = vmatpush1.msra.mxu0 0.0
        %6091 = vmatprep.subr.mxu0 0.0
        %6092 = vmatpush1.msra.mxu0 0.0
        %6093 = vmatprep.subr.mxu0 0.0
        %6094 = vmatpush1.msra.mxu0 0.0
        %6095 = vmatprep.subr.mxu0 0.0
        %6096 = vmatpush1.msra.mxu0 0.0
        %6097 = vmatprep.subr.mxu0 0.0
        %6098 = vmatpush1.msra.mxu0 0.0
        %6099 = vmatprep.subr.mxu0 0.0
        %6100 = vmatpush1.msra.mxu0 0.0
        %6101 = vmatprep.subr.mxu0 0.0
        %6102 = vmatpush1.msra.mxu0 0.0
        %6103 = vmatprep.subr.mxu0 0.0
        %6104 = vmatpush1.msra.mxu0 0.0
        %6105 = vmatprep.subr.mxu0 0.0
        %6106 = vmatpush1.msra.mxu0 0.0
        %6107 = vmatprep.subr.mxu0 0.0
        %6108 = vmatpush1.msra.mxu0 0.0
        %6109 = vmatprep.subr.mxu0 0.0
        %6110 = vmatpush1.msra.mxu0 0.0
        %6111 = vmatprep.mubr.f32.mxu0 0.0
        %6112 = vmatmul.mubr.f32.gmra.mrb[0].mxu0 %v6045
        %v6113 = vpop.f32.mrb[0].mxu0
        %v6114 = vadd.f32 0.0, %v6113
        %v6115 = vpop.f32.mrb[0].mxu0
        %6116 = vdwg.mxu0
        %v6118 = vsel %vm2729, %v6026, 0
        %6120 = vmatprep.subr.mxu0 0.0
        %6121 = vmatpush1.msra.mxu0 %v6027
        %6122 = vmatprep.subr.mxu0 0.0
        %6123 = vmatpush1.msra.mxu0 %v6028
        %6124 = vmatprep.subr.mxu0 0.0
        %6125 = vmatpush1.msra.mxu0 %v6029
        %6126 = vmatprep.subr.mxu0 0.0
        %6127 = vmatpush1.msra.mxu0 %v6030
        %6128 = vmatprep.subr.mxu0 0.0
        %6129 = vmatpush1.msra.mxu0 %v6031
        %6130 = vmatprep.subr.mxu0 0.0
        %6131 = vmatpush1.msra.mxu0 %v6032
        %6132 = vmatprep.subr.mxu0 0.0
        %6133 = vmatpush1.msra.mxu0 %v6033
        %6134 = vmatprep.subr.mxu0 0.0
        %6135 = vmatpush1.msra.mxu0 %v6034
        %6136 = vmatprep.subr.mxu0 0.0
        %6137 = vmatpush1.msra.mxu0 0.0
        %6138 = vmatprep.subr.mxu0 0.0
        %6139 = vmatpush1.msra.mxu0 0.0
        %6140 = vmatprep.subr.mxu0 0.0
        %6141 = vmatpush1.msra.mxu0 0.0
        %6142 = vmatprep.subr.mxu0 0.0
        %6143 = vmatpush1.msra.mxu0 0.0
        %6144 = vmatprep.subr.mxu0 0.0
        %6145 = vmatpush1.msra.mxu0 0.0
        %6146 = vmatprep.subr.mxu0 0.0
        %6147 = vmatpush1.msra.mxu0 0.0
        %6148 = vmatprep.subr.mxu0 0.0
        %6149 = vmatpush1.msra.mxu0 0.0
        %6150 = vmatprep.subr.mxu0 0.0
        %6151 = vmatpush1.msra.mxu0 0.0
        %6152 = vmatprep.subr.mxu0 0.0
        %6153 = vmatpush1.msra.mxu0 0.0
        %6154 = vmatprep.subr.mxu0 0.0
        %6155 = vmatpush1.msra.mxu0 0.0
        %6156 = vmatprep.subr.mxu0 0.0
        %6157 = vmatpush1.msra.mxu0 0.0
        %6158 = vmatprep.subr.mxu0 0.0
        %6159 = vmatpush1.msra.mxu0 0.0
        %6160 = vmatprep.subr.mxu0 0.0
        %6161 = vmatpush1.msra.mxu0 0.0
        %6162 = vmatprep.subr.mxu0 0.0
        %6163 = vmatpush1.msra.mxu0 0.0
        %6164 = vmatprep.subr.mxu0 0.0
        %6165 = vmatpush1.msra.mxu0 0.0
        %6166 = vmatprep.subr.mxu0 0.0
        %6167 = vmatpush1.msra.mxu0 0.0
        %6168 = vmatprep.subr.mxu0 0.0
        %6169 = vmatpush1.msra.mxu0 0.0
        %6170 = vmatprep.subr.mxu0 0.0
        %6171 = vmatpush1.msra.mxu0 0.0
        %6172 = vmatprep.subr.mxu0 0.0
        %6173 = vmatpush1.msra.mxu0 0.0
        %6174 = vmatprep.subr.mxu0 0.0
        %6175 = vmatpush1.msra.mxu0 0.0
        %6176 = vmatprep.subr.mxu0 0.0
        %6177 = vmatpush1.msra.mxu0 0.0
        %6178 = vmatprep.subr.mxu0 0.0
        %6179 = vmatpush1.msra.mxu0 0.0
        %6180 = vmatprep.subr.mxu0 0.0
        %6181 = vmatpush1.msra.mxu0 0.0
        %6182 = vmatprep.subr.mxu0 0.0
        %6183 = vmatpush1.msra.mxu0 0.0
        %6184 = vmatprep.mubr.f32.mxu0 0.0
        %6185 = vmatmul.mubr.f32.gmra.mrb[0].mxu0 %v6118
        %v6186 = vpop.f32.mrb[0].mxu0
        %v6187 = vadd.f32 %v6114, %v6186
        %v6188 = vpop.f32.mrb[0].mxu0
        %6189 = vdwg.mxu0
        %v6190 = vld [vmem:[%s1526] ss:$2 sm:$0x1]
        %v6191 = vld [vmem:[%s65 + $0x80] sm:$0xff]
        %v6192 = vld [vmem:[%s65 + $0x88] sm:$0xff]
        %v6193 = vld [vmem:[%s65 + $0x90] sm:$0xff]
        %v6194 = vld [vmem:[%s65 + $0x98] sm:$0xff]
        %v6195 = vld [vmem:[%s65 + $0xa0] sm:$0xff]
        %v6196 = vld [vmem:[%s65 + $0xa8] sm:$0xff]
        %v6197 = vld [vmem:[%s65 + $0xb0] sm:$0xff]
        %v6198 = vld [vmem:[%s65 + $0xb8] sm:$0xff]
        %v6200 = vsel %vm2729, %v6190, 0
        %6202 = vmatprep.subr.mxu0 0.0
        %6203 = vmatpush1.msra.mxu0 %v6191
        %6204 = vmatprep.subr.mxu0 0.0
        %6205 = vmatpush1.msra.mxu0 %v6192
        %6206 = vmatprep.subr.mxu0 0.0
        %6207 = vmatpush1.msra.mxu0 %v6193
        %6208 = vmatprep.subr.mxu0 0.0
        %6209 = vmatpush1.msra.mxu0 %v6194
        %6210 = vmatprep.subr.mxu0 0.0
        %6211 = vmatpush1.msra.mxu0 %v6195
        %6212 = vmatprep.subr.mxu0 0.0
        %6213 = vmatpush1.msra.mxu0 %v6196
        %6214 = vmatprep.subr.mxu0 0.0
        %6215 = vmatpush1.msra.mxu0 %v6197
        %6216 = vmatprep.subr.mxu0 0.0
        %6217 = vmatpush1.msra.mxu0 %v6198
        %6218 = vmatprep.subr.mxu0 0.0
        %6219 = vmatpush1.msra.mxu0 0.0
        %6220 = vmatprep.subr.mxu0 0.0
        %6221 = vmatpush1.msra.mxu0 0.0
        %6222 = vmatprep.subr.mxu0 0.0
        %6223 = vmatpush1.msra.mxu0 0.0
        %6224 = vmatprep.subr.mxu0 0.0
        %6225 = vmatpush1.msra.mxu0 0.0
        %6226 = vmatprep.subr.mxu0 0.0
        %6227 = vmatpush1.msra.mxu0 0.0
        %6228 = vmatprep.subr.mxu0 0.0
        %6229 = vmatpush1.msra.mxu0 0.0
        %6230 = vmatprep.subr.mxu0 0.0
        %6231 = vmatpush1.msra.mxu0 0.0
        %6232 = vmatprep.subr.mxu0 0.0
        %6233 = vmatpush1.msra.mxu0 0.0
        %6234 = vmatprep.subr.mxu0 0.0
        %6235 = vmatpush1.msra.mxu0 0.0
        %6236 = vmatprep.subr.mxu0 0.0
        %6237 = vmatpush1.msra.mxu0 0.0
        %6238 = vmatprep.subr.mxu0 0.0
        %6239 = vmatpush1.msra.mxu0 0.0
        %6240 = vmatprep.subr.mxu0 0.0
        %6241 = vmatpush1.msra.mxu0 0.0
        %6242 = vmatprep.subr.mxu0 0.0
        %6243 = vmatpush1.msra.mxu0 0.0
        %6244 = vmatprep.subr.mxu0 0.0
        %6245 = vmatpush1.msra.mxu0 0.0
        %6246 = vmatprep.subr.mxu0 0.0
        %6247 = vmatpush1.msra.mxu0 0.0
        %6248 = vmatprep.subr.mxu0 0.0
        %6249 = vmatpush1.msra.mxu0 0.0
        %6250 = vmatprep.subr.mxu0 0.0
        %6251 = vmatpush1.msra.mxu0 0.0
        %6252 = vmatprep.subr.mxu0 0.0
        %6253 = vmatpush1.msra.mxu0 0.0
        %6254 = vmatprep.subr.mxu0 0.0
        %6255 = vmatpush1.msra.mxu0 0.0
        %6256 = vmatprep.subr.mxu0 0.0
        %6257 = vmatpush1.msra.mxu0 0.0
        %6258 = vmatprep.subr.mxu0 0.0
        %6259 = vmatpush1.msra.mxu0 0.0
        %6260 = vmatprep.subr.mxu0 0.0
        %6261 = vmatpush1.msra.mxu0 0.0
        %6262 = vmatprep.subr.mxu0 0.0
        %6263 = vmatpush1.msra.mxu0 0.0
        %6264 = vmatprep.subr.mxu0 0.0
        %6265 = vmatpush1.msra.mxu0 0.0
        %6266 = vmatprep.mubr.f32.mxu0 0.0
        %6267 = vmatmul.mubr.f32.gmra.mrb[0].mxu0 %v6200
        %v6268 = vpop.f32.mrb[0].mxu0
        %v6269 = vadd.f32 0.0, %v6268
        %v6270 = vpop.f32.mrb[0].mxu0
        %6271 = vdwg.mxu0
        %v6272 = vadd.f32 %v6187, %v6269
        %v6273 = vadd.f32 %v6272, %v6025
        %v6274 = vmax.f32 %v6273, 0.0
        %6275 = vst.msk [vmem:[#allocation3] sm:$0x1] %vm2726, 0.0
        %6276 = vst.msk [vmem:[#allocation3 + $0x2] sm:$0x1] %vm2726, 0.0
        %6277 = vst.msk [vmem:[#allocation3 + $0x1] sm:$0x1] %vm2726, %v6274
        %v6278 = vld [vmem:[%s71] sm:$0x1]
        %v6279 = vld [vmem:[#allocation3] sm:$0x1]
        %v6280 = vld [vmem:[%s69] sm:$0xff]
        %v6281 = vld [vmem:[%s69 + $0x8] sm:$0xff]
        %v6282 = vld [vmem:[%s69 + $0x10] sm:$0xff]
        %v6283 = vld [vmem:[%s69 + $0x18] sm:$0xff]
        %v6284 = vld [vmem:[%s69 + $0x20] sm:$0xff]
        %v6285 = vld [vmem:[%s69 + $0x28] sm:$0xff]
        %v6286 = vld [vmem:[%s69 + $0x30] sm:$0xff]
        %v6287 = vld [vmem:[%s69 + $0x38] sm:$0xff]
        %v6288 = vld [vmem:[#allocation3 + $0x1] sm:$0x1]
        %v6289 = vld [vmem:[%s69 + $0x40] sm:$0xff]
        %v6290 = vld [vmem:[%s69 + $0x48] sm:$0xff]
        %v6291 = vld [vmem:[%s69 + $0x50] sm:$0xff]
        %v6292 = vld [vmem:[%s69 + $0x58] sm:$0xff]
        %v6293 = vld [vmem:[%s69 + $0x60] sm:$0xff]
        %v6294 = vld [vmem:[%s69 + $0x68] sm:$0xff]
        %v6295 = vld [vmem:[%s69 + $0x70] sm:$0xff]
        %v6296 = vld [vmem:[%s69 + $0x78] sm:$0xff]
        %v6298 = vsel %vm2729, %v6288, 0
        %6300 = vmatprep.subr.mxu0 0.0
        %6301 = vmatpush1.msra.mxu0 %v6289
        %6302 = vmatprep.subr.mxu0 0.0
        %6303 = vmatpush1.msra.mxu0 %v6290
        %6304 = vmatprep.subr.mxu0 0.0
        %6305 = vmatpush1.msra.mxu0 %v6291
        %6306 = vmatprep.subr.mxu0 0.0
        %6307 = vmatpush1.msra.mxu0 %v6292
        %6308 = vmatprep.subr.mxu0 0.0
        %6309 = vmatpush1.msra.mxu0 %v6293
        %6310 = vmatprep.subr.mxu0 0.0
        %6311 = vmatpush1.msra.mxu0 %v6294
        %6312 = vmatprep.subr.mxu0 0.0
        %6313 = vmatpush1.msra.mxu0 %v6295
        %6314 = vmatprep.subr.mxu0 0.0
        %6315 = vmatpush1.msra.mxu0 %v6296
        %6316 = vmatprep.subr.mxu0 0.0
        %6317 = vmatpush1.msra.mxu0 0.0
        %6318 = vmatprep.subr.mxu0 0.0
        %6319 = vmatpush1.msra.mxu0 0.0
        %6320 = vmatprep.subr.mxu0 0.0
        %6321 = vmatpush1.msra.mxu0 0.0
        %6322 = vmatprep.subr.mxu0 0.0
        %6323 = vmatpush1.msra.mxu0 0.0
        %6324 = vmatprep.subr.mxu0 0.0
        %6325 = vmatpush1.msra.mxu0 0.0
        %6326 = vmatprep.subr.mxu0 0.0
        %6327 = vmatpush1.msra.mxu0 0.0
        %6328 = vmatprep.subr.mxu0 0.0
        %6329 = vmatpush1.msra.mxu0 0.0
        %6330 = vmatprep.subr.mxu0 0.0
        %6331 = vmatpush1.msra.mxu0 0.0
        %6332 = vmatprep.subr.mxu0 0.0
        %6333 = vmatpush1.msra.mxu0 0.0
        %6334 = vmatprep.subr.mxu0 0.0
        %6335 = vmatpush1.msra.mxu0 0.0
        %6336 = vmatprep.subr.mxu0 0.0
        %6337 = vmatpush1.msra.mxu0 0.0
        %6338 = vmatprep.subr.mxu0 0.0
        %6339 = vmatpush1.msra.mxu0 0.0
        %6340 = vmatprep.subr.mxu0 0.0
        %6341 = vmatpush1.msra.mxu0 0.0
        %6342 = vmatprep.subr.mxu0 0.0
        %6343 = vmatpush1.msra.mxu0 0.0
        %6344 = vmatprep.subr.mxu0 0.0
        %6345 = vmatpush1.msra.mxu0 0.0
        %6346 = vmatprep.subr.mxu0 0.0
        %6347 = vmatpush1.msra.mxu0 0.0
        %6348 = vmatprep.subr.mxu0 0.0
        %6349 = vmatpush1.msra.mxu0 0.0
        %6350 = vmatprep.subr.mxu0 0.0
        %6351 = vmatpush1.msra.mxu0 0.0
        %6352 = vmatprep.subr.mxu0 0.0
        %6353 = vmatpush1.msra.mxu0 0.0
        %6354 = vmatprep.subr.mxu0 0.0
        %6355 = vmatpush1.msra.mxu0 0.0
        %6356 = vmatprep.subr.mxu0 0.0
        %6357 = vmatpush1.msra.mxu0 0.0
        %6358 = vmatprep.subr.mxu0 0.0
        %6359 = vmatpush1.msra.mxu0 0.0
        %6360 = vmatprep.subr.mxu0 0.0
        %6361 = vmatpush1.msra.mxu0 0.0
        %6362 = vmatprep.subr.mxu0 0.0
        %6363 = vmatpush1.msra.mxu0 0.0
        %6364 = vmatprep.mubr.f32.mxu0 0.0
        %6365 = vmatmul.mubr.f32.gmra.mrb[0].mxu0 %v6298
        %v6366 = vpop.f32.mrb[0].mxu0
        %v6367 = vadd.f32 0.0, %v6366
        %v6368 = vpop.f32.mrb[0].mxu0
        %6369 = vdwg.mxu0
        %v6371 = vsel %vm2729, %v6279, 0
        %6373 = vmatprep.subr.mxu0 0.0
        %6374 = vmatpush1.msra.mxu0 %v6280
        %6375 = vmatprep.subr.mxu0 0.0
        %6376 = vmatpush1.msra.mxu0 %v6281
        %6377 = vmatprep.subr.mxu0 0.0
        %6378 = vmatpush1.msra.mxu0 %v6282
        %6379 = vmatprep.subr.mxu0 0.0
        %6380 = vmatpush1.msra.mxu0 %v6283
        %6381 = vmatprep.subr.mxu0 0.0
        %6382 = vmatpush1.msra.mxu0 %v6284
        %6383 = vmatprep.subr.mxu0 0.0
        %6384 = vmatpush1.msra.mxu0 %v6285
        %6385 = vmatprep.subr.mxu0 0.0
        %6386 = vmatpush1.msra.mxu0 %v6286
        %6387 = vmatprep.subr.mxu0 0.0
        %6388 = vmatpush1.msra.mxu0 %v6287
        %6389 = vmatprep.subr.mxu0 0.0
        %6390 = vmatpush1.msra.mxu0 0.0
        %6391 = vmatprep.subr.mxu0 0.0
        %6392 = vmatpush1.msra.mxu0 0.0
        %6393 = vmatprep.subr.mxu0 0.0
        %6394 = vmatpush1.msra.mxu0 0.0
        %6395 = vmatprep.subr.mxu0 0.0
        %6396 = vmatpush1.msra.mxu0 0.0
        %6397 = vmatprep.subr.mxu0 0.0
        %6398 = vmatpush1.msra.mxu0 0.0
        %6399 = vmatprep.subr.mxu0 0.0
        %6400 = vmatpush1.msra.mxu0 0.0
        %6401 = vmatprep.subr.mxu0 0.0
        %6402 = vmatpush1.msra.mxu0 0.0
        %6403 = vmatprep.subr.mxu0 0.0
        %6404 = vmatpush1.msra.mxu0 0.0
        %6405 = vmatprep.subr.mxu0 0.0
        %6406 = vmatpush1.msra.mxu0 0.0
        %6407 = vmatprep.subr.mxu0 0.0
        %6408 = vmatpush1.msra.mxu0 0.0
        %6409 = vmatprep.subr.mxu0 0.0
        %6410 = vmatpush1.msra.mxu0 0.0
        %6411 = vmatprep.subr.mxu0 0.0
        %6412 = vmatpush1.msra.mxu0 0.0
        %6413 = vmatprep.subr.mxu0 0.0
        %6414 = vmatpush1.msra.mxu0 0.0
        %6415 = vmatprep.subr.mxu0 0.0
        %6416 = vmatpush1.msra.mxu0 0.0
        %6417 = vmatprep.subr.mxu0 0.0
        %6418 = vmatpush1.msra.mxu0 0.0
        %6419 = vmatprep.subr.mxu0 0.0
        %6420 = vmatpush1.msra.mxu0 0.0
        %6421 = vmatprep.subr.mxu0 0.0
        %6422 = vmatpush1.msra.mxu0 0.0
        %6423 = vmatprep.subr.mxu0 0.0
        %6424 = vmatpush1.msra.mxu0 0.0
        %6425 = vmatprep.subr.mxu0 0.0
        %6426 = vmatpush1.msra.mxu0 0.0
        %6427 = vmatprep.subr.mxu0 0.0
        %6428 = vmatpush1.msra.mxu0 0.0
        %6429 = vmatprep.subr.mxu0 0.0
        %6430 = vmatpush1.msra.mxu0 0.0
        %6431 = vmatprep.subr.mxu0 0.0
        %6432 = vmatpush1.msra.mxu0 0.0
        %6433 = vmatprep.subr.mxu0 0.0
        %6434 = vmatpush1.msra.mxu0 0.0
        %6435 = vmatprep.subr.mxu0 0.0
        %6436 = vmatpush1.msra.mxu0 0.0
        %6437 = vmatprep.mubr.f32.mxu0 0.0
        %6438 = vmatmul.mubr.f32.gmra.mrb[0].mxu0 %v6371
        %v6439 = vpop.f32.mrb[0].mxu0
        %v6440 = vadd.f32 %v6367, %v6439
        %v6441 = vpop.f32.mrb[0].mxu0
        %6442 = vdwg.mxu0
        %v6443 = vld [vmem:[#allocation3 + $0x2] sm:$0x1]
        %v6444 = vld [vmem:[%s69 + $0x80] sm:$0xff]
        %v6445 = vld [vmem:[%s69 + $0x88] sm:$0xff]
        %v6446 = vld [vmem:[%s69 + $0x90] sm:$0xff]
        %v6447 = vld [vmem:[%s69 + $0x98] sm:$0xff]
        %v6448 = vld [vmem:[%s69 + $0xa0] sm:$0xff]
        %v6449 = vld [vmem:[%s69 + $0xa8] sm:$0xff]
        %v6450 = vld [vmem:[%s69 + $0xb0] sm:$0xff]
        %v6451 = vld [vmem:[%s69 + $0xb8] sm:$0xff]
        %v6453 = vsel %vm2729, %v6443, 0
        %6455 = vmatprep.subr.mxu0 0.0
        %6456 = vmatpush1.msra.mxu0 %v6444
        %6457 = vmatprep.subr.mxu0 0.0
        %6458 = vmatpush1.msra.mxu0 %v6445
        %6459 = vmatprep.subr.mxu0 0.0
        %6460 = vmatpush1.msra.mxu0 %v6446
        %6461 = vmatprep.subr.mxu0 0.0
        %6462 = vmatpush1.msra.mxu0 %v6447
        %6463 = vmatprep.subr.mxu0 0.0
        %6464 = vmatpush1.msra.mxu0 %v6448
        %6465 = vmatprep.subr.mxu0 0.0
        %6466 = vmatpush1.msra.mxu0 %v6449
        %6467 = vmatprep.subr.mxu0 0.0
        %6468 = vmatpush1.msra.mxu0 %v6450
        %6469 = vmatprep.subr.mxu0 0.0
        %6470 = vmatpush1.msra.mxu0 %v6451
        %6471 = vmatprep.subr.mxu0 0.0
        %6472 = vmatpush1.msra.mxu0 0.0
        %6473 = vmatprep.subr.mxu0 0.0
        %6474 = vmatpush1.msra.mxu0 0.0
        %6475 = vmatprep.subr.mxu0 0.0
        %6476 = vmatpush1.msra.mxu0 0.0
        %6477 = vmatprep.subr.mxu0 0.0
        %6478 = vmatpush1.msra.mxu0 0.0
        %6479 = vmatprep.subr.mxu0 0.0
        %6480 = vmatpush1.msra.mxu0 0.0
        %6481 = vmatprep.subr.mxu0 0.0
        %6482 = vmatpush1.msra.mxu0 0.0
        %6483 = vmatprep.subr.mxu0 0.0
        %6484 = vmatpush1.msra.mxu0 0.0
        %6485 = vmatprep.subr.mxu0 0.0
        %6486 = vmatpush1.msra.mxu0 0.0
        %6487 = vmatprep.subr.mxu0 0.0
        %6488 = vmatpush1.msra.mxu0 0.0
        %6489 = vmatprep.subr.mxu0 0.0
        %6490 = vmatpush1.msra.mxu0 0.0
        %6491 = vmatprep.subr.mxu0 0.0
        %6492 = vmatpush1.msra.mxu0 0.0
        %6493 = vmatprep.subr.mxu0 0.0
        %6494 = vmatpush1.msra.mxu0 0.0
        %6495 = vmatprep.subr.mxu0 0.0
        %6496 = vmatpush1.msra.mxu0 0.0
        %6497 = vmatprep.subr.mxu0 0.0
        %6498 = vmatpush1.msra.mxu0 0.0
        %6499 = vmatprep.subr.mxu0 0.0
        %6500 = vmatpush1.msra.mxu0 0.0
        %6501 = vmatprep.subr.mxu0 0.0
        %6502 = vmatpush1.msra.mxu0 0.0
        %6503 = vmatprep.subr.mxu0 0.0
        %6504 = vmatpush1.msra.mxu0 0.0
        %6505 = vmatprep.subr.mxu0 0.0
        %6506 = vmatpush1.msra.mxu0 0.0
        %6507 = vmatprep.subr.mxu0 0.0
        %6508 = vmatpush1.msra.mxu0 0.0
        %6509 = vmatprep.subr.mxu0 0.0
        %6510 = vmatpush1.msra.mxu0 0.0
        %6511 = vmatprep.subr.mxu0 0.0
        %6512 = vmatpush1.msra.mxu0 0.0
        %6513 = vmatprep.subr.mxu0 0.0
        %6514 = vmatpush1.msra.mxu0 0.0
        %6515 = vmatprep.subr.mxu0 0.0
        %6516 = vmatpush1.msra.mxu0 0.0
        %6517 = vmatprep.subr.mxu0 0.0
        %6518 = vmatpush1.msra.mxu0 0.0
        %6519 = vmatprep.mubr.f32.mxu0 0.0
        %6520 = vmatmul.mubr.f32.gmra.mrb[0].mxu0 %v6453
        %v6521 = vpop.f32.mrb[0].mxu0
        %v6522 = vadd.f32 0.0, %v6521
        %v6523 = vpop.f32.mrb[0].mxu0
        %6524 = vdwg.mxu0
        %v6525 = vadd.f32 %v6440, %v6522
        %v6526 = vadd.f32 %v6525, %v6278
        %v6527 = vld [vmem:[%s75] sm:$0x1]
        %v6528 = vld [vmem:[%s1348] ss:$2 sm:$0x1]
        %v6529 = vld [vmem:[%s73] sm:$0xff]
        %v6530 = vld [vmem:[%s73 + $0x8] sm:$0xff]
        %v6531 = vld [vmem:[%s73 + $0x10] sm:$0xff]
        %v6532 = vld [vmem:[%s73 + $0x18] sm:$0xff]
        %v6533 = vld [vmem:[%s73 + $0x20] sm:$0xff]
        %v6534 = vld [vmem:[%s73 + $0x28] sm:$0xff]
        %v6535 = vld [vmem:[%s73 + $0x30] sm:$0xff]
        %v6536 = vld [vmem:[%s73 + $0x38] sm:$0xff]
        %v6538 = vsel %vm2729, %v6528, 0
        %6540 = vmatprep.subr.mxu0 0.0
        %6541 = vmatpush1.msra.mxu0 %v6529
        %6542 = vmatprep.subr.mxu0 0.0
        %6543 = vmatpush1.msra.mxu0 %v6530
        %6544 = vmatprep.subr.mxu0 0.0
        %6545 = vmatpush1.msra.mxu0 %v6531
        %6546 = vmatprep.subr.mxu0 0.0
        %6547 = vmatpush1.msra.mxu0 %v6532
        %6548 = vmatprep.subr.mxu0 0.0
        %6549 = vmatpush1.msra.mxu0 %v6533
        %6550 = vmatprep.subr.mxu0 0.0
        %6551 = vmatpush1.msra.mxu0 %v6534
        %6552 = vmatprep.subr.mxu0 0.0
        %6553 = vmatpush1.msra.mxu0 %v6535
        %6554 = vmatprep.subr.mxu0 0.0
        %6555 = vmatpush1.msra.mxu0 %v6536
        %6556 = vmatprep.subr.mxu0 0.0
        %6557 = vmatpush1.msra.mxu0 0.0
        %6558 = vmatprep.subr.mxu0 0.0
        %6559 = vmatpush1.msra.mxu0 0.0
        %6560 = vmatprep.subr.mxu0 0.0
        %6561 = vmatpush1.msra.mxu0 0.0
        %6562 = vmatprep.subr.mxu0 0.0
        %6563 = vmatpush1.msra.mxu0 0.0
        %6564 = vmatprep.subr.mxu0 0.0
        %6565 = vmatpush1.msra.mxu0 0.0
        %6566 = vmatprep.subr.mxu0 0.0
        %6567 = vmatpush1.msra.mxu0 0.0
        %6568 = vmatprep.subr.mxu0 0.0
        %6569 = vmatpush1.msra.mxu0 0.0
        %6570 = vmatprep.subr.mxu0 0.0
        %6571 = vmatpush1.msra.mxu0 0.0
        %6572 = vmatprep.subr.mxu0 0.0
        %6573 = vmatpush1.msra.mxu0 0.0
        %6574 = vmatprep.subr.mxu0 0.0
        %6575 = vmatpush1.msra.mxu0 0.0
        %6576 = vmatprep.subr.mxu0 0.0
        %6577 = vmatpush1.msra.mxu0 0.0
        %6578 = vmatprep.subr.mxu0 0.0
        %6579 = vmatpush1.msra.mxu0 0.0
        %6580 = vmatprep.subr.mxu0 0.0
        %6581 = vmatpush1.msra.mxu0 0.0
        %6582 = vmatprep.subr.mxu0 0.0
        %6583 = vmatpush1.msra.mxu0 0.0
        %6584 = vmatprep.subr.mxu0 0.0
        %6585 = vmatpush1.msra.mxu0 0.0
        %6586 = vmatprep.subr.mxu0 0.0
        %6587 = vmatpush1.msra.mxu0 0.0
        %6588 = vmatprep.subr.mxu0 0.0
        %6589 = vmatpush1.msra.mxu0 0.0
        %6590 = vmatprep.subr.mxu0 0.0
        %6591 = vmatpush1.msra.mxu0 0.0
        %6592 = vmatprep.subr.mxu0 0.0
        %6593 = vmatpush1.msra.mxu0 0.0
        %6594 = vmatprep.subr.mxu0 0.0
        %6595 = vmatpush1.msra.mxu0 0.0
        %6596 = vmatprep.subr.mxu0 0.0
        %6597 = vmatpush1.msra.mxu0 0.0
        %6598 = vmatprep.subr.mxu0 0.0
        %6599 = vmatpush1.msra.mxu0 0.0
        %6600 = vmatprep.subr.mxu0 0.0
        %6601 = vmatpush1.msra.mxu0 0.0
        %6602 = vmatprep.subr.mxu0 0.0
        %6603 = vmatpush1.msra.mxu0 0.0
        %6604 = vmatprep.mubr.f32.mxu0 0.0
        %6605 = vmatmul.mubr.f32.gmra.mrb[0].mxu0 %v6538
        %v6606 = vpop.f32.mrb[0].mxu0
        %v6607 = vadd.f32 %v6527, %v6606
        %v6608 = vpop.f32.mrb[0].mxu0
        %6609 = vdwg.mxu0
        %v6610 = vadd.f32 %v6526, %v6607
        %v6611 = vmax.f32 %v6610, 0.0
        %6612 = vst.msk [vmem:[#allocation2] sm:$0x1] %vm2726, 0.0
        %6613 = vst.msk [vmem:[#allocation2 + $0x2] sm:$0x1] %vm2726, 0.0
        %6614 = vst.msk [vmem:[#allocation2 + $0x1] sm:$0x1] %vm2726, %v6611
        %v6615 = vld [vmem:[%s79] sm:$0x1]
        %v6616 = vld [vmem:[#allocation2] sm:$0x1]
        %v6617 = vld [vmem:[%s77] sm:$0xff]
        %v6618 = vld [vmem:[%s77 + $0x8] sm:$0xff]
        %v6619 = vld [vmem:[%s77 + $0x10] sm:$0xff]
        %v6620 = vld [vmem:[%s77 + $0x18] sm:$0xff]
        %v6621 = vld [vmem:[%s77 + $0x20] sm:$0xff]
        %v6622 = vld [vmem:[%s77 + $0x28] sm:$0xff]
        %v6623 = vld [vmem:[%s77 + $0x30] sm:$0xff]
        %v6624 = vld [vmem:[%s77 + $0x38] sm:$0xff]
        %v6625 = vld [vmem:[#allocation2 + $0x1] sm:$0x1]
        %v6626 = vld [vmem:[%s77 + $0x40] sm:$0xff]
        %v6627 = vld [vmem:[%s77 + $0x48] sm:$0xff]
        %v6628 = vld [vmem:[%s77 + $0x50] sm:$0xff]
        %v6629 = vld [vmem:[%s77 + $0x58] sm:$0xff]
        %v6630 = vld [vmem:[%s77 + $0x60] sm:$0xff]
        %v6631 = vld [vmem:[%s77 + $0x68] sm:$0xff]
        %v6632 = vld [vmem:[%s77 + $0x70] sm:$0xff]
        %v6633 = vld [vmem:[%s77 + $0x78] sm:$0xff]
        %v6635 = vsel %vm2729, %v6625, 0
        %6637 = vmatprep.subr.mxu0 0.0
        %6638 = vmatpush1.msra.mxu0 %v6626
        %6639 = vmatprep.subr.mxu0 0.0
        %6640 = vmatpush1.msra.mxu0 %v6627
        %6641 = vmatprep.subr.mxu0 0.0
        %6642 = vmatpush1.msra.mxu0 %v6628
        %6643 = vmatprep.subr.mxu0 0.0
        %6644 = vmatpush1.msra.mxu0 %v6629
        %6645 = vmatprep.subr.mxu0 0.0
        %6646 = vmatpush1.msra.mxu0 %v6630
        %6647 = vmatprep.subr.mxu0 0.0
        %6648 = vmatpush1.msra.mxu0 %v6631
        %6649 = vmatprep.subr.mxu0 0.0
        %6650 = vmatpush1.msra.mxu0 %v6632
        %6651 = vmatprep.subr.mxu0 0.0
        %6652 = vmatpush1.msra.mxu0 %v6633
        %6653 = vmatprep.subr.mxu0 0.0
        %6654 = vmatpush1.msra.mxu0 0.0
        %6655 = vmatprep.subr.mxu0 0.0
        %6656 = vmatpush1.msra.mxu0 0.0
        %6657 = vmatprep.subr.mxu0 0.0
        %6658 = vmatpush1.msra.mxu0 0.0
        %6659 = vmatprep.subr.mxu0 0.0
        %6660 = vmatpush1.msra.mxu0 0.0
        %6661 = vmatprep.subr.mxu0 0.0
        %6662 = vmatpush1.msra.mxu0 0.0
        %6663 = vmatprep.subr.mxu0 0.0
        %6664 = vmatpush1.msra.mxu0 0.0
        %6665 = vmatprep.subr.mxu0 0.0
        %6666 = vmatpush1.msra.mxu0 0.0
        %6667 = vmatprep.subr.mxu0 0.0
        %6668 = vmatpush1.msra.mxu0 0.0
        %6669 = vmatprep.subr.mxu0 0.0
        %6670 = vmatpush1.msra.mxu0 0.0
        %6671 = vmatprep.subr.mxu0 0.0
        %6672 = vmatpush1.msra.mxu0 0.0
        %6673 = vmatprep.subr.mxu0 0.0
        %6674 = vmatpush1.msra.mxu0 0.0
        %6675 = vmatprep.subr.mxu0 0.0
        %6676 = vmatpush1.msra.mxu0 0.0
        %6677 = vmatprep.subr.mxu0 0.0
        %6678 = vmatpush1.msra.mxu0 0.0
        %6679 = vmatprep.subr.mxu0 0.0
        %6680 = vmatpush1.msra.mxu0 0.0
        %6681 = vmatprep.subr.mxu0 0.0
        %6682 = vmatpush1.msra.mxu0 0.0
        %6683 = vmatprep.subr.mxu0 0.0
        %6684 = vmatpush1.msra.mxu0 0.0
        %6685 = vmatprep.subr.mxu0 0.0
        %6686 = vmatpush1.msra.mxu0 0.0
        %6687 = vmatprep.subr.mxu0 0.0
        %6688 = vmatpush1.msra.mxu0 0.0
        %6689 = vmatprep.subr.mxu0 0.0
        %6690 = vmatpush1.msra.mxu0 0.0
        %6691 = vmatprep.subr.mxu0 0.0
        %6692 = vmatpush1.msra.mxu0 0.0
        %6693 = vmatprep.subr.mxu0 0.0
        %6694 = vmatpush1.msra.mxu0 0.0
        %6695 = vmatprep.subr.mxu0 0.0
        %6696 = vmatpush1.msra.mxu0 0.0
        %6697 = vmatprep.subr.mxu0 0.0
        %6698 = vmatpush1.msra.mxu0 0.0
        %6699 = vmatprep.subr.mxu0 0.0
        %6700 = vmatpush1.msra.mxu0 0.0
        %6701 = vmatprep.mubr.f32.mxu0 0.0
        %6702 = vmatmul.mubr.f32.gmra.mrb[0].mxu0 %v6635
        %v6703 = vpop.f32.mrb[0].mxu0
        %v6704 = vadd.f32 0.0, %v6703
        %v6705 = vpop.f32.mrb[0].mxu0
        %6706 = vdwg.mxu0
        %v6708 = vsel %vm2729, %v6616, 0
        %6710 = vmatprep.subr.mxu0 0.0
        %6711 = vmatpush1.msra.mxu0 %v6617
        %6712 = vmatprep.subr.mxu0 0.0
        %6713 = vmatpush1.msra.mxu0 %v6618
        %6714 = vmatprep.subr.mxu0 0.0
        %6715 = vmatpush1.msra.mxu0 %v6619
        %6716 = vmatprep.subr.mxu0 0.0
        %6717 = vmatpush1.msra.mxu0 %v6620
        %6718 = vmatprep.subr.mxu0 0.0
        %6719 = vmatpush1.msra.mxu0 %v6621
        %6720 = vmatprep.subr.mxu0 0.0
        %6721 = vmatpush1.msra.mxu0 %v6622
        %6722 = vmatprep.subr.mxu0 0.0
        %6723 = vmatpush1.msra.mxu0 %v6623
        %6724 = vmatprep.subr.mxu0 0.0
        %6725 = vmatpush1.msra.mxu0 %v6624
        %6726 = vmatprep.subr.mxu0 0.0
        %6727 = vmatpush1.msra.mxu0 0.0
        %6728 = vmatprep.subr.mxu0 0.0
        %6729 = vmatpush1.msra.mxu0 0.0
        %6730 = vmatprep.subr.mxu0 0.0
        %6731 = vmatpush1.msra.mxu0 0.0
        %6732 = vmatprep.subr.mxu0 0.0
        %6733 = vmatpush1.msra.mxu0 0.0
        %6734 = vmatprep.subr.mxu0 0.0
        %6735 = vmatpush1.msra.mxu0 0.0
        %6736 = vmatprep.subr.mxu0 0.0
        %6737 = vmatpush1.msra.mxu0 0.0
        %6738 = vmatprep.subr.mxu0 0.0
        %6739 = vmatpush1.msra.mxu0 0.0
        %6740 = vmatprep.subr.mxu0 0.0
        %6741 = vmatpush1.msra.mxu0 0.0
        %6742 = vmatprep.subr.mxu0 0.0
        %6743 = vmatpush1.msra.mxu0 0.0
        %6744 = vmatprep.subr.mxu0 0.0
        %6745 = vmatpush1.msra.mxu0 0.0
        %6746 = vmatprep.subr.mxu0 0.0
        %6747 = vmatpush1.msra.mxu0 0.0
        %6748 = vmatprep.subr.mxu0 0.0
        %6749 = vmatpush1.msra.mxu0 0.0
        %6750 = vmatprep.subr.mxu0 0.0
        %6751 = vmatpush1.msra.mxu0 0.0
        %6752 = vmatprep.subr.mxu0 0.0
        %6753 = vmatpush1.msra.mxu0 0.0
        %6754 = vmatprep.subr.mxu0 0.0
        %6755 = vmatpush1.msra.mxu0 0.0
        %6756 = vmatprep.subr.mxu0 0.0
        %6757 = vmatpush1.msra.mxu0 0.0
        %6758 = vmatprep.subr.mxu0 0.0
        %6759 = vmatpush1.msra.mxu0 0.0
        %6760 = vmatprep.subr.mxu0 0.0
        %6761 = vmatpush1.msra.mxu0 0.0
        %6762 = vmatprep.subr.mxu0 0.0
        %6763 = vmatpush1.msra.mxu0 0.0
        %6764 = vmatprep.subr.mxu0 0.0
        %6765 = vmatpush1.msra.mxu0 0.0
        %6766 = vmatprep.subr.mxu0 0.0
        %6767 = vmatpush1.msra.mxu0 0.0
        %6768 = vmatprep.subr.mxu0 0.0
        %6769 = vmatpush1.msra.mxu0 0.0
        %6770 = vmatprep.subr.mxu0 0.0
        %6771 = vmatpush1.msra.mxu0 0.0
        %6772 = vmatprep.subr.mxu0 0.0
        %6773 = vmatpush1.msra.mxu0 0.0
        %6774 = vmatprep.mubr.f32.mxu0 0.0
        %6775 = vmatmul.mubr.f32.gmra.mrb[0].mxu0 %v6708
        %v6776 = vpop.f32.mrb[0].mxu0
        %v6777 = vadd.f32 %v6704, %v6776
        %v6778 = vpop.f32.mrb[0].mxu0
        %6779 = vdwg.mxu0
        %v6780 = vld [vmem:[#allocation2 + $0x2] sm:$0x1]
        %v6781 = vld [vmem:[%s77 + $0x80] sm:$0xff]
        %v6782 = vld [vmem:[%s77 + $0x88] sm:$0xff]
        %v6783 = vld [vmem:[%s77 + $0x90] sm:$0xff]
        %v6784 = vld [vmem:[%s77 + $0x98] sm:$0xff]
        %v6785 = vld [vmem:[%s77 + $0xa0] sm:$0xff]
        %v6786 = vld [vmem:[%s77 + $0xa8] sm:$0xff]
        %v6787 = vld [vmem:[%s77 + $0xb0] sm:$0xff]
        %v6788 = vld [vmem:[%s77 + $0xb8] sm:$0xff]
        %v6790 = vsel %vm2729, %v6780, 0
        %6792 = vmatprep.subr.mxu0 0.0
        %6793 = vmatpush1.msra.mxu0 %v6781
        %6794 = vmatprep.subr.mxu0 0.0
        %6795 = vmatpush1.msra.mxu0 %v6782
        %6796 = vmatprep.subr.mxu0 0.0
        %6797 = vmatpush1.msra.mxu0 %v6783
        %6798 = vmatprep.subr.mxu0 0.0
        %6799 = vmatpush1.msra.mxu0 %v6784
        %6800 = vmatprep.subr.mxu0 0.0
        %6801 = vmatpush1.msra.mxu0 %v6785
        %6802 = vmatprep.subr.mxu0 0.0
        %6803 = vmatpush1.msra.mxu0 %v6786
        %6804 = vmatprep.subr.mxu0 0.0
        %6805 = vmatpush1.msra.mxu0 %v6787
        %6806 = vmatprep.subr.mxu0 0.0
        %6807 = vmatpush1.msra.mxu0 %v6788
        %6808 = vmatprep.subr.mxu0 0.0
        %6809 = vmatpush1.msra.mxu0 0.0
        %6810 = vmatprep.subr.mxu0 0.0
        %6811 = vmatpush1.msra.mxu0 0.0
        %6812 = vmatprep.subr.mxu0 0.0
        %6813 = vmatpush1.msra.mxu0 0.0
        %6814 = vmatprep.subr.mxu0 0.0
        %6815 = vmatpush1.msra.mxu0 0.0
        %6816 = vmatprep.subr.mxu0 0.0
        %6817 = vmatpush1.msra.mxu0 0.0
        %6818 = vmatprep.subr.mxu0 0.0
        %6819 = vmatpush1.msra.mxu0 0.0
        %6820 = vmatprep.subr.mxu0 0.0
        %6821 = vmatpush1.msra.mxu0 0.0
        %6822 = vmatprep.subr.mxu0 0.0
        %6823 = vmatpush1.msra.mxu0 0.0
        %6824 = vmatprep.subr.mxu0 0.0
        %6825 = vmatpush1.msra.mxu0 0.0
        %6826 = vmatprep.subr.mxu0 0.0
        %6827 = vmatpush1.msra.mxu0 0.0
        %6828 = vmatprep.subr.mxu0 0.0
        %6829 = vmatpush1.msra.mxu0 0.0
        %6830 = vmatprep.subr.mxu0 0.0
        %6831 = vmatpush1.msra.mxu0 0.0
        %6832 = vmatprep.subr.mxu0 0.0
        %6833 = vmatpush1.msra.mxu0 0.0
        %6834 = vmatprep.subr.mxu0 0.0
        %6835 = vmatpush1.msra.mxu0 0.0
        %6836 = vmatprep.subr.mxu0 0.0
        %6837 = vmatpush1.msra.mxu0 0.0
        %6838 = vmatprep.subr.mxu0 0.0
        %6839 = vmatpush1.msra.mxu0 0.0
        %6840 = vmatprep.subr.mxu0 0.0
        %6841 = vmatpush1.msra.mxu0 0.0
        %6842 = vmatprep.subr.mxu0 0.0
        %6843 = vmatpush1.msra.mxu0 0.0
        %6844 = vmatprep.subr.mxu0 0.0
        %6845 = vmatpush1.msra.mxu0 0.0
        %6846 = vmatprep.subr.mxu0 0.0
        %6847 = vmatpush1.msra.mxu0 0.0
        %6848 = vmatprep.subr.mxu0 0.0
        %6849 = vmatpush1.msra.mxu0 0.0
        %6850 = vmatprep.subr.mxu0 0.0
        %6851 = vmatpush1.msra.mxu0 0.0
        %6852 = vmatprep.subr.mxu0 0.0
        %6853 = vmatpush1.msra.mxu0 0.0
        %6854 = vmatprep.subr.mxu0 0.0
        %6855 = vmatpush1.msra.mxu0 0.0
        %6856 = vmatprep.mubr.f32.mxu0 0.0
        %6857 = vmatmul.mubr.f32.gmra.mrb[0].mxu0 %v6790
        %v6858 = vpop.f32.mrb[0].mxu0
        %v6859 = vadd.f32 0.0, %v6858
        %v6860 = vpop.f32.mrb[0].mxu0
        %6861 = vdwg.mxu0
        %v6862 = vadd.f32 %v6777, %v6859
        %v6863 = vadd.f32 %v6862, %v6615
        %v6864 = vmax.f32 %v6863, 0.0
        %6865 = vst.msk [vmem:[#allocation3] sm:$0x1] %vm2726, 0.0
        %6866 = vst.msk [vmem:[#allocation3 + $0x2] sm:$0x1] %vm2726, 0.0
        %6867 = vst.msk [vmem:[#allocation3 + $0x1] sm:$0x1] %vm2726, %v6864
        %v6868 = vld [vmem:[%s83] sm:$0x1]
        %v6869 = vld [vmem:[#allocation3] sm:$0x1]
        %v6870 = vld [vmem:[%s81] sm:$0xff]
        %v6871 = vld [vmem:[%s81 + $0x8] sm:$0xff]
        %v6872 = vld [vmem:[%s81 + $0x10] sm:$0xff]
        %v6873 = vld [vmem:[%s81 + $0x18] sm:$0xff]
        %v6874 = vld [vmem:[%s81 + $0x20] sm:$0xff]
        %v6875 = vld [vmem:[%s81 + $0x28] sm:$0xff]
        %v6876 = vld [vmem:[%s81 + $0x30] sm:$0xff]
        %v6877 = vld [vmem:[%s81 + $0x38] sm:$0xff]
        %v6878 = vld [vmem:[#allocation3 + $0x1] sm:$0x1]
        %v6879 = vld [vmem:[%s81 + $0x40] sm:$0xff]
        %v6880 = vld [vmem:[%s81 + $0x48] sm:$0xff]
        %v6881 = vld [vmem:[%s81 + $0x50] sm:$0xff]
        %v6882 = vld [vmem:[%s81 + $0x58] sm:$0xff]
        %v6883 = vld [vmem:[%s81 + $0x60] sm:$0xff]
        %v6884 = vld [vmem:[%s81 + $0x68] sm:$0xff]
        %v6885 = vld [vmem:[%s81 + $0x70] sm:$0xff]
        %v6886 = vld [vmem:[%s81 + $0x78] sm:$0xff]
        %v6888 = vsel %vm2729, %v6878, 0
        %6890 = vmatprep.subr.mxu0 0.0
        %6891 = vmatpush1.msra.mxu0 %v6879
        %6892 = vmatprep.subr.mxu0 0.0
        %6893 = vmatpush1.msra.mxu0 %v6880
        %6894 = vmatprep.subr.mxu0 0.0
        %6895 = vmatpush1.msra.mxu0 %v6881
        %6896 = vmatprep.subr.mxu0 0.0
        %6897 = vmatpush1.msra.mxu0 %v6882
        %6898 = vmatprep.subr.mxu0 0.0
        %6899 = vmatpush1.msra.mxu0 %v6883
        %6900 = vmatprep.subr.mxu0 0.0
        %6901 = vmatpush1.msra.mxu0 %v6884
        %6902 = vmatprep.subr.mxu0 0.0
        %6903 = vmatpush1.msra.mxu0 %v6885
        %6904 = vmatprep.subr.mxu0 0.0
        %6905 = vmatpush1.msra.mxu0 %v6886
        %6906 = vmatprep.subr.mxu0 0.0
        %6907 = vmatpush1.msra.mxu0 0.0
        %6908 = vmatprep.subr.mxu0 0.0
        %6909 = vmatpush1.msra.mxu0 0.0
        %6910 = vmatprep.subr.mxu0 0.0
        %6911 = vmatpush1.msra.mxu0 0.0
        %6912 = vmatprep.subr.mxu0 0.0
        %6913 = vmatpush1.msra.mxu0 0.0
        %6914 = vmatprep.subr.mxu0 0.0
        %6915 = vmatpush1.msra.mxu0 0.0
        %6916 = vmatprep.subr.mxu0 0.0
        %6917 = vmatpush1.msra.mxu0 0.0
        %6918 = vmatprep.subr.mxu0 0.0
        %6919 = vmatpush1.msra.mxu0 0.0
        %6920 = vmatprep.subr.mxu0 0.0
        %6921 = vmatpush1.msra.mxu0 0.0
        %6922 = vmatprep.subr.mxu0 0.0
        %6923 = vmatpush1.msra.mxu0 0.0
        %6924 = vmatprep.subr.mxu0 0.0
        %6925 = vmatpush1.msra.mxu0 0.0
        %6926 = vmatprep.subr.mxu0 0.0
        %6927 = vmatpush1.msra.mxu0 0.0
        %6928 = vmatprep.subr.mxu0 0.0
        %6929 = vmatpush1.msra.mxu0 0.0
        %6930 = vmatprep.subr.mxu0 0.0
        %6931 = vmatpush1.msra.mxu0 0.0
        %6932 = vmatprep.subr.mxu0 0.0
        %6933 = vmatpush1.msra.mxu0 0.0
        %6934 = vmatprep.subr.mxu0 0.0
        %6935 = vmatpush1.msra.mxu0 0.0
        %6936 = vmatprep.subr.mxu0 0.0
        %6937 = vmatpush1.msra.mxu0 0.0
        %6938 = vmatprep.subr.mxu0 0.0
        %6939 = vmatpush1.msra.mxu0 0.0
        %6940 = vmatprep.subr.mxu0 0.0
        %6941 = vmatpush1.msra.mxu0 0.0
        %6942 = vmatprep.subr.mxu0 0.0
        %6943 = vmatpush1.msra.mxu0 0.0
        %6944 = vmatprep.subr.mxu0 0.0
        %6945 = vmatpush1.msra.mxu0 0.0
        %6946 = vmatprep.subr.mxu0 0.0
        %6947 = vmatpush1.msra.mxu0 0.0
        %6948 = vmatprep.subr.mxu0 0.0
        %6949 = vmatpush1.msra.mxu0 0.0
        %6950 = vmatprep.subr.mxu0 0.0
        %6951 = vmatpush1.msra.mxu0 0.0
        %6952 = vmatprep.subr.mxu0 0.0
        %6953 = vmatpush1.msra.mxu0 0.0
        %6954 = vmatprep.mubr.f32.mxu0 0.0
        %6955 = vmatmul.mubr.f32.gmra.mrb[0].mxu0 %v6888
        %v6956 = vpop.f32.mrb[0].mxu0
        %v6957 = vadd.f32 0.0, %v6956
        %v6958 = vpop.f32.mrb[0].mxu0
        %6959 = vdwg.mxu0
        %v6961 = vsel %vm2729, %v6869, 0
        %6963 = vmatprep.subr.mxu0 0.0
        %6964 = vmatpush1.msra.mxu0 %v6870
        %6965 = vmatprep.subr.mxu0 0.0
        %6966 = vmatpush1.msra.mxu0 %v6871
        %6967 = vmatprep.subr.mxu0 0.0
        %6968 = vmatpush1.msra.mxu0 %v6872
        %6969 = vmatprep.subr.mxu0 0.0
        %6970 = vmatpush1.msra.mxu0 %v6873
        %6971 = vmatprep.subr.mxu0 0.0
        %6972 = vmatpush1.msra.mxu0 %v6874
        %6973 = vmatprep.subr.mxu0 0.0
        %6974 = vmatpush1.msra.mxu0 %v6875
        %6975 = vmatprep.subr.mxu0 0.0
        %6976 = vmatpush1.msra.mxu0 %v6876
        %6977 = vmatprep.subr.mxu0 0.0
        %6978 = vmatpush1.msra.mxu0 %v6877
        %6979 = vmatprep.subr.mxu0 0.0
        %6980 = vmatpush1.msra.mxu0 0.0
        %6981 = vmatprep.subr.mxu0 0.0
        %6982 = vmatpush1.msra.mxu0 0.0
        %6983 = vmatprep.subr.mxu0 0.0
        %6984 = vmatpush1.msra.mxu0 0.0
        %6985 = vmatprep.subr.mxu0 0.0
        %6986 = vmatpush1.msra.mxu0 0.0
        %6987 = vmatprep.subr.mxu0 0.0
        %6988 = vmatpush1.msra.mxu0 0.0
        %6989 = vmatprep.subr.mxu0 0.0
        %6990 = vmatpush1.msra.mxu0 0.0
        %6991 = vmatprep.subr.mxu0 0.0
        %6992 = vmatpush1.msra.mxu0 0.0
        %6993 = vmatprep.subr.mxu0 0.0
        %6994 = vmatpush1.msra.mxu0 0.0
        %6995 = vmatprep.subr.mxu0 0.0
        %6996 = vmatpush1.msra.mxu0 0.0
        %6997 = vmatprep.subr.mxu0 0.0
        %6998 = vmatpush1.msra.mxu0 0.0
        %6999 = vmatprep.subr.mxu0 0.0
        %7000 = vmatpush1.msra.mxu0 0.0
        %7001 = vmatprep.subr.mxu0 0.0
        %7002 = vmatpush1.msra.mxu0 0.0
        %7003 = vmatprep.subr.mxu0 0.0
        %7004 = vmatpush1.msra.mxu0 0.0
        %7005 = vmatprep.subr.mxu0 0.0
        %7006 = vmatpush1.msra.mxu0 0.0
        %7007 = vmatprep.subr.mxu0 0.0
        %7008 = vmatpush1.msra.mxu0 0.0
        %7009 = vmatprep.subr.mxu0 0.0
        %7010 = vmatpush1.msra.mxu0 0.0
        %7011 = vmatprep.subr.mxu0 0.0
        %7012 = vmatpush1.msra.mxu0 0.0
        %7013 = vmatprep.subr.mxu0 0.0
        %7014 = vmatpush1.msra.mxu0 0.0
        %7015 = vmatprep.subr.mxu0 0.0
        %7016 = vmatpush1.msra.mxu0 0.0
        %7017 = vmatprep.subr.mxu0 0.0
        %7018 = vmatpush1.msra.mxu0 0.0
        %7019 = vmatprep.subr.mxu0 0.0
        %7020 = vmatpush1.msra.mxu0 0.0
        %7021 = vmatprep.subr.mxu0 0.0
        %7022 = vmatpush1.msra.mxu0 0.0
        %7023 = vmatprep.subr.mxu0 0.0
        %7024 = vmatpush1.msra.mxu0 0.0
        %7025 = vmatprep.subr.mxu0 0.0
        %7026 = vmatpush1.msra.mxu0 0.0
        %7027 = vmatprep.mubr.f32.mxu0 0.0
        %7028 = vmatmul.mubr.f32.gmra.mrb[0].mxu0 %v6961
        %v7029 = vpop.f32.mrb[0].mxu0
        %v7030 = vadd.f32 %v6957, %v7029
        %v7031 = vpop.f32.mrb[0].mxu0
        %7032 = vdwg.mxu0
        %v7033 = vld [vmem:[#allocation3 + $0x2] sm:$0x1]
        %v7034 = vld [vmem:[%s81 + $0x80] sm:$0xff]
        %v7035 = vld [vmem:[%s81 + $0x88] sm:$0xff]
        %v7036 = vld [vmem:[%s81 + $0x90] sm:$0xff]
        %v7037 = vld [vmem:[%s81 + $0x98] sm:$0xff]
        %v7038 = vld [vmem:[%s81 + $0xa0] sm:$0xff]
        %v7039 = vld [vmem:[%s81 + $0xa8] sm:$0xff]
        %v7040 = vld [vmem:[%s81 + $0xb0] sm:$0xff]
        %v7041 = vld [vmem:[%s81 + $0xb8] sm:$0xff]
        %v7043 = vsel %vm2729, %v7033, 0
        %7045 = vmatprep.subr.mxu0 0.0
        %7046 = vmatpush1.msra.mxu0 %v7034
        %7047 = vmatprep.subr.mxu0 0.0
        %7048 = vmatpush1.msra.mxu0 %v7035
        %7049 = vmatprep.subr.mxu0 0.0
        %7050 = vmatpush1.msra.mxu0 %v7036
        %7051 = vmatprep.subr.mxu0 0.0
        %7052 = vmatpush1.msra.mxu0 %v7037
        %7053 = vmatprep.subr.mxu0 0.0
        %7054 = vmatpush1.msra.mxu0 %v7038
        %7055 = vmatprep.subr.mxu0 0.0
        %7056 = vmatpush1.msra.mxu0 %v7039
        %7057 = vmatprep.subr.mxu0 0.0
        %7058 = vmatpush1.msra.mxu0 %v7040
        %7059 = vmatprep.subr.mxu0 0.0
        %7060 = vmatpush1.msra.mxu0 %v7041
        %7061 = vmatprep.subr.mxu0 0.0
        %7062 = vmatpush1.msra.mxu0 0.0
        %7063 = vmatprep.subr.mxu0 0.0
        %7064 = vmatpush1.msra.mxu0 0.0
        %7065 = vmatprep.subr.mxu0 0.0
        %7066 = vmatpush1.msra.mxu0 0.0
        %7067 = vmatprep.subr.mxu0 0.0
        %7068 = vmatpush1.msra.mxu0 0.0
        %7069 = vmatprep.subr.mxu0 0.0
        %7070 = vmatpush1.msra.mxu0 0.0
        %7071 = vmatprep.subr.mxu0 0.0
        %7072 = vmatpush1.msra.mxu0 0.0
        %7073 = vmatprep.subr.mxu0 0.0
        %7074 = vmatpush1.msra.mxu0 0.0
        %7075 = vmatprep.subr.mxu0 0.0
        %7076 = vmatpush1.msra.mxu0 0.0
        %7077 = vmatprep.subr.mxu0 0.0
        %7078 = vmatpush1.msra.mxu0 0.0
        %7079 = vmatprep.subr.mxu0 0.0
        %7080 = vmatpush1.msra.mxu0 0.0
        %7081 = vmatprep.subr.mxu0 0.0
        %7082 = vmatpush1.msra.mxu0 0.0
        %7083 = vmatprep.subr.mxu0 0.0
        %7084 = vmatpush1.msra.mxu0 0.0
        %7085 = vmatprep.subr.mxu0 0.0
        %7086 = vmatpush1.msra.mxu0 0.0
        %7087 = vmatprep.subr.mxu0 0.0
        %7088 = vmatpush1.msra.mxu0 0.0
        %7089 = vmatprep.subr.mxu0 0.0
        %7090 = vmatpush1.msra.mxu0 0.0
        %7091 = vmatprep.subr.mxu0 0.0
        %7092 = vmatpush1.msra.mxu0 0.0
        %7093 = vmatprep.subr.mxu0 0.0
        %7094 = vmatpush1.msra.mxu0 0.0
        %7095 = vmatprep.subr.mxu0 0.0
        %7096 = vmatpush1.msra.mxu0 0.0
        %7097 = vmatprep.subr.mxu0 0.0
        %7098 = vmatpush1.msra.mxu0 0.0
        %7099 = vmatprep.subr.mxu0 0.0
        %7100 = vmatpush1.msra.mxu0 0.0
        %7101 = vmatprep.subr.mxu0 0.0
        %7102 = vmatpush1.msra.mxu0 0.0
        %7103 = vmatprep.subr.mxu0 0.0
        %7104 = vmatpush1.msra.mxu0 0.0
        %7105 = vmatprep.subr.mxu0 0.0
        %7106 = vmatpush1.msra.mxu0 0.0
        %7107 = vmatprep.subr.mxu0 0.0
        %7108 = vmatpush1.msra.mxu0 0.0
        %7109 = vmatprep.mubr.f32.mxu0 0.0
        %7110 = vmatmul.mubr.f32.gmra.mrb[0].mxu0 %v7043
        %v7111 = vpop.f32.mrb[0].mxu0
        %v7112 = vadd.f32 0.0, %v7111
        %v7113 = vpop.f32.mrb[0].mxu0
        %7114 = vdwg.mxu0
        %v7115 = vadd.f32 %v7030, %v7112
        %v7116 = vadd.f32 %v7115, %v6868
        %v7117 = vadd.f32 %v7116, %v6611
        %v7118 = vmax.f32 %v7117, 0.0
        %v7119 = vld [vmem:[%s85] sm:$0xff]
        %v7120 = vld [vmem:[%s85 + $0x8] sm:$0xff]
        %v7121 = vld [vmem:[%s85 + $0x10] sm:$0xff]
        %v7122 = vld [vmem:[%s85 + $0x18] sm:$0xff]
        %v7123 = vld [vmem:[%s85 + $0x20] sm:$0xff]
        %v7124 = vld [vmem:[%s85 + $0x28] sm:$0xff]
        %v7125 = vld [vmem:[%s85 + $0x30] sm:$0xff]
        %v7126 = vld [vmem:[%s85 + $0x38] sm:$0xff]
        %v7127 = vld [vmem:[%s87] sm:$0x1]
        %v7129 = vsel %vm2729, %v7118, 0
        %7131 = vmatprep.subr.mxu0 0.0
        %7132 = vmatpush1.msra.mxu0 %v7119
        %7133 = vmatprep.subr.mxu0 0.0
        %7134 = vmatpush1.msra.mxu0 %v7120
        %7135 = vmatprep.subr.mxu0 0.0
        %7136 = vmatpush1.msra.mxu0 %v7121
        %7137 = vmatprep.subr.mxu0 0.0
        %7138 = vmatpush1.msra.mxu0 %v7122
        %7139 = vmatprep.subr.mxu0 0.0
        %7140 = vmatpush1.msra.mxu0 %v7123
        %7141 = vmatprep.subr.mxu0 0.0
        %7142 = vmatpush1.msra.mxu0 %v7124
        %7143 = vmatprep.subr.mxu0 0.0
        %7144 = vmatpush1.msra.mxu0 %v7125
        %7145 = vmatprep.subr.mxu0 0.0
        %7146 = vmatpush1.msra.mxu0 %v7126
        %7147 = vmatprep.subr.mxu0 0.0
        %7148 = vmatpush1.msra.mxu0 0.0
        %7149 = vmatprep.subr.mxu0 0.0
        %7150 = vmatpush1.msra.mxu0 0.0
        %7151 = vmatprep.subr.mxu0 0.0
        %7152 = vmatpush1.msra.mxu0 0.0
        %7153 = vmatprep.subr.mxu0 0.0
        %7154 = vmatpush1.msra.mxu0 0.0
        %7155 = vmatprep.subr.mxu0 0.0
        %7156 = vmatpush1.msra.mxu0 0.0
        %7157 = vmatprep.subr.mxu0 0.0
        %7158 = vmatpush1.msra.mxu0 0.0
        %7159 = vmatprep.subr.mxu0 0.0
        %7160 = vmatpush1.msra.mxu0 0.0
        %7161 = vmatprep.subr.mxu0 0.0
        %7162 = vmatpush1.msra.mxu0 0.0
        %7163 = vmatprep.subr.mxu0 0.0
        %7164 = vmatpush1.msra.mxu0 0.0
        %7165 = vmatprep.subr.mxu0 0.0
        %7166 = vmatpush1.msra.mxu0 0.0
        %7167 = vmatprep.subr.mxu0 0.0
        %7168 = vmatpush1.msra.mxu0 0.0
        %7169 = vmatprep.subr.mxu0 0.0
        %7170 = vmatpush1.msra.mxu0 0.0
        %7171 = vmatprep.subr.mxu0 0.0
        %7172 = vmatpush1.msra.mxu0 0.0
        %7173 = vmatprep.subr.mxu0 0.0
        %7174 = vmatpush1.msra.mxu0 0.0
        %7175 = vmatprep.subr.mxu0 0.0
        %7176 = vmatpush1.msra.mxu0 0.0
        %7177 = vmatprep.subr.mxu0 0.0
        %7178 = vmatpush1.msra.mxu0 0.0
        %7179 = vmatprep.subr.mxu0 0.0
        %7180 = vmatpush1.msra.mxu0 0.0
        %7181 = vmatprep.subr.mxu0 0.0
        %7182 = vmatpush1.msra.mxu0 0.0
        %7183 = vmatprep.subr.mxu0 0.0
        %7184 = vmatpush1.msra.mxu0 0.0
        %7185 = vmatprep.subr.mxu0 0.0
        %7186 = vmatpush1.msra.mxu0 0.0
        %7187 = vmatprep.subr.mxu0 0.0
        %7188 = vmatpush1.msra.mxu0 0.0
        %7189 = vmatprep.subr.mxu0 0.0
        %7190 = vmatpush1.msra.mxu0 0.0
        %7191 = vmatprep.subr.mxu0 0.0
        %7192 = vmatpush1.msra.mxu0 0.0
        %7193 = vmatprep.subr.mxu0 0.0
        %7194 = vmatpush1.msra.mxu0 0.0
        %7195 = vmatprep.mubr.f32.mxu0 0.0
        %7196 = vmatmul.mubr.f32.gmra.mrb[0].mxu0 %v7129
        %v7197 = vpop.f32.mrb[0].mxu0
        %v7198 = vadd.f32 %v7127, %v7197
        %v7199 = vpop.f32.mrb[0].mxu0
        %7200 = vdwg.mxu0
        %vm7201 = vcmask 73728
        %7202 = vst.msk [vmem:[%s1314] sm:$0x1] %vm7201, %v7198
        %s7203 = sand.u32 %s1040, 1
        %s7204 = scalar_lea.sflag [#allocation5], %s7203
        %s7205 = sand.u32 %s1040, 1
        %s7206 = scalar_lea.vmem [#allocation4], %s7205
        // Predicated region
        $region197: #{_lambda_.1} parent=195 // pred_check
          %p7207 = pneg %p1050
        $region198: #{_lambda_.1} parent=195 // pred_check_branch
          %7209 = sbr.rel (%p7207) target = $region200
        $region199: #{_lambda_.1} parent=195 // pred_region
          %s7211 = ssub.s32 16, 16
          %7212 = vsyncadd %s7204, %s7211
          %s7213 = smul.addr %s103, 16
          %s7214 = scalar_lea.hbm %s89, %s7213
          %s7216 = sshll.u32 %s7206, 4
          %s7217 = int_to_ptr.vmem [resolvable:$true] %s7216
          %7219 = dma.vmem_to_hbm [thread:$0]  %s7217, 16, %s7214, %s7204
        $region200: #{_lambda_.1} parent=195 // pred_fallthru
          _
      $region196: #{_lambda_.1} parent=5 // pred_fallthru
        _
      %p7220 = scmp.le.s32.totalorder 2, %s98
      // Predicated region
      $region201: #{_lambda_.1} parent=5 // pred_check
        %p7221 = pneg %p7220
      $region202: #{_lambda_.1} parent=5 // pred_check_branch
        %7223 = sbr.rel (%p7221) target = $region204
      $region203: #{_lambda_.1} parent=5 // pred_region
        %s7224 = ssub.s32 %s98, 2
        // Predicated region
        $region205: #{_lambda_.1} parent=203 // pred_check
          %p7225 = pneg %p1056
        $region206: #{_lambda_.1} parent=203 // pred_check_branch
          %7227 = sbr.rel (%p7225) target = $region208
        $region207: #{_lambda_.1} parent=203 // pred_region
          %s7228 = sand.u32 %s1041, 1
          %s7229 = scalar_lea.sflag [#allocation5], %s7228
          %s7230 = sand.u32 %s1041, 1
          %s7231 = scalar_lea.vmem [#allocation4], %s7230
          %7232 = dma.done %s7229, 16
        $region208: #{_lambda_.1} parent=203 // pred_fallthru
          _
      $region204: #{_lambda_.1} parent=5 // pred_fallthru
        _
    $region6: #{_lambda_.1} parent=1 // loop_footer
      %s102 = sadd.s32 1, %s98
    $region7: #{_lambda_.1} parent=1 // loop_footer_branch
      %97 = sbr.rel target = $region3
    $region8: #{_lambda_.1} parent=1 // loop_exit
      _
    %7233 = vsyncpa [#allocation5], 1
    %s7234 = scalar_lea.sflag [#allocation5], 1
    %7235 = vsyncpa %s7234, 1

</llo_original>
